<compile_context>
chip_gen: v7x
topology: tpu7x:2x2x1
jax: 0.10.0
libtpu: 0.0.40
codegen_flags: <defaults>
</compile_context>

<pallas_src>
import jax
import jax.numpy as jnp
import numpy as np
from jax import lax
from jax.experimental import pallas as pl
from jax.experimental.pallas import tpu as pltpu

_C128 = 128   # Cout of p1_conv1 / p2_conv1 (fixed by the module)
_PAD = 8      # sublane-aligned halo width used inside the pad scratches


# ----------------------------------------------------------------------------
# In-kernel helpers (operate on values; carries stay in vregs)
# ----------------------------------------------------------------------------
def _suffix_max_rows(x):
    """Reverse (suffix) cummax along axis 0 of a (N, W, C) value (TopPool).

    log2(N) doubling steps; shifted operand built via an outer-axis concat.
    Assumes x >= 0 (post-ReLU) so zero is a valid fill for max."""
    n = x.shape[0]
    s = 1
    while s < n:
        fill = jnp.zeros((s,) + x.shape[1:], x.dtype)
        x = jnp.maximum(x, jnp.concatenate([x[s:], fill], axis=0))
        s *= 2
    return x


def _suffix_max_cols(x, buf_ref):
    """Reverse (suffix) cummax along axis 1 (sublane axis) of a (H, W, C) value
    (LeftPool).  Each doubling step stores the carry into a (H, 2W, C) VMEM
    scratch (aligned stores only; right half zero) and re-reads it at a shifted
    column offset as a plain value slice.  Assumes x >= 0."""
    H, W, C = x.shape
    buf_ref[:, W:, :] = jnp.zeros((H, W, C), x.dtype)   # fill region
    s = 1
    while s < W:
        buf_ref[:, :W, :] = x
        buf = buf_ref[...]
        x = jnp.maximum(x, buf[:, s:s + W, :])
        s *= 2
    return x


def _im2col3x3(xpad, h0, w0, H, W):
    """Collect the nine 3x3 taps of a spatially padded (..., C) value as a list
    of (H*W, C) matrices in (kh-major, kw, c) order — matches an HWIO reshape.
    (h0, w0) is the position of output pixel (0, 0)'s top-left tap."""
    C = xpad.shape[-1]
    cols = []
    for kh in range(3):
        for kw in range(3):
            cols.append(xpad[h0 + kh:h0 + kh + H,
                             w0 + kw:w0 + kw + W, :].reshape(H * W, C))
    return cols


# ----------------------------------------------------------------------------
# The fused TwoPool kernel (one batch element per grid step)
# ----------------------------------------------------------------------------
def _two_pool_kernel(xp_ref, w12_ref, b12_ref, wpc_ref, bpc_ref, wc2_ref, bc2_ref,
                     o_ref, ppad_ref, zpad_ref, wbuf_ref):
    """
      xp_ref : (1, H+2, W+2, dim)  zero-padded NHWC input
      w12_ref: (9*dim, 256)        p1|p2 3x3 weights (BN scale folded), Cout-concat
      b12_ref: (1, 256)            p1|p2 folded BN biases
      wpc_ref: (9*128+dim, dim)    p_conv1 3x3 weights stacked on K with conv1 (1x1)
      bpc_ref: (1, dim)            p_bn1 bias + bn1 bias
      wc2_ref: (9*dim, dim)        conv2 3x3 weights (BN scale folded)
      bc2_ref: (1, dim)            conv2 BN bias
      o_ref  : (1, H, W, dim)
      ppad_ref/zpad_ref           : halo-pad scratches (aligned stores only)
      wbuf_ref                    : LeftPool doubling-scan buffer
    """
    _, Hp2, Wp2, dim = xp_ref.shape
    H, W = Hp2 - 2, Wp2 - 2
    HW = H * W

    xp = xp_ref[0]                                              # (H+2, W+2, dim)

    # --- p1_conv1 & p2_conv1 as ONE GEMM (K=9*dim, N=256), bias, ReLU ----------
    lhs1 = jnp.concatenate(_im2col3x3(xp, 0, 0, H, W), axis=-1)   # (HW, 9*dim)
    y12 = jnp.dot(lhs1, w12_ref[...], preferred_element_type=jnp.float32)
    y12 = jnp.maximum(y12 + b12_ref[...], 0.0).reshape(H, W, 2 * _C128)

    # --- corner pools fused as an epilogue (conv output already in VMEM) -------
    pool1 = _suffix_max_rows(y12[:, :, :_C128])                 # TopPool  (over H)
    pool2 = _suffix_max_cols(y12[:, :, _C128:], wbuf_ref)       # LeftPool (over W)
    pooled = pool1 + pool2                                      # (H, W, 128)

    # --- p_conv1 (3x3, 128->dim) + conv1 (1x1, dim->dim) as ONE GEMM -----------
    #     z = relu(p_bn1 + bn1)
    ppad_ref[...] = jnp.zeros_like(ppad_ref)                    # halo pad in VMEM
    ppad_ref[1:H + 1, _PAD:_PAD + W, :] = pooled
    cols2 = _im2col3x3(ppad_ref[...], 0, _PAD - 1, H, W)        # 9 x (HW, 128)
    cols2.append(xp[1:H + 1, 1:W + 1, :].reshape(HW, dim))      # 1x1-conv operand
    lhs2 = jnp.concatenate(cols2, axis=-1)                      # (HW, 9*128+dim)
    z = jnp.dot(lhs2, wpc_ref[...], preferred_element_type=jnp.float32)
    z = jnp.maximum(z + bpc_ref[...], 0.0)                      # (HW, dim)

    # --- conv2 (3x3, dim->dim) + BN + ReLU --------------------------------------
    zpad_ref[...] = jnp.zeros_like(zpad_ref)
    zpad_ref[1:H + 1, _PAD:_PAD + W, :] = z.reshape(H, W, dim)
    lhs3 = jnp.concatenate(_im2col3x3(zpad_ref[...], 0, _PAD - 1, H, W), axis=-1)
    out = jnp.dot(lhs3, wc2_ref[...], preferred_element_type=jnp.float32)
    out = jnp.maximum(out + bc2_ref[...], 0.0)

    o_ref[...] = out.reshape(1, H, W, dim)


# ----------------------------------------------------------------------------
# Wrapper: weight preparation (BN-scale folding, Cout/K concatenation) + call
# ----------------------------------------------------------------------------
def _hwio(w_oihw):
    return jnp.transpose(w_oihw, (2, 3, 1, 0))


def _fold(w_hwio, scale):
    """Fold the BatchNorm scale into the conv weights (per output channel)."""
    return w_hwio * scale.reshape(1, 1, 1, -1)


def two_pool_forward(x_nchw, p):
    x = jnp.transpose(x_nchw, (0, 2, 3, 1)).astype(jnp.float32)     # NCHW -> NHWC
    B, H, W, dim = x.shape

    # x is padded ONCE and shared by both branch 3x3 convs; the kernel reads the
    # interior slice for the fused 1x1 conv.
    x_pad = jnp.pad(x, ((0, 0), (1, 1), (1, 1), (0, 0)))

    # p1/p2 3x3 convs fused along Cout (N = 256), BN scale folded into weights.
    w1 = _fold(_hwio(p['p1_w_oihw']), p['p1_s']).reshape(9 * dim, _C128)
    w2 = _fold(_hwio(p['p2_w_oihw']), p['p2_s']).reshape(9 * dim, _C128)
    w12 = jnp.concatenate([w1, w2], axis=-1)                        # (9*dim, 256)
    b12 = jnp.concatenate([p['p1_b'], p['p2_b']]).reshape(1, 2 * _C128)

    # p_conv1 (3x3, 128->dim) stacked on K with conv1 (1x1, dim->dim).
    wp = _fold(_hwio(p['p_w_oihw']), p['p_s']).reshape(9 * _C128, dim)
    wc1 = jnp.transpose(p['c1_w_oihw'][:, :, 0, 0], (1, 0)) * p['c1_s'].reshape(1, -1)
    wpc = jnp.concatenate([wp, wc1], axis=0)                        # (9*128+dim, dim)
    bpc = (p['p_b'] + p['c1_b']).reshape(1, dim)

    wc2 = _fold(_hwio(p['c2_w_oihw']), p['c2_s']).reshape(9 * dim, dim)
    bc2 = p['c2_b'].reshape(1, dim)

    out = pl.pallas_call(
        _two_pool_kernel,
        out_shape=jax.ShapeDtypeStruct((B, H, W, dim), jnp.float32),
        grid=(B,),
        in_specs=[
            pl.BlockSpec((1, H + 2, W + 2, dim), lambda b: (b, 0, 0, 0)),
            pl.BlockSpec((9 * dim, 2 * _C128), lambda b: (0, 0)),
            pl.BlockSpec((1, 2 * _C128), lambda b: (0, 0)),
            pl.BlockSpec((9 * _C128 + dim, dim), lambda b: (0, 0)),
            pl.BlockSpec((1, dim), lambda b: (0, 0)),
            pl.BlockSpec((9 * dim, dim), lambda b: (0, 0)),
            pl.BlockSpec((1, dim), lambda b: (0, 0)),
        ],
        out_specs=pl.BlockSpec((1, H, W, dim), lambda b: (b, 0, 0, 0)),
        scratch_shapes=[
            pltpu.VMEM((H + 2, W + 2 * _PAD, _C128), jnp.float32),   # pooled halo pad
            pltpu.VMEM((H + 2, W + 2 * _PAD, dim), jnp.float32),     # z halo pad
            pltpu.VMEM((H, 2 * W, _C128), jnp.float32),              # LeftPool scan buf
        ],
        compiler_params=pltpu.CompilerParams(
            dimension_semantics=("parallel",)),   # batch -> v7x megacore sharding
    )(x_pad, w12, b12, wpc, bpc, wc2, bc2)

    return jnp.transpose(out, (0, 3, 1, 2))                         # NHWC -> NCHW


# ----------------------------------------------------------------------------
# Parameters (deterministic synthetic init, PyTorch layouts kept for reference)
# ----------------------------------------------------------------------------
def make_params(key, dim):
    ks = jax.random.split(key, 12)

    def conv_w(k, cout, cin, ksz):
        return jax.random.normal(k, (cout, cin, ksz, ksz), jnp.float32) * 0.05

    def bn_fold(k, c):
        k1, k2, k3, k4 = jax.random.split(k, 4)
        gamma = 1.0 + 0.1 * jax.random.normal(k1, (c,), jnp.float32)
        beta = 0.1 * jax.random.normal(k2, (c,), jnp.float32)
        mean = 0.1 * jax.random.normal(k3, (c,), jnp.float32)
        var = 1.0 + 0.1 * jax.random.uniform(k4, (c,), jnp.float32)
        eps = 1e-5
        scale = gamma / jnp.sqrt(var + eps)
        bias = beta - mean * scale
        return scale, bias

    p = {}
    p['p1_w_oihw'] = conv_w(ks[0], 128, dim, 3)
    p['p1_s'], p['p1_b'] = bn_fold(ks[1], 128)
    p['p2_w_oihw'] = conv_w(ks[2], 128, dim, 3)
    p['p2_s'], p['p2_b'] = bn_fold(ks[3], 128)
    p['p_w_oihw'] = conv_w(ks[4], dim, 128, 3)
    p['p_s'], p['p_b'] = bn_fold(ks[5], dim)
    p['c1_w_oihw'] = conv_w(ks[6], dim, dim, 1)
    p['c1_s'], p['c1_b'] = bn_fold(ks[7], dim)
    p['c2_w_oihw'] = conv_w(ks[8], dim, dim, 3)
    p['c2_s'], p['c2_b'] = bn_fold(ks[9], dim)
    return p


# ----------------------------------------------------------------------------
# Pure-JAX reference (for the correctness check)
# ----------------------------------------------------------------------------
def ref_forward(x_nchw, p):
    x = jnp.transpose(x_nchw, (0, 2, 3, 1)).astype(jnp.float32)

    def conv(inp, w_oihw, pad):
        return lax.conv_general_dilated(
            inp, w_oihw, (1, 1), [(pad, pad), (pad, pad)],
            dimension_numbers=('NHWC', 'OIHW', 'NHWC'))

    def bn(inp, s, b):
        return inp * s + b

    p1 = jax.nn.relu(bn(conv(x, p['p1_w_oihw'], 1), p['p1_s'], p['p1_b']))
    p2 = jax.nn.relu(bn(conv(x, p['p2_w_oihw'], 1), p['p2_s'], p['p2_b']))
    pool1 = lax.cummax(p1, axis=1, reverse=True)      # TopPool
    pool2 = lax.cummax(p2, axis=2, reverse=True)      # LeftPool
    p_bn1 = bn(conv(pool1 + pool2, p['p_w_oihw'], 1), p['p_s'], p['p_b'])
    bn1 = bn(conv(x, p['c1_w_oihw'], 0), p['c1_s'], p['c1_b'])
    out = jax.nn.relu(bn(conv(jax.nn.relu(p_bn1 + bn1), p['c2_w_oihw'], 1),
                         p['c2_s'], p['c2_b']))
    return jnp.transpose(out, (0, 3, 1, 2))


# ----------------------------------------------------------------------------
if __name__ == "__main__":
    key = jax.random.PRNGKey(0)
    B, dim, H, W = 2, 32, 16, 16
    kx, kp = jax.random.split(key)
    x = jax.random.normal(kx, (B, dim, H, W), jnp.float32)
    params = make_params(kp, dim)

    out = two_pool_forward(x, params)
    out = jax.block_until_ready(out)
    assert out.shape == (B, dim, H, W), out.shape

    ref = ref_forward(x, params)
    np.testing.assert_allclose(np.asarray(out), np.asarray(ref),
                               atol=1e-2, rtol=1e-2)
    print("KERNEL_OK")
</pallas_src>

<mosaic_0001>
module attributes {stable_mosaic.version = 11 : i64} {
  func.func @_two_pool_kernel(%arg0: i32, %arg1: memref<1x18x18x32xf32, #tpu.memory_space<vmem>>, %arg2: memref<288x256xf32, #tpu.memory_space<vmem>>, %arg3: memref<1x256xf32, #tpu.memory_space<vmem>>, %arg4: memref<1184x32xf32, #tpu.memory_space<vmem>>, %arg5: memref<1x32xf32, #tpu.memory_space<vmem>>, %arg6: memref<288x32xf32, #tpu.memory_space<vmem>>, %arg7: memref<1x32xf32, #tpu.memory_space<vmem>>, %arg8: memref<1x16x16x32xf32, #tpu.memory_space<vmem>>, %arg9: memref<18x32x128xf32, #tpu.memory_space<vmem>>, %arg10: memref<18x32x32xf32, #tpu.memory_space<vmem>>, %arg11: memref<16x32x128xf32, #tpu.memory_space<vmem>>) attributes {dimension_semantics = [#tpu.dimension_semantics<parallel>], iteration_bounds = array<i64: 2>, scalar_prefetch = 0 : i64, scratch_operands = 3 : i64, tpu.core_type = #tpu.core_type<tc>, window_params = [{transform_indices = @transform_0, window_bounds = array<i64: 1, 18, 18, 32>}, {pipeline_mode = #tpu.pipeline_mode<synchronous>, transform_indices = @transform_1, window_bounds = array<i64: 288, 256>}, {pipeline_mode = #tpu.pipeline_mode<synchronous>, transform_indices = @transform_2, window_bounds = array<i64: 1, 256>}, {pipeline_mode = #tpu.pipeline_mode<synchronous>, transform_indices = @transform_3, window_bounds = array<i64: 1184, 32>}, {pipeline_mode = #tpu.pipeline_mode<synchronous>, transform_indices = @transform_4, window_bounds = array<i64: 1, 32>}, {pipeline_mode = #tpu.pipeline_mode<synchronous>, transform_indices = @transform_5, window_bounds = array<i64: 288, 32>}, {pipeline_mode = #tpu.pipeline_mode<synchronous>, transform_indices = @transform_6, window_bounds = array<i64: 1, 32>}, {transform_indices = @transform_7, window_bounds = array<i64: 1, 16, 16, 32>}]} {
    %c0 = arith.constant 0 : index
    %c0_0 = arith.constant 0 : index
    %c0_1 = arith.constant 0 : index
    %c0_2 = arith.constant 0 : index
    %0 = vector.load %arg1[%c0, %c0_0, %c0_1, %c0_2] : memref<1x18x18x32xf32, #tpu.memory_space<vmem>>, vector<1x18x18x32xf32>
    %1 = vector.shape_cast %0 : vector<1x18x18x32xf32> to vector<18x18x32xf32>
    %2 = vector.extract_strided_slice %1 {offsets = [0, 0, 0], sizes = [16, 16, 32], strides = [1, 1, 1]} : vector<18x18x32xf32> to vector<16x16x32xf32>
    %3 = vector.shape_cast %2 : vector<16x16x32xf32> to vector<256x32xf32>
    %4 = vector.extract_strided_slice %1 {offsets = [0, 1, 0], sizes = [16, 16, 32], strides = [1, 1, 1]} : vector<18x18x32xf32> to vector<16x16x32xf32>
    %5 = vector.shape_cast %4 : vector<16x16x32xf32> to vector<256x32xf32>
    %6 = vector.extract_strided_slice %1 {offsets = [0, 2, 0], sizes = [16, 16, 32], strides = [1, 1, 1]} : vector<18x18x32xf32> to vector<16x16x32xf32>
    %7 = vector.shape_cast %6 : vector<16x16x32xf32> to vector<256x32xf32>
    %8 = vector.extract_strided_slice %1 {offsets = [1, 0, 0], sizes = [16, 16, 32], strides = [1, 1, 1]} : vector<18x18x32xf32> to vector<16x16x32xf32>
    %9 = vector.shape_cast %8 : vector<16x16x32xf32> to vector<256x32xf32>
    %10 = vector.extract_strided_slice %1 {offsets = [1, 1, 0], sizes = [16, 16, 32], strides = [1, 1, 1]} : vector<18x18x32xf32> to vector<16x16x32xf32>
    %11 = vector.shape_cast %10 : vector<16x16x32xf32> to vector<256x32xf32>
    %12 = vector.extract_strided_slice %1 {offsets = [1, 2, 0], sizes = [16, 16, 32], strides = [1, 1, 1]} : vector<18x18x32xf32> to vector<16x16x32xf32>
    %13 = vector.shape_cast %12 : vector<16x16x32xf32> to vector<256x32xf32>
    %14 = vector.extract_strided_slice %1 {offsets = [2, 0, 0], sizes = [16, 16, 32], strides = [1, 1, 1]} : vector<18x18x32xf32> to vector<16x16x32xf32>
    %15 = vector.shape_cast %14 : vector<16x16x32xf32> to vector<256x32xf32>
    %16 = vector.extract_strided_slice %1 {offsets = [2, 1, 0], sizes = [16, 16, 32], strides = [1, 1, 1]} : vector<18x18x32xf32> to vector<16x16x32xf32>
    %17 = vector.shape_cast %16 : vector<16x16x32xf32> to vector<256x32xf32>
    %18 = vector.extract_strided_slice %1 {offsets = [2, 2, 0], sizes = [16, 16, 32], strides = [1, 1, 1]} : vector<18x18x32xf32> to vector<16x16x32xf32>
    %19 = vector.shape_cast %18 : vector<16x16x32xf32> to vector<256x32xf32>
    %20 = tpu.concatenate %3, %5, %7, %9, %11, %13, %15, %17, %19 in 1 : vector<256x32xf32>, vector<256x32xf32>, vector<256x32xf32>, vector<256x32xf32>, vector<256x32xf32>, vector<256x32xf32>, vector<256x32xf32>, vector<256x32xf32>, vector<256x32xf32> -> vector<256x288xf32>
    %c0_3 = arith.constant 0 : index
    %c0_4 = arith.constant 0 : index
    %21 = vector.load %arg2[%c0_3, %c0_4] : memref<288x256xf32, #tpu.memory_space<vmem>>, vector<288x256xf32>
    %cst = arith.constant dense<0.000000e+00> : vector<256x256xf32>
    %22 = tpu.matmul %20, %21, %cst {dimension_numbers = #tpu.dot_dimension_numbers<[1], [0], [0], [1], [0, 0, 1, 1], [], []>} : vector<256x288xf32>, vector<288x256xf32>, vector<256x256xf32> -> vector<256x256xf32>
    %c0_5 = arith.constant 0 : index
    %c0_6 = arith.constant 0 : index
    %23 = vector.load %arg3[%c0_5, %c0_6] : memref<1x256xf32, #tpu.memory_space<vmem>>, vector<1x256xf32>
    %24 = vector.broadcast %23 : vector<1x256xf32> to vector<256x256xf32>
    %25 = arith.addf %22, %24 : vector<256x256xf32>
    %cst_7 = arith.constant 0.000000e+00 : f32
    %26 = vector.broadcast %cst_7 : f32 to vector<256x256xf32>
    %27 = arith.maximumf %25, %26 : vector<256x256xf32>
    %28 = vector.shape_cast %27 : vector<256x256xf32> to vector<16x16x256xf32>
    %29 = vector.extract_strided_slice %28 {offsets = [0, 0, 0], sizes = [16, 16, 128], strides = [1, 1, 1]} : vector<16x16x256xf32> to vector<16x16x128xf32>
    %cst_8 = arith.constant 0.000000e+00 : f32
    %30 = vector.broadcast %cst_8 : f32 to vector<1x16x128xf32>
    %31 = vector.extract_strided_slice %29 {offsets = [1, 0, 0], sizes = [15, 16, 128], strides = [1, 1, 1]} : vector<16x16x128xf32> to vector<15x16x128xf32>
    %32 = tpu.concatenate %31, %30 in 0 : vector<15x16x128xf32>, vector<1x16x128xf32> -> vector<16x16x128xf32>
    %33 = arith.maximumf %29, %32 : vector<16x16x128xf32>
    %cst_9 = arith.constant 0.000000e+00 : f32
    %34 = vector.broadcast %cst_9 : f32 to vector<2x16x128xf32>
    %35 = vector.extract_strided_slice %33 {offsets = [2, 0, 0], sizes = [14, 16, 128], strides = [1, 1, 1]} : vector<16x16x128xf32> to vector<14x16x128xf32>
    %36 = tpu.concatenate %35, %34 in 0 : vector<14x16x128xf32>, vector<2x16x128xf32> -> vector<16x16x128xf32>
    %37 = arith.maximumf %33, %36 : vector<16x16x128xf32>
    %cst_10 = arith.constant 0.000000e+00 : f32
    %38 = vector.broadcast %cst_10 : f32 to vector<4x16x128xf32>
    %39 = vector.extract_strided_slice %37 {offsets = [4, 0, 0], sizes = [12, 16, 128], strides = [1, 1, 1]} : vector<16x16x128xf32> to vector<12x16x128xf32>
    %40 = tpu.concatenate %39, %38 in 0 : vector<12x16x128xf32>, vector<4x16x128xf32> -> vector<16x16x128xf32>
    %41 = arith.maximumf %37, %40 : vector<16x16x128xf32>
    %cst_11 = arith.constant 0.000000e+00 : f32
    %42 = vector.broadcast %cst_11 : f32 to vector<8x16x128xf32>
    %43 = vector.extract_strided_slice %41 {offsets = [8, 0, 0], sizes = [8, 16, 128], strides = [1, 1, 1]} : vector<16x16x128xf32> to vector<8x16x128xf32>
    %44 = tpu.concatenate %43, %42 in 0 : vector<8x16x128xf32>, vector<8x16x128xf32> -> vector<16x16x128xf32>
    %45 = arith.maximumf %41, %44 : vector<16x16x128xf32>
    %46 = vector.extract_strided_slice %28 {offsets = [0, 0, 128], sizes = [16, 16, 128], strides = [1, 1, 1]} : vector<16x16x256xf32> to vector<16x16x128xf32>
    %cst_12 = arith.constant 0.000000e+00 : f32
    %47 = vector.broadcast %cst_12 : f32 to vector<16x16x128xf32>
    %c0_13 = arith.constant 0 : index
    %c16 = arith.constant 16 : index
    %c0_14 = arith.constant 0 : index
    %48 = vector.load %arg11[%c0_13, %c16, %c0_14] : memref<16x32x128xf32, #tpu.memory_space<vmem>>, vector<16x16x128xf32>
    tpu.vector_store %arg11[%c0_13, %c16, %c0_14], %47 {strides = array<i32>} : memref<16x32x128xf32, #tpu.memory_space<vmem>>, vector<16x16x128xf32>,
    %c0_15 = arith.constant 0 : index
    %c0_16 = arith.constant 0 : index
    %c0_17 = arith.constant 0 : index
    %49 = vector.load %arg11[%c0_15, %c0_16, %c0_17] : memref<16x32x128xf32, #tpu.memory_space<vmem>>, vector<16x16x128xf32>
    tpu.vector_store %arg11[%c0_15, %c0_16, %c0_17], %46 {strides = array<i32>} : memref<16x32x128xf32, #tpu.memory_space<vmem>>, vector<16x16x128xf32>,
    %c0_18 = arith.constant 0 : index
    %c0_19 = arith.constant 0 : index
    %c0_20 = arith.constant 0 : index
    %50 = vector.load %arg11[%c0_18, %c0_19, %c0_20] : memref<16x32x128xf32, #tpu.memory_space<vmem>>, vector<16x32x128xf32>
    %51 = vector.extract_strided_slice %50 {offsets = [0, 1, 0], sizes = [16, 16, 128], strides = [1, 1, 1]} : vector<16x32x128xf32> to vector<16x16x128xf32>
    %52 = arith.maximumf %46, %51 : vector<16x16x128xf32>
    %c0_21 = arith.constant 0 : index
    %c0_22 = arith.constant 0 : index
    %c0_23 = arith.constant 0 : index
    %53 = vector.load %arg11[%c0_21, %c0_22, %c0_23] : memref<16x32x128xf32, #tpu.memory_space<vmem>>, vector<16x16x128xf32>
    tpu.vector_store %arg11[%c0_21, %c0_22, %c0_23], %52 {strides = array<i32>} : memref<16x32x128xf32, #tpu.memory_space<vmem>>, vector<16x16x128xf32>,
    %c0_24 = arith.constant 0 : index
    %c0_25 = arith.constant 0 : index
    %c0_26 = arith.constant 0 : index
    %54 = vector.load %arg11[%c0_24, %c0_25, %c0_26] : memref<16x32x128xf32, #tpu.memory_space<vmem>>, vector<16x32x128xf32>
    %55 = vector.extract_strided_slice %54 {offsets = [0, 2, 0], sizes = [16, 16, 128], strides = [1, 1, 1]} : vector<16x32x128xf32> to vector<16x16x128xf32>
    %56 = arith.maximumf %52, %55 : vector<16x16x128xf32>
    %c0_27 = arith.constant 0 : index
    %c0_28 = arith.constant 0 : index
    %c0_29 = arith.constant 0 : index
    %57 = vector.load %arg11[%c0_27, %c0_28, %c0_29] : memref<16x32x128xf32, #tpu.memory_space<vmem>>, vector<16x16x128xf32>
    tpu.vector_store %arg11[%c0_27, %c0_28, %c0_29], %56 {strides = array<i32>} : memref<16x32x128xf32, #tpu.memory_space<vmem>>, vector<16x16x128xf32>,
    %c0_30 = arith.constant 0 : index
    %c0_31 = arith.constant 0 : index
    %c0_32 = arith.constant 0 : index
    %58 = vector.load %arg11[%c0_30, %c0_31, %c0_32] : memref<16x32x128xf32, #tpu.memory_space<vmem>>, vector<16x32x128xf32>
    %59 = vector.extract_strided_slice %58 {offsets = [0, 4, 0], sizes = [16, 16, 128], strides = [1, 1, 1]} : vector<16x32x128xf32> to vector<16x16x128xf32>
    %60 = arith.maximumf %56, %59 : vector<16x16x128xf32>
    %c0_33 = arith.constant 0 : index
    %c0_34 = arith.constant 0 : index
    %c0_35 = arith.constant 0 : index
    %61 = vector.load %arg11[%c0_33, %c0_34, %c0_35] : memref<16x32x128xf32, #tpu.memory_space<vmem>>, vector<16x16x128xf32>
    tpu.vector_store %arg11[%c0_33, %c0_34, %c0_35], %60 {strides = array<i32>} : memref<16x32x128xf32, #tpu.memory_space<vmem>>, vector<16x16x128xf32>,
    %c0_36 = arith.constant 0 : index
    %c0_37 = arith.constant 0 : index
    %c0_38 = arith.constant 0 : index
    %62 = vector.load %arg11[%c0_36, %c0_37, %c0_38] : memref<16x32x128xf32, #tpu.memory_space<vmem>>, vector<16x32x128xf32>
    %63 = vector.extract_strided_slice %62 {offsets = [0, 8, 0], sizes = [16, 16, 128], strides = [1, 1, 1]} : vector<16x32x128xf32> to vector<16x16x128xf32>
    %64 = arith.maximumf %60, %63 : vector<16x16x128xf32>
    %65 = arith.addf %45, %64 : vector<16x16x128xf32>
    %cst_39 = arith.constant 0.000000e+00 : f32
    %66 = vector.broadcast %cst_39 : f32 to vector<18x32x128xf32>
    %c0_40 = arith.constant 0 : index
    %c0_41 = arith.constant 0 : index
    %c0_42 = arith.constant 0 : index
    %67 = vector.load %arg9[%c0_40, %c0_41, %c0_42] : memref<18x32x128xf32, #tpu.memory_space<vmem>>, vector<18x32x128xf32>
    tpu.vector_store %arg9[%c0_40, %c0_41, %c0_42], %66 {strides = array<i32>} : memref<18x32x128xf32, #tpu.memory_space<vmem>>, vector<18x32x128xf32>,
    %c1 = arith.constant 1 : index
    %c8 = arith.constant 8 : index
    %c0_43 = arith.constant 0 : index
    %68 = vector.load %arg9[%c1, %c8, %c0_43] : memref<18x32x128xf32, #tpu.memory_space<vmem>>, vector<16x16x128xf32>
    tpu.vector_store %arg9[%c1, %c8, %c0_43], %65 {strides = array<i32>} : memref<18x32x128xf32, #tpu.memory_space<vmem>>, vector<16x16x128xf32>,
    %c0_44 = arith.constant 0 : index
    %c0_45 = arith.constant 0 : index
    %c0_46 = arith.constant 0 : index
    %69 = vector.load %arg9[%c0_44, %c0_45, %c0_46] : memref<18x32x128xf32, #tpu.memory_space<vmem>>, vector<18x32x128xf32>
    %70 = vector.extract_strided_slice %69 {offsets = [0, 7, 0], sizes = [16, 16, 128], strides = [1, 1, 1]} : vector<18x32x128xf32> to vector<16x16x128xf32>
    %71 = vector.shape_cast %70 : vector<16x16x128xf32> to vector<256x128xf32>
    %72 = vector.extract_strided_slice %69 {offsets = [0, 8, 0], sizes = [16, 16, 128], strides = [1, 1, 1]} : vector<18x32x128xf32> to vector<16x16x128xf32>
    %73 = vector.shape_cast %72 : vector<16x16x128xf32> to vector<256x128xf32>
    %74 = vector.extract_strided_slice %69 {offsets = [0, 9, 0], sizes = [16, 16, 128], strides = [1, 1, 1]} : vector<18x32x128xf32> to vector<16x16x128xf32>
    %75 = vector.shape_cast %74 : vector<16x16x128xf32> to vector<256x128xf32>
    %76 = vector.extract_strided_slice %69 {offsets = [1, 7, 0], sizes = [16, 16, 128], strides = [1, 1, 1]} : vector<18x32x128xf32> to vector<16x16x128xf32>
    %77 = vector.shape_cast %76 : vector<16x16x128xf32> to vector<256x128xf32>
    %78 = vector.extract_strided_slice %69 {offsets = [1, 8, 0], sizes = [16, 16, 128], strides = [1, 1, 1]} : vector<18x32x128xf32> to vector<16x16x128xf32>
    %79 = vector.shape_cast %78 : vector<16x16x128xf32> to vector<256x128xf32>
    %80 = vector.extract_strided_slice %69 {offsets = [1, 9, 0], sizes = [16, 16, 128], strides = [1, 1, 1]} : vector<18x32x128xf32> to vector<16x16x128xf32>
    %81 = vector.shape_cast %80 : vector<16x16x128xf32> to vector<256x128xf32>
    %82 = vector.extract_strided_slice %69 {offsets = [2, 7, 0], sizes = [16, 16, 128], strides = [1, 1, 1]} : vector<18x32x128xf32> to vector<16x16x128xf32>
    %83 = vector.shape_cast %82 : vector<16x16x128xf32> to vector<256x128xf32>
    %84 = vector.extract_strided_slice %69 {offsets = [2, 8, 0], sizes = [16, 16, 128], strides = [1, 1, 1]} : vector<18x32x128xf32> to vector<16x16x128xf32>
    %85 = vector.shape_cast %84 : vector<16x16x128xf32> to vector<256x128xf32>
    %86 = vector.extract_strided_slice %69 {offsets = [2, 9, 0], sizes = [16, 16, 128], strides = [1, 1, 1]} : vector<18x32x128xf32> to vector<16x16x128xf32>
    %87 = vector.shape_cast %86 : vector<16x16x128xf32> to vector<256x128xf32>
    %88 = vector.extract_strided_slice %1 {offsets = [1, 1, 0], sizes = [16, 16, 32], strides = [1, 1, 1]} : vector<18x18x32xf32> to vector<16x16x32xf32>
    %89 = vector.shape_cast %88 : vector<16x16x32xf32> to vector<256x32xf32>
    %90 = tpu.concatenate %71, %73, %75, %77, %79, %81, %83, %85, %87, %89 in 1 : vector<256x128xf32>, vector<256x128xf32>, vector<256x128xf32>, vector<256x128xf32>, vector<256x128xf32>, vector<256x128xf32>, vector<256x128xf32>, vector<256x128xf32>, vector<256x128xf32>, vector<256x32xf32> -> vector<256x1184xf32>
    %c0_47 = arith.constant 0 : index
    %c0_48 = arith.constant 0 : index
    %91 = vector.load %arg4[%c0_47, %c0_48] : memref<1184x32xf32, #tpu.memory_space<vmem>>, vector<1184x32xf32>
    %cst_49 = arith.constant dense<0.000000e+00> : vector<256x32xf32>
    %92 = tpu.matmul %90, %91, %cst_49 {dimension_numbers = #tpu.dot_dimension_numbers<[1], [0], [0], [1], [0, 0, 1, 1], [], []>} : vector<256x1184xf32>, vector<1184x32xf32>, vector<256x32xf32> -> vector<256x32xf32>
    %c0_50 = arith.constant 0 : index
    %c0_51 = arith.constant 0 : index
    %93 = vector.load %arg5[%c0_50, %c0_51] : memref<1x32xf32, #tpu.memory_space<vmem>>, vector<1x32xf32>
    %94 = vector.broadcast %93 : vector<1x32xf32> to vector<256x32xf32>
    %95 = arith.addf %92, %94 : vector<256x32xf32>
    %cst_52 = arith.constant 0.000000e+00 : f32
    %96 = vector.broadcast %cst_52 : f32 to vector<256x32xf32>
    %97 = arith.maximumf %95, %96 : vector<256x32xf32>
    %cst_53 = arith.constant 0.000000e+00 : f32
    %98 = vector.broadcast %cst_53 : f32 to vector<18x32x32xf32>
    %c0_54 = arith.constant 0 : index
    %c0_55 = arith.constant 0 : index
    %c0_56 = arith.constant 0 : index
    %99 = vector.load %arg10[%c0_54, %c0_55, %c0_56] : memref<18x32x32xf32, #tpu.memory_space<vmem>>, vector<18x32x32xf32>
    tpu.vector_store %arg10[%c0_54, %c0_55, %c0_56], %98 {strides = array<i32>} : memref<18x32x32xf32, #tpu.memory_space<vmem>>, vector<18x32x32xf32>,
    %100 = vector.shape_cast %97 : vector<256x32xf32> to vector<16x16x32xf32>
    %c1_57 = arith.constant 1 : index
    %c8_58 = arith.constant 8 : index
    %c0_59 = arith.constant 0 : index
    %101 = vector.load %arg10[%c1_57, %c8_58, %c0_59] : memref<18x32x32xf32, #tpu.memory_space<vmem>>, vector<16x16x32xf32>
    tpu.vector_store %arg10[%c1_57, %c8_58, %c0_59], %100 {strides = array<i32>} : memref<18x32x32xf32, #tpu.memory_space<vmem>>, vector<16x16x32xf32>,
    %c0_60 = arith.constant 0 : index
    %c0_61 = arith.constant 0 : index
    %c0_62 = arith.constant 0 : index
    %102 = vector.load %arg10[%c0_60, %c0_61, %c0_62] : memref<18x32x32xf32, #tpu.memory_space<vmem>>, vector<18x32x32xf32>
    %103 = vector.extract_strided_slice %102 {offsets = [0, 7, 0], sizes = [16, 16, 32], strides = [1, 1, 1]} : vector<18x32x32xf32> to vector<16x16x32xf32>
    %104 = vector.shape_cast %103 : vector<16x16x32xf32> to vector<256x32xf32>
    %105 = vector.extract_strided_slice %102 {offsets = [0, 8, 0], sizes = [16, 16, 32], strides = [1, 1, 1]} : vector<18x32x32xf32> to vector<16x16x32xf32>
    %106 = vector.shape_cast %105 : vector<16x16x32xf32> to vector<256x32xf32>
    %107 = vector.extract_strided_slice %102 {offsets = [0, 9, 0], sizes = [16, 16, 32], strides = [1, 1, 1]} : vector<18x32x32xf32> to vector<16x16x32xf32>
    %108 = vector.shape_cast %107 : vector<16x16x32xf32> to vector<256x32xf32>
    %109 = vector.extract_strided_slice %102 {offsets = [1, 7, 0], sizes = [16, 16, 32], strides = [1, 1, 1]} : vector<18x32x32xf32> to vector<16x16x32xf32>
    %110 = vector.shape_cast %109 : vector<16x16x32xf32> to vector<256x32xf32>
    %111 = vector.extract_strided_slice %102 {offsets = [1, 8, 0], sizes = [16, 16, 32], strides = [1, 1, 1]} : vector<18x32x32xf32> to vector<16x16x32xf32>
    %112 = vector.shape_cast %111 : vector<16x16x32xf32> to vector<256x32xf32>
    %113 = vector.extract_strided_slice %102 {offsets = [1, 9, 0], sizes = [16, 16, 32], strides = [1, 1, 1]} : vector<18x32x32xf32> to vector<16x16x32xf32>
    %114 = vector.shape_cast %113 : vector<16x16x32xf32> to vector<256x32xf32>
    %115 = vector.extract_strided_slice %102 {offsets = [2, 7, 0], sizes = [16, 16, 32], strides = [1, 1, 1]} : vector<18x32x32xf32> to vector<16x16x32xf32>
    %116 = vector.shape_cast %115 : vector<16x16x32xf32> to vector<256x32xf32>
    %117 = vector.extract_strided_slice %102 {offsets = [2, 8, 0], sizes = [16, 16, 32], strides = [1, 1, 1]} : vector<18x32x32xf32> to vector<16x16x32xf32>
    %118 = vector.shape_cast %117 : vector<16x16x32xf32> to vector<256x32xf32>
    %119 = vector.extract_strided_slice %102 {offsets = [2, 9, 0], sizes = [16, 16, 32], strides = [1, 1, 1]} : vector<18x32x32xf32> to vector<16x16x32xf32>
    %120 = vector.shape_cast %119 : vector<16x16x32xf32> to vector<256x32xf32>
    %121 = tpu.concatenate %104, %106, %108, %110, %112, %114, %116, %118, %120 in 1 : vector<256x32xf32>, vector<256x32xf32>, vector<256x32xf32>, vector<256x32xf32>, vector<256x32xf32>, vector<256x32xf32>, vector<256x32xf32>, vector<256x32xf32>, vector<256x32xf32> -> vector<256x288xf32>
    %c0_63 = arith.constant 0 : index
    %c0_64 = arith.constant 0 : index
    %122 = vector.load %arg6[%c0_63, %c0_64] : memref<288x32xf32, #tpu.memory_space<vmem>>, vector<288x32xf32>
    %cst_65 = arith.constant dense<0.000000e+00> : vector<256x32xf32>
    %123 = tpu.matmul %121, %122, %cst_65 {dimension_numbers = #tpu.dot_dimension_numbers<[1], [0], [0], [1], [0, 0, 1, 1], [], []>} : vector<256x288xf32>, vector<288x32xf32>, vector<256x32xf32> -> vector<256x32xf32>
    %c0_66 = arith.constant 0 : index
    %c0_67 = arith.constant 0 : index
    %124 = vector.load %arg7[%c0_66, %c0_67] : memref<1x32xf32, #tpu.memory_space<vmem>>, vector<1x32xf32>
    %125 = vector.broadcast %124 : vector<1x32xf32> to vector<256x32xf32>
    %126 = arith.addf %123, %125 : vector<256x32xf32>
    %cst_68 = arith.constant 0.000000e+00 : f32
    %127 = vector.broadcast %cst_68 : f32 to vector<256x32xf32>
    %128 = arith.maximumf %126, %127 : vector<256x32xf32>
    %129 = vector.shape_cast %128 : vector<256x32xf32> to vector<1x16x16x32xf32>
    %c0_69 = arith.constant 0 : index
    %c0_70 = arith.constant 0 : index
    %c0_71 = arith.constant 0 : index
    %c0_72 = arith.constant 0 : index
    %130 = vector.load %arg8[%c0_69, %c0_70, %c0_71, %c0_72] : memref<1x16x16x32xf32, #tpu.memory_space<vmem>>, vector<1x16x16x32xf32>
    tpu.vector_store %arg8[%c0_69, %c0_70, %c0_71, %c0_72], %129 {strides = array<i32>} : memref<1x16x16x32xf32, #tpu.memory_space<vmem>>, vector<1x16x16x32xf32>,
    return
  }
  func.func @transform_0(%arg0: i32) -> (i32, i32, i32, i32) {
    %c0_i32 = arith.constant 0 : i32
    %c0_i32_0 = arith.constant 0 : i32
    %c0_i32_1 = arith.constant 0 : i32
    %c0_i32_2 = arith.constant 0 : i32
    return %arg0, %c0_i32, %c0_i32_0, %c0_i32_1 : i32, i32, i32, i32
  }
  func.func @transform_1(%arg0: i32) -> (i32, i32) {
    %c0_i32 = arith.constant 0 : i32
    %c0_i32_0 = arith.constant 0 : i32
    %c0_i32_1 = arith.constant 0 : i32
    return %c0_i32, %c0_i32_0 : i32, i32
  }
  func.func @transform_2(%arg0: i32) -> (i32, i32) {
    %c0_i32 = arith.constant 0 : i32
    %c0_i32_0 = arith.constant 0 : i32
    %c0_i32_1 = arith.constant 0 : i32
    return %c0_i32, %c0_i32_0 : i32, i32
  }
  func.func @transform_3(%arg0: i32) -> (i32, i32) {
    %c0_i32 = arith.constant 0 : i32
    %c0_i32_0 = arith.constant 0 : i32
    %c0_i32_1 = arith.constant 0 : i32
    return %c0_i32, %c0_i32_0 : i32, i32
  }
  func.func @transform_4(%arg0: i32) -> (i32, i32) {
    %c0_i32 = arith.constant 0 : i32
    %c0_i32_0 = arith.constant 0 : i32
    %c0_i32_1 = arith.constant 0 : i32
    return %c0_i32, %c0_i32_0 : i32, i32
  }
  func.func @transform_5(%arg0: i32) -> (i32, i32) {
    %c0_i32 = arith.constant 0 : i32
    %c0_i32_0 = arith.constant 0 : i32
    %c0_i32_1 = arith.constant 0 : i32
    return %c0_i32, %c0_i32_0 : i32, i32
  }
  func.func @transform_6(%arg0: i32) -> (i32, i32) {
    %c0_i32 = arith.constant 0 : i32
    %c0_i32_0 = arith.constant 0 : i32
    %c0_i32_1 = arith.constant 0 : i32
    return %c0_i32, %c0_i32_0 : i32, i32
  }
  func.func @transform_7(%arg0: i32) -> (i32, i32, i32, i32) {
    %c0_i32 = arith.constant 0 : i32
    %c0_i32_0 = arith.constant 0 : i32
    %c0_i32_1 = arith.constant 0 : i32
    %c0_i32_2 = arith.constant 0 : i32
    return %arg0, %c0_i32, %c0_i32_0, %c0_i32_1 : i32, i32, i32, i32
  }
}

</mosaic_0001>

<llo_original>
// kernel: tpu_custom_call.1
$region0: #{tpu_custom_call.1}
  #allocation0 [shape = 'u32[]', space=smem, size = 0x4, offset = 0x4, fixed_abs, tag = 'smem constant byte address 0x4 - core index']
  #allocation1 [shape = 'u32[144,128]{1,0:T(1,128)}', space=vmem, size = 0x12000, scoped, tag = 'internal scratch']
  #allocation2 [shape = 'f32[18,32,128]{2,1,0:T(8,128)}', space=vmem, size = 0x48000, scoped, tag = 'scratch operand']
  #allocation3 [shape = 'f32[18,32,32]{2,1,0:T(8,128)}', space=vmem, size = 0x48000, scoped, tag = 'scratch operand']
  #allocation4 [shape = 'f32[16,32,128]{2,1,0:T(8,128)}', space=vmem, size = 0x40000, scoped, tag = 'scratch operand']
  %s0 = inlined_call_operand.vmem [shape: f32[2,18,18,32], index: 0, kind: input, shape index: {}]
  %s1 = inlined_call_operand.vmem [shape: f32[288,256], index: 1, kind: input, shape index: {}]
  %s2 = inlined_call_operand.vmem [shape: f32[1,256], index: 2, kind: input, shape index: {}]
  %s3 = inlined_call_operand.vmem [shape: f32[1184,32], index: 3, kind: input, shape index: {}]
  %s4 = inlined_call_operand.vmem [shape: f32[1,32], index: 4, kind: input, shape index: {}]
  %s5 = inlined_call_operand.vmem [shape: f32[288,32], index: 5, kind: input, shape index: {}]
  %s6 = inlined_call_operand.vmem [shape: f32[1,32], index: 6, kind: input, shape index: {}]
  %s7 = inlined_call_operand.hbm [shape: f32[2,16,16,32], index: 7, kind: output, shape index: {}]
  %s8 = sld [smem:[#allocation0]]
  $region61: #{tpu_custom_call.1} parent=0
    _
  %s10 = ssub.s32 1, %s8
  %s11 = scalar_select 0, %s10, %s8
  $region1: #{tpu_custom_call.1} parent=0
    #allocation5 [shape = 'u8[262144]{0}', space=vmem, size = 0x40000, scoped, tag = 'output window, operand 0']
    #allocation6 [shape = 's32[2]{0}', space=sflag, size = 0x8, scoped, tag = 'scoped memory for tpu_custom_call.1']
    %12 = vsyncpa [#allocation6], 0
    %s13 = scalar_lea.sflag [#allocation6], 1
    %14 = vsyncpa %s13, 0
    loop: start=0, step=1, limit=4
    $region2: #{tpu_custom_call.1} parent=1 // loop_pre_header
      _
    $region3: #{tpu_custom_call.1} parent=1 // loop_header
      %s16 = sphi 0, %s20
      %p17 = scmp.ge.s32.totalorder %s16, 4
      %s26 = sphi 0, %s28
      %s29 = sphi 0, %s26
      %s30 = sphi 0, %s29
      %s46 = sphi 0, %s30
      %s50 = sphi 0, %s50
      %s52 = sphi 0, %s50
      %s53 = sphi 0, %s52
      %s67 = sphi 0, %s53
      %s71 = sphi 0, %s71
      %s73 = sphi 0, %s71
      %s74 = sphi 0, %s73
      %s88 = sphi 0, %s74
      %s92 = sphi 0, %s92
      %s94 = sphi 0, %s92
      %s95 = sphi 0, %s94
      %s109 = sphi 0, %s95
      %s113 = sphi 0, %s113
      %s115 = sphi 0, %s113
      %s116 = sphi 0, %s115
      %s130 = sphi 0, %s116
      %s134 = sphi 0, %s134
      %s136 = sphi 0, %s134
      %s137 = sphi 0, %s136
      %s151 = sphi 0, %s137
      %s155 = sphi 0, %s155
      %s157 = sphi 0, %s155
      %s158 = sphi 0, %s157
      %s172 = sphi 0, %s158
      %s178 = sphi 0, %s180
      %s181 = sphi 0, %s178
      %s182 = sphi 0, %s181
      %s198 = sphi 0, %s182
    $region4: #{tpu_custom_call.1} parent=1 // loop_header_branch
      %19 = sbr.rel (%p17) target = $region8
    $region5: #{tpu_custom_call.1} parent=1 // loop_body
      %s21 = ssub.s32 %s16, 1
      %s22 = ssub.s32 %s16, 2
      %s23 = sadd.s32 %s16, 1
      %s24 = ssub.s32 %s16, %s23
      %p25 = scmp.eq.s32.totalorder %s24, 0
      %s27 = sadd.s32 %s26, 1
      %s28 = scalar_select %p25, %s26, %s27
      %p31 = pneg %p25
      %p32 = scmp.eq.s32.totalorder %s16, 1
      %p33 = por %p31, %p32
      %p34 = scmp.ne.s32.totalorder %s26, %s29
      %p35 = scmp.eq.s32.totalorder %s16, 0
      %p36 = por %p34, %p35
      %p37 = scmp.ne.s32.totalorder %s26, %s29
      %p38 = scmp.eq.s32.totalorder %s21, 1
      %p39 = por %p37, %p38
      %p40 = scmp.ne.s32.totalorder %s29, %s30
      %p41 = scmp.eq.s32.totalorder %s21, 0
      %p42 = por %p40, %p41
      %p43 = scmp.ne.s32.totalorder %s29, %s30
      %p44 = scmp.eq.s32.totalorder %s22, 1
      %p45 = por %p43, %p44
      %p47 = scmp.ne.s32.totalorder %s30, %s46
      %p48 = scmp.eq.s32.totalorder %s22, 0
      %p49 = por %p47, %p48
      %s51 = sadd.s32 %s50, 1
      %p54 = scmp.eq.s32.totalorder %s16, 1
      %p55 = scmp.ne.s32.totalorder %s50, %s52
      %p56 = scmp.eq.s32.totalorder %s16, 0
      %p57 = por %p55, %p56
      %p58 = scmp.ne.s32.totalorder %s50, %s52
      %p59 = scmp.eq.s32.totalorder %s21, 1
      %p60 = por %p58, %p59
      %p61 = scmp.ne.s32.totalorder %s52, %s53
      %p62 = scmp.eq.s32.totalorder %s21, 0
      %p63 = por %p61, %p62
      %p64 = scmp.ne.s32.totalorder %s52, %s53
      %p65 = scmp.eq.s32.totalorder %s22, 1
      %p66 = por %p64, %p65
      %p68 = scmp.ne.s32.totalorder %s53, %s67
      %p69 = scmp.eq.s32.totalorder %s22, 0
      %p70 = por %p68, %p69
      %s72 = sadd.s32 %s71, 1
      %p75 = scmp.eq.s32.totalorder %s16, 1
      %p76 = scmp.ne.s32.totalorder %s71, %s73
      %p77 = scmp.eq.s32.totalorder %s16, 0
      %p78 = por %p76, %p77
      %p79 = scmp.ne.s32.totalorder %s71, %s73
      %p80 = scmp.eq.s32.totalorder %s21, 1
      %p81 = por %p79, %p80
      %p82 = scmp.ne.s32.totalorder %s73, %s74
      %p83 = scmp.eq.s32.totalorder %s21, 0
      %p84 = por %p82, %p83
      %p85 = scmp.ne.s32.totalorder %s73, %s74
      %p86 = scmp.eq.s32.totalorder %s22, 1
      %p87 = por %p85, %p86
      %p89 = scmp.ne.s32.totalorder %s74, %s88
      %p90 = scmp.eq.s32.totalorder %s22, 0
      %p91 = por %p89, %p90
      %s93 = sadd.s32 %s92, 1
      %p96 = scmp.eq.s32.totalorder %s16, 1
      %p97 = scmp.ne.s32.totalorder %s92, %s94
      %p98 = scmp.eq.s32.totalorder %s16, 0
      %p99 = por %p97, %p98
      %p100 = scmp.ne.s32.totalorder %s92, %s94
      %p101 = scmp.eq.s32.totalorder %s21, 1
      %p102 = por %p100, %p101
      %p103 = scmp.ne.s32.totalorder %s94, %s95
      %p104 = scmp.eq.s32.totalorder %s21, 0
      %p105 = por %p103, %p104
      %p106 = scmp.ne.s32.totalorder %s94, %s95
      %p107 = scmp.eq.s32.totalorder %s22, 1
      %p108 = por %p106, %p107
      %p110 = scmp.ne.s32.totalorder %s95, %s109
      %p111 = scmp.eq.s32.totalorder %s22, 0
      %p112 = por %p110, %p111
      %s114 = sadd.s32 %s113, 1
      %p117 = scmp.eq.s32.totalorder %s16, 1
      %p118 = scmp.ne.s32.totalorder %s113, %s115
      %p119 = scmp.eq.s32.totalorder %s16, 0
      %p120 = por %p118, %p119
      %p121 = scmp.ne.s32.totalorder %s113, %s115
      %p122 = scmp.eq.s32.totalorder %s21, 1
      %p123 = por %p121, %p122
      %p124 = scmp.ne.s32.totalorder %s115, %s116
      %p125 = scmp.eq.s32.totalorder %s21, 0
      %p126 = por %p124, %p125
      %p127 = scmp.ne.s32.totalorder %s115, %s116
      %p128 = scmp.eq.s32.totalorder %s22, 1
      %p129 = por %p127, %p128
      %p131 = scmp.ne.s32.totalorder %s116, %s130
      %p132 = scmp.eq.s32.totalorder %s22, 0
      %p133 = por %p131, %p132
      %s135 = sadd.s32 %s134, 1
      %p138 = scmp.eq.s32.totalorder %s16, 1
      %p139 = scmp.ne.s32.totalorder %s134, %s136
      %p140 = scmp.eq.s32.totalorder %s16, 0
      %p141 = por %p139, %p140
      %p142 = scmp.ne.s32.totalorder %s134, %s136
      %p143 = scmp.eq.s32.totalorder %s21, 1
      %p144 = por %p142, %p143
      %p145 = scmp.ne.s32.totalorder %s136, %s137
      %p146 = scmp.eq.s32.totalorder %s21, 0
      %p147 = por %p145, %p146
      %p148 = scmp.ne.s32.totalorder %s136, %s137
      %p149 = scmp.eq.s32.totalorder %s22, 1
      %p150 = por %p148, %p149
      %p152 = scmp.ne.s32.totalorder %s137, %s151
      %p153 = scmp.eq.s32.totalorder %s22, 0
      %p154 = por %p152, %p153
      %s156 = sadd.s32 %s155, 1
      %p159 = scmp.eq.s32.totalorder %s16, 1
      %p160 = scmp.ne.s32.totalorder %s155, %s157
      %p161 = scmp.eq.s32.totalorder %s16, 0
      %p162 = por %p160, %p161
      %p163 = scmp.ne.s32.totalorder %s155, %s157
      %p164 = scmp.eq.s32.totalorder %s21, 1
      %p165 = por %p163, %p164
      %p166 = scmp.ne.s32.totalorder %s157, %s158
      %p167 = scmp.eq.s32.totalorder %s21, 0
      %p168 = por %p166, %p167
      %p169 = scmp.ne.s32.totalorder %s157, %s158
      %p170 = scmp.eq.s32.totalorder %s22, 1
      %p171 = por %p169, %p170
      %p173 = scmp.ne.s32.totalorder %s158, %s172
      %p174 = scmp.eq.s32.totalorder %s22, 0
      %p175 = por %p173, %p174
      %s176 = ssub.s32 %s16, %s23
      %p177 = scmp.eq.s32.totalorder %s176, 0
      %s179 = sadd.s32 %s178, 1
      %s180 = scalar_select %p177, %s178, %s179
      %p183 = pneg %p177
      %p184 = scmp.eq.s32.totalorder %s16, 1
      %p185 = por %p183, %p184
      %p186 = scmp.ne.s32.totalorder %s178, %s181
      %p187 = scmp.eq.s32.totalorder %s16, 0
      %p188 = por %p186, %p187
      %p189 = scmp.ne.s32.totalorder %s178, %s181
      %p190 = scmp.eq.s32.totalorder %s21, 1
      %p191 = por %p189, %p190
      %p192 = scmp.ne.s32.totalorder %s181, %s182
      %p193 = scmp.eq.s32.totalorder %s21, 0
      %p194 = por %p192, %p193
      %p195 = scmp.ne.s32.totalorder %s181, %s182
      %p196 = scmp.eq.s32.totalorder %s22, 1
      %p197 = por %p195, %p196
      %p199 = scmp.ne.s32.totalorder %s182, %s198
      %p200 = scmp.eq.s32.totalorder %s22, 0
      %p201 = por %p199, %p200
      %p202 = scmp.le.s32.totalorder 1, %s16
      %p203 = scmp.lt.s32.totalorder %s16, 3
      %p204 = pnand %p202, %p203
      %p205 = pneg %p204
      // Predicated region
      $region9: #{tpu_custom_call.1} parent=5 // pred_check
        _
      $region10: #{tpu_custom_call.1} parent=5 // pred_check_branch
        %207 = sbr.rel (%p204) target = $region12
      $region11: #{tpu_custom_call.1} parent=5 // pred_region
        %s208 = ssub.s32 %s16, 1
        // Predicated region
        $region13: #{tpu_custom_call.1} parent=11 // pred_check
          %p209 = pneg %p63
        $region14: #{tpu_custom_call.1} parent=11 // pred_check_branch
          %211 = sbr.rel (%p209) target = $region16
        $region15: #{tpu_custom_call.1} parent=11 // pred_region
          _
        $region16: #{tpu_custom_call.1} parent=11 // pred_fallthru
          _
        // Predicated region
        $region17: #{tpu_custom_call.1} parent=11 // pred_check
          %p212 = pneg %p84
        $region18: #{tpu_custom_call.1} parent=11 // pred_check_branch
          %214 = sbr.rel (%p212) target = $region20
        $region19: #{tpu_custom_call.1} parent=11 // pred_region
          _
        $region20: #{tpu_custom_call.1} parent=11 // pred_fallthru
          _
        // Predicated region
        $region21: #{tpu_custom_call.1} parent=11 // pred_check
          %p215 = pneg %p105
        $region22: #{tpu_custom_call.1} parent=11 // pred_check_branch
          %217 = sbr.rel (%p215) target = $region24
        $region23: #{tpu_custom_call.1} parent=11 // pred_region
          _
        $region24: #{tpu_custom_call.1} parent=11 // pred_fallthru
          _
        // Predicated region
        $region25: #{tpu_custom_call.1} parent=11 // pred_check
          %p218 = pneg %p126
        $region26: #{tpu_custom_call.1} parent=11 // pred_check_branch
          %220 = sbr.rel (%p218) target = $region28
        $region27: #{tpu_custom_call.1} parent=11 // pred_region
          _
        $region28: #{tpu_custom_call.1} parent=11 // pred_fallthru
          _
        // Predicated region
        $region29: #{tpu_custom_call.1} parent=11 // pred_check
          %p221 = pneg %p147
        $region30: #{tpu_custom_call.1} parent=11 // pred_check_branch
          %223 = sbr.rel (%p221) target = $region32
        $region31: #{tpu_custom_call.1} parent=11 // pred_region
          _
        $region32: #{tpu_custom_call.1} parent=11 // pred_fallthru
          _
        // Predicated region
        $region33: #{tpu_custom_call.1} parent=11 // pred_check
          %p224 = pneg %p168
        $region34: #{tpu_custom_call.1} parent=11 // pred_check_branch
          %226 = sbr.rel (%p224) target = $region36
        $region35: #{tpu_custom_call.1} parent=11 // pred_region
          _
        $region36: #{tpu_custom_call.1} parent=11 // pred_fallthru
          _
      $region12: #{tpu_custom_call.1} parent=5 // pred_fallthru
        _
      %p227 = scmp.lt.s32.totalorder %s16, 2
      // Predicated region
      $region37: #{tpu_custom_call.1} parent=5 // pred_check
        %p228 = pneg %p227
      $region38: #{tpu_custom_call.1} parent=5 // pred_check_branch
        %230 = sbr.rel (%p228) target = $region40
      $region39: #{tpu_custom_call.1} parent=5 // pred_region
        // Predicated region
        $region41: #{tpu_custom_call.1} parent=39 // pred_check
          %p231 = pneg %p36
        $region42: #{tpu_custom_call.1} parent=39 // pred_check_branch
          %233 = sbr.rel (%p231) target = $region44
        $region43: #{tpu_custom_call.1} parent=39 // pred_region
          %p234 = scmp.lt.s32.totalorder %s16, 1
          %s235 = scalar_select %p234, %s16, 1
          %s236 = smul.addr %s235, 54
          %s237 = smul.addr %s236, 8
          %s238 = scalar_lea.vmem %s0, %s237
        $region44: #{tpu_custom_call.1} parent=39 // pred_fallthru
          _
      $region40: #{tpu_custom_call.1} parent=5 // pred_fallthru
        _
      %p239 = scmp.le.s32.totalorder 1, %s16
      %p240 = scmp.lt.s32.totalorder %s16, 3
      %p241 = pnand %p239, %p240
      %p242 = pneg %p241
      // Predicated region
      $region45: #{tpu_custom_call.1} parent=5 // pred_check
        _
      $region46: #{tpu_custom_call.1} parent=5 // pred_check_branch
        %244 = sbr.rel (%p241) target = $region48
      $region47: #{tpu_custom_call.1} parent=5 // pred_region
        %s245 = ssub.s32 %s16, 1
        %p246 = scmp.lt.s32.totalorder %s21, 1
        %s247 = scalar_select %p246, %s21, 1
        %s248 = smul.addr %s247, 54
        %s249 = smul.addr %s248, 8
        %s250 = scalar_lea.vmem %s0, %s249
        %p251 = pneg %p42
        %p252 = pneg %p39
        %p253 = pneg %p63
        %p254 = pneg %p60
        %p255 = pneg %p84
        %p256 = pneg %p81
        %p257 = pneg %p105
        %p258 = pneg %p102
        %p259 = pneg %p126
        %p260 = pneg %p123
        %p261 = pneg %p147
        %p262 = pneg %p144
        %p263 = pneg %p168
        %p264 = pneg %p165
        %p265 = pneg %p194
        %p266 = pneg %p191
        %s267 = sand.u32 %s181, 1
        %s268 = scalar_lea.sflag [#allocation6], %s267
        %s269 = sand.u32 %s181, 1
        %s270 = smul.addr %s269, 256
        %s271 = scalar_lea.vmem [#allocation5], %s270
        %p272 = scmp.lt.s32.totalorder %s21, 1
        %s273 = scalar_select %p272, %s21, 1
        %s274 = smul.addr %s273, 54
        %s275 = smul.addr %s274, 8
        %s276 = scalar_lea.vmem %s0, %s275
        %v277 = vld [vmem:[%s276] sm:$0xff]
        %v278 = vld [vmem:[%s276 + $0x8] sm:$0xff]
        %v279 = vld [vmem:[%s276 + $0x10] sm:$0x3]
        %v280 = vld [vmem:[%s276 + $0x18] sm:$0xff]
        %v281 = vld [vmem:[%s276 + $0x20] sm:$0xff]
        %v282 = vld [vmem:[%s276 + $0x28] sm:$0x3]
        %v283 = vld [vmem:[%s276 + $0x30] sm:$0xff]
        %v284 = vld [vmem:[%s276 + $0x38] sm:$0xff]
        %v285 = vld [vmem:[%s276 + $0x40] sm:$0x3]
        %v286 = vld [vmem:[%s276 + $0x48] sm:$0xff]
        %v287 = vld [vmem:[%s276 + $0x50] sm:$0xff]
        %v288 = vld [vmem:[%s276 + $0x58] sm:$0x3]
        %v289 = vld [vmem:[%s276 + $0x60] sm:$0xff]
        %v290 = vld [vmem:[%s276 + $0x68] sm:$0xff]
        %v291 = vld [vmem:[%s276 + $0x70] sm:$0x3]
        %v292 = vld [vmem:[%s276 + $0x78] sm:$0xff]
        %v293 = vld [vmem:[%s276 + $0x80] sm:$0xff]
        %v294 = vld [vmem:[%s276 + $0x88] sm:$0x3]
        %v295 = vld [vmem:[%s276 + $0x90] sm:$0xff]
        %v296 = vld [vmem:[%s276 + $0x98] sm:$0xff]
        %v297 = vld [vmem:[%s276 + $0xa0] sm:$0x3]
        %v298 = vld [vmem:[%s276 + $0xa8] sm:$0xff]
        %v299 = vld [vmem:[%s276 + $0xb0] sm:$0xff]
        %v300 = vld [vmem:[%s276 + $0xb8] sm:$0x3]
        %v301 = vld [vmem:[%s276 + $0xc0] sm:$0xff]
        %v302 = vld [vmem:[%s276 + $0xc8] sm:$0xff]
        %v303 = vld [vmem:[%s276 + $0xd0] sm:$0x3]
        %v304 = vld [vmem:[%s276 + $0xd8] sm:$0xff]
        %v305 = vld [vmem:[%s276 + $0xe0] sm:$0xff]
        %v306 = vld [vmem:[%s276 + $0xe8] sm:$0x3]
        %v307 = vld [vmem:[%s276 + $0xf0] sm:$0xff]
        %v308 = vld [vmem:[%s276 + $0xf8] sm:$0xff]
        %v309 = vld [vmem:[%s276 + $0x100] sm:$0x3]
        %v310 = vld [vmem:[%s276 + $0x108] sm:$0xff]
        %v311 = vld [vmem:[%s276 + $0x110] sm:$0xff]
        %v312 = vld [vmem:[%s276 + $0x118] sm:$0x3]
        %v313 = vld [vmem:[%s276 + $0x120] sm:$0xff]
        %v314 = vld [vmem:[%s276 + $0x128] sm:$0xff]
        %v315 = vld [vmem:[%s276 + $0x130] sm:$0x3]
        %v316 = vld [vmem:[%s276 + $0x138] sm:$0xff]
        %v317 = vld [vmem:[%s276 + $0x140] sm:$0xff]
        %v318 = vld [vmem:[%s276 + $0x148] sm:$0x3]
        %v319 = vld [vmem:[%s276 + $0x150] sm:$0xff]
        %v320 = vld [vmem:[%s276 + $0x158] sm:$0xff]
        %v321 = vld [vmem:[%s276 + $0x160] sm:$0x3]
        %v322 = vld [vmem:[%s276 + $0x168] sm:$0xff]
        %v323 = vld [vmem:[%s276 + $0x170] sm:$0xff]
        %v324 = vld [vmem:[%s276 + $0x178] sm:$0x3]
        %v325 = vld [vmem:[%s276 + $0x180] sm:$0xff]
        %v326 = vld [vmem:[%s276 + $0x188] sm:$0xff]
        %v327 = vld [vmem:[%s276 + $0x190] sm:$0x3]
        %v328 = vld [vmem:[%s276 + $0x198] sm:$0xff]
        %v329 = vld [vmem:[%s276 + $0x1a0] sm:$0xff]
        %v330 = vld [vmem:[%s276 + $0x1a8] sm:$0x3]
        %vm379 = vcmask 1046528
        %v380 = vrot.slane %v277, 1
        %v381 = vrot.slane %v278, 1
        %v382 = vsel %vm379, %v380, %v381
        %v383 = vrot.slane %v279, 1
        %v384 = vsel %vm379, %v381, %v383
        %v385 = vrot.slane %v280, 1
        %v386 = vrot.slane %v281, 1
        %v387 = vsel %vm379, %v385, %v386
        %v388 = vrot.slane %v282, 1
        %v389 = vsel %vm379, %v386, %v388
        %v390 = vrot.slane %v283, 1
        %v391 = vrot.slane %v284, 1
        %v392 = vsel %vm379, %v390, %v391
        %v393 = vrot.slane %v285, 1
        %v394 = vsel %vm379, %v391, %v393
        %v395 = vrot.slane %v286, 1
        %v396 = vrot.slane %v287, 1
        %v397 = vsel %vm379, %v395, %v396
        %v398 = vrot.slane %v288, 1
        %v399 = vsel %vm379, %v396, %v398
        %v400 = vrot.slane %v289, 1
        %v401 = vrot.slane %v290, 1
        %v402 = vsel %vm379, %v400, %v401
        %v403 = vrot.slane %v291, 1
        %v404 = vsel %vm379, %v401, %v403
        %v405 = vrot.slane %v292, 1
        %v406 = vrot.slane %v293, 1
        %v407 = vsel %vm379, %v405, %v406
        %v408 = vrot.slane %v294, 1
        %v409 = vsel %vm379, %v406, %v408
        %v410 = vrot.slane %v295, 1
        %v411 = vrot.slane %v296, 1
        %v412 = vsel %vm379, %v410, %v411
        %v413 = vrot.slane %v297, 1
        %v414 = vsel %vm379, %v411, %v413
        %v415 = vrot.slane %v298, 1
        %v416 = vrot.slane %v299, 1
        %v417 = vsel %vm379, %v415, %v416
        %v418 = vrot.slane %v300, 1
        %v419 = vsel %vm379, %v416, %v418
        %v420 = vrot.slane %v301, 1
        %v421 = vrot.slane %v302, 1
        %v422 = vsel %vm379, %v420, %v421
        %v423 = vrot.slane %v303, 1
        %v424 = vsel %vm379, %v421, %v423
        %v425 = vrot.slane %v304, 1
        %v426 = vrot.slane %v305, 1
        %v427 = vsel %vm379, %v425, %v426
        %v428 = vrot.slane %v306, 1
        %v429 = vsel %vm379, %v426, %v428
        %v430 = vrot.slane %v307, 1
        %v431 = vrot.slane %v308, 1
        %v432 = vsel %vm379, %v430, %v431
        %v433 = vrot.slane %v309, 1
        %v434 = vsel %vm379, %v431, %v433
        %v435 = vrot.slane %v310, 1
        %v436 = vrot.slane %v311, 1
        %v437 = vsel %vm379, %v435, %v436
        %v438 = vrot.slane %v312, 1
        %v439 = vsel %vm379, %v436, %v438
        %v440 = vrot.slane %v313, 1
        %v441 = vrot.slane %v314, 1
        %v442 = vsel %vm379, %v440, %v441
        %v443 = vrot.slane %v315, 1
        %v444 = vsel %vm379, %v441, %v443
        %v445 = vrot.slane %v316, 1
        %v446 = vrot.slane %v317, 1
        %v447 = vsel %vm379, %v445, %v446
        %v448 = vrot.slane %v318, 1
        %v449 = vsel %vm379, %v446, %v448
        %v450 = vrot.slane %v319, 1
        %v451 = vrot.slane %v320, 1
        %v452 = vsel %vm379, %v450, %v451
        %v453 = vrot.slane %v321, 1
        %v454 = vsel %vm379, %v451, %v453
        %v455 = vrot.slane %v322, 1
        %v456 = vrot.slane %v323, 1
        %v457 = vsel %vm379, %v455, %v456
        %v458 = vrot.slane %v324, 1
        %v459 = vsel %vm379, %v456, %v458
        %vm460 = vcmask 1045504
        %v461 = vrot.slane %v277, 2
        %v462 = vrot.slane %v278, 2
        %v463 = vsel %vm460, %v461, %v462
        %v464 = vrot.slane %v279, 2
        %v465 = vsel %vm460, %v462, %v464
        %v466 = vrot.slane %v280, 2
        %v467 = vrot.slane %v281, 2
        %v468 = vsel %vm460, %v466, %v467
        %v469 = vrot.slane %v282, 2
        %v470 = vsel %vm460, %v467, %v469
        %v471 = vrot.slane %v283, 2
        %v472 = vrot.slane %v284, 2
        %v473 = vsel %vm460, %v471, %v472
        %v474 = vrot.slane %v285, 2
        %v475 = vsel %vm460, %v472, %v474
        %v476 = vrot.slane %v286, 2
        %v477 = vrot.slane %v287, 2
        %v478 = vsel %vm460, %v476, %v477
        %v479 = vrot.slane %v288, 2
        %v480 = vsel %vm460, %v477, %v479
        %v481 = vrot.slane %v289, 2
        %v482 = vrot.slane %v290, 2
        %v483 = vsel %vm460, %v481, %v482
        %v484 = vrot.slane %v291, 2
        %v485 = vsel %vm460, %v482, %v484
        %v486 = vrot.slane %v292, 2
        %v487 = vrot.slane %v293, 2
        %v488 = vsel %vm460, %v486, %v487
        %v489 = vrot.slane %v294, 2
        %v490 = vsel %vm460, %v487, %v489
        %v491 = vrot.slane %v295, 2
        %v492 = vrot.slane %v296, 2
        %v493 = vsel %vm460, %v491, %v492
        %v494 = vrot.slane %v297, 2
        %v495 = vsel %vm460, %v492, %v494
        %v496 = vrot.slane %v298, 2
        %v497 = vrot.slane %v299, 2
        %v498 = vsel %vm460, %v496, %v497
        %v499 = vrot.slane %v300, 2
        %v500 = vsel %vm460, %v497, %v499
        %v501 = vrot.slane %v301, 2
        %v502 = vrot.slane %v302, 2
        %v503 = vsel %vm460, %v501, %v502
        %v504 = vrot.slane %v303, 2
        %v505 = vsel %vm460, %v502, %v504
        %v506 = vrot.slane %v304, 2
        %v507 = vrot.slane %v305, 2
        %v508 = vsel %vm460, %v506, %v507
        %v509 = vrot.slane %v306, 2
        %v510 = vsel %vm460, %v507, %v509
        %v511 = vrot.slane %v307, 2
        %v512 = vrot.slane %v308, 2
        %v513 = vsel %vm460, %v511, %v512
        %v514 = vrot.slane %v309, 2
        %v515 = vsel %vm460, %v512, %v514
        %v516 = vrot.slane %v310, 2
        %v517 = vrot.slane %v311, 2
        %v518 = vsel %vm460, %v516, %v517
        %v519 = vrot.slane %v312, 2
        %v520 = vsel %vm460, %v517, %v519
        %v521 = vrot.slane %v313, 2
        %v522 = vrot.slane %v314, 2
        %v523 = vsel %vm460, %v521, %v522
        %v524 = vrot.slane %v315, 2
        %v525 = vsel %vm460, %v522, %v524
        %v526 = vrot.slane %v316, 2
        %v527 = vrot.slane %v317, 2
        %v528 = vsel %vm460, %v526, %v527
        %v529 = vrot.slane %v318, 2
        %v530 = vsel %vm460, %v527, %v529
        %v531 = vrot.slane %v319, 2
        %v532 = vrot.slane %v320, 2
        %v533 = vsel %vm460, %v531, %v532
        %v534 = vrot.slane %v321, 2
        %v535 = vsel %vm460, %v532, %v534
        %v536 = vrot.slane %v322, 2
        %v537 = vrot.slane %v323, 2
        %v538 = vsel %vm460, %v536, %v537
        %v539 = vrot.slane %v324, 2
        %v540 = vsel %vm460, %v537, %v539
        %v544 = vrot.slane %v325, 1
        %v545 = vrot.slane %v326, 1
        %v546 = vsel %vm379, %v544, %v545
        %v547 = vrot.slane %v327, 1
        %v548 = vsel %vm379, %v545, %v547
        %v581 = vrot.slane %v325, 2
        %v582 = vrot.slane %v326, 2
        %v583 = vsel %vm460, %v581, %v582
        %v584 = vrot.slane %v327, 2
        %v585 = vsel %vm460, %v582, %v584
        %v589 = vrot.slane %v328, 1
        %v590 = vrot.slane %v329, 1
        %v591 = vsel %vm379, %v589, %v590
        %v592 = vrot.slane %v330, 1
        %v593 = vsel %vm379, %v590, %v592
        %v594 = vrot.slane %v328, 2
        %v595 = vrot.slane %v329, 2
        %v596 = vsel %vm460, %v594, %v595
        %v597 = vrot.slane %v330, 2
        %v598 = vsel %vm460, %v595, %v597
        %599 = vrot.lane.b32.xlu0 %v382, 32
        %v600 = vpop.permute.xlu0 %599
        %601 = vrot.lane.b32.xlu0 %v384, 32
        %v602 = vpop.permute.xlu0 %601
        %603 = vrot.lane.b32.xlu0 %v387, 32
        %v604 = vpop.permute.xlu0 %603
        %605 = vrot.lane.b32.xlu0 %v389, 32
        %v606 = vpop.permute.xlu0 %605
        %607 = vrot.lane.b32.xlu0 %v392, 32
        %v608 = vpop.permute.xlu0 %607
        %609 = vrot.lane.b32.xlu0 %v394, 32
        %v610 = vpop.permute.xlu0 %609
        %611 = vrot.lane.b32.xlu0 %v397, 32
        %v612 = vpop.permute.xlu0 %611
        %613 = vrot.lane.b32.xlu0 %v399, 32
        %v614 = vpop.permute.xlu0 %613
        %615 = vrot.lane.b32.xlu0 %v402, 32
        %v616 = vpop.permute.xlu0 %615
        %617 = vrot.lane.b32.xlu0 %v404, 32
        %v618 = vpop.permute.xlu0 %617
        %619 = vrot.lane.b32.xlu0 %v407, 32
        %v620 = vpop.permute.xlu0 %619
        %621 = vrot.lane.b32.xlu0 %v409, 32
        %v622 = vpop.permute.xlu0 %621
        %623 = vrot.lane.b32.xlu0 %v412, 32
        %v624 = vpop.permute.xlu0 %623
        %625 = vrot.lane.b32.xlu0 %v414, 32
        %v626 = vpop.permute.xlu0 %625
        %627 = vrot.lane.b32.xlu0 %v417, 32
        %v628 = vpop.permute.xlu0 %627
        %629 = vrot.lane.b32.xlu0 %v419, 32
        %v630 = vpop.permute.xlu0 %629
        %631 = vrot.lane.b32.xlu0 %v422, 32
        %v632 = vpop.permute.xlu0 %631
        %633 = vrot.lane.b32.xlu0 %v424, 32
        %v634 = vpop.permute.xlu0 %633
        %635 = vrot.lane.b32.xlu0 %v427, 32
        %v636 = vpop.permute.xlu0 %635
        %637 = vrot.lane.b32.xlu0 %v429, 32
        %v638 = vpop.permute.xlu0 %637
        %639 = vrot.lane.b32.xlu0 %v432, 32
        %v640 = vpop.permute.xlu0 %639
        %641 = vrot.lane.b32.xlu0 %v434, 32
        %v642 = vpop.permute.xlu0 %641
        %643 = vrot.lane.b32.xlu0 %v437, 32
        %v644 = vpop.permute.xlu0 %643
        %645 = vrot.lane.b32.xlu0 %v439, 32
        %v646 = vpop.permute.xlu0 %645
        %647 = vrot.lane.b32.xlu0 %v442, 32
        %v648 = vpop.permute.xlu0 %647
        %649 = vrot.lane.b32.xlu0 %v444, 32
        %v650 = vpop.permute.xlu0 %649
        %651 = vrot.lane.b32.xlu0 %v447, 32
        %v652 = vpop.permute.xlu0 %651
        %653 = vrot.lane.b32.xlu0 %v449, 32
        %v654 = vpop.permute.xlu0 %653
        %655 = vrot.lane.b32.xlu0 %v452, 32
        %v656 = vpop.permute.xlu0 %655
        %657 = vrot.lane.b32.xlu0 %v454, 32
        %v658 = vpop.permute.xlu0 %657
        %659 = vrot.lane.b32.xlu0 %v457, 32
        %v660 = vpop.permute.xlu0 %659
        %661 = vrot.lane.b32.xlu0 %v459, 32
        %v662 = vpop.permute.xlu0 %661
        %695 = vrot.lane.b32.xlu0 %v463, 64
        %v696 = vpop.permute.xlu0 %695
        %697 = vrot.lane.b32.xlu0 %v465, 64
        %v698 = vpop.permute.xlu0 %697
        %699 = vrot.lane.b32.xlu0 %v468, 64
        %v700 = vpop.permute.xlu0 %699
        %701 = vrot.lane.b32.xlu0 %v470, 64
        %v702 = vpop.permute.xlu0 %701
        %703 = vrot.lane.b32.xlu0 %v473, 64
        %v704 = vpop.permute.xlu0 %703
        %705 = vrot.lane.b32.xlu0 %v475, 64
        %v706 = vpop.permute.xlu0 %705
        %707 = vrot.lane.b32.xlu0 %v478, 64
        %v708 = vpop.permute.xlu0 %707
        %709 = vrot.lane.b32.xlu0 %v480, 64
        %v710 = vpop.permute.xlu0 %709
        %711 = vrot.lane.b32.xlu0 %v483, 64
        %v712 = vpop.permute.xlu0 %711
        %713 = vrot.lane.b32.xlu0 %v485, 64
        %v714 = vpop.permute.xlu0 %713
        %715 = vrot.lane.b32.xlu0 %v488, 64
        %v716 = vpop.permute.xlu0 %715
        %717 = vrot.lane.b32.xlu0 %v490, 64
        %v718 = vpop.permute.xlu0 %717
        %719 = vrot.lane.b32.xlu0 %v493, 64
        %v720 = vpop.permute.xlu0 %719
        %721 = vrot.lane.b32.xlu0 %v495, 64
        %v722 = vpop.permute.xlu0 %721
        %723 = vrot.lane.b32.xlu0 %v498, 64
        %v724 = vpop.permute.xlu0 %723
        %725 = vrot.lane.b32.xlu0 %v500, 64
        %v726 = vpop.permute.xlu0 %725
        %727 = vrot.lane.b32.xlu0 %v503, 64
        %v728 = vpop.permute.xlu0 %727
        %729 = vrot.lane.b32.xlu0 %v505, 64
        %v730 = vpop.permute.xlu0 %729
        %731 = vrot.lane.b32.xlu0 %v508, 64
        %v732 = vpop.permute.xlu0 %731
        %733 = vrot.lane.b32.xlu0 %v510, 64
        %v734 = vpop.permute.xlu0 %733
        %735 = vrot.lane.b32.xlu0 %v513, 64
        %v736 = vpop.permute.xlu0 %735
        %737 = vrot.lane.b32.xlu0 %v515, 64
        %v738 = vpop.permute.xlu0 %737
        %739 = vrot.lane.b32.xlu0 %v518, 64
        %v740 = vpop.permute.xlu0 %739
        %741 = vrot.lane.b32.xlu0 %v520, 64
        %v742 = vpop.permute.xlu0 %741
        %743 = vrot.lane.b32.xlu0 %v523, 64
        %v744 = vpop.permute.xlu0 %743
        %745 = vrot.lane.b32.xlu0 %v525, 64
        %v746 = vpop.permute.xlu0 %745
        %747 = vrot.lane.b32.xlu0 %v528, 64
        %v748 = vpop.permute.xlu0 %747
        %749 = vrot.lane.b32.xlu0 %v530, 64
        %v750 = vpop.permute.xlu0 %749
        %751 = vrot.lane.b32.xlu0 %v533, 64
        %v752 = vpop.permute.xlu0 %751
        %753 = vrot.lane.b32.xlu0 %v535, 64
        %v754 = vpop.permute.xlu0 %753
        %755 = vrot.lane.b32.xlu0 %v538, 64
        %v756 = vpop.permute.xlu0 %755
        %757 = vrot.lane.b32.xlu0 %v540, 64
        %v758 = vpop.permute.xlu0 %757
        %791 = vrot.lane.b32.xlu0 %v280, 96
        %v792 = vpop.permute.xlu0 %791
        %793 = vrot.lane.b32.xlu0 %v281, 96
        %v794 = vpop.permute.xlu0 %793
        %795 = vrot.lane.b32.xlu0 %v283, 96
        %v796 = vpop.permute.xlu0 %795
        %797 = vrot.lane.b32.xlu0 %v284, 96
        %v798 = vpop.permute.xlu0 %797
        %799 = vrot.lane.b32.xlu0 %v286, 96
        %v800 = vpop.permute.xlu0 %799
        %801 = vrot.lane.b32.xlu0 %v287, 96
        %v802 = vpop.permute.xlu0 %801
        %803 = vrot.lane.b32.xlu0 %v289, 96
        %v804 = vpop.permute.xlu0 %803
        %805 = vrot.lane.b32.xlu0 %v290, 96
        %v806 = vpop.permute.xlu0 %805
        %807 = vrot.lane.b32.xlu0 %v292, 96
        %v808 = vpop.permute.xlu0 %807
        %809 = vrot.lane.b32.xlu0 %v293, 96
        %v810 = vpop.permute.xlu0 %809
        %811 = vrot.lane.b32.xlu0 %v295, 96
        %v812 = vpop.permute.xlu0 %811
        %813 = vrot.lane.b32.xlu0 %v296, 96
        %v814 = vpop.permute.xlu0 %813
        %815 = vrot.lane.b32.xlu0 %v298, 96
        %v816 = vpop.permute.xlu0 %815
        %817 = vrot.lane.b32.xlu0 %v299, 96
        %v818 = vpop.permute.xlu0 %817
        %819 = vrot.lane.b32.xlu0 %v301, 96
        %v820 = vpop.permute.xlu0 %819
        %821 = vrot.lane.b32.xlu0 %v302, 96
        %v822 = vpop.permute.xlu0 %821
        %823 = vrot.lane.b32.xlu0 %v304, 96
        %v824 = vpop.permute.xlu0 %823
        %825 = vrot.lane.b32.xlu0 %v305, 96
        %v826 = vpop.permute.xlu0 %825
        %827 = vrot.lane.b32.xlu0 %v307, 96
        %v828 = vpop.permute.xlu0 %827
        %829 = vrot.lane.b32.xlu0 %v308, 96
        %v830 = vpop.permute.xlu0 %829
        %831 = vrot.lane.b32.xlu0 %v310, 96
        %v832 = vpop.permute.xlu0 %831
        %833 = vrot.lane.b32.xlu0 %v311, 96
        %v834 = vpop.permute.xlu0 %833
        %835 = vrot.lane.b32.xlu0 %v313, 96
        %v836 = vpop.permute.xlu0 %835
        %837 = vrot.lane.b32.xlu0 %v314, 96
        %v838 = vpop.permute.xlu0 %837
        %839 = vrot.lane.b32.xlu0 %v316, 96
        %v840 = vpop.permute.xlu0 %839
        %841 = vrot.lane.b32.xlu0 %v317, 96
        %v842 = vpop.permute.xlu0 %841
        %843 = vrot.lane.b32.xlu0 %v319, 96
        %v844 = vpop.permute.xlu0 %843
        %845 = vrot.lane.b32.xlu0 %v320, 96
        %v846 = vpop.permute.xlu0 %845
        %847 = vrot.lane.b32.xlu0 %v322, 96
        %v848 = vpop.permute.xlu0 %847
        %849 = vrot.lane.b32.xlu0 %v323, 96
        %v850 = vpop.permute.xlu0 %849
        %851 = vrot.lane.b32.xlu0 %v325, 96
        %v852 = vpop.permute.xlu0 %851
        %853 = vrot.lane.b32.xlu0 %v326, 96
        %v854 = vpop.permute.xlu0 %853
        %887 = vrot.lane.b32.xlu0 %v468, 32
        %v888 = vpop.permute.xlu0 %887
        %889 = vrot.lane.b32.xlu0 %v470, 32
        %v890 = vpop.permute.xlu0 %889
        %891 = vrot.lane.b32.xlu0 %v473, 32
        %v892 = vpop.permute.xlu0 %891
        %893 = vrot.lane.b32.xlu0 %v475, 32
        %v894 = vpop.permute.xlu0 %893
        %895 = vrot.lane.b32.xlu0 %v478, 32
        %v896 = vpop.permute.xlu0 %895
        %897 = vrot.lane.b32.xlu0 %v480, 32
        %v898 = vpop.permute.xlu0 %897
        %899 = vrot.lane.b32.xlu0 %v483, 32
        %v900 = vpop.permute.xlu0 %899
        %901 = vrot.lane.b32.xlu0 %v485, 32
        %v902 = vpop.permute.xlu0 %901
        %903 = vrot.lane.b32.xlu0 %v488, 32
        %v904 = vpop.permute.xlu0 %903
        %905 = vrot.lane.b32.xlu0 %v490, 32
        %v906 = vpop.permute.xlu0 %905
        %907 = vrot.lane.b32.xlu0 %v493, 32
        %v908 = vpop.permute.xlu0 %907
        %909 = vrot.lane.b32.xlu0 %v495, 32
        %v910 = vpop.permute.xlu0 %909
        %911 = vrot.lane.b32.xlu0 %v498, 32
        %v912 = vpop.permute.xlu0 %911
        %913 = vrot.lane.b32.xlu0 %v500, 32
        %v914 = vpop.permute.xlu0 %913
        %915 = vrot.lane.b32.xlu0 %v503, 32
        %v916 = vpop.permute.xlu0 %915
        %917 = vrot.lane.b32.xlu0 %v505, 32
        %v918 = vpop.permute.xlu0 %917
        %919 = vrot.lane.b32.xlu0 %v508, 32
        %v920 = vpop.permute.xlu0 %919
        %921 = vrot.lane.b32.xlu0 %v510, 32
        %v922 = vpop.permute.xlu0 %921
        %923 = vrot.lane.b32.xlu0 %v513, 32
        %v924 = vpop.permute.xlu0 %923
        %925 = vrot.lane.b32.xlu0 %v515, 32
        %v926 = vpop.permute.xlu0 %925
        %927 = vrot.lane.b32.xlu0 %v518, 32
        %v928 = vpop.permute.xlu0 %927
        %929 = vrot.lane.b32.xlu0 %v520, 32
        %v930 = vpop.permute.xlu0 %929
        %931 = vrot.lane.b32.xlu0 %v523, 32
        %v932 = vpop.permute.xlu0 %931
        %933 = vrot.lane.b32.xlu0 %v525, 32
        %v934 = vpop.permute.xlu0 %933
        %935 = vrot.lane.b32.xlu0 %v528, 32
        %v936 = vpop.permute.xlu0 %935
        %937 = vrot.lane.b32.xlu0 %v530, 32
        %v938 = vpop.permute.xlu0 %937
        %939 = vrot.lane.b32.xlu0 %v533, 32
        %v940 = vpop.permute.xlu0 %939
        %941 = vrot.lane.b32.xlu0 %v535, 32
        %v942 = vpop.permute.xlu0 %941
        %943 = vrot.lane.b32.xlu0 %v538, 32
        %v944 = vpop.permute.xlu0 %943
        %945 = vrot.lane.b32.xlu0 %v540, 32
        %v946 = vpop.permute.xlu0 %945
        %947 = vrot.lane.b32.xlu0 %v583, 32
        %v948 = vpop.permute.xlu0 %947
        %949 = vrot.lane.b32.xlu0 %v585, 32
        %v950 = vpop.permute.xlu0 %949
        %983 = vrot.lane.b32.xlu0 %v283, 64
        %v984 = vpop.permute.xlu0 %983
        %985 = vrot.lane.b32.xlu0 %v284, 64
        %v986 = vpop.permute.xlu0 %985
        %987 = vrot.lane.b32.xlu0 %v286, 64
        %v988 = vpop.permute.xlu0 %987
        %989 = vrot.lane.b32.xlu0 %v287, 64
        %v990 = vpop.permute.xlu0 %989
        %991 = vrot.lane.b32.xlu0 %v289, 64
        %v992 = vpop.permute.xlu0 %991
        %993 = vrot.lane.b32.xlu0 %v290, 64
        %v994 = vpop.permute.xlu0 %993
        %995 = vrot.lane.b32.xlu0 %v292, 64
        %v996 = vpop.permute.xlu0 %995
        %997 = vrot.lane.b32.xlu0 %v293, 64
        %v998 = vpop.permute.xlu0 %997
        %999 = vrot.lane.b32.xlu0 %v295, 64
        %v1000 = vpop.permute.xlu0 %999
        %1001 = vrot.lane.b32.xlu0 %v296, 64
        %v1002 = vpop.permute.xlu0 %1001
        %1003 = vrot.lane.b32.xlu0 %v298, 64
        %v1004 = vpop.permute.xlu0 %1003
        %1005 = vrot.lane.b32.xlu0 %v299, 64
        %v1006 = vpop.permute.xlu0 %1005
        %1007 = vrot.lane.b32.xlu0 %v301, 64
        %v1008 = vpop.permute.xlu0 %1007
        %1009 = vrot.lane.b32.xlu0 %v302, 64
        %v1010 = vpop.permute.xlu0 %1009
        %1011 = vrot.lane.b32.xlu0 %v304, 64
        %v1012 = vpop.permute.xlu0 %1011
        %1013 = vrot.lane.b32.xlu0 %v305, 64
        %v1014 = vpop.permute.xlu0 %1013
        %1015 = vrot.lane.b32.xlu0 %v307, 64
        %v1016 = vpop.permute.xlu0 %1015
        %1017 = vrot.lane.b32.xlu0 %v308, 64
        %v1018 = vpop.permute.xlu0 %1017
        %1019 = vrot.lane.b32.xlu0 %v310, 64
        %v1020 = vpop.permute.xlu0 %1019
        %1021 = vrot.lane.b32.xlu0 %v311, 64
        %v1022 = vpop.permute.xlu0 %1021
        %1023 = vrot.lane.b32.xlu0 %v313, 64
        %v1024 = vpop.permute.xlu0 %1023
        %1025 = vrot.lane.b32.xlu0 %v314, 64
        %v1026 = vpop.permute.xlu0 %1025
        %1027 = vrot.lane.b32.xlu0 %v316, 64
        %v1028 = vpop.permute.xlu0 %1027
        %1029 = vrot.lane.b32.xlu0 %v317, 64
        %v1030 = vpop.permute.xlu0 %1029
        %1031 = vrot.lane.b32.xlu0 %v319, 64
        %v1032 = vpop.permute.xlu0 %1031
        %1033 = vrot.lane.b32.xlu0 %v320, 64
        %v1034 = vpop.permute.xlu0 %1033
        %1035 = vrot.lane.b32.xlu0 %v322, 64
        %v1036 = vpop.permute.xlu0 %1035
        %1037 = vrot.lane.b32.xlu0 %v323, 64
        %v1038 = vpop.permute.xlu0 %1037
        %1039 = vrot.lane.b32.xlu0 %v325, 64
        %v1040 = vpop.permute.xlu0 %1039
        %1041 = vrot.lane.b32.xlu0 %v326, 64
        %v1042 = vpop.permute.xlu0 %1041
        %1043 = vrot.lane.b32.xlu0 %v328, 64
        %v1044 = vpop.permute.xlu0 %1043
        %1045 = vrot.lane.b32.xlu0 %v329, 64
        %v1046 = vpop.permute.xlu0 %1045
        %1079 = vrot.lane.b32.xlu0 %v392, 96
        %v1080 = vpop.permute.xlu0 %1079
        %1081 = vrot.lane.b32.xlu0 %v394, 96
        %v1082 = vpop.permute.xlu0 %1081
        %1083 = vrot.lane.b32.xlu0 %v397, 96
        %v1084 = vpop.permute.xlu0 %1083
        %1085 = vrot.lane.b32.xlu0 %v399, 96
        %v1086 = vpop.permute.xlu0 %1085
        %1087 = vrot.lane.b32.xlu0 %v402, 96
        %v1088 = vpop.permute.xlu0 %1087
        %1089 = vrot.lane.b32.xlu0 %v404, 96
        %v1090 = vpop.permute.xlu0 %1089
        %1091 = vrot.lane.b32.xlu0 %v407, 96
        %v1092 = vpop.permute.xlu0 %1091
        %1093 = vrot.lane.b32.xlu0 %v409, 96
        %v1094 = vpop.permute.xlu0 %1093
        %1095 = vrot.lane.b32.xlu0 %v412, 96
        %v1096 = vpop.permute.xlu0 %1095
        %1097 = vrot.lane.b32.xlu0 %v414, 96
        %v1098 = vpop.permute.xlu0 %1097
        %1099 = vrot.lane.b32.xlu0 %v417, 96
        %v1100 = vpop.permute.xlu0 %1099
        %1101 = vrot.lane.b32.xlu0 %v419, 96
        %v1102 = vpop.permute.xlu0 %1101
        %1103 = vrot.lane.b32.xlu0 %v422, 96
        %v1104 = vpop.permute.xlu0 %1103
        %1105 = vrot.lane.b32.xlu0 %v424, 96
        %v1106 = vpop.permute.xlu0 %1105
        %1107 = vrot.lane.b32.xlu0 %v427, 96
        %v1108 = vpop.permute.xlu0 %1107
        %1109 = vrot.lane.b32.xlu0 %v429, 96
        %v1110 = vpop.permute.xlu0 %1109
        %1111 = vrot.lane.b32.xlu0 %v432, 96
        %v1112 = vpop.permute.xlu0 %1111
        %1113 = vrot.lane.b32.xlu0 %v434, 96
        %v1114 = vpop.permute.xlu0 %1113
        %1115 = vrot.lane.b32.xlu0 %v437, 96
        %v1116 = vpop.permute.xlu0 %1115
        %1117 = vrot.lane.b32.xlu0 %v439, 96
        %v1118 = vpop.permute.xlu0 %1117
        %1119 = vrot.lane.b32.xlu0 %v442, 96
        %v1120 = vpop.permute.xlu0 %1119
        %1121 = vrot.lane.b32.xlu0 %v444, 96
        %v1122 = vpop.permute.xlu0 %1121
        %1123 = vrot.lane.b32.xlu0 %v447, 96
        %v1124 = vpop.permute.xlu0 %1123
        %1125 = vrot.lane.b32.xlu0 %v449, 96
        %v1126 = vpop.permute.xlu0 %1125
        %1127 = vrot.lane.b32.xlu0 %v452, 96
        %v1128 = vpop.permute.xlu0 %1127
        %1129 = vrot.lane.b32.xlu0 %v454, 96
        %v1130 = vpop.permute.xlu0 %1129
        %1131 = vrot.lane.b32.xlu0 %v457, 96
        %v1132 = vpop.permute.xlu0 %1131
        %1133 = vrot.lane.b32.xlu0 %v459, 96
        %v1134 = vpop.permute.xlu0 %1133
        %1135 = vrot.lane.b32.xlu0 %v546, 96
        %v1136 = vpop.permute.xlu0 %1135
        %1137 = vrot.lane.b32.xlu0 %v548, 96
        %v1138 = vpop.permute.xlu0 %1137
        %1139 = vrot.lane.b32.xlu0 %v591, 96
        %v1140 = vpop.permute.xlu0 %1139
        %1141 = vrot.lane.b32.xlu0 %v593, 96
        %v1142 = vpop.permute.xlu0 %1141
        %vm1175 = vcmask 261120
        %v1176 = vsel %vm1175, %v277, %v600
        %v1177 = vsel %vm1175, %v278, %v602
        %v1178 = vsel %vm1175, %v280, %v604
        %v1179 = vsel %vm1175, %v281, %v606
        %v1180 = vsel %vm1175, %v283, %v608
        %v1181 = vsel %vm1175, %v284, %v610
        %v1182 = vsel %vm1175, %v286, %v612
        %v1183 = vsel %vm1175, %v287, %v614
        %v1184 = vsel %vm1175, %v289, %v616
        %v1185 = vsel %vm1175, %v290, %v618
        %v1186 = vsel %vm1175, %v292, %v620
        %v1187 = vsel %vm1175, %v293, %v622
        %v1188 = vsel %vm1175, %v295, %v624
        %v1189 = vsel %vm1175, %v296, %v626
        %v1190 = vsel %vm1175, %v298, %v628
        %v1191 = vsel %vm1175, %v299, %v630
        %v1192 = vsel %vm1175, %v301, %v632
        %v1193 = vsel %vm1175, %v302, %v634
        %v1194 = vsel %vm1175, %v304, %v636
        %v1195 = vsel %vm1175, %v305, %v638
        %v1196 = vsel %vm1175, %v307, %v640
        %v1197 = vsel %vm1175, %v308, %v642
        %v1198 = vsel %vm1175, %v310, %v644
        %v1199 = vsel %vm1175, %v311, %v646
        %v1200 = vsel %vm1175, %v313, %v648
        %v1201 = vsel %vm1175, %v314, %v650
        %v1202 = vsel %vm1175, %v316, %v652
        %v1203 = vsel %vm1175, %v317, %v654
        %v1204 = vsel %vm1175, %v319, %v656
        %v1205 = vsel %vm1175, %v320, %v658
        %v1206 = vsel %vm1175, %v322, %v660
        %v1207 = vsel %vm1175, %v323, %v662
        %vm1208 = vcmask 523264
        %v1209 = vsel %vm1208, %v1176, %v696
        %v1210 = vsel %vm1208, %v1177, %v698
        %v1211 = vsel %vm1208, %v1178, %v700
        %v1212 = vsel %vm1208, %v1179, %v702
        %v1213 = vsel %vm1208, %v1180, %v704
        %v1214 = vsel %vm1208, %v1181, %v706
        %v1215 = vsel %vm1208, %v1182, %v708
        %v1216 = vsel %vm1208, %v1183, %v710
        %v1217 = vsel %vm1208, %v1184, %v712
        %v1218 = vsel %vm1208, %v1185, %v714
        %v1219 = vsel %vm1208, %v1186, %v716
        %v1220 = vsel %vm1208, %v1187, %v718
        %v1221 = vsel %vm1208, %v1188, %v720
        %v1222 = vsel %vm1208, %v1189, %v722
        %v1223 = vsel %vm1208, %v1190, %v724
        %v1224 = vsel %vm1208, %v1191, %v726
        %v1225 = vsel %vm1208, %v1192, %v728
        %v1226 = vsel %vm1208, %v1193, %v730
        %v1227 = vsel %vm1208, %v1194, %v732
        %v1228 = vsel %vm1208, %v1195, %v734
        %v1229 = vsel %vm1208, %v1196, %v736
        %v1230 = vsel %vm1208, %v1197, %v738
        %v1231 = vsel %vm1208, %v1198, %v740
        %v1232 = vsel %vm1208, %v1199, %v742
        %v1233 = vsel %vm1208, %v1200, %v744
        %v1234 = vsel %vm1208, %v1201, %v746
        %v1235 = vsel %vm1208, %v1202, %v748
        %v1236 = vsel %vm1208, %v1203, %v750
        %v1237 = vsel %vm1208, %v1204, %v752
        %v1238 = vsel %vm1208, %v1205, %v754
        %v1239 = vsel %vm1208, %v1206, %v756
        %v1240 = vsel %vm1208, %v1207, %v758
        %vm1241 = vcmask 785408
        %v1242 = vsel %vm1241, %v1209, %v792
        %v1243 = vsel %vm1241, %v1210, %v794
        %v1244 = vsel %vm1241, %v1211, %v796
        %v1245 = vsel %vm1241, %v1212, %v798
        %v1246 = vsel %vm1241, %v1213, %v800
        %v1247 = vsel %vm1241, %v1214, %v802
        %v1248 = vsel %vm1241, %v1215, %v804
        %v1249 = vsel %vm1241, %v1216, %v806
        %v1250 = vsel %vm1241, %v1217, %v808
        %v1251 = vsel %vm1241, %v1218, %v810
        %v1252 = vsel %vm1241, %v1219, %v812
        %v1253 = vsel %vm1241, %v1220, %v814
        %v1254 = vsel %vm1241, %v1221, %v816
        %v1255 = vsel %vm1241, %v1222, %v818
        %v1256 = vsel %vm1241, %v1223, %v820
        %v1257 = vsel %vm1241, %v1224, %v822
        %v1258 = vsel %vm1241, %v1225, %v824
        %v1259 = vsel %vm1241, %v1226, %v826
        %v1260 = vsel %vm1241, %v1227, %v828
        %v1261 = vsel %vm1241, %v1228, %v830
        %v1262 = vsel %vm1241, %v1229, %v832
        %v1263 = vsel %vm1241, %v1230, %v834
        %v1264 = vsel %vm1241, %v1231, %v836
        %v1265 = vsel %vm1241, %v1232, %v838
        %v1266 = vsel %vm1241, %v1233, %v840
        %v1267 = vsel %vm1241, %v1234, %v842
        %v1268 = vsel %vm1241, %v1235, %v844
        %v1269 = vsel %vm1241, %v1236, %v846
        %v1270 = vsel %vm1241, %v1237, %v848
        %v1271 = vsel %vm1241, %v1238, %v850
        %v1272 = vsel %vm1241, %v1239, %v852
        %v1273 = vsel %vm1241, %v1240, %v854
        %v1274 = vsel %vm1175, %v387, %v888
        %v1275 = vsel %vm1175, %v389, %v890
        %v1276 = vsel %vm1175, %v392, %v892
        %v1277 = vsel %vm1175, %v394, %v894
        %v1278 = vsel %vm1175, %v397, %v896
        %v1279 = vsel %vm1175, %v399, %v898
        %v1280 = vsel %vm1175, %v402, %v900
        %v1281 = vsel %vm1175, %v404, %v902
        %v1282 = vsel %vm1175, %v407, %v904
        %v1283 = vsel %vm1175, %v409, %v906
        %v1284 = vsel %vm1175, %v412, %v908
        %v1285 = vsel %vm1175, %v414, %v910
        %v1286 = vsel %vm1175, %v417, %v912
        %v1287 = vsel %vm1175, %v419, %v914
        %v1288 = vsel %vm1175, %v422, %v916
        %v1289 = vsel %vm1175, %v424, %v918
        %v1290 = vsel %vm1175, %v427, %v920
        %v1291 = vsel %vm1175, %v429, %v922
        %v1292 = vsel %vm1175, %v432, %v924
        %v1293 = vsel %vm1175, %v434, %v926
        %v1294 = vsel %vm1175, %v437, %v928
        %v1295 = vsel %vm1175, %v439, %v930
        %v1296 = vsel %vm1175, %v442, %v932
        %v1297 = vsel %vm1175, %v444, %v934
        %v1298 = vsel %vm1175, %v447, %v936
        %v1299 = vsel %vm1175, %v449, %v938
        %v1300 = vsel %vm1175, %v452, %v940
        %v1301 = vsel %vm1175, %v454, %v942
        %v1302 = vsel %vm1175, %v457, %v944
        %v1303 = vsel %vm1175, %v459, %v946
        %v1304 = vsel %vm1175, %v546, %v948
        %v1305 = vsel %vm1175, %v548, %v950
        %v1306 = vsel %vm1208, %v1274, %v984
        %v1307 = vsel %vm1208, %v1275, %v986
        %v1308 = vsel %vm1208, %v1276, %v988
        %v1309 = vsel %vm1208, %v1277, %v990
        %v1310 = vsel %vm1208, %v1278, %v992
        %v1311 = vsel %vm1208, %v1279, %v994
        %v1312 = vsel %vm1208, %v1280, %v996
        %v1313 = vsel %vm1208, %v1281, %v998
        %v1314 = vsel %vm1208, %v1282, %v1000
        %v1315 = vsel %vm1208, %v1283, %v1002
        %v1316 = vsel %vm1208, %v1284, %v1004
        %v1317 = vsel %vm1208, %v1285, %v1006
        %v1318 = vsel %vm1208, %v1286, %v1008
        %v1319 = vsel %vm1208, %v1287, %v1010
        %v1320 = vsel %vm1208, %v1288, %v1012
        %v1321 = vsel %vm1208, %v1289, %v1014
        %v1322 = vsel %vm1208, %v1290, %v1016
        %v1323 = vsel %vm1208, %v1291, %v1018
        %v1324 = vsel %vm1208, %v1292, %v1020
        %v1325 = vsel %vm1208, %v1293, %v1022
        %v1326 = vsel %vm1208, %v1294, %v1024
        %v1327 = vsel %vm1208, %v1295, %v1026
        %v1328 = vsel %vm1208, %v1296, %v1028
        %v1329 = vsel %vm1208, %v1297, %v1030
        %v1330 = vsel %vm1208, %v1298, %v1032
        %v1331 = vsel %vm1208, %v1299, %v1034
        %v1332 = vsel %vm1208, %v1300, %v1036
        %v1333 = vsel %vm1208, %v1301, %v1038
        %v1334 = vsel %vm1208, %v1302, %v1040
        %v1335 = vsel %vm1208, %v1303, %v1042
        %v1336 = vsel %vm1208, %v1304, %v1044
        %v1337 = vsel %vm1208, %v1305, %v1046
        %v1338 = vsel %vm1241, %v1306, %v1080
        %v1339 = vsel %vm1241, %v1307, %v1082
        %v1340 = vsel %vm1241, %v1308, %v1084
        %v1341 = vsel %vm1241, %v1309, %v1086
        %v1342 = vsel %vm1241, %v1310, %v1088
        %v1343 = vsel %vm1241, %v1311, %v1090
        %v1344 = vsel %vm1241, %v1312, %v1092
        %v1345 = vsel %vm1241, %v1313, %v1094
        %v1346 = vsel %vm1241, %v1314, %v1096
        %v1347 = vsel %vm1241, %v1315, %v1098
        %v1348 = vsel %vm1241, %v1316, %v1100
        %v1349 = vsel %vm1241, %v1317, %v1102
        %v1350 = vsel %vm1241, %v1318, %v1104
        %v1351 = vsel %vm1241, %v1319, %v1106
        %v1352 = vsel %vm1241, %v1320, %v1108
        %v1353 = vsel %vm1241, %v1321, %v1110
        %v1354 = vsel %vm1241, %v1322, %v1112
        %v1355 = vsel %vm1241, %v1323, %v1114
        %v1356 = vsel %vm1241, %v1324, %v1116
        %v1357 = vsel %vm1241, %v1325, %v1118
        %v1358 = vsel %vm1241, %v1326, %v1120
        %v1359 = vsel %vm1241, %v1327, %v1122
        %v1360 = vsel %vm1241, %v1328, %v1124
        %v1361 = vsel %vm1241, %v1329, %v1126
        %v1362 = vsel %vm1241, %v1330, %v1128
        %v1363 = vsel %vm1241, %v1331, %v1130
        %v1364 = vsel %vm1241, %v1332, %v1132
        %v1365 = vsel %vm1241, %v1333, %v1134
        %v1366 = vsel %vm1241, %v1334, %v1136
        %v1367 = vsel %vm1241, %v1335, %v1138
        %v1368 = vsel %vm1241, %v1336, %v1140
        %v1369 = vsel %vm1241, %v1337, %v1142
        %v1370 = vld [vmem:[%s1] sm:$0xff]
        %v1371 = vld [vmem:[%s1 + $0x8] sm:$0xff]
        %v1372 = vld [vmem:[%s1 + $0x10] sm:$0xff]
        %v1373 = vld [vmem:[%s1 + $0x18] sm:$0xff]
        %v1374 = vld [vmem:[%s1 + $0x20] sm:$0xff]
        %v1375 = vld [vmem:[%s1 + $0x28] sm:$0xff]
        %v1376 = vld [vmem:[%s1 + $0x30] sm:$0xff]
        %v1377 = vld [vmem:[%s1 + $0x38] sm:$0xff]
        %v1378 = vld [vmem:[%s1 + $0x40] sm:$0xff]
        %v1379 = vld [vmem:[%s1 + $0x48] sm:$0xff]
        %v1380 = vld [vmem:[%s1 + $0x50] sm:$0xff]
        %v1381 = vld [vmem:[%s1 + $0x58] sm:$0xff]
        %v1382 = vld [vmem:[%s1 + $0x60] sm:$0xff]
        %v1383 = vld [vmem:[%s1 + $0x68] sm:$0xff]
        %v1384 = vld [vmem:[%s1 + $0x70] sm:$0xff]
        %v1385 = vld [vmem:[%s1 + $0x78] sm:$0xff]
        %v1386 = vld [vmem:[%s1 + $0x80] sm:$0xff]
        %v1387 = vld [vmem:[%s1 + $0x88] sm:$0xff]
        %v1388 = vld [vmem:[%s1 + $0x90] sm:$0xff]
        %v1389 = vld [vmem:[%s1 + $0x98] sm:$0xff]
        %v1390 = vld [vmem:[%s1 + $0xa0] sm:$0xff]
        %v1391 = vld [vmem:[%s1 + $0xa8] sm:$0xff]
        %v1392 = vld [vmem:[%s1 + $0xb0] sm:$0xff]
        %v1393 = vld [vmem:[%s1 + $0xb8] sm:$0xff]
        %v1394 = vld [vmem:[%s1 + $0xc0] sm:$0xff]
        %v1395 = vld [vmem:[%s1 + $0xc8] sm:$0xff]
        %v1396 = vld [vmem:[%s1 + $0xd0] sm:$0xff]
        %v1397 = vld [vmem:[%s1 + $0xd8] sm:$0xff]
        %v1398 = vld [vmem:[%s1 + $0xe0] sm:$0xff]
        %v1399 = vld [vmem:[%s1 + $0xe8] sm:$0xff]
        %v1400 = vld [vmem:[%s1 + $0xf0] sm:$0xff]
        %v1401 = vld [vmem:[%s1 + $0xf8] sm:$0xff]
        %v1402 = vld [vmem:[%s1 + $0x100] sm:$0xff]
        %v1403 = vld [vmem:[%s1 + $0x108] sm:$0xff]
        %v1404 = vld [vmem:[%s1 + $0x110] sm:$0xff]
        %v1405 = vld [vmem:[%s1 + $0x118] sm:$0xff]
        %v1406 = vld [vmem:[%s1 + $0x120] sm:$0xff]
        %v1407 = vld [vmem:[%s1 + $0x128] sm:$0xff]
        %v1408 = vld [vmem:[%s1 + $0x130] sm:$0xff]
        %v1409 = vld [vmem:[%s1 + $0x138] sm:$0xff]
        %v1410 = vld [vmem:[%s1 + $0x140] sm:$0xff]
        %v1411 = vld [vmem:[%s1 + $0x148] sm:$0xff]
        %v1412 = vld [vmem:[%s1 + $0x150] sm:$0xff]
        %v1413 = vld [vmem:[%s1 + $0x158] sm:$0xff]
        %v1414 = vld [vmem:[%s1 + $0x160] sm:$0xff]
        %v1415 = vld [vmem:[%s1 + $0x168] sm:$0xff]
        %v1416 = vld [vmem:[%s1 + $0x170] sm:$0xff]
        %v1417 = vld [vmem:[%s1 + $0x178] sm:$0xff]
        %v1418 = vld [vmem:[%s1 + $0x180] sm:$0xff]
        %v1419 = vld [vmem:[%s1 + $0x188] sm:$0xff]
        %v1420 = vld [vmem:[%s1 + $0x190] sm:$0xff]
        %v1421 = vld [vmem:[%s1 + $0x198] sm:$0xff]
        %v1422 = vld [vmem:[%s1 + $0x1a0] sm:$0xff]
        %v1423 = vld [vmem:[%s1 + $0x1a8] sm:$0xff]
        %v1424 = vld [vmem:[%s1 + $0x1b0] sm:$0xff]
        %v1425 = vld [vmem:[%s1 + $0x1b8] sm:$0xff]
        %v1426 = vld [vmem:[%s1 + $0x1c0] sm:$0xff]
        %v1427 = vld [vmem:[%s1 + $0x1c8] sm:$0xff]
        %v1428 = vld [vmem:[%s1 + $0x1d0] sm:$0xff]
        %v1429 = vld [vmem:[%s1 + $0x1d8] sm:$0xff]
        %v1430 = vld [vmem:[%s1 + $0x1e0] sm:$0xff]
        %v1431 = vld [vmem:[%s1 + $0x1e8] sm:$0xff]
        %v1432 = vld [vmem:[%s1 + $0x1f0] sm:$0xff]
        %v1433 = vld [vmem:[%s1 + $0x1f8] sm:$0xff]
        %v1434 = vld [vmem:[%s1 + $0x200] sm:$0xff]
        %v1435 = vld [vmem:[%s1 + $0x208] sm:$0xff]
        %v1436 = vld [vmem:[%s1 + $0x210] sm:$0xff]
        %v1437 = vld [vmem:[%s1 + $0x218] sm:$0xff]
        %v1438 = vld [vmem:[%s1 + $0x220] sm:$0xff]
        %v1439 = vld [vmem:[%s1 + $0x228] sm:$0xff]
        %v1440 = vld [vmem:[%s1 + $0x230] sm:$0xff]
        %v1441 = vld [vmem:[%s1 + $0x238] sm:$0xff]
        %v1442 = vld [vmem:[%s2] sm:$0x3]
        %v1444 = vlaneseq
        %v1445 = vshrl.u32 %v1444, 7
        %v1446 = vsub.s32 0, %v1445
        %v1447 = vrot.slane %v1442, %v1446
        %v1448 = vlaneseq
        %v1449 = vshrl.u32 %v1448, 7
        %v1450 = vsub.s32 1, %v1449
        %v1451 = vrot.slane %v1442, %v1450
        %v1454 = vsel %vm1175, %v473, 0
        %v1456 = vsel %vm1175, %v475, 0
        %v1458 = vsel %vm1175, %v478, 0
        %v1460 = vsel %vm1175, %v480, 0
        %v1462 = vsel %vm1175, %v483, 0
        %v1464 = vsel %vm1175, %v485, 0
        %v1466 = vsel %vm1175, %v488, 0
        %v1468 = vsel %vm1175, %v490, 0
        %v1470 = vsel %vm1175, %v493, 0
        %v1472 = vsel %vm1175, %v495, 0
        %v1474 = vsel %vm1175, %v498, 0
        %v1476 = vsel %vm1175, %v500, 0
        %v1478 = vsel %vm1175, %v503, 0
        %v1480 = vsel %vm1175, %v505, 0
        %v1482 = vsel %vm1175, %v508, 0
        %v1484 = vsel %vm1175, %v510, 0
        %v1486 = vsel %vm1175, %v513, 0
        %v1488 = vsel %vm1175, %v515, 0
        %v1490 = vsel %vm1175, %v518, 0
        %v1492 = vsel %vm1175, %v520, 0
        %v1494 = vsel %vm1175, %v523, 0
        %v1496 = vsel %vm1175, %v525, 0
        %v1498 = vsel %vm1175, %v528, 0
        %v1500 = vsel %vm1175, %v530, 0
        %v1502 = vsel %vm1175, %v533, 0
        %v1504 = vsel %vm1175, %v535, 0
        %v1506 = vsel %vm1175, %v538, 0
        %v1508 = vsel %vm1175, %v540, 0
        %v1510 = vsel %vm1175, %v583, 0
        %v1512 = vsel %vm1175, %v585, 0
        %v1514 = vsel %vm1175, %v596, 0
        %v1516 = vsel %vm1175, %v598, 0
        %1518 = vmatprep.subr.mxu0 %v1371
        %1519 = vmatpush1.msra.mxu0 %v1370
        %1520 = vmatprep.subr.mxu0 %v1373
        %1521 = vmatpush1.msra.mxu0 %v1372
        %1522 = vmatprep.subr.mxu0 %v1375
        %1523 = vmatpush1.msra.mxu0 %v1374
        %1524 = vmatprep.subr.mxu0 %v1377
        %1525 = vmatpush1.msra.mxu0 %v1376
        %1526 = vmatprep.subr.mxu0 %v1379
        %1527 = vmatpush1.msra.mxu0 %v1378
        %1528 = vmatprep.subr.mxu0 %v1381
        %1529 = vmatpush1.msra.mxu0 %v1380
        %1530 = vmatprep.subr.mxu0 %v1383
        %1531 = vmatpush1.msra.mxu0 %v1382
        %1532 = vmatprep.subr.mxu0 %v1385
        %1533 = vmatpush1.msra.mxu0 %v1384
        %1534 = vmatprep.subr.mxu0 %v1387
        %1535 = vmatpush1.msra.mxu0 %v1386
        %1536 = vmatprep.subr.mxu0 %v1389
        %1537 = vmatpush1.msra.mxu0 %v1388
        %1538 = vmatprep.subr.mxu0 %v1391
        %1539 = vmatpush1.msra.mxu0 %v1390
        %1540 = vmatprep.subr.mxu0 %v1393
        %1541 = vmatpush1.msra.mxu0 %v1392
        %1542 = vmatprep.subr.mxu0 %v1395
        %1543 = vmatpush1.msra.mxu0 %v1394
        %1544 = vmatprep.subr.mxu0 %v1397
        %1545 = vmatpush1.msra.mxu0 %v1396
        %1546 = vmatprep.subr.mxu0 %v1399
        %1547 = vmatpush1.msra.mxu0 %v1398
        %1548 = vmatprep.subr.mxu0 %v1401
        %1549 = vmatpush1.msra.mxu0 %v1400
        %1550 = vmatprep.subr.mxu0 %v1403
        %1551 = vmatpush1.msra.mxu0 %v1402
        %1552 = vmatprep.subr.mxu0 %v1405
        %1553 = vmatpush1.msra.mxu0 %v1404
        %1554 = vmatprep.subr.mxu0 %v1407
        %1555 = vmatpush1.msra.mxu0 %v1406
        %1556 = vmatprep.subr.mxu0 %v1409
        %1557 = vmatpush1.msra.mxu0 %v1408
        %1558 = vmatprep.subr.mxu0 %v1411
        %1559 = vmatpush1.msra.mxu0 %v1410
        %1560 = vmatprep.subr.mxu0 %v1413
        %1561 = vmatpush1.msra.mxu0 %v1412
        %1562 = vmatprep.subr.mxu0 %v1415
        %1563 = vmatpush1.msra.mxu0 %v1414
        %1564 = vmatprep.subr.mxu0 %v1417
        %1565 = vmatpush1.msra.mxu0 %v1416
        %1566 = vmatprep.subr.mxu0 %v1419
        %1567 = vmatpush1.msra.mxu0 %v1418
        %1568 = vmatprep.subr.mxu0 %v1421
        %1569 = vmatpush1.msra.mxu0 %v1420
        %1570 = vmatprep.subr.mxu0 %v1423
        %1571 = vmatpush1.msra.mxu0 %v1422
        %1572 = vmatprep.subr.mxu0 %v1425
        %1573 = vmatpush1.msra.mxu0 %v1424
        %1574 = vmatprep.subr.mxu0 %v1427
        %1575 = vmatpush1.msra.mxu0 %v1426
        %1576 = vmatprep.subr.mxu0 %v1429
        %1577 = vmatpush1.msra.mxu0 %v1428
        %1578 = vmatprep.subr.mxu0 %v1431
        %1579 = vmatpush1.msra.mxu0 %v1430
        %1580 = vmatprep.subr.mxu0 %v1433
        %1581 = vmatpush1.msra.mxu0 %v1432
        %1582 = vmatprep.mubr.f32.mxu0 %v1338
        %1583 = vmatmul.mubr.f32.gmra.mrb[0].mxu0 %v1242
        %v1584 = vpop.f32.mrb[0].mxu0
        %v1585 = vadd.f32 %v1447, %v1584
        %v1586 = vpop.f32.mrb[0].mxu0
        %v1587 = vadd.f32 %v1451, %v1586
        %1588 = vmatprep.mubr.f32.mxu0 %v1339
        %1589 = vmatmul.mubr.f32.gmra.mrb[0].mxu0 %v1243
        %v1590 = vpop.f32.mrb[0].mxu0
        %v1591 = vadd.f32 %v1447, %v1590
        %v1592 = vpop.f32.mrb[0].mxu0
        %v1593 = vadd.f32 %v1451, %v1592
        %1594 = vmatprep.mubr.f32.mxu0 %v1340
        %1595 = vmatmul.mubr.f32.gmra.mrb[0].mxu0 %v1244
        %v1596 = vpop.f32.mrb[0].mxu0
        %v1597 = vadd.f32 %v1447, %v1596
        %v1598 = vpop.f32.mrb[0].mxu0
        %v1599 = vadd.f32 %v1451, %v1598
        %1600 = vmatprep.mubr.f32.mxu0 %v1341
        %1601 = vmatmul.mubr.f32.gmra.mrb[0].mxu0 %v1245
        %v1602 = vpop.f32.mrb[0].mxu0
        %v1603 = vadd.f32 %v1447, %v1602
        %v1604 = vpop.f32.mrb[0].mxu0
        %v1605 = vadd.f32 %v1451, %v1604
        %1606 = vmatprep.mubr.f32.mxu0 %v1342
        %1607 = vmatmul.mubr.f32.gmra.mrb[0].mxu0 %v1246
        %v1608 = vpop.f32.mrb[0].mxu0
        %v1609 = vadd.f32 %v1447, %v1608
        %v1610 = vpop.f32.mrb[0].mxu0
        %v1611 = vadd.f32 %v1451, %v1610
        %1612 = vmatprep.mubr.f32.mxu0 %v1343
        %1613 = vmatmul.mubr.f32.gmra.mrb[0].mxu0 %v1247
        %v1614 = vpop.f32.mrb[0].mxu0
        %v1615 = vadd.f32 %v1447, %v1614
        %v1616 = vpop.f32.mrb[0].mxu0
        %v1617 = vadd.f32 %v1451, %v1616
        %1618 = vmatprep.mubr.f32.mxu0 %v1344
        %1619 = vmatmul.mubr.f32.gmra.mrb[0].mxu0 %v1248
        %v1620 = vpop.f32.mrb[0].mxu0
        %v1621 = vadd.f32 %v1447, %v1620
        %v1622 = vpop.f32.mrb[0].mxu0
        %v1623 = vadd.f32 %v1451, %v1622
        %1624 = vmatprep.mubr.f32.mxu0 %v1345
        %1625 = vmatmul.mubr.f32.gmra.mrb[0].mxu0 %v1249
        %v1626 = vpop.f32.mrb[0].mxu0
        %v1627 = vadd.f32 %v1447, %v1626
        %v1628 = vpop.f32.mrb[0].mxu0
        %v1629 = vadd.f32 %v1451, %v1628
        %1630 = vmatprep.mubr.f32.mxu0 %v1346
        %1631 = vmatmul.mubr.f32.gmra.mrb[0].mxu0 %v1250
        %v1632 = vpop.f32.mrb[0].mxu0
        %v1633 = vadd.f32 %v1447, %v1632
        %v1634 = vpop.f32.mrb[0].mxu0
        %v1635 = vadd.f32 %v1451, %v1634
        %1636 = vmatprep.mubr.f32.mxu0 %v1347
        %1637 = vmatmul.mubr.f32.gmra.mrb[0].mxu0 %v1251
        %v1638 = vpop.f32.mrb[0].mxu0
        %v1639 = vadd.f32 %v1447, %v1638
        %v1640 = vpop.f32.mrb[0].mxu0
        %v1641 = vadd.f32 %v1451, %v1640
        %1642 = vmatprep.mubr.f32.mxu0 %v1348
        %1643 = vmatmul.mubr.f32.gmra.mrb[0].mxu0 %v1252
        %v1644 = vpop.f32.mrb[0].mxu0
        %v1645 = vadd.f32 %v1447, %v1644
        %v1646 = vpop.f32.mrb[0].mxu0
        %v1647 = vadd.f32 %v1451, %v1646
        %1648 = vmatprep.mubr.f32.mxu0 %v1349
        %1649 = vmatmul.mubr.f32.gmra.mrb[0].mxu0 %v1253
        %v1650 = vpop.f32.mrb[0].mxu0
        %v1651 = vadd.f32 %v1447, %v1650
        %v1652 = vpop.f32.mrb[0].mxu0
        %v1653 = vadd.f32 %v1451, %v1652
        %1654 = vmatprep.mubr.f32.mxu0 %v1350
        %1655 = vmatmul.mubr.f32.gmra.mrb[0].mxu0 %v1254
        %v1656 = vpop.f32.mrb[0].mxu0
        %v1657 = vadd.f32 %v1447, %v1656
        %v1658 = vpop.f32.mrb[0].mxu0
        %v1659 = vadd.f32 %v1451, %v1658
        %1660 = vmatprep.mubr.f32.mxu0 %v1351
        %1661 = vmatmul.mubr.f32.gmra.mrb[0].mxu0 %v1255
        %v1662 = vpop.f32.mrb[0].mxu0
        %v1663 = vadd.f32 %v1447, %v1662
        %v1664 = vpop.f32.mrb[0].mxu0
        %v1665 = vadd.f32 %v1451, %v1664
        %1666 = vmatprep.mubr.f32.mxu0 %v1352
        %1667 = vmatmul.mubr.f32.gmra.mrb[0].mxu0 %v1256
        %v1668 = vpop.f32.mrb[0].mxu0
        %v1669 = vadd.f32 %v1447, %v1668
        %v1670 = vpop.f32.mrb[0].mxu0
        %v1671 = vadd.f32 %v1451, %v1670
        %1672 = vmatprep.mubr.f32.mxu0 %v1353
        %1673 = vmatmul.mubr.f32.gmra.mrb[0].mxu0 %v1257
        %v1674 = vpop.f32.mrb[0].mxu0
        %v1675 = vadd.f32 %v1447, %v1674
        %v1676 = vpop.f32.mrb[0].mxu0
        %v1677 = vadd.f32 %v1451, %v1676
        %1678 = vmatprep.mubr.f32.mxu0 %v1354
        %1679 = vmatmul.mubr.f32.gmra.mrb[0].mxu0 %v1258
        %v1680 = vpop.f32.mrb[0].mxu0
        %v1681 = vadd.f32 %v1447, %v1680
        %v1682 = vpop.f32.mrb[0].mxu0
        %v1683 = vadd.f32 %v1451, %v1682
        %1684 = vmatprep.mubr.f32.mxu0 %v1355
        %1685 = vmatmul.mubr.f32.gmra.mrb[0].mxu0 %v1259
        %v1686 = vpop.f32.mrb[0].mxu0
        %v1687 = vadd.f32 %v1447, %v1686
        %v1688 = vpop.f32.mrb[0].mxu0
        %v1689 = vadd.f32 %v1451, %v1688
        %1690 = vmatprep.mubr.f32.mxu0 %v1356
        %1691 = vmatmul.mubr.f32.gmra.mrb[0].mxu0 %v1260
        %v1692 = vpop.f32.mrb[0].mxu0
        %v1693 = vadd.f32 %v1447, %v1692
        %v1694 = vpop.f32.mrb[0].mxu0
        %v1695 = vadd.f32 %v1451, %v1694
        %1696 = vmatprep.mubr.f32.mxu0 %v1357
        %1697 = vmatmul.mubr.f32.gmra.mrb[0].mxu0 %v1261
        %v1698 = vpop.f32.mrb[0].mxu0
        %v1699 = vadd.f32 %v1447, %v1698
        %v1700 = vpop.f32.mrb[0].mxu0
        %v1701 = vadd.f32 %v1451, %v1700
        %1702 = vmatprep.mubr.f32.mxu0 %v1358
        %1703 = vmatmul.mubr.f32.gmra.mrb[0].mxu0 %v1262
        %v1704 = vpop.f32.mrb[0].mxu0
        %v1705 = vadd.f32 %v1447, %v1704
        %v1706 = vpop.f32.mrb[0].mxu0
        %v1707 = vadd.f32 %v1451, %v1706
        %1708 = vmatprep.mubr.f32.mxu0 %v1359
        %1709 = vmatmul.mubr.f32.gmra.mrb[0].mxu0 %v1263
        %v1710 = vpop.f32.mrb[0].mxu0
        %v1711 = vadd.f32 %v1447, %v1710
        %v1712 = vpop.f32.mrb[0].mxu0
        %v1713 = vadd.f32 %v1451, %v1712
        %1714 = vmatprep.mubr.f32.mxu0 %v1360
        %1715 = vmatmul.mubr.f32.gmra.mrb[0].mxu0 %v1264
        %v1716 = vpop.f32.mrb[0].mxu0
        %v1717 = vadd.f32 %v1447, %v1716
        %v1718 = vpop.f32.mrb[0].mxu0
        %v1719 = vadd.f32 %v1451, %v1718
        %1720 = vmatprep.mubr.f32.mxu0 %v1361
        %1721 = vmatmul.mubr.f32.gmra.mrb[0].mxu0 %v1265
        %v1722 = vpop.f32.mrb[0].mxu0
        %v1723 = vadd.f32 %v1447, %v1722
        %v1724 = vpop.f32.mrb[0].mxu0
        %v1725 = vadd.f32 %v1451, %v1724
        %1726 = vmatprep.mubr.f32.mxu0 %v1362
        %1727 = vmatmul.mubr.f32.gmra.mrb[0].mxu0 %v1266
        %v1728 = vpop.f32.mrb[0].mxu0
        %v1729 = vadd.f32 %v1447, %v1728
        %v1730 = vpop.f32.mrb[0].mxu0
        %v1731 = vadd.f32 %v1451, %v1730
        %1732 = vmatprep.mubr.f32.mxu0 %v1363
        %1733 = vmatmul.mubr.f32.gmra.mrb[0].mxu0 %v1267
        %v1734 = vpop.f32.mrb[0].mxu0
        %v1735 = vadd.f32 %v1447, %v1734
        %v1736 = vpop.f32.mrb[0].mxu0
        %v1737 = vadd.f32 %v1451, %v1736
        %1738 = vmatprep.mubr.f32.mxu0 %v1364
        %1739 = vmatmul.mubr.f32.gmra.mrb[0].mxu0 %v1268
        %v1740 = vpop.f32.mrb[0].mxu0
        %v1741 = vadd.f32 %v1447, %v1740
        %v1742 = vpop.f32.mrb[0].mxu0
        %v1743 = vadd.f32 %v1451, %v1742
        %1744 = vmatprep.mubr.f32.mxu0 %v1365
        %1745 = vmatmul.mubr.f32.gmra.mrb[0].mxu0 %v1269
        %v1746 = vpop.f32.mrb[0].mxu0
        %v1747 = vadd.f32 %v1447, %v1746
        %v1748 = vpop.f32.mrb[0].mxu0
        %v1749 = vadd.f32 %v1451, %v1748
        %1750 = vmatprep.mubr.f32.mxu0 %v1366
        %1751 = vmatmul.mubr.f32.gmra.mrb[0].mxu0 %v1270
        %v1752 = vpop.f32.mrb[0].mxu0
        %v1753 = vadd.f32 %v1447, %v1752
        %v1754 = vpop.f32.mrb[0].mxu0
        %v1755 = vadd.f32 %v1451, %v1754
        %1756 = vmatprep.mubr.f32.mxu0 %v1367
        %1757 = vmatmul.mubr.f32.gmra.mrb[0].mxu0 %v1271
        %v1758 = vpop.f32.mrb[0].mxu0
        %v1759 = vadd.f32 %v1447, %v1758
        %v1760 = vpop.f32.mrb[0].mxu0
        %v1761 = vadd.f32 %v1451, %v1760
        %1762 = vmatprep.mubr.f32.mxu0 %v1368
        %1763 = vmatmul.mubr.f32.gmra.mrb[0].mxu0 %v1272
        %v1764 = vpop.f32.mrb[0].mxu0
        %v1765 = vadd.f32 %v1447, %v1764
        %v1766 = vpop.f32.mrb[0].mxu0
        %v1767 = vadd.f32 %v1451, %v1766
        %1768 = vmatprep.mubr.f32.mxu0 %v1369
        %1769 = vmatmul.mubr.f32.gmra.mrb[0].mxu0 %v1273
        %v1770 = vpop.f32.mrb[0].mxu0
        %v1771 = vadd.f32 %v1447, %v1770
        %v1772 = vpop.f32.mrb[0].mxu0
        %v1773 = vadd.f32 %v1451, %v1772
        %1774 = vdwg.mxu0
        %1775 = vmatprep.subr.mxu0 %v1435
        %1776 = vmatpush1.msra.mxu0 %v1434
        %1777 = vmatprep.subr.mxu0 %v1437
        %1778 = vmatpush1.msra.mxu0 %v1436
        %1779 = vmatprep.subr.mxu0 %v1439
        %1780 = vmatpush1.msra.mxu0 %v1438
        %1781 = vmatprep.subr.mxu0 %v1441
        %1782 = vmatpush1.msra.mxu0 %v1440
        %1783 = vmatprep.subr.mxu0 0.0
        %1784 = vmatpush1.msra.mxu0 0.0
        %1785 = vmatprep.subr.mxu0 0.0
        %1786 = vmatpush1.msra.mxu0 0.0
        %1787 = vmatprep.subr.mxu0 0.0
        %1788 = vmatpush1.msra.mxu0 0.0
        %1789 = vmatprep.subr.mxu0 0.0
        %1790 = vmatpush1.msra.mxu0 0.0
        %1791 = vmatprep.subr.mxu0 0.0
        %1792 = vmatpush1.msra.mxu0 0.0
        %1793 = vmatprep.subr.mxu0 0.0
        %1794 = vmatpush1.msra.mxu0 0.0
        %1795 = vmatprep.subr.mxu0 0.0
        %1796 = vmatpush1.msra.mxu0 0.0
        %1797 = vmatprep.subr.mxu0 0.0
        %1798 = vmatpush1.msra.mxu0 0.0
        %1799 = vmatprep.subr.mxu0 0.0
        %1800 = vmatpush1.msra.mxu0 0.0
        %1801 = vmatprep.subr.mxu0 0.0
        %1802 = vmatpush1.msra.mxu0 0.0
        %1803 = vmatprep.subr.mxu0 0.0
        %1804 = vmatpush1.msra.mxu0 0.0
        %1805 = vmatprep.subr.mxu0 0.0
        %1806 = vmatpush1.msra.mxu0 0.0
        %1807 = vmatprep.subr.mxu0 0.0
        %1808 = vmatpush1.msra.mxu0 0.0
        %1809 = vmatprep.subr.mxu0 0.0
        %1810 = vmatpush1.msra.mxu0 0.0
        %1811 = vmatprep.subr.mxu0 0.0
        %1812 = vmatpush1.msra.mxu0 0.0
        %1813 = vmatprep.subr.mxu0 0.0
        %1814 = vmatpush1.msra.mxu0 0.0
        %1815 = vmatprep.subr.mxu0 0.0
        %1816 = vmatpush1.msra.mxu0 0.0
        %1817 = vmatprep.subr.mxu0 0.0
        %1818 = vmatpush1.msra.mxu0 0.0
        %1819 = vmatprep.subr.mxu0 0.0
        %1820 = vmatpush1.msra.mxu0 0.0
        %1821 = vmatprep.subr.mxu0 0.0
        %1822 = vmatpush1.msra.mxu0 0.0
        %1823 = vmatprep.subr.mxu0 0.0
        %1824 = vmatpush1.msra.mxu0 0.0
        %1825 = vmatprep.subr.mxu0 0.0
        %1826 = vmatpush1.msra.mxu0 0.0
        %1827 = vmatprep.subr.mxu0 0.0
        %1828 = vmatpush1.msra.mxu0 0.0
        %1829 = vmatprep.subr.mxu0 0.0
        %1830 = vmatpush1.msra.mxu0 0.0
        %1831 = vmatprep.subr.mxu0 0.0
        %1832 = vmatpush1.msra.mxu0 0.0
        %1833 = vmatprep.subr.mxu0 0.0
        %1834 = vmatpush1.msra.mxu0 0.0
        %1835 = vmatprep.subr.mxu0 0.0
        %1836 = vmatpush1.msra.mxu0 0.0
        %1837 = vmatprep.subr.mxu0 0.0
        %1838 = vmatpush1.msra.mxu0 0.0
        %1839 = vmatprep.mubr.f32.mxu0 0.0
        %1840 = vmatmul.mubr.f32.gmra.mrb[0].mxu0 %v1454
        %v1841 = vpop.f32.mrb[0].mxu0
        %v1842 = vadd.f32 %v1585, %v1841
        %v1843 = vpop.f32.mrb[0].mxu0
        %v1844 = vadd.f32 %v1587, %v1843
        %1845 = vmatprep.mubr.f32.mxu0 0.0
        %1846 = vmatmul.mubr.f32.gmra.mrb[0].mxu0 %v1456
        %v1847 = vpop.f32.mrb[0].mxu0
        %v1848 = vadd.f32 %v1591, %v1847
        %v1849 = vpop.f32.mrb[0].mxu0
        %v1850 = vadd.f32 %v1593, %v1849
        %1851 = vmatprep.mubr.f32.mxu0 0.0
        %1852 = vmatmul.mubr.f32.gmra.mrb[0].mxu0 %v1458
        %v1853 = vpop.f32.mrb[0].mxu0
        %v1854 = vadd.f32 %v1597, %v1853
        %v1855 = vpop.f32.mrb[0].mxu0
        %v1856 = vadd.f32 %v1599, %v1855
        %1857 = vmatprep.mubr.f32.mxu0 0.0
        %1858 = vmatmul.mubr.f32.gmra.mrb[0].mxu0 %v1460
        %v1859 = vpop.f32.mrb[0].mxu0
        %v1860 = vadd.f32 %v1603, %v1859
        %v1861 = vpop.f32.mrb[0].mxu0
        %v1862 = vadd.f32 %v1605, %v1861
        %1863 = vmatprep.mubr.f32.mxu0 0.0
        %1864 = vmatmul.mubr.f32.gmra.mrb[0].mxu0 %v1462
        %v1865 = vpop.f32.mrb[0].mxu0
        %v1866 = vadd.f32 %v1609, %v1865
        %v1867 = vpop.f32.mrb[0].mxu0
        %v1868 = vadd.f32 %v1611, %v1867
        %1869 = vmatprep.mubr.f32.mxu0 0.0
        %1870 = vmatmul.mubr.f32.gmra.mrb[0].mxu0 %v1464
        %v1871 = vpop.f32.mrb[0].mxu0
        %v1872 = vadd.f32 %v1615, %v1871
        %v1873 = vpop.f32.mrb[0].mxu0
        %v1874 = vadd.f32 %v1617, %v1873
        %1875 = vmatprep.mubr.f32.mxu0 0.0
        %1876 = vmatmul.mubr.f32.gmra.mrb[0].mxu0 %v1466
        %v1877 = vpop.f32.mrb[0].mxu0
        %v1878 = vadd.f32 %v1621, %v1877
        %v1879 = vpop.f32.mrb[0].mxu0
        %v1880 = vadd.f32 %v1623, %v1879
        %1881 = vmatprep.mubr.f32.mxu0 0.0
        %1882 = vmatmul.mubr.f32.gmra.mrb[0].mxu0 %v1468
        %v1883 = vpop.f32.mrb[0].mxu0
        %v1884 = vadd.f32 %v1627, %v1883
        %v1885 = vpop.f32.mrb[0].mxu0
        %v1886 = vadd.f32 %v1629, %v1885
        %1887 = vmatprep.mubr.f32.mxu0 0.0
        %1888 = vmatmul.mubr.f32.gmra.mrb[0].mxu0 %v1470
        %v1889 = vpop.f32.mrb[0].mxu0
        %v1890 = vadd.f32 %v1633, %v1889
        %v1891 = vpop.f32.mrb[0].mxu0
        %v1892 = vadd.f32 %v1635, %v1891
        %1893 = vmatprep.mubr.f32.mxu0 0.0
        %1894 = vmatmul.mubr.f32.gmra.mrb[0].mxu0 %v1472
        %v1895 = vpop.f32.mrb[0].mxu0
        %v1896 = vadd.f32 %v1639, %v1895
        %v1897 = vpop.f32.mrb[0].mxu0
        %v1898 = vadd.f32 %v1641, %v1897
        %1899 = vmatprep.mubr.f32.mxu0 0.0
        %1900 = vmatmul.mubr.f32.gmra.mrb[0].mxu0 %v1474
        %v1901 = vpop.f32.mrb[0].mxu0
        %v1902 = vadd.f32 %v1645, %v1901
        %v1903 = vpop.f32.mrb[0].mxu0
        %v1904 = vadd.f32 %v1647, %v1903
        %1905 = vmatprep.mubr.f32.mxu0 0.0
        %1906 = vmatmul.mubr.f32.gmra.mrb[0].mxu0 %v1476
        %v1907 = vpop.f32.mrb[0].mxu0
        %v1908 = vadd.f32 %v1651, %v1907
        %v1909 = vpop.f32.mrb[0].mxu0
        %v1910 = vadd.f32 %v1653, %v1909
        %1911 = vmatprep.mubr.f32.mxu0 0.0
        %1912 = vmatmul.mubr.f32.gmra.mrb[0].mxu0 %v1478
        %v1913 = vpop.f32.mrb[0].mxu0
        %v1914 = vadd.f32 %v1657, %v1913
        %v1915 = vpop.f32.mrb[0].mxu0
        %v1916 = vadd.f32 %v1659, %v1915
        %1917 = vmatprep.mubr.f32.mxu0 0.0
        %1918 = vmatmul.mubr.f32.gmra.mrb[0].mxu0 %v1480
        %v1919 = vpop.f32.mrb[0].mxu0
        %v1920 = vadd.f32 %v1663, %v1919
        %v1921 = vpop.f32.mrb[0].mxu0
        %v1922 = vadd.f32 %v1665, %v1921
        %1923 = vmatprep.mubr.f32.mxu0 0.0
        %1924 = vmatmul.mubr.f32.gmra.mrb[0].mxu0 %v1482
        %v1925 = vpop.f32.mrb[0].mxu0
        %v1926 = vadd.f32 %v1669, %v1925
        %v1927 = vpop.f32.mrb[0].mxu0
        %v1928 = vadd.f32 %v1671, %v1927
        %1929 = vmatprep.mubr.f32.mxu0 0.0
        %1930 = vmatmul.mubr.f32.gmra.mrb[0].mxu0 %v1484
        %v1931 = vpop.f32.mrb[0].mxu0
        %v1932 = vadd.f32 %v1675, %v1931
        %v1933 = vpop.f32.mrb[0].mxu0
        %v1934 = vadd.f32 %v1677, %v1933
        %1935 = vmatprep.mubr.f32.mxu0 0.0
        %1936 = vmatmul.mubr.f32.gmra.mrb[0].mxu0 %v1486
        %v1937 = vpop.f32.mrb[0].mxu0
        %v1938 = vadd.f32 %v1681, %v1937
        %v1939 = vpop.f32.mrb[0].mxu0
        %v1940 = vadd.f32 %v1683, %v1939
        %1941 = vmatprep.mubr.f32.mxu0 0.0
        %1942 = vmatmul.mubr.f32.gmra.mrb[0].mxu0 %v1488
        %v1943 = vpop.f32.mrb[0].mxu0
        %v1944 = vadd.f32 %v1687, %v1943
        %v1945 = vpop.f32.mrb[0].mxu0
        %v1946 = vadd.f32 %v1689, %v1945
        %1947 = vmatprep.mubr.f32.mxu0 0.0
        %1948 = vmatmul.mubr.f32.gmra.mrb[0].mxu0 %v1490
        %v1949 = vpop.f32.mrb[0].mxu0
        %v1950 = vadd.f32 %v1693, %v1949
        %v1951 = vpop.f32.mrb[0].mxu0
        %v1952 = vadd.f32 %v1695, %v1951
        %1953 = vmatprep.mubr.f32.mxu0 0.0
        %1954 = vmatmul.mubr.f32.gmra.mrb[0].mxu0 %v1492
        %v1955 = vpop.f32.mrb[0].mxu0
        %v1956 = vadd.f32 %v1699, %v1955
        %v1957 = vpop.f32.mrb[0].mxu0
        %v1958 = vadd.f32 %v1701, %v1957
        %1959 = vmatprep.mubr.f32.mxu0 0.0
        %1960 = vmatmul.mubr.f32.gmra.mrb[0].mxu0 %v1494
        %v1961 = vpop.f32.mrb[0].mxu0
        %v1962 = vadd.f32 %v1705, %v1961
        %v1963 = vpop.f32.mrb[0].mxu0
        %v1964 = vadd.f32 %v1707, %v1963
        %1965 = vmatprep.mubr.f32.mxu0 0.0
        %1966 = vmatmul.mubr.f32.gmra.mrb[0].mxu0 %v1496
        %v1967 = vpop.f32.mrb[0].mxu0
        %v1968 = vadd.f32 %v1711, %v1967
        %v1969 = vpop.f32.mrb[0].mxu0
        %v1970 = vadd.f32 %v1713, %v1969
        %1971 = vmatprep.mubr.f32.mxu0 0.0
        %1972 = vmatmul.mubr.f32.gmra.mrb[0].mxu0 %v1498
        %v1973 = vpop.f32.mrb[0].mxu0
        %v1974 = vadd.f32 %v1717, %v1973
        %v1975 = vpop.f32.mrb[0].mxu0
        %v1976 = vadd.f32 %v1719, %v1975
        %1977 = vmatprep.mubr.f32.mxu0 0.0
        %1978 = vmatmul.mubr.f32.gmra.mrb[0].mxu0 %v1500
        %v1979 = vpop.f32.mrb[0].mxu0
        %v1980 = vadd.f32 %v1723, %v1979
        %v1981 = vpop.f32.mrb[0].mxu0
        %v1982 = vadd.f32 %v1725, %v1981
        %1983 = vmatprep.mubr.f32.mxu0 0.0
        %1984 = vmatmul.mubr.f32.gmra.mrb[0].mxu0 %v1502
        %v1985 = vpop.f32.mrb[0].mxu0
        %v1986 = vadd.f32 %v1729, %v1985
        %v1987 = vpop.f32.mrb[0].mxu0
        %v1988 = vadd.f32 %v1731, %v1987
        %1989 = vmatprep.mubr.f32.mxu0 0.0
        %1990 = vmatmul.mubr.f32.gmra.mrb[0].mxu0 %v1504
        %v1991 = vpop.f32.mrb[0].mxu0
        %v1992 = vadd.f32 %v1735, %v1991
        %v1993 = vpop.f32.mrb[0].mxu0
        %v1994 = vadd.f32 %v1737, %v1993
        %1995 = vmatprep.mubr.f32.mxu0 0.0
        %1996 = vmatmul.mubr.f32.gmra.mrb[0].mxu0 %v1506
        %v1997 = vpop.f32.mrb[0].mxu0
        %v1998 = vadd.f32 %v1741, %v1997
        %v1999 = vpop.f32.mrb[0].mxu0
        %v2000 = vadd.f32 %v1743, %v1999
        %2001 = vmatprep.mubr.f32.mxu0 0.0
        %2002 = vmatmul.mubr.f32.gmra.mrb[0].mxu0 %v1508
        %v2003 = vpop.f32.mrb[0].mxu0
        %v2004 = vadd.f32 %v1747, %v2003
        %v2005 = vpop.f32.mrb[0].mxu0
        %v2006 = vadd.f32 %v1749, %v2005
        %2007 = vmatprep.mubr.f32.mxu0 0.0
        %2008 = vmatmul.mubr.f32.gmra.mrb[0].mxu0 %v1510
        %v2009 = vpop.f32.mrb[0].mxu0
        %v2010 = vadd.f32 %v1753, %v2009
        %v2011 = vpop.f32.mrb[0].mxu0
        %v2012 = vadd.f32 %v1755, %v2011
        %2013 = vmatprep.mubr.f32.mxu0 0.0
        %2014 = vmatmul.mubr.f32.gmra.mrb[0].mxu0 %v1512
        %v2015 = vpop.f32.mrb[0].mxu0
        %v2016 = vadd.f32 %v1759, %v2015
        %v2017 = vpop.f32.mrb[0].mxu0
        %v2018 = vadd.f32 %v1761, %v2017
        %2019 = vmatprep.mubr.f32.mxu0 0.0
        %2020 = vmatmul.mubr.f32.gmra.mrb[0].mxu0 %v1514
        %v2021 = vpop.f32.mrb[0].mxu0
        %v2022 = vadd.f32 %v1765, %v2021
        %v2023 = vpop.f32.mrb[0].mxu0
        %v2024 = vadd.f32 %v1767, %v2023
        %2025 = vmatprep.mubr.f32.mxu0 0.0
        %2026 = vmatmul.mubr.f32.gmra.mrb[0].mxu0 %v1516
        %v2027 = vpop.f32.mrb[0].mxu0
        %v2028 = vadd.f32 %v1771, %v2027
        %v2029 = vpop.f32.mrb[0].mxu0
        %v2030 = vadd.f32 %v1773, %v2029
        %2031 = vdwg.mxu0
        %v2032 = vmax.f32 %v1842, 0.0
        %v2033 = vmax.f32 %v1844, 0.0
        %v2034 = vmax.f32 %v1848, 0.0
        %v2035 = vmax.f32 %v1850, 0.0
        %v2036 = vmax.f32 %v1854, 0.0
        %v2037 = vmax.f32 %v1856, 0.0
        %v2038 = vmax.f32 %v1860, 0.0
        %v2039 = vmax.f32 %v1862, 0.0
        %v2040 = vmax.f32 %v1866, 0.0
        %v2041 = vmax.f32 %v1868, 0.0
        %v2042 = vmax.f32 %v1872, 0.0
        %v2043 = vmax.f32 %v1874, 0.0
        %v2044 = vmax.f32 %v1878, 0.0
        %v2045 = vmax.f32 %v1880, 0.0
        %v2046 = vmax.f32 %v1884, 0.0
        %v2047 = vmax.f32 %v1886, 0.0
        %v2048 = vmax.f32 %v1890, 0.0
        %v2049 = vmax.f32 %v1892, 0.0
        %v2050 = vmax.f32 %v1896, 0.0
        %v2051 = vmax.f32 %v1898, 0.0
        %v2052 = vmax.f32 %v1902, 0.0
        %v2053 = vmax.f32 %v1904, 0.0
        %v2054 = vmax.f32 %v1908, 0.0
        %v2055 = vmax.f32 %v1910, 0.0
        %v2056 = vmax.f32 %v1914, 0.0
        %v2057 = vmax.f32 %v1916, 0.0
        %v2058 = vmax.f32 %v1920, 0.0
        %v2059 = vmax.f32 %v1922, 0.0
        %v2060 = vmax.f32 %v1926, 0.0
        %v2061 = vmax.f32 %v1928, 0.0
        %v2062 = vmax.f32 %v1932, 0.0
        %v2063 = vmax.f32 %v1934, 0.0
        %v2064 = vmax.f32 %v1938, 0.0
        %v2065 = vmax.f32 %v1940, 0.0
        %v2066 = vmax.f32 %v1944, 0.0
        %v2067 = vmax.f32 %v1946, 0.0
        %v2068 = vmax.f32 %v1950, 0.0
        %v2069 = vmax.f32 %v1952, 0.0
        %v2070 = vmax.f32 %v1956, 0.0
        %v2071 = vmax.f32 %v1958, 0.0
        %v2072 = vmax.f32 %v1962, 0.0
        %v2073 = vmax.f32 %v1964, 0.0
        %v2074 = vmax.f32 %v1968, 0.0
        %v2075 = vmax.f32 %v1970, 0.0
        %v2076 = vmax.f32 %v1974, 0.0
        %v2077 = vmax.f32 %v1976, 0.0
        %v2078 = vmax.f32 %v1980, 0.0
        %v2079 = vmax.f32 %v1982, 0.0
        %v2080 = vmax.f32 %v1986, 0.0
        %v2081 = vmax.f32 %v1988, 0.0
        %v2082 = vmax.f32 %v1992, 0.0
        %v2083 = vmax.f32 %v1994, 0.0
        %v2084 = vmax.f32 %v1998, 0.0
        %v2085 = vmax.f32 %v2000, 0.0
        %v2086 = vmax.f32 %v2004, 0.0
        %v2087 = vmax.f32 %v2006, 0.0
        %v2088 = vmax.f32 %v2010, 0.0
        %v2089 = vmax.f32 %v2012, 0.0
        %v2090 = vmax.f32 %v2016, 0.0
        %v2091 = vmax.f32 %v2018, 0.0
        %v2092 = vmax.f32 %v2022, 0.0
        %v2093 = vmax.f32 %v2024, 0.0
        %v2094 = vmax.f32 %v2028, 0.0
        %v2095 = vmax.f32 %v2030, 0.0
        %v2096 = vmax.f32 %v2032, %v2036
        %v2097 = vmax.f32 %v2034, %v2038
        %v2098 = vmax.f32 %v2036, %v2040
        %v2099 = vmax.f32 %v2038, %v2042
        %v2100 = vmax.f32 %v2040, %v2044
        %v2101 = vmax.f32 %v2042, %v2046
        %v2102 = vmax.f32 %v2044, %v2048
        %v2103 = vmax.f32 %v2046, %v2050
        %v2104 = vmax.f32 %v2048, %v2052
        %v2105 = vmax.f32 %v2050, %v2054
        %v2106 = vmax.f32 %v2052, %v2056
        %v2107 = vmax.f32 %v2054, %v2058
        %v2108 = vmax.f32 %v2056, %v2060
        %v2109 = vmax.f32 %v2058, %v2062
        %v2110 = vmax.f32 %v2060, %v2064
        %v2111 = vmax.f32 %v2062, %v2066
        %v2112 = vmax.f32 %v2064, %v2068
        %v2113 = vmax.f32 %v2066, %v2070
        %v2114 = vmax.f32 %v2068, %v2072
        %v2115 = vmax.f32 %v2070, %v2074
        %v2116 = vmax.f32 %v2072, %v2076
        %v2117 = vmax.f32 %v2074, %v2078
        %v2118 = vmax.f32 %v2076, %v2080
        %v2119 = vmax.f32 %v2078, %v2082
        %v2120 = vmax.f32 %v2080, %v2084
        %v2121 = vmax.f32 %v2082, %v2086
        %v2122 = vmax.f32 %v2084, %v2088
        %v2123 = vmax.f32 %v2086, %v2090
        %v2124 = vmax.f32 %v2088, %v2092
        %v2125 = vmax.f32 %v2090, %v2094
        %v2126 = vmax.f32 %v2092, 0.0
        %v2127 = vmax.f32 %v2094, 0.0
        %v2128 = vmax.f32 %v2096, %v2100
        %v2129 = vmax.f32 %v2097, %v2101
        %v2130 = vmax.f32 %v2098, %v2102
        %v2131 = vmax.f32 %v2099, %v2103
        %v2132 = vmax.f32 %v2100, %v2104
        %v2133 = vmax.f32 %v2101, %v2105
        %v2134 = vmax.f32 %v2102, %v2106
        %v2135 = vmax.f32 %v2103, %v2107
        %v2136 = vmax.f32 %v2104, %v2108
        %v2137 = vmax.f32 %v2105, %v2109
        %v2138 = vmax.f32 %v2106, %v2110
        %v2139 = vmax.f32 %v2107, %v2111
        %v2140 = vmax.f32 %v2108, %v2112
        %v2141 = vmax.f32 %v2109, %v2113
        %v2142 = vmax.f32 %v2110, %v2114
        %v2143 = vmax.f32 %v2111, %v2115
        %v2144 = vmax.f32 %v2112, %v2116
        %v2145 = vmax.f32 %v2113, %v2117
        %v2146 = vmax.f32 %v2114, %v2118
        %v2147 = vmax.f32 %v2115, %v2119
        %v2148 = vmax.f32 %v2116, %v2120
        %v2149 = vmax.f32 %v2117, %v2121
        %v2150 = vmax.f32 %v2118, %v2122
        %v2151 = vmax.f32 %v2119, %v2123
        %v2152 = vmax.f32 %v2120, %v2124
        %v2153 = vmax.f32 %v2121, %v2125
        %v2154 = vmax.f32 %v2122, %v2126
        %v2155 = vmax.f32 %v2123, %v2127
        %v2156 = vmax.f32 %v2124, 0.0
        %v2157 = vmax.f32 %v2125, 0.0
        %v2158 = vmax.f32 %v2126, 0.0
        %v2159 = vmax.f32 %v2127, 0.0
        %v2160 = vmax.f32 %v2128, %v2136
        %v2161 = vmax.f32 %v2129, %v2137
        %v2162 = vmax.f32 %v2130, %v2138
        %v2163 = vmax.f32 %v2131, %v2139
        %v2164 = vmax.f32 %v2132, %v2140
        %v2165 = vmax.f32 %v2133, %v2141
        %v2166 = vmax.f32 %v2134, %v2142
        %v2167 = vmax.f32 %v2135, %v2143
        %v2168 = vmax.f32 %v2136, %v2144
        %v2169 = vmax.f32 %v2137, %v2145
        %v2170 = vmax.f32 %v2138, %v2146
        %v2171 = vmax.f32 %v2139, %v2147
        %v2172 = vmax.f32 %v2140, %v2148
        %v2173 = vmax.f32 %v2141, %v2149
        %v2174 = vmax.f32 %v2142, %v2150
        %v2175 = vmax.f32 %v2143, %v2151
        %v2176 = vmax.f32 %v2144, %v2152
        %v2177 = vmax.f32 %v2145, %v2153
        %v2178 = vmax.f32 %v2146, %v2154
        %v2179 = vmax.f32 %v2147, %v2155
        %v2180 = vmax.f32 %v2148, %v2156
        %v2181 = vmax.f32 %v2149, %v2157
        %v2182 = vmax.f32 %v2150, %v2158
        %v2183 = vmax.f32 %v2151, %v2159
        %v2184 = vmax.f32 %v2152, 0.0
        %v2185 = vmax.f32 %v2153, 0.0
        %v2186 = vmax.f32 %v2154, 0.0
        %v2187 = vmax.f32 %v2155, 0.0
        %v2188 = vmax.f32 %v2156, 0.0
        %v2189 = vmax.f32 %v2157, 0.0
        %v2190 = vmax.f32 %v2158, 0.0
        %v2191 = vmax.f32 %v2159, 0.0
        %v2192 = vmax.f32 %v2160, %v2176
        %v2193 = vmax.f32 %v2161, %v2177
        %v2194 = vmax.f32 %v2162, %v2178
        %v2195 = vmax.f32 %v2163, %v2179
        %v2196 = vmax.f32 %v2164, %v2180
        %v2197 = vmax.f32 %v2165, %v2181
        %v2198 = vmax.f32 %v2166, %v2182
        %v2199 = vmax.f32 %v2167, %v2183
        %v2200 = vmax.f32 %v2168, %v2184
        %v2201 = vmax.f32 %v2169, %v2185
        %v2202 = vmax.f32 %v2170, %v2186
        %v2203 = vmax.f32 %v2171, %v2187
        %v2204 = vmax.f32 %v2172, %v2188
        %v2205 = vmax.f32 %v2173, %v2189
        %v2206 = vmax.f32 %v2174, %v2190
        %v2207 = vmax.f32 %v2175, %v2191
        %v2208 = vmax.f32 %v2176, 0.0
        %v2209 = vmax.f32 %v2177, 0.0
        %v2210 = vmax.f32 %v2178, 0.0
        %v2211 = vmax.f32 %v2179, 0.0
        %v2212 = vmax.f32 %v2180, 0.0
        %v2213 = vmax.f32 %v2181, 0.0
        %v2214 = vmax.f32 %v2182, 0.0
        %v2215 = vmax.f32 %v2183, 0.0
        %v2216 = vmax.f32 %v2184, 0.0
        %v2217 = vmax.f32 %v2185, 0.0
        %v2218 = vmax.f32 %v2186, 0.0
        %v2219 = vmax.f32 %v2187, 0.0
        %v2220 = vmax.f32 %v2188, 0.0
        %v2221 = vmax.f32 %v2189, 0.0
        %v2222 = vmax.f32 %v2190, 0.0
        %v2223 = vmax.f32 %v2191, 0.0
        %2224 = vst [vmem:[#allocation4 + $0x10] sm:$0xff] 0.0
        %2225 = vst [vmem:[#allocation4 + $0x18] sm:$0xff] 0.0
        %2226 = vst [vmem:[#allocation4 + $0x30] sm:$0xff] 0.0
        %2227 = vst [vmem:[#allocation4 + $0x38] sm:$0xff] 0.0
        %2228 = vst [vmem:[#allocation4 + $0x50] sm:$0xff] 0.0
        %2229 = vst [vmem:[#allocation4 + $0x58] sm:$0xff] 0.0
        %2230 = vst [vmem:[#allocation4 + $0x70] sm:$0xff] 0.0
        %2231 = vst [vmem:[#allocation4 + $0x78] sm:$0xff] 0.0
        %2232 = vst [vmem:[#allocation4 + $0x90] sm:$0xff] 0.0
        %2233 = vst [vmem:[#allocation4 + $0x98] sm:$0xff] 0.0
        %2234 = vst [vmem:[#allocation4 + $0xb0] sm:$0xff] 0.0
        %2235 = vst [vmem:[#allocation4 + $0xb8] sm:$0xff] 0.0
        %2236 = vst [vmem:[#allocation4 + $0xd0] sm:$0xff] 0.0
        %2237 = vst [vmem:[#allocation4 + $0xd8] sm:$0xff] 0.0
        %2238 = vst [vmem:[#allocation4 + $0xf0] sm:$0xff] 0.0
        %2239 = vst [vmem:[#allocation4 + $0xf8] sm:$0xff] 0.0
        %2240 = vst [vmem:[#allocation4 + $0x110] sm:$0xff] 0.0
        %2241 = vst [vmem:[#allocation4 + $0x118] sm:$0xff] 0.0
        %2242 = vst [vmem:[#allocation4 + $0x130] sm:$0xff] 0.0
        %2243 = vst [vmem:[#allocation4 + $0x138] sm:$0xff] 0.0
        %2244 = vst [vmem:[#allocation4 + $0x150] sm:$0xff] 0.0
        %2245 = vst [vmem:[#allocation4 + $0x158] sm:$0xff] 0.0
        %2246 = vst [vmem:[#allocation4 + $0x170] sm:$0xff] 0.0
        %2247 = vst [vmem:[#allocation4 + $0x178] sm:$0xff] 0.0
        %2248 = vst [vmem:[#allocation4 + $0x190] sm:$0xff] 0.0
        %2249 = vst [vmem:[#allocation4 + $0x198] sm:$0xff] 0.0
        %2250 = vst [vmem:[#allocation4 + $0x1b0] sm:$0xff] 0.0
        %2251 = vst [vmem:[#allocation4 + $0x1b8] sm:$0xff] 0.0
        %2252 = vst [vmem:[#allocation4 + $0x1d0] sm:$0xff] 0.0
        %2253 = vst [vmem:[#allocation4 + $0x1d8] sm:$0xff] 0.0
        %2254 = vst [vmem:[#allocation4 + $0x1f0] sm:$0xff] 0.0
        %2255 = vst [vmem:[#allocation4 + $0x1f8] sm:$0xff] 0.0
        %2256 = vst [vmem:[#allocation4] sm:$0xff] %v2033
        %2257 = vst [vmem:[#allocation4 + $0x8] sm:$0xff] %v2035
        %2258 = vst [vmem:[#allocation4 + $0x20] sm:$0xff] %v2037
        %2259 = vst [vmem:[#allocation4 + $0x28] sm:$0xff] %v2039
        %2260 = vst [vmem:[#allocation4 + $0x40] sm:$0xff] %v2041
        %2261 = vst [vmem:[#allocation4 + $0x48] sm:$0xff] %v2043
        %2262 = vst [vmem:[#allocation4 + $0x60] sm:$0xff] %v2045
        %2263 = vst [vmem:[#allocation4 + $0x68] sm:$0xff] %v2047
        %2264 = vst [vmem:[#allocation4 + $0x80] sm:$0xff] %v2049
        %2265 = vst [vmem:[#allocation4 + $0x88] sm:$0xff] %v2051
        %2266 = vst [vmem:[#allocation4 + $0xa0] sm:$0xff] %v2053
        %2267 = vst [vmem:[#allocation4 + $0xa8] sm:$0xff] %v2055
        %2268 = vst [vmem:[#allocation4 + $0xc0] sm:$0xff] %v2057
        %2269 = vst [vmem:[#allocation4 + $0xc8] sm:$0xff] %v2059
        %2270 = vst [vmem:[#allocation4 + $0xe0] sm:$0xff] %v2061
        %2271 = vst [vmem:[#allocation4 + $0xe8] sm:$0xff] %v2063
        %2272 = vst [vmem:[#allocation4 + $0x100] sm:$0xff] %v2065
        %2273 = vst [vmem:[#allocation4 + $0x108] sm:$0xff] %v2067
        %2274 = vst [vmem:[#allocation4 + $0x120] sm:$0xff] %v2069
        %2275 = vst [vmem:[#allocation4 + $0x128] sm:$0xff] %v2071
        %2276 = vst [vmem:[#allocation4 + $0x140] sm:$0xff] %v2073
        %2277 = vst [vmem:[#allocation4 + $0x148] sm:$0xff] %v2075
        %2278 = vst [vmem:[#allocation4 + $0x160] sm:$0xff] %v2077
        %2279 = vst [vmem:[#allocation4 + $0x168] sm:$0xff] %v2079
        %2280 = vst [vmem:[#allocation4 + $0x180] sm:$0xff] %v2081
        %2281 = vst [vmem:[#allocation4 + $0x188] sm:$0xff] %v2083
        %2282 = vst [vmem:[#allocation4 + $0x1a0] sm:$0xff] %v2085
        %2283 = vst [vmem:[#allocation4 + $0x1a8] sm:$0xff] %v2087
        %2284 = vst [vmem:[#allocation4 + $0x1c0] sm:$0xff] %v2089
        %2285 = vst [vmem:[#allocation4 + $0x1c8] sm:$0xff] %v2091
        %2286 = vst [vmem:[#allocation4 + $0x1e0] sm:$0xff] %v2093
        %2287 = vst [vmem:[#allocation4 + $0x1e8] sm:$0xff] %v2095
        %v2288 = vld [vmem:[#allocation4] sm:$0xff]
        %v2289 = vld [vmem:[#allocation4 + $0x8] sm:$0xff]
        %v2290 = vld [vmem:[#allocation4 + $0x10] sm:$0xff]
        %v2291 = vld [vmem:[#allocation4 + $0x20] sm:$0xff]
        %v2292 = vld [vmem:[#allocation4 + $0x28] sm:$0xff]
        %v2293 = vld [vmem:[#allocation4 + $0x30] sm:$0xff]
        %v2294 = vld [vmem:[#allocation4 + $0x40] sm:$0xff]
        %v2295 = vld [vmem:[#allocation4 + $0x48] sm:$0xff]
        %v2296 = vld [vmem:[#allocation4 + $0x50] sm:$0xff]
        %v2297 = vld [vmem:[#allocation4 + $0x60] sm:$0xff]
        %v2298 = vld [vmem:[#allocation4 + $0x68] sm:$0xff]
        %v2299 = vld [vmem:[#allocation4 + $0x70] sm:$0xff]
        %v2300 = vld [vmem:[#allocation4 + $0x80] sm:$0xff]
        %v2301 = vld [vmem:[#allocation4 + $0x88] sm:$0xff]
        %v2302 = vld [vmem:[#allocation4 + $0x90] sm:$0xff]
        %v2303 = vld [vmem:[#allocation4 + $0xa0] sm:$0xff]
        %v2304 = vld [vmem:[#allocation4 + $0xa8] sm:$0xff]
        %v2305 = vld [vmem:[#allocation4 + $0xb0] sm:$0xff]
        %v2306 = vld [vmem:[#allocation4 + $0xc0] sm:$0xff]
        %v2307 = vld [vmem:[#allocation4 + $0xc8] sm:$0xff]
        %v2308 = vld [vmem:[#allocation4 + $0xd0] sm:$0xff]
        %v2309 = vld [vmem:[#allocation4 + $0xe0] sm:$0xff]
        %v2310 = vld [vmem:[#allocation4 + $0xe8] sm:$0xff]
        %v2311 = vld [vmem:[#allocation4 + $0xf0] sm:$0xff]
        %v2312 = vld [vmem:[#allocation4 + $0x100] sm:$0xff]
        %v2313 = vld [vmem:[#allocation4 + $0x108] sm:$0xff]
        %v2314 = vld [vmem:[#allocation4 + $0x110] sm:$0xff]
        %v2315 = vld [vmem:[#allocation4 + $0x120] sm:$0xff]
        %v2316 = vld [vmem:[#allocation4 + $0x128] sm:$0xff]
        %v2317 = vld [vmem:[#allocation4 + $0x130] sm:$0xff]
        %v2318 = vld [vmem:[#allocation4 + $0x140] sm:$0xff]
        %v2319 = vld [vmem:[#allocation4 + $0x148] sm:$0xff]
        %v2320 = vld [vmem:[#allocation4 + $0x150] sm:$0xff]
        %v2321 = vld [vmem:[#allocation4 + $0x160] sm:$0xff]
        %v2322 = vld [vmem:[#allocation4 + $0x168] sm:$0xff]
        %v2323 = vld [vmem:[#allocation4 + $0x170] sm:$0xff]
        %v2324 = vld [vmem:[#allocation4 + $0x180] sm:$0xff]
        %v2325 = vld [vmem:[#allocation4 + $0x188] sm:$0xff]
        %v2326 = vld [vmem:[#allocation4 + $0x190] sm:$0xff]
        %v2327 = vld [vmem:[#allocation4 + $0x1a0] sm:$0xff]
        %v2328 = vld [vmem:[#allocation4 + $0x1a8] sm:$0xff]
        %v2329 = vld [vmem:[#allocation4 + $0x1b0] sm:$0xff]
        %v2330 = vld [vmem:[#allocation4 + $0x1c0] sm:$0xff]
        %v2331 = vld [vmem:[#allocation4 + $0x1c8] sm:$0xff]
        %v2332 = vld [vmem:[#allocation4 + $0x1d0] sm:$0xff]
        %v2333 = vld [vmem:[#allocation4 + $0x1e0] sm:$0xff]
        %v2334 = vld [vmem:[#allocation4 + $0x1e8] sm:$0xff]
        %v2335 = vld [vmem:[#allocation4 + $0x1f0] sm:$0xff]
        %v2384 = vrot.slane %v2288, 1
        %v2385 = vrot.slane %v2289, 1
        %v2386 = vsel %vm379, %v2384, %v2385
        %v2387 = vrot.slane %v2290, 1
        %v2388 = vsel %vm379, %v2385, %v2387
        %v2389 = vrot.slane %v2291, 1
        %v2390 = vrot.slane %v2292, 1
        %v2391 = vsel %vm379, %v2389, %v2390
        %v2392 = vrot.slane %v2293, 1
        %v2393 = vsel %vm379, %v2390, %v2392
        %v2394 = vrot.slane %v2294, 1
        %v2395 = vrot.slane %v2295, 1
        %v2396 = vsel %vm379, %v2394, %v2395
        %v2397 = vrot.slane %v2296, 1
        %v2398 = vsel %vm379, %v2395, %v2397
        %v2399 = vrot.slane %v2297, 1
        %v2400 = vrot.slane %v2298, 1
        %v2401 = vsel %vm379, %v2399, %v2400
        %v2402 = vrot.slane %v2299, 1
        %v2403 = vsel %vm379, %v2400, %v2402
        %v2404 = vrot.slane %v2300, 1
        %v2405 = vrot.slane %v2301, 1
        %v2406 = vsel %vm379, %v2404, %v2405
        %v2407 = vrot.slane %v2302, 1
        %v2408 = vsel %vm379, %v2405, %v2407
        %v2409 = vrot.slane %v2303, 1
        %v2410 = vrot.slane %v2304, 1
        %v2411 = vsel %vm379, %v2409, %v2410
        %v2412 = vrot.slane %v2305, 1
        %v2413 = vsel %vm379, %v2410, %v2412
        %v2414 = vrot.slane %v2306, 1
        %v2415 = vrot.slane %v2307, 1
        %v2416 = vsel %vm379, %v2414, %v2415
        %v2417 = vrot.slane %v2308, 1
        %v2418 = vsel %vm379, %v2415, %v2417
        %v2419 = vrot.slane %v2309, 1
        %v2420 = vrot.slane %v2310, 1
        %v2421 = vsel %vm379, %v2419, %v2420
        %v2422 = vrot.slane %v2311, 1
        %v2423 = vsel %vm379, %v2420, %v2422
        %v2424 = vrot.slane %v2312, 1
        %v2425 = vrot.slane %v2313, 1
        %v2426 = vsel %vm379, %v2424, %v2425
        %v2427 = vrot.slane %v2314, 1
        %v2428 = vsel %vm379, %v2425, %v2427
        %v2429 = vrot.slane %v2315, 1
        %v2430 = vrot.slane %v2316, 1
        %v2431 = vsel %vm379, %v2429, %v2430
        %v2432 = vrot.slane %v2317, 1
        %v2433 = vsel %vm379, %v2430, %v2432
        %v2434 = vrot.slane %v2318, 1
        %v2435 = vrot.slane %v2319, 1
        %v2436 = vsel %vm379, %v2434, %v2435
        %v2437 = vrot.slane %v2320, 1
        %v2438 = vsel %vm379, %v2435, %v2437
        %v2439 = vrot.slane %v2321, 1
        %v2440 = vrot.slane %v2322, 1
        %v2441 = vsel %vm379, %v2439, %v2440
        %v2442 = vrot.slane %v2323, 1
        %v2443 = vsel %vm379, %v2440, %v2442
        %v2444 = vrot.slane %v2324, 1
        %v2445 = vrot.slane %v2325, 1
        %v2446 = vsel %vm379, %v2444, %v2445
        %v2447 = vrot.slane %v2326, 1
        %v2448 = vsel %vm379, %v2445, %v2447
        %v2449 = vrot.slane %v2327, 1
        %v2450 = vrot.slane %v2328, 1
        %v2451 = vsel %vm379, %v2449, %v2450
        %v2452 = vrot.slane %v2329, 1
        %v2453 = vsel %vm379, %v2450, %v2452
        %v2454 = vrot.slane %v2330, 1
        %v2455 = vrot.slane %v2331, 1
        %v2456 = vsel %vm379, %v2454, %v2455
        %v2457 = vrot.slane %v2332, 1
        %v2458 = vsel %vm379, %v2455, %v2457
        %v2459 = vrot.slane %v2333, 1
        %v2460 = vrot.slane %v2334, 1
        %v2461 = vsel %vm379, %v2459, %v2460
        %v2462 = vrot.slane %v2335, 1
        %v2463 = vsel %vm379, %v2460, %v2462
        %v2496 = vmax.f32 %v2033, %v2386
        %v2497 = vmax.f32 %v2035, %v2388
        %v2498 = vmax.f32 %v2037, %v2391
        %v2499 = vmax.f32 %v2039, %v2393
        %v2500 = vmax.f32 %v2041, %v2396
        %v2501 = vmax.f32 %v2043, %v2398
        %v2502 = vmax.f32 %v2045, %v2401
        %v2503 = vmax.f32 %v2047, %v2403
        %v2504 = vmax.f32 %v2049, %v2406
        %v2505 = vmax.f32 %v2051, %v2408
        %v2506 = vmax.f32 %v2053, %v2411
        %v2507 = vmax.f32 %v2055, %v2413
        %v2508 = vmax.f32 %v2057, %v2416
        %v2509 = vmax.f32 %v2059, %v2418
        %v2510 = vmax.f32 %v2061, %v2421
        %v2511 = vmax.f32 %v2063, %v2423
        %v2512 = vmax.f32 %v2065, %v2426
        %v2513 = vmax.f32 %v2067, %v2428
        %v2514 = vmax.f32 %v2069, %v2431
        %v2515 = vmax.f32 %v2071, %v2433
        %v2516 = vmax.f32 %v2073, %v2436
        %v2517 = vmax.f32 %v2075, %v2438
        %v2518 = vmax.f32 %v2077, %v2441
        %v2519 = vmax.f32 %v2079, %v2443
        %v2520 = vmax.f32 %v2081, %v2446
        %v2521 = vmax.f32 %v2083, %v2448
        %v2522 = vmax.f32 %v2085, %v2451
        %v2523 = vmax.f32 %v2087, %v2453
        %v2524 = vmax.f32 %v2089, %v2456
        %v2525 = vmax.f32 %v2091, %v2458
        %v2526 = vmax.f32 %v2093, %v2461
        %v2527 = vmax.f32 %v2095, %v2463
        %2528 = vst [vmem:[#allocation4] sm:$0xff] %v2496
        %2529 = vst [vmem:[#allocation4 + $0x8] sm:$0xff] %v2497
        %2530 = vst [vmem:[#allocation4 + $0x20] sm:$0xff] %v2498
        %2531 = vst [vmem:[#allocation4 + $0x28] sm:$0xff] %v2499
        %2532 = vst [vmem:[#allocation4 + $0x40] sm:$0xff] %v2500
        %2533 = vst [vmem:[#allocation4 + $0x48] sm:$0xff] %v2501
        %2534 = vst [vmem:[#allocation4 + $0x60] sm:$0xff] %v2502
        %2535 = vst [vmem:[#allocation4 + $0x68] sm:$0xff] %v2503
        %2536 = vst [vmem:[#allocation4 + $0x80] sm:$0xff] %v2504
        %2537 = vst [vmem:[#allocation4 + $0x88] sm:$0xff] %v2505
        %2538 = vst [vmem:[#allocation4 + $0xa0] sm:$0xff] %v2506
        %2539 = vst [vmem:[#allocation4 + $0xa8] sm:$0xff] %v2507
        %2540 = vst [vmem:[#allocation4 + $0xc0] sm:$0xff] %v2508
        %2541 = vst [vmem:[#allocation4 + $0xc8] sm:$0xff] %v2509
        %2542 = vst [vmem:[#allocation4 + $0xe0] sm:$0xff] %v2510
        %2543 = vst [vmem:[#allocation4 + $0xe8] sm:$0xff] %v2511
        %2544 = vst [vmem:[#allocation4 + $0x100] sm:$0xff] %v2512
        %2545 = vst [vmem:[#allocation4 + $0x108] sm:$0xff] %v2513
        %2546 = vst [vmem:[#allocation4 + $0x120] sm:$0xff] %v2514
        %2547 = vst [vmem:[#allocation4 + $0x128] sm:$0xff] %v2515
        %2548 = vst [vmem:[#allocation4 + $0x140] sm:$0xff] %v2516
        %2549 = vst [vmem:[#allocation4 + $0x148] sm:$0xff] %v2517
        %2550 = vst [vmem:[#allocation4 + $0x160] sm:$0xff] %v2518
        %2551 = vst [vmem:[#allocation4 + $0x168] sm:$0xff] %v2519
        %2552 = vst [vmem:[#allocation4 + $0x180] sm:$0xff] %v2520
        %2553 = vst [vmem:[#allocation4 + $0x188] sm:$0xff] %v2521
        %2554 = vst [vmem:[#allocation4 + $0x1a0] sm:$0xff] %v2522
        %2555 = vst [vmem:[#allocation4 + $0x1a8] sm:$0xff] %v2523
        %2556 = vst [vmem:[#allocation4 + $0x1c0] sm:$0xff] %v2524
        %2557 = vst [vmem:[#allocation4 + $0x1c8] sm:$0xff] %v2525
        %2558 = vst [vmem:[#allocation4 + $0x1e0] sm:$0xff] %v2526
        %2559 = vst [vmem:[#allocation4 + $0x1e8] sm:$0xff] %v2527
        %v2560 = vld [vmem:[#allocation4] sm:$0xff]
        %v2561 = vld [vmem:[#allocation4 + $0x8] sm:$0xff]
        %v2562 = vld [vmem:[#allocation4 + $0x10] sm:$0xff]
        %v2563 = vld [vmem:[#allocation4 + $0x20] sm:$0xff]
        %v2564 = vld [vmem:[#allocation4 + $0x28] sm:$0xff]
        %v2565 = vld [vmem:[#allocation4 + $0x30] sm:$0xff]
        %v2566 = vld [vmem:[#allocation4 + $0x40] sm:$0xff]
        %v2567 = vld [vmem:[#allocation4 + $0x48] sm:$0xff]
        %v2568 = vld [vmem:[#allocation4 + $0x50] sm:$0xff]
        %v2569 = vld [vmem:[#allocation4 + $0x60] sm:$0xff]
        %v2570 = vld [vmem:[#allocation4 + $0x68] sm:$0xff]
        %v2571 = vld [vmem:[#allocation4 + $0x70] sm:$0xff]
        %v2572 = vld [vmem:[#allocation4 + $0x80] sm:$0xff]
        %v2573 = vld [vmem:[#allocation4 + $0x88] sm:$0xff]
        %v2574 = vld [vmem:[#allocation4 + $0x90] sm:$0xff]
        %v2575 = vld [vmem:[#allocation4 + $0xa0] sm:$0xff]
        %v2576 = vld [vmem:[#allocation4 + $0xa8] sm:$0xff]
        %v2577 = vld [vmem:[#allocation4 + $0xb0] sm:$0xff]
        %v2578 = vld [vmem:[#allocation4 + $0xc0] sm:$0xff]
        %v2579 = vld [vmem:[#allocation4 + $0xc8] sm:$0xff]
        %v2580 = vld [vmem:[#allocation4 + $0xd0] sm:$0xff]
        %v2581 = vld [vmem:[#allocation4 + $0xe0] sm:$0xff]
        %v2582 = vld [vmem:[#allocation4 + $0xe8] sm:$0xff]
        %v2583 = vld [vmem:[#allocation4 + $0xf0] sm:$0xff]
        %v2584 = vld [vmem:[#allocation4 + $0x100] sm:$0xff]
        %v2585 = vld [vmem:[#allocation4 + $0x108] sm:$0xff]
        %v2586 = vld [vmem:[#allocation4 + $0x110] sm:$0xff]
        %v2587 = vld [vmem:[#allocation4 + $0x120] sm:$0xff]
        %v2588 = vld [vmem:[#allocation4 + $0x128] sm:$0xff]
        %v2589 = vld [vmem:[#allocation4 + $0x130] sm:$0xff]
        %v2590 = vld [vmem:[#allocation4 + $0x140] sm:$0xff]
        %v2591 = vld [vmem:[#allocation4 + $0x148] sm:$0xff]
        %v2592 = vld [vmem:[#allocation4 + $0x150] sm:$0xff]
        %v2593 = vld [vmem:[#allocation4 + $0x160] sm:$0xff]
        %v2594 = vld [vmem:[#allocation4 + $0x168] sm:$0xff]
        %v2595 = vld [vmem:[#allocation4 + $0x170] sm:$0xff]
        %v2596 = vld [vmem:[#allocation4 + $0x180] sm:$0xff]
        %v2597 = vld [vmem:[#allocation4 + $0x188] sm:$0xff]
        %v2598 = vld [vmem:[#allocation4 + $0x190] sm:$0xff]
        %v2599 = vld [vmem:[#allocation4 + $0x1a0] sm:$0xff]
        %v2600 = vld [vmem:[#allocation4 + $0x1a8] sm:$0xff]
        %v2601 = vld [vmem:[#allocation4 + $0x1b0] sm:$0xff]
        %v2602 = vld [vmem:[#allocation4 + $0x1c0] sm:$0xff]
        %v2603 = vld [vmem:[#allocation4 + $0x1c8] sm:$0xff]
        %v2604 = vld [vmem:[#allocation4 + $0x1d0] sm:$0xff]
        %v2605 = vld [vmem:[#allocation4 + $0x1e0] sm:$0xff]
        %v2606 = vld [vmem:[#allocation4 + $0x1e8] sm:$0xff]
        %v2607 = vld [vmem:[#allocation4 + $0x1f0] sm:$0xff]
        %v2656 = vrot.slane %v2560, 2
        %v2657 = vrot.slane %v2561, 2
        %v2658 = vsel %vm460, %v2656, %v2657
        %v2659 = vrot.slane %v2562, 2
        %v2660 = vsel %vm460, %v2657, %v2659
        %v2661 = vrot.slane %v2563, 2
        %v2662 = vrot.slane %v2564, 2
        %v2663 = vsel %vm460, %v2661, %v2662
        %v2664 = vrot.slane %v2565, 2
        %v2665 = vsel %vm460, %v2662, %v2664
        %v2666 = vrot.slane %v2566, 2
        %v2667 = vrot.slane %v2567, 2
        %v2668 = vsel %vm460, %v2666, %v2667
        %v2669 = vrot.slane %v2568, 2
        %v2670 = vsel %vm460, %v2667, %v2669
        %v2671 = vrot.slane %v2569, 2
        %v2672 = vrot.slane %v2570, 2
        %v2673 = vsel %vm460, %v2671, %v2672
        %v2674 = vrot.slane %v2571, 2
        %v2675 = vsel %vm460, %v2672, %v2674
        %v2676 = vrot.slane %v2572, 2
        %v2677 = vrot.slane %v2573, 2
        %v2678 = vsel %vm460, %v2676, %v2677
        %v2679 = vrot.slane %v2574, 2
        %v2680 = vsel %vm460, %v2677, %v2679
        %v2681 = vrot.slane %v2575, 2
        %v2682 = vrot.slane %v2576, 2
        %v2683 = vsel %vm460, %v2681, %v2682
        %v2684 = vrot.slane %v2577, 2
        %v2685 = vsel %vm460, %v2682, %v2684
        %v2686 = vrot.slane %v2578, 2
        %v2687 = vrot.slane %v2579, 2
        %v2688 = vsel %vm460, %v2686, %v2687
        %v2689 = vrot.slane %v2580, 2
        %v2690 = vsel %vm460, %v2687, %v2689
        %v2691 = vrot.slane %v2581, 2
        %v2692 = vrot.slane %v2582, 2
        %v2693 = vsel %vm460, %v2691, %v2692
        %v2694 = vrot.slane %v2583, 2
        %v2695 = vsel %vm460, %v2692, %v2694
        %v2696 = vrot.slane %v2584, 2
        %v2697 = vrot.slane %v2585, 2
        %v2698 = vsel %vm460, %v2696, %v2697
        %v2699 = vrot.slane %v2586, 2
        %v2700 = vsel %vm460, %v2697, %v2699
        %v2701 = vrot.slane %v2587, 2
        %v2702 = vrot.slane %v2588, 2
        %v2703 = vsel %vm460, %v2701, %v2702
        %v2704 = vrot.slane %v2589, 2
        %v2705 = vsel %vm460, %v2702, %v2704
        %v2706 = vrot.slane %v2590, 2
        %v2707 = vrot.slane %v2591, 2
        %v2708 = vsel %vm460, %v2706, %v2707
        %v2709 = vrot.slane %v2592, 2
        %v2710 = vsel %vm460, %v2707, %v2709
        %v2711 = vrot.slane %v2593, 2
        %v2712 = vrot.slane %v2594, 2
        %v2713 = vsel %vm460, %v2711, %v2712
        %v2714 = vrot.slane %v2595, 2
        %v2715 = vsel %vm460, %v2712, %v2714
        %v2716 = vrot.slane %v2596, 2
        %v2717 = vrot.slane %v2597, 2
        %v2718 = vsel %vm460, %v2716, %v2717
        %v2719 = vrot.slane %v2598, 2
        %v2720 = vsel %vm460, %v2717, %v2719
        %v2721 = vrot.slane %v2599, 2
        %v2722 = vrot.slane %v2600, 2
        %v2723 = vsel %vm460, %v2721, %v2722
        %v2724 = vrot.slane %v2601, 2
        %v2725 = vsel %vm460, %v2722, %v2724
        %v2726 = vrot.slane %v2602, 2
        %v2727 = vrot.slane %v2603, 2
        %v2728 = vsel %vm460, %v2726, %v2727
        %v2729 = vrot.slane %v2604, 2
        %v2730 = vsel %vm460, %v2727, %v2729
        %v2731 = vrot.slane %v2605, 2
        %v2732 = vrot.slane %v2606, 2
        %v2733 = vsel %vm460, %v2731, %v2732
        %v2734 = vrot.slane %v2607, 2
        %v2735 = vsel %vm460, %v2732, %v2734
        %v2768 = vmax.f32 %v2496, %v2658
        %v2769 = vmax.f32 %v2497, %v2660
        %v2770 = vmax.f32 %v2498, %v2663
        %v2771 = vmax.f32 %v2499, %v2665
        %v2772 = vmax.f32 %v2500, %v2668
        %v2773 = vmax.f32 %v2501, %v2670
        %v2774 = vmax.f32 %v2502, %v2673
        %v2775 = vmax.f32 %v2503, %v2675
        %v2776 = vmax.f32 %v2504, %v2678
        %v2777 = vmax.f32 %v2505, %v2680
        %v2778 = vmax.f32 %v2506, %v2683
        %v2779 = vmax.f32 %v2507, %v2685
        %v2780 = vmax.f32 %v2508, %v2688
        %v2781 = vmax.f32 %v2509, %v2690
        %v2782 = vmax.f32 %v2510, %v2693
        %v2783 = vmax.f32 %v2511, %v2695
        %v2784 = vmax.f32 %v2512, %v2698
        %v2785 = vmax.f32 %v2513, %v2700
        %v2786 = vmax.f32 %v2514, %v2703
        %v2787 = vmax.f32 %v2515, %v2705
        %v2788 = vmax.f32 %v2516, %v2708
        %v2789 = vmax.f32 %v2517, %v2710
        %v2790 = vmax.f32 %v2518, %v2713
        %v2791 = vmax.f32 %v2519, %v2715
        %v2792 = vmax.f32 %v2520, %v2718
        %v2793 = vmax.f32 %v2521, %v2720
        %v2794 = vmax.f32 %v2522, %v2723
        %v2795 = vmax.f32 %v2523, %v2725
        %v2796 = vmax.f32 %v2524, %v2728
        %v2797 = vmax.f32 %v2525, %v2730
        %v2798 = vmax.f32 %v2526, %v2733
        %v2799 = vmax.f32 %v2527, %v2735
        %2800 = vst [vmem:[#allocation4] sm:$0xff] %v2768
        %2801 = vst [vmem:[#allocation4 + $0x8] sm:$0xff] %v2769
        %2802 = vst [vmem:[#allocation4 + $0x20] sm:$0xff] %v2770
        %2803 = vst [vmem:[#allocation4 + $0x28] sm:$0xff] %v2771
        %2804 = vst [vmem:[#allocation4 + $0x40] sm:$0xff] %v2772
        %2805 = vst [vmem:[#allocation4 + $0x48] sm:$0xff] %v2773
        %2806 = vst [vmem:[#allocation4 + $0x60] sm:$0xff] %v2774
        %2807 = vst [vmem:[#allocation4 + $0x68] sm:$0xff] %v2775
        %2808 = vst [vmem:[#allocation4 + $0x80] sm:$0xff] %v2776
        %2809 = vst [vmem:[#allocation4 + $0x88] sm:$0xff] %v2777
        %2810 = vst [vmem:[#allocation4 + $0xa0] sm:$0xff] %v2778
        %2811 = vst [vmem:[#allocation4 + $0xa8] sm:$0xff] %v2779
        %2812 = vst [vmem:[#allocation4 + $0xc0] sm:$0xff] %v2780
        %2813 = vst [vmem:[#allocation4 + $0xc8] sm:$0xff] %v2781
        %2814 = vst [vmem:[#allocation4 + $0xe0] sm:$0xff] %v2782
        %2815 = vst [vmem:[#allocation4 + $0xe8] sm:$0xff] %v2783
        %2816 = vst [vmem:[#allocation4 + $0x100] sm:$0xff] %v2784
        %2817 = vst [vmem:[#allocation4 + $0x108] sm:$0xff] %v2785
        %2818 = vst [vmem:[#allocation4 + $0x120] sm:$0xff] %v2786
        %2819 = vst [vmem:[#allocation4 + $0x128] sm:$0xff] %v2787
        %2820 = vst [vmem:[#allocation4 + $0x140] sm:$0xff] %v2788
        %2821 = vst [vmem:[#allocation4 + $0x148] sm:$0xff] %v2789
        %2822 = vst [vmem:[#allocation4 + $0x160] sm:$0xff] %v2790
        %2823 = vst [vmem:[#allocation4 + $0x168] sm:$0xff] %v2791
        %2824 = vst [vmem:[#allocation4 + $0x180] sm:$0xff] %v2792
        %2825 = vst [vmem:[#allocation4 + $0x188] sm:$0xff] %v2793
        %2826 = vst [vmem:[#allocation4 + $0x1a0] sm:$0xff] %v2794
        %2827 = vst [vmem:[#allocation4 + $0x1a8] sm:$0xff] %v2795
        %2828 = vst [vmem:[#allocation4 + $0x1c0] sm:$0xff] %v2796
        %2829 = vst [vmem:[#allocation4 + $0x1c8] sm:$0xff] %v2797
        %2830 = vst [vmem:[#allocation4 + $0x1e0] sm:$0xff] %v2798
        %2831 = vst [vmem:[#allocation4 + $0x1e8] sm:$0xff] %v2799
        %v2832 = vld [vmem:[#allocation4] sm:$0xff]
        %v2833 = vld [vmem:[#allocation4 + $0x8] sm:$0xff]
        %v2834 = vld [vmem:[#allocation4 + $0x10] sm:$0xff]
        %v2835 = vld [vmem:[#allocation4 + $0x20] sm:$0xff]
        %v2836 = vld [vmem:[#allocation4 + $0x28] sm:$0xff]
        %v2837 = vld [vmem:[#allocation4 + $0x30] sm:$0xff]
        %v2838 = vld [vmem:[#allocation4 + $0x40] sm:$0xff]
        %v2839 = vld [vmem:[#allocation4 + $0x48] sm:$0xff]
        %v2840 = vld [vmem:[#allocation4 + $0x50] sm:$0xff]
        %v2841 = vld [vmem:[#allocation4 + $0x60] sm:$0xff]
        %v2842 = vld [vmem:[#allocation4 + $0x68] sm:$0xff]
        %v2843 = vld [vmem:[#allocation4 + $0x70] sm:$0xff]
        %v2844 = vld [vmem:[#allocation4 + $0x80] sm:$0xff]
        %v2845 = vld [vmem:[#allocation4 + $0x88] sm:$0xff]
        %v2846 = vld [vmem:[#allocation4 + $0x90] sm:$0xff]
        %v2847 = vld [vmem:[#allocation4 + $0xa0] sm:$0xff]
        %v2848 = vld [vmem:[#allocation4 + $0xa8] sm:$0xff]
        %v2849 = vld [vmem:[#allocation4 + $0xb0] sm:$0xff]
        %v2850 = vld [vmem:[#allocation4 + $0xc0] sm:$0xff]
        %v2851 = vld [vmem:[#allocation4 + $0xc8] sm:$0xff]
        %v2852 = vld [vmem:[#allocation4 + $0xd0] sm:$0xff]
        %v2853 = vld [vmem:[#allocation4 + $0xe0] sm:$0xff]
        %v2854 = vld [vmem:[#allocation4 + $0xe8] sm:$0xff]
        %v2855 = vld [vmem:[#allocation4 + $0xf0] sm:$0xff]
        %v2856 = vld [vmem:[#allocation4 + $0x100] sm:$0xff]
        %v2857 = vld [vmem:[#allocation4 + $0x108] sm:$0xff]
        %v2858 = vld [vmem:[#allocation4 + $0x110] sm:$0xff]
        %v2859 = vld [vmem:[#allocation4 + $0x120] sm:$0xff]
        %v2860 = vld [vmem:[#allocation4 + $0x128] sm:$0xff]
        %v2861 = vld [vmem:[#allocation4 + $0x130] sm:$0xff]
        %v2862 = vld [vmem:[#allocation4 + $0x140] sm:$0xff]
        %v2863 = vld [vmem:[#allocation4 + $0x148] sm:$0xff]
        %v2864 = vld [vmem:[#allocation4 + $0x150] sm:$0xff]
        %v2865 = vld [vmem:[#allocation4 + $0x160] sm:$0xff]
        %v2866 = vld [vmem:[#allocation4 + $0x168] sm:$0xff]
        %v2867 = vld [vmem:[#allocation4 + $0x170] sm:$0xff]
        %v2868 = vld [vmem:[#allocation4 + $0x180] sm:$0xff]
        %v2869 = vld [vmem:[#allocation4 + $0x188] sm:$0xff]
        %v2870 = vld [vmem:[#allocation4 + $0x190] sm:$0xff]
        %v2871 = vld [vmem:[#allocation4 + $0x1a0] sm:$0xff]
        %v2872 = vld [vmem:[#allocation4 + $0x1a8] sm:$0xff]
        %v2873 = vld [vmem:[#allocation4 + $0x1b0] sm:$0xff]
        %v2874 = vld [vmem:[#allocation4 + $0x1c0] sm:$0xff]
        %v2875 = vld [vmem:[#allocation4 + $0x1c8] sm:$0xff]
        %v2876 = vld [vmem:[#allocation4 + $0x1d0] sm:$0xff]
        %v2877 = vld [vmem:[#allocation4 + $0x1e0] sm:$0xff]
        %v2878 = vld [vmem:[#allocation4 + $0x1e8] sm:$0xff]
        %v2879 = vld [vmem:[#allocation4 + $0x1f0] sm:$0xff]
        %vm2928 = vcmask 1043456
        %v2929 = vrot.slane %v2832, 4
        %v2930 = vrot.slane %v2833, 4
        %v2931 = vsel %vm2928, %v2929, %v2930
        %v2932 = vrot.slane %v2834, 4
        %v2933 = vsel %vm2928, %v2930, %v2932
        %v2934 = vrot.slane %v2835, 4
        %v2935 = vrot.slane %v2836, 4
        %v2936 = vsel %vm2928, %v2934, %v2935
        %v2937 = vrot.slane %v2837, 4
        %v2938 = vsel %vm2928, %v2935, %v2937
        %v2939 = vrot.slane %v2838, 4
        %v2940 = vrot.slane %v2839, 4
        %v2941 = vsel %vm2928, %v2939, %v2940
        %v2942 = vrot.slane %v2840, 4
        %v2943 = vsel %vm2928, %v2940, %v2942
        %v2944 = vrot.slane %v2841, 4
        %v2945 = vrot.slane %v2842, 4
        %v2946 = vsel %vm2928, %v2944, %v2945
        %v2947 = vrot.slane %v2843, 4
        %v2948 = vsel %vm2928, %v2945, %v2947
        %v2949 = vrot.slane %v2844, 4
        %v2950 = vrot.slane %v2845, 4
        %v2951 = vsel %vm2928, %v2949, %v2950
        %v2952 = vrot.slane %v2846, 4
        %v2953 = vsel %vm2928, %v2950, %v2952
        %v2954 = vrot.slane %v2847, 4
        %v2955 = vrot.slane %v2848, 4
        %v2956 = vsel %vm2928, %v2954, %v2955
        %v2957 = vrot.slane %v2849, 4
        %v2958 = vsel %vm2928, %v2955, %v2957
        %v2959 = vrot.slane %v2850, 4
        %v2960 = vrot.slane %v2851, 4
        %v2961 = vsel %vm2928, %v2959, %v2960
        %v2962 = vrot.slane %v2852, 4
        %v2963 = vsel %vm2928, %v2960, %v2962
        %v2964 = vrot.slane %v2853, 4
        %v2965 = vrot.slane %v2854, 4
        %v2966 = vsel %vm2928, %v2964, %v2965
        %v2967 = vrot.slane %v2855, 4
        %v2968 = vsel %vm2928, %v2965, %v2967
        %v2969 = vrot.slane %v2856, 4
        %v2970 = vrot.slane %v2857, 4
        %v2971 = vsel %vm2928, %v2969, %v2970
        %v2972 = vrot.slane %v2858, 4
        %v2973 = vsel %vm2928, %v2970, %v2972
        %v2974 = vrot.slane %v2859, 4
        %v2975 = vrot.slane %v2860, 4
        %v2976 = vsel %vm2928, %v2974, %v2975
        %v2977 = vrot.slane %v2861, 4
        %v2978 = vsel %vm2928, %v2975, %v2977
        %v2979 = vrot.slane %v2862, 4
        %v2980 = vrot.slane %v2863, 4
        %v2981 = vsel %vm2928, %v2979, %v2980
        %v2982 = vrot.slane %v2864, 4
        %v2983 = vsel %vm2928, %v2980, %v2982
        %v2984 = vrot.slane %v2865, 4
        %v2985 = vrot.slane %v2866, 4
        %v2986 = vsel %vm2928, %v2984, %v2985
        %v2987 = vrot.slane %v2867, 4
        %v2988 = vsel %vm2928, %v2985, %v2987
        %v2989 = vrot.slane %v2868, 4
        %v2990 = vrot.slane %v2869, 4
        %v2991 = vsel %vm2928, %v2989, %v2990
        %v2992 = vrot.slane %v2870, 4
        %v2993 = vsel %vm2928, %v2990, %v2992
        %v2994 = vrot.slane %v2871, 4
        %v2995 = vrot.slane %v2872, 4
        %v2996 = vsel %vm2928, %v2994, %v2995
        %v2997 = vrot.slane %v2873, 4
        %v2998 = vsel %vm2928, %v2995, %v2997
        %v2999 = vrot.slane %v2874, 4
        %v3000 = vrot.slane %v2875, 4
        %v3001 = vsel %vm2928, %v2999, %v3000
        %v3002 = vrot.slane %v2876, 4
        %v3003 = vsel %vm2928, %v3000, %v3002
        %v3004 = vrot.slane %v2877, 4
        %v3005 = vrot.slane %v2878, 4
        %v3006 = vsel %vm2928, %v3004, %v3005
        %v3007 = vrot.slane %v2879, 4
        %v3008 = vsel %vm2928, %v3005, %v3007
        %v3041 = vmax.f32 %v2768, %v2931
        %v3042 = vmax.f32 %v2769, %v2933
        %v3043 = vmax.f32 %v2770, %v2936
        %v3044 = vmax.f32 %v2771, %v2938
        %v3045 = vmax.f32 %v2772, %v2941
        %v3046 = vmax.f32 %v2773, %v2943
        %v3047 = vmax.f32 %v2774, %v2946
        %v3048 = vmax.f32 %v2775, %v2948
        %v3049 = vmax.f32 %v2776, %v2951
        %v3050 = vmax.f32 %v2777, %v2953
        %v3051 = vmax.f32 %v2778, %v2956
        %v3052 = vmax.f32 %v2779, %v2958
        %v3053 = vmax.f32 %v2780, %v2961
        %v3054 = vmax.f32 %v2781, %v2963
        %v3055 = vmax.f32 %v2782, %v2966
        %v3056 = vmax.f32 %v2783, %v2968
        %v3057 = vmax.f32 %v2784, %v2971
        %v3058 = vmax.f32 %v2785, %v2973
        %v3059 = vmax.f32 %v2786, %v2976
        %v3060 = vmax.f32 %v2787, %v2978
        %v3061 = vmax.f32 %v2788, %v2981
        %v3062 = vmax.f32 %v2789, %v2983
        %v3063 = vmax.f32 %v2790, %v2986
        %v3064 = vmax.f32 %v2791, %v2988
        %v3065 = vmax.f32 %v2792, %v2991
        %v3066 = vmax.f32 %v2793, %v2993
        %v3067 = vmax.f32 %v2794, %v2996
        %v3068 = vmax.f32 %v2795, %v2998
        %v3069 = vmax.f32 %v2796, %v3001
        %v3070 = vmax.f32 %v2797, %v3003
        %v3071 = vmax.f32 %v2798, %v3006
        %v3072 = vmax.f32 %v2799, %v3008
        %3073 = vst [vmem:[#allocation4] sm:$0xff] %v3041
        %3074 = vst [vmem:[#allocation4 + $0x8] sm:$0xff] %v3042
        %3075 = vst [vmem:[#allocation4 + $0x20] sm:$0xff] %v3043
        %3076 = vst [vmem:[#allocation4 + $0x28] sm:$0xff] %v3044
        %3077 = vst [vmem:[#allocation4 + $0x40] sm:$0xff] %v3045
        %3078 = vst [vmem:[#allocation4 + $0x48] sm:$0xff] %v3046
        %3079 = vst [vmem:[#allocation4 + $0x60] sm:$0xff] %v3047
        %3080 = vst [vmem:[#allocation4 + $0x68] sm:$0xff] %v3048
        %3081 = vst [vmem:[#allocation4 + $0x80] sm:$0xff] %v3049
        %3082 = vst [vmem:[#allocation4 + $0x88] sm:$0xff] %v3050
        %3083 = vst [vmem:[#allocation4 + $0xa0] sm:$0xff] %v3051
        %3084 = vst [vmem:[#allocation4 + $0xa8] sm:$0xff] %v3052
        %3085 = vst [vmem:[#allocation4 + $0xc0] sm:$0xff] %v3053
        %3086 = vst [vmem:[#allocation4 + $0xc8] sm:$0xff] %v3054
        %3087 = vst [vmem:[#allocation4 + $0xe0] sm:$0xff] %v3055
        %3088 = vst [vmem:[#allocation4 + $0xe8] sm:$0xff] %v3056
        %3089 = vst [vmem:[#allocation4 + $0x100] sm:$0xff] %v3057
        %3090 = vst [vmem:[#allocation4 + $0x108] sm:$0xff] %v3058
        %3091 = vst [vmem:[#allocation4 + $0x120] sm:$0xff] %v3059
        %3092 = vst [vmem:[#allocation4 + $0x128] sm:$0xff] %v3060
        %3093 = vst [vmem:[#allocation4 + $0x140] sm:$0xff] %v3061
        %3094 = vst [vmem:[#allocation4 + $0x148] sm:$0xff] %v3062
        %3095 = vst [vmem:[#allocation4 + $0x160] sm:$0xff] %v3063
        %3096 = vst [vmem:[#allocation4 + $0x168] sm:$0xff] %v3064
        %3097 = vst [vmem:[#allocation4 + $0x180] sm:$0xff] %v3065
        %3098 = vst [vmem:[#allocation4 + $0x188] sm:$0xff] %v3066
        %3099 = vst [vmem:[#allocation4 + $0x1a0] sm:$0xff] %v3067
        %3100 = vst [vmem:[#allocation4 + $0x1a8] sm:$0xff] %v3068
        %3101 = vst [vmem:[#allocation4 + $0x1c0] sm:$0xff] %v3069
        %3102 = vst [vmem:[#allocation4 + $0x1c8] sm:$0xff] %v3070
        %3103 = vst [vmem:[#allocation4 + $0x1e0] sm:$0xff] %v3071
        %3104 = vst [vmem:[#allocation4 + $0x1e8] sm:$0xff] %v3072
        %v3105 = vld [vmem:[#allocation4 + $0x8] sm:$0xff]
        %v3106 = vld [vmem:[#allocation4 + $0x10] sm:$0xff]
        %v3107 = vld [vmem:[#allocation4 + $0x28] sm:$0xff]
        %v3108 = vld [vmem:[#allocation4 + $0x30] sm:$0xff]
        %v3109 = vld [vmem:[#allocation4 + $0x48] sm:$0xff]
        %v3110 = vld [vmem:[#allocation4 + $0x50] sm:$0xff]
        %v3111 = vld [vmem:[#allocation4 + $0x68] sm:$0xff]
        %v3112 = vld [vmem:[#allocation4 + $0x70] sm:$0xff]
        %v3113 = vld [vmem:[#allocation4 + $0x88] sm:$0xff]
        %v3114 = vld [vmem:[#allocation4 + $0x90] sm:$0xff]
        %v3115 = vld [vmem:[#allocation4 + $0xa8] sm:$0xff]
        %v3116 = vld [vmem:[#allocation4 + $0xb0] sm:$0xff]
        %v3117 = vld [vmem:[#allocation4 + $0xc8] sm:$0xff]
        %v3118 = vld [vmem:[#allocation4 + $0xd0] sm:$0xff]
        %v3119 = vld [vmem:[#allocation4 + $0xe8] sm:$0xff]
        %v3120 = vld [vmem:[#allocation4 + $0xf0] sm:$0xff]
        %v3121 = vld [vmem:[#allocation4 + $0x108] sm:$0xff]
        %v3122 = vld [vmem:[#allocation4 + $0x110] sm:$0xff]
        %v3123 = vld [vmem:[#allocation4 + $0x128] sm:$0xff]
        %v3124 = vld [vmem:[#allocation4 + $0x130] sm:$0xff]
        %v3125 = vld [vmem:[#allocation4 + $0x148] sm:$0xff]
        %v3126 = vld [vmem:[#allocation4 + $0x150] sm:$0xff]
        %v3127 = vld [vmem:[#allocation4 + $0x168] sm:$0xff]
        %v3128 = vld [vmem:[#allocation4 + $0x170] sm:$0xff]
        %v3129 = vld [vmem:[#allocation4 + $0x188] sm:$0xff]
        %v3130 = vld [vmem:[#allocation4 + $0x190] sm:$0xff]
        %v3131 = vld [vmem:[#allocation4 + $0x1a8] sm:$0xff]
        %v3132 = vld [vmem:[#allocation4 + $0x1b0] sm:$0xff]
        %v3133 = vld [vmem:[#allocation4 + $0x1c8] sm:$0xff]
        %v3134 = vld [vmem:[#allocation4 + $0x1d0] sm:$0xff]
        %v3135 = vld [vmem:[#allocation4 + $0x1e8] sm:$0xff]
        %v3136 = vld [vmem:[#allocation4 + $0x1f0] sm:$0xff]
        %v3137 = vmax.f32 %v3041, %v3105
        %v3138 = vmax.f32 %v3042, %v3106
        %v3139 = vmax.f32 %v3043, %v3107
        %v3140 = vmax.f32 %v3044, %v3108
        %v3141 = vmax.f32 %v3045, %v3109
        %v3142 = vmax.f32 %v3046, %v3110
        %v3143 = vmax.f32 %v3047, %v3111
        %v3144 = vmax.f32 %v3048, %v3112
        %v3145 = vmax.f32 %v3049, %v3113
        %v3146 = vmax.f32 %v3050, %v3114
        %v3147 = vmax.f32 %v3051, %v3115
        %v3148 = vmax.f32 %v3052, %v3116
        %v3149 = vmax.f32 %v3053, %v3117
        %v3150 = vmax.f32 %v3054, %v3118
        %v3151 = vmax.f32 %v3055, %v3119
        %v3152 = vmax.f32 %v3056, %v3120
        %v3153 = vmax.f32 %v3057, %v3121
        %v3154 = vmax.f32 %v3058, %v3122
        %v3155 = vmax.f32 %v3059, %v3123
        %v3156 = vmax.f32 %v3060, %v3124
        %v3157 = vmax.f32 %v3061, %v3125
        %v3158 = vmax.f32 %v3062, %v3126
        %v3159 = vmax.f32 %v3063, %v3127
        %v3160 = vmax.f32 %v3064, %v3128
        %v3161 = vmax.f32 %v3065, %v3129
        %v3162 = vmax.f32 %v3066, %v3130
        %v3163 = vmax.f32 %v3067, %v3131
        %v3164 = vmax.f32 %v3068, %v3132
        %v3165 = vmax.f32 %v3069, %v3133
        %v3166 = vmax.f32 %v3070, %v3134
        %v3167 = vmax.f32 %v3071, %v3135
        %v3168 = vmax.f32 %v3072, %v3136
        %v3169 = vadd.f32 %v2192, %v3137
        %v3170 = vadd.f32 %v2193, %v3138
        %v3171 = vadd.f32 %v2194, %v3139
        %v3172 = vadd.f32 %v2195, %v3140
        %v3173 = vadd.f32 %v2196, %v3141
        %v3174 = vadd.f32 %v2197, %v3142
        %v3175 = vadd.f32 %v2198, %v3143
        %v3176 = vadd.f32 %v2199, %v3144
        %v3177 = vadd.f32 %v2200, %v3145
        %v3178 = vadd.f32 %v2201, %v3146
        %v3179 = vadd.f32 %v2202, %v3147
        %v3180 = vadd.f32 %v2203, %v3148
        %v3181 = vadd.f32 %v2204, %v3149
        %v3182 = vadd.f32 %v2205, %v3150
        %v3183 = vadd.f32 %v2206, %v3151
        %v3184 = vadd.f32 %v2207, %v3152
        %v3185 = vadd.f32 %v2208, %v3153
        %v3186 = vadd.f32 %v2209, %v3154
        %v3187 = vadd.f32 %v2210, %v3155
        %v3188 = vadd.f32 %v2211, %v3156
        %v3189 = vadd.f32 %v2212, %v3157
        %v3190 = vadd.f32 %v2213, %v3158
        %v3191 = vadd.f32 %v2214, %v3159
        %v3192 = vadd.f32 %v2215, %v3160
        %v3193 = vadd.f32 %v2216, %v3161
        %v3194 = vadd.f32 %v2217, %v3162
        %v3195 = vadd.f32 %v2218, %v3163
        %v3196 = vadd.f32 %v2219, %v3164
        %v3197 = vadd.f32 %v2220, %v3165
        %v3198 = vadd.f32 %v2221, %v3166
        %v3199 = vadd.f32 %v2222, %v3167
        %v3200 = vadd.f32 %v2223, %v3168
        %3201 = vst [vmem:[#allocation2] sm:$0xff] 0.0
        %3202 = vst [vmem:[#allocation2 + $0x8] sm:$0xff] 0.0
        %3203 = vst [vmem:[#allocation2 + $0x10] sm:$0xff] 0.0
        %3204 = vst [vmem:[#allocation2 + $0x18] sm:$0xff] 0.0
        %3205 = vst [vmem:[#allocation2 + $0x20] sm:$0xff] 0.0
        %3206 = vst [vmem:[#allocation2 + $0x28] sm:$0xff] 0.0
        %3207 = vst [vmem:[#allocation2 + $0x30] sm:$0xff] 0.0
        %3208 = vst [vmem:[#allocation2 + $0x38] sm:$0xff] 0.0
        %3209 = vst [vmem:[#allocation2 + $0x40] sm:$0xff] 0.0
        %3210 = vst [vmem:[#allocation2 + $0x48] sm:$0xff] 0.0
        %3211 = vst [vmem:[#allocation2 + $0x50] sm:$0xff] 0.0
        %3212 = vst [vmem:[#allocation2 + $0x58] sm:$0xff] 0.0
        %3213 = vst [vmem:[#allocation2 + $0x60] sm:$0xff] 0.0
        %3214 = vst [vmem:[#allocation2 + $0x68] sm:$0xff] 0.0
        %3215 = vst [vmem:[#allocation2 + $0x70] sm:$0xff] 0.0
        %3216 = vst [vmem:[#allocation2 + $0x78] sm:$0xff] 0.0
        %3217 = vst [vmem:[#allocation2 + $0x80] sm:$0xff] 0.0
        %3218 = vst [vmem:[#allocation2 + $0x88] sm:$0xff] 0.0
        %3219 = vst [vmem:[#allocation2 + $0x90] sm:$0xff] 0.0
        %3220 = vst [vmem:[#allocation2 + $0x98] sm:$0xff] 0.0
        %3221 = vst [vmem:[#allocation2 + $0xa0] sm:$0xff] 0.0
        %3222 = vst [vmem:[#allocation2 + $0xa8] sm:$0xff] 0.0
        %3223 = vst [vmem:[#allocation2 + $0xb0] sm:$0xff] 0.0
        %3224 = vst [vmem:[#allocation2 + $0xb8] sm:$0xff] 0.0
        %3225 = vst [vmem:[#allocation2 + $0xc0] sm:$0xff] 0.0
        %3226 = vst [vmem:[#allocation2 + $0xc8] sm:$0xff] 0.0
        %3227 = vst [vmem:[#allocation2 + $0xd0] sm:$0xff] 0.0
        %3228 = vst [vmem:[#allocation2 + $0xd8] sm:$0xff] 0.0
        %3229 = vst [vmem:[#allocation2 + $0xe0] sm:$0xff] 0.0
        %3230 = vst [vmem:[#allocation2 + $0xe8] sm:$0xff] 0.0
        %3231 = vst [vmem:[#allocation2 + $0xf0] sm:$0xff] 0.0
        %3232 = vst [vmem:[#allocation2 + $0xf8] sm:$0xff] 0.0
        %3233 = vst [vmem:[#allocation2 + $0x100] sm:$0xff] 0.0
        %3234 = vst [vmem:[#allocation2 + $0x108] sm:$0xff] 0.0
        %3235 = vst [vmem:[#allocation2 + $0x110] sm:$0xff] 0.0
        %3236 = vst [vmem:[#allocation2 + $0x118] sm:$0xff] 0.0
        %3237 = vst [vmem:[#allocation2 + $0x120] sm:$0xff] 0.0
        %3238 = vst [vmem:[#allocation2 + $0x128] sm:$0xff] 0.0
        %3239 = vst [vmem:[#allocation2 + $0x130] sm:$0xff] 0.0
        %3240 = vst [vmem:[#allocation2 + $0x138] sm:$0xff] 0.0
        %3241 = vst [vmem:[#allocation2 + $0x140] sm:$0xff] 0.0
        %3242 = vst [vmem:[#allocation2 + $0x148] sm:$0xff] 0.0
        %3243 = vst [vmem:[#allocation2 + $0x150] sm:$0xff] 0.0
        %3244 = vst [vmem:[#allocation2 + $0x158] sm:$0xff] 0.0
        %3245 = vst [vmem:[#allocation2 + $0x160] sm:$0xff] 0.0
        %3246 = vst [vmem:[#allocation2 + $0x168] sm:$0xff] 0.0
        %3247 = vst [vmem:[#allocation2 + $0x170] sm:$0xff] 0.0
        %3248 = vst [vmem:[#allocation2 + $0x178] sm:$0xff] 0.0
        %3249 = vst [vmem:[#allocation2 + $0x180] sm:$0xff] 0.0
        %3250 = vst [vmem:[#allocation2 + $0x188] sm:$0xff] 0.0
        %3251 = vst [vmem:[#allocation2 + $0x190] sm:$0xff] 0.0
        %3252 = vst [vmem:[#allocation2 + $0x198] sm:$0xff] 0.0
        %3253 = vst [vmem:[#allocation2 + $0x1a0] sm:$0xff] 0.0
        %3254 = vst [vmem:[#allocation2 + $0x1a8] sm:$0xff] 0.0
        %3255 = vst [vmem:[#allocation2 + $0x1b0] sm:$0xff] 0.0
        %3256 = vst [vmem:[#allocation2 + $0x1b8] sm:$0xff] 0.0
        %3257 = vst [vmem:[#allocation2 + $0x1c0] sm:$0xff] 0.0
        %3258 = vst [vmem:[#allocation2 + $0x1c8] sm:$0xff] 0.0
        %3259 = vst [vmem:[#allocation2 + $0x1d0] sm:$0xff] 0.0
        %3260 = vst [vmem:[#allocation2 + $0x1d8] sm:$0xff] 0.0
        %3261 = vst [vmem:[#allocation2 + $0x1e0] sm:$0xff] 0.0
        %3262 = vst [vmem:[#allocation2 + $0x1e8] sm:$0xff] 0.0
        %3263 = vst [vmem:[#allocation2 + $0x1f0] sm:$0xff] 0.0
        %3264 = vst [vmem:[#allocation2 + $0x1f8] sm:$0xff] 0.0
        %3265 = vst [vmem:[#allocation2 + $0x200] sm:$0xff] 0.0
        %3266 = vst [vmem:[#allocation2 + $0x208] sm:$0xff] 0.0
        %3267 = vst [vmem:[#allocation2 + $0x210] sm:$0xff] 0.0
        %3268 = vst [vmem:[#allocation2 + $0x218] sm:$0xff] 0.0
        %3269 = vst [vmem:[#allocation2 + $0x220] sm:$0xff] 0.0
        %3270 = vst [vmem:[#allocation2 + $0x228] sm:$0xff] 0.0
        %3271 = vst [vmem:[#allocation2 + $0x230] sm:$0xff] 0.0
        %3272 = vst [vmem:[#allocation2 + $0x238] sm:$0xff] 0.0
        %s3273 = scalar_lea.vmem [#allocation2], 32
        %3274 = vst [vmem:[%s3273 + $0x8] sm:$0xff] %v3169
        %3275 = vst [vmem:[%s3273 + $0x10] sm:$0xff] %v3170
        %3276 = vst [vmem:[%s3273 + $0x28] sm:$0xff] %v3171
        %3277 = vst [vmem:[%s3273 + $0x30] sm:$0xff] %v3172
        %3278 = vst [vmem:[%s3273 + $0x48] sm:$0xff] %v3173
        %3279 = vst [vmem:[%s3273 + $0x50] sm:$0xff] %v3174
        %3280 = vst [vmem:[%s3273 + $0x68] sm:$0xff] %v3175
        %3281 = vst [vmem:[%s3273 + $0x70] sm:$0xff] %v3176
        %3282 = vst [vmem:[%s3273 + $0x88] sm:$0xff] %v3177
        %3283 = vst [vmem:[%s3273 + $0x90] sm:$0xff] %v3178
        %3284 = vst [vmem:[%s3273 + $0xa8] sm:$0xff] %v3179
        %3285 = vst [vmem:[%s3273 + $0xb0] sm:$0xff] %v3180
        %3286 = vst [vmem:[%s3273 + $0xc8] sm:$0xff] %v3181
        %3287 = vst [vmem:[%s3273 + $0xd0] sm:$0xff] %v3182
        %3288 = vst [vmem:[%s3273 + $0xe8] sm:$0xff] %v3183
        %3289 = vst [vmem:[%s3273 + $0xf0] sm:$0xff] %v3184
        %3290 = vst [vmem:[%s3273 + $0x108] sm:$0xff] %v3185
        %3291 = vst [vmem:[%s3273 + $0x110] sm:$0xff] %v3186
        %3292 = vst [vmem:[%s3273 + $0x128] sm:$0xff] %v3187
        %3293 = vst [vmem:[%s3273 + $0x130] sm:$0xff] %v3188
        %3294 = vst [vmem:[%s3273 + $0x148] sm:$0xff] %v3189
        %3295 = vst [vmem:[%s3273 + $0x150] sm:$0xff] %v3190
        %3296 = vst [vmem:[%s3273 + $0x168] sm:$0xff] %v3191
        %3297 = vst [vmem:[%s3273 + $0x170] sm:$0xff] %v3192
        %3298 = vst [vmem:[%s3273 + $0x188] sm:$0xff] %v3193
        %3299 = vst [vmem:[%s3273 + $0x190] sm:$0xff] %v3194
        %3300 = vst [vmem:[%s3273 + $0x1a8] sm:$0xff] %v3195
        %3301 = vst [vmem:[%s3273 + $0x1b0] sm:$0xff] %v3196
        %3302 = vst [vmem:[%s3273 + $0x1c8] sm:$0xff] %v3197
        %3303 = vst [vmem:[%s3273 + $0x1d0] sm:$0xff] %v3198
        %3304 = vst [vmem:[%s3273 + $0x1e8] sm:$0xff] %v3199
        %3305 = vst [vmem:[%s3273 + $0x1f0] sm:$0xff] %v3200
        %v3306 = vld [vmem:[#allocation2] sm:$0xff]
        %v3307 = vld [vmem:[#allocation2 + $0x8] sm:$0xff]
        %v3308 = vld [vmem:[#allocation2 + $0x10] sm:$0xff]
        %v3309 = vld [vmem:[#allocation2 + $0x18] sm:$0xff]
        %v3310 = vld [vmem:[#allocation2 + $0x20] sm:$0xff]
        %v3311 = vld [vmem:[#allocation2 + $0x28] sm:$0xff]
        %v3312 = vld [vmem:[#allocation2 + $0x30] sm:$0xff]
        %v3313 = vld [vmem:[#allocation2 + $0x38] sm:$0xff]
        %v3314 = vld [vmem:[#allocation2 + $0x40] sm:$0xff]
        %v3315 = vld [vmem:[#allocation2 + $0x48] sm:$0xff]
        %v3316 = vld [vmem:[#allocation2 + $0x50] sm:$0xff]
        %v3317 = vld [vmem:[#allocation2 + $0x58] sm:$0xff]
        %v3318 = vld [vmem:[#allocation2 + $0x60] sm:$0xff]
        %v3319 = vld [vmem:[#allocation2 + $0x68] sm:$0xff]
        %v3320 = vld [vmem:[#allocation2 + $0x70] sm:$0xff]
        %v3321 = vld [vmem:[#allocation2 + $0x78] sm:$0xff]
        %v3322 = vld [vmem:[#allocation2 + $0x80] sm:$0xff]
        %v3323 = vld [vmem:[#allocation2 + $0x88] sm:$0xff]
        %v3324 = vld [vmem:[#allocation2 + $0x90] sm:$0xff]
        %v3325 = vld [vmem:[#allocation2 + $0x98] sm:$0xff]
        %v3326 = vld [vmem:[#allocation2 + $0xa0] sm:$0xff]
        %v3327 = vld [vmem:[#allocation2 + $0xa8] sm:$0xff]
        %v3328 = vld [vmem:[#allocation2 + $0xb0] sm:$0xff]
        %v3329 = vld [vmem:[#allocation2 + $0xb8] sm:$0xff]
        %v3330 = vld [vmem:[#allocation2 + $0xc0] sm:$0xff]
        %v3331 = vld [vmem:[#allocation2 + $0xc8] sm:$0xff]
        %v3332 = vld [vmem:[#allocation2 + $0xd0] sm:$0xff]
        %v3333 = vld [vmem:[#allocation2 + $0xd8] sm:$0xff]
        %v3334 = vld [vmem:[#allocation2 + $0xe0] sm:$0xff]
        %v3335 = vld [vmem:[#allocation2 + $0xe8] sm:$0xff]
        %v3336 = vld [vmem:[#allocation2 + $0xf0] sm:$0xff]
        %v3337 = vld [vmem:[#allocation2 + $0xf8] sm:$0xff]
        %v3338 = vld [vmem:[#allocation2 + $0x100] sm:$0xff]
        %v3339 = vld [vmem:[#allocation2 + $0x108] sm:$0xff]
        %v3340 = vld [vmem:[#allocation2 + $0x110] sm:$0xff]
        %v3341 = vld [vmem:[#allocation2 + $0x118] sm:$0xff]
        %v3342 = vld [vmem:[#allocation2 + $0x120] sm:$0xff]
        %v3343 = vld [vmem:[#allocation2 + $0x128] sm:$0xff]
        %v3344 = vld [vmem:[#allocation2 + $0x130] sm:$0xff]
        %v3345 = vld [vmem:[#allocation2 + $0x138] sm:$0xff]
        %v3346 = vld [vmem:[#allocation2 + $0x140] sm:$0xff]
        %v3347 = vld [vmem:[#allocation2 + $0x148] sm:$0xff]
        %v3348 = vld [vmem:[#allocation2 + $0x150] sm:$0xff]
        %v3349 = vld [vmem:[#allocation2 + $0x158] sm:$0xff]
        %v3350 = vld [vmem:[#allocation2 + $0x160] sm:$0xff]
        %v3351 = vld [vmem:[#allocation2 + $0x168] sm:$0xff]
        %v3352 = vld [vmem:[#allocation2 + $0x170] sm:$0xff]
        %v3353 = vld [vmem:[#allocation2 + $0x178] sm:$0xff]
        %v3354 = vld [vmem:[#allocation2 + $0x180] sm:$0xff]
        %v3355 = vld [vmem:[#allocation2 + $0x188] sm:$0xff]
        %v3356 = vld [vmem:[#allocation2 + $0x190] sm:$0xff]
        %v3357 = vld [vmem:[#allocation2 + $0x198] sm:$0xff]
        %v3358 = vld [vmem:[#allocation2 + $0x1a0] sm:$0xff]
        %v3359 = vld [vmem:[#allocation2 + $0x1a8] sm:$0xff]
        %v3360 = vld [vmem:[#allocation2 + $0x1b0] sm:$0xff]
        %v3361 = vld [vmem:[#allocation2 + $0x1b8] sm:$0xff]
        %v3362 = vld [vmem:[#allocation2 + $0x1c0] sm:$0xff]
        %v3363 = vld [vmem:[#allocation2 + $0x1c8] sm:$0xff]
        %v3364 = vld [vmem:[#allocation2 + $0x1d0] sm:$0xff]
        %v3365 = vld [vmem:[#allocation2 + $0x1d8] sm:$0xff]
        %v3366 = vld [vmem:[#allocation2 + $0x1e0] sm:$0xff]
        %v3367 = vld [vmem:[#allocation2 + $0x1e8] sm:$0xff]
        %v3368 = vld [vmem:[#allocation2 + $0x1f0] sm:$0xff]
        %v3369 = vld [vmem:[#allocation2 + $0x1f8] sm:$0xff]
        %v3370 = vld [vmem:[#allocation2 + $0x200] sm:$0xff]
        %v3371 = vld [vmem:[#allocation2 + $0x208] sm:$0xff]
        %v3372 = vld [vmem:[#allocation2 + $0x210] sm:$0xff]
        %v3373 = vld [vmem:[#allocation2 + $0x218] sm:$0xff]
        %v3374 = vld [vmem:[#allocation2 + $0x220] sm:$0xff]
        %v3375 = vld [vmem:[#allocation2 + $0x228] sm:$0xff]
        %v3376 = vld [vmem:[#allocation2 + $0x230] sm:$0xff]
        %v3377 = vld [vmem:[#allocation2 + $0x238] sm:$0xff]
        %vm3426 = vcmask 1040384
        %v3427 = vrot.slane %v3306, 7
        %v3428 = vrot.slane %v3307, 7
        %v3429 = vsel %vm3426, %v3427, %v3428
        %v3430 = vrot.slane %v3308, 7
        %v3431 = vsel %vm3426, %v3428, %v3430
        %v3432 = vrot.slane %v3310, 7
        %v3433 = vrot.slane %v3311, 7
        %v3434 = vsel %vm3426, %v3432, %v3433
        %v3435 = vrot.slane %v3312, 7
        %v3436 = vsel %vm3426, %v3433, %v3435
        %v3437 = vrot.slane %v3314, 7
        %v3438 = vrot.slane %v3315, 7
        %v3439 = vsel %vm3426, %v3437, %v3438
        %v3440 = vrot.slane %v3316, 7
        %v3441 = vsel %vm3426, %v3438, %v3440
        %v3442 = vrot.slane %v3318, 7
        %v3443 = vrot.slane %v3319, 7
        %v3444 = vsel %vm3426, %v3442, %v3443
        %v3445 = vrot.slane %v3320, 7
        %v3446 = vsel %vm3426, %v3443, %v3445
        %v3447 = vrot.slane %v3322, 7
        %v3448 = vrot.slane %v3323, 7
        %v3449 = vsel %vm3426, %v3447, %v3448
        %v3450 = vrot.slane %v3324, 7
        %v3451 = vsel %vm3426, %v3448, %v3450
        %v3452 = vrot.slane %v3326, 7
        %v3453 = vrot.slane %v3327, 7
        %v3454 = vsel %vm3426, %v3452, %v3453
        %v3455 = vrot.slane %v3328, 7
        %v3456 = vsel %vm3426, %v3453, %v3455
        %v3457 = vrot.slane %v3330, 7
        %v3458 = vrot.slane %v3331, 7
        %v3459 = vsel %vm3426, %v3457, %v3458
        %v3460 = vrot.slane %v3332, 7
        %v3461 = vsel %vm3426, %v3458, %v3460
        %v3462 = vrot.slane %v3334, 7
        %v3463 = vrot.slane %v3335, 7
        %v3464 = vsel %vm3426, %v3462, %v3463
        %v3465 = vrot.slane %v3336, 7
        %v3466 = vsel %vm3426, %v3463, %v3465
        %v3467 = vrot.slane %v3338, 7
        %v3468 = vrot.slane %v3339, 7
        %v3469 = vsel %vm3426, %v3467, %v3468
        %v3470 = vrot.slane %v3340, 7
        %v3471 = vsel %vm3426, %v3468, %v3470
        %v3472 = vrot.slane %v3342, 7
        %v3473 = vrot.slane %v3343, 7
        %v3474 = vsel %vm3426, %v3472, %v3473
        %v3475 = vrot.slane %v3344, 7
        %v3476 = vsel %vm3426, %v3473, %v3475
        %v3477 = vrot.slane %v3346, 7
        %v3478 = vrot.slane %v3347, 7
        %v3479 = vsel %vm3426, %v3477, %v3478
        %v3480 = vrot.slane %v3348, 7
        %v3481 = vsel %vm3426, %v3478, %v3480
        %v3482 = vrot.slane %v3350, 7
        %v3483 = vrot.slane %v3351, 7
        %v3484 = vsel %vm3426, %v3482, %v3483
        %v3485 = vrot.slane %v3352, 7
        %v3486 = vsel %vm3426, %v3483, %v3485
        %v3487 = vrot.slane %v3354, 7
        %v3488 = vrot.slane %v3355, 7
        %v3489 = vsel %vm3426, %v3487, %v3488
        %v3490 = vrot.slane %v3356, 7
        %v3491 = vsel %vm3426, %v3488, %v3490
        %v3492 = vrot.slane %v3358, 7
        %v3493 = vrot.slane %v3359, 7
        %v3494 = vsel %vm3426, %v3492, %v3493
        %v3495 = vrot.slane %v3360, 7
        %v3496 = vsel %vm3426, %v3493, %v3495
        %v3497 = vrot.slane %v3362, 7
        %v3498 = vrot.slane %v3363, 7
        %v3499 = vsel %vm3426, %v3497, %v3498
        %v3500 = vrot.slane %v3364, 7
        %v3501 = vsel %vm3426, %v3498, %v3500
        %v3502 = vrot.slane %v3366, 7
        %v3503 = vrot.slane %v3367, 7
        %v3504 = vsel %vm3426, %v3502, %v3503
        %v3505 = vrot.slane %v3368, 7
        %v3506 = vsel %vm3426, %v3503, %v3505
        %v3555 = vrot.slane %v3307, 1
        %v3556 = vrot.slane %v3308, 1
        %v3557 = vsel %vm379, %v3555, %v3556
        %v3558 = vrot.slane %v3309, 1
        %v3559 = vsel %vm379, %v3556, %v3558
        %v3560 = vrot.slane %v3311, 1
        %v3561 = vrot.slane %v3312, 1
        %v3562 = vsel %vm379, %v3560, %v3561
        %v3563 = vrot.slane %v3313, 1
        %v3564 = vsel %vm379, %v3561, %v3563
        %v3565 = vrot.slane %v3315, 1
        %v3566 = vrot.slane %v3316, 1
        %v3567 = vsel %vm379, %v3565, %v3566
        %v3568 = vrot.slane %v3317, 1
        %v3569 = vsel %vm379, %v3566, %v3568
        %v3570 = vrot.slane %v3319, 1
        %v3571 = vrot.slane %v3320, 1
        %v3572 = vsel %vm379, %v3570, %v3571
        %v3573 = vrot.slane %v3321, 1
        %v3574 = vsel %vm379, %v3571, %v3573
        %v3575 = vrot.slane %v3323, 1
        %v3576 = vrot.slane %v3324, 1
        %v3577 = vsel %vm379, %v3575, %v3576
        %v3578 = vrot.slane %v3325, 1
        %v3579 = vsel %vm379, %v3576, %v3578
        %v3580 = vrot.slane %v3327, 1
        %v3581 = vrot.slane %v3328, 1
        %v3582 = vsel %vm379, %v3580, %v3581
        %v3583 = vrot.slane %v3329, 1
        %v3584 = vsel %vm379, %v3581, %v3583
        %v3585 = vrot.slane %v3331, 1
        %v3586 = vrot.slane %v3332, 1
        %v3587 = vsel %vm379, %v3585, %v3586
        %v3588 = vrot.slane %v3333, 1
        %v3589 = vsel %vm379, %v3586, %v3588
        %v3590 = vrot.slane %v3335, 1
        %v3591 = vrot.slane %v3336, 1
        %v3592 = vsel %vm379, %v3590, %v3591
        %v3593 = vrot.slane %v3337, 1
        %v3594 = vsel %vm379, %v3591, %v3593
        %v3595 = vrot.slane %v3339, 1
        %v3596 = vrot.slane %v3340, 1
        %v3597 = vsel %vm379, %v3595, %v3596
        %v3598 = vrot.slane %v3341, 1
        %v3599 = vsel %vm379, %v3596, %v3598
        %v3600 = vrot.slane %v3343, 1
        %v3601 = vrot.slane %v3344, 1
        %v3602 = vsel %vm379, %v3600, %v3601
        %v3603 = vrot.slane %v3345, 1
        %v3604 = vsel %vm379, %v3601, %v3603
        %v3605 = vrot.slane %v3347, 1
        %v3606 = vrot.slane %v3348, 1
        %v3607 = vsel %vm379, %v3605, %v3606
        %v3608 = vrot.slane %v3349, 1
        %v3609 = vsel %vm379, %v3606, %v3608
        %v3610 = vrot.slane %v3351, 1
        %v3611 = vrot.slane %v3352, 1
        %v3612 = vsel %vm379, %v3610, %v3611
        %v3613 = vrot.slane %v3353, 1
        %v3614 = vsel %vm379, %v3611, %v3613
        %v3615 = vrot.slane %v3355, 1
        %v3616 = vrot.slane %v3356, 1
        %v3617 = vsel %vm379, %v3615, %v3616
        %v3618 = vrot.slane %v3357, 1
        %v3619 = vsel %vm379, %v3616, %v3618
        %v3620 = vrot.slane %v3359, 1
        %v3621 = vrot.slane %v3360, 1
        %v3622 = vsel %vm379, %v3620, %v3621
        %v3623 = vrot.slane %v3361, 1
        %v3624 = vsel %vm379, %v3621, %v3623
        %v3625 = vrot.slane %v3363, 1
        %v3626 = vrot.slane %v3364, 1
        %v3627 = vsel %vm379, %v3625, %v3626
        %v3628 = vrot.slane %v3365, 1
        %v3629 = vsel %vm379, %v3626, %v3628
        %v3630 = vrot.slane %v3367, 1
        %v3631 = vrot.slane %v3368, 1
        %v3632 = vsel %vm379, %v3630, %v3631
        %v3633 = vrot.slane %v3369, 1
        %v3634 = vsel %vm379, %v3631, %v3633
        %v3670 = vrot.slane %v3370, 7
        %v3671 = vrot.slane %v3371, 7
        %v3672 = vsel %vm3426, %v3670, %v3671
        %v3673 = vrot.slane %v3372, 7
        %v3674 = vsel %vm3426, %v3671, %v3673
        %v3678 = vrot.slane %v3371, 1
        %v3679 = vrot.slane %v3372, 1
        %v3680 = vsel %vm379, %v3678, %v3679
        %v3681 = vrot.slane %v3373, 1
        %v3682 = vsel %vm379, %v3679, %v3681
        %v3688 = vrot.slane %v3374, 7
        %v3689 = vrot.slane %v3375, 7
        %v3690 = vsel %vm3426, %v3688, %v3689
        %v3691 = vrot.slane %v3376, 7
        %v3692 = vsel %vm3426, %v3689, %v3691
        %v3696 = vrot.slane %v3375, 1
        %v3697 = vrot.slane %v3376, 1
        %v3698 = vsel %vm379, %v3696, %v3697
        %v3699 = vrot.slane %v3377, 1
        %v3700 = vsel %vm379, %v3697, %v3699
        %v3703 = vld [vmem:[%s3] sm:$0xff]
        %v3704 = vld [vmem:[%s3 + $0x8] sm:$0xff]
        %v3705 = vld [vmem:[%s3 + $0x10] sm:$0xff]
        %v3706 = vld [vmem:[%s3 + $0x18] sm:$0xff]
        %v3707 = vld [vmem:[%s3 + $0x20] sm:$0xff]
        %v3708 = vld [vmem:[%s3 + $0x28] sm:$0xff]
        %v3709 = vld [vmem:[%s3 + $0x30] sm:$0xff]
        %v3710 = vld [vmem:[%s3 + $0x38] sm:$0xff]
        %v3711 = vld [vmem:[%s3 + $0x40] sm:$0xff]
        %v3712 = vld [vmem:[%s3 + $0x48] sm:$0xff]
        %v3713 = vld [vmem:[%s3 + $0x50] sm:$0xff]
        %v3714 = vld [vmem:[%s3 + $0x58] sm:$0xff]
        %v3715 = vld [vmem:[%s3 + $0x60] sm:$0xff]
        %v3716 = vld [vmem:[%s3 + $0x68] sm:$0xff]
        %v3717 = vld [vmem:[%s3 + $0x70] sm:$0xff]
        %v3718 = vld [vmem:[%s3 + $0x78] sm:$0xff]
        %v3719 = vld [vmem:[%s3 + $0x80] sm:$0xff]
        %v3720 = vld [vmem:[%s3 + $0x88] sm:$0xff]
        %v3721 = vld [vmem:[%s3 + $0x90] sm:$0xff]
        %v3722 = vld [vmem:[%s3 + $0x98] sm:$0xff]
        %v3723 = vld [vmem:[%s3 + $0xa0] sm:$0xff]
        %v3724 = vld [vmem:[%s3 + $0xa8] sm:$0xff]
        %v3725 = vld [vmem:[%s3 + $0xb0] sm:$0xff]
        %v3726 = vld [vmem:[%s3 + $0xb8] sm:$0xff]
        %v3727 = vld [vmem:[%s3 + $0xc0] sm:$0xff]
        %v3728 = vld [vmem:[%s3 + $0xc8] sm:$0xff]
        %v3729 = vld [vmem:[%s3 + $0xd0] sm:$0xff]
        %v3730 = vld [vmem:[%s3 + $0xd8] sm:$0xff]
        %v3731 = vld [vmem:[%s3 + $0xe0] sm:$0xff]
        %v3732 = vld [vmem:[%s3 + $0xe8] sm:$0xff]
        %v3733 = vld [vmem:[%s3 + $0xf0] sm:$0xff]
        %v3734 = vld [vmem:[%s3 + $0xf8] sm:$0xff]
        %v3735 = vld [vmem:[%s3 + $0x100] sm:$0xff]
        %v3736 = vld [vmem:[%s3 + $0x108] sm:$0xff]
        %v3737 = vld [vmem:[%s3 + $0x110] sm:$0xff]
        %v3738 = vld [vmem:[%s3 + $0x118] sm:$0xff]
        %v3739 = vld [vmem:[%s3 + $0x120] sm:$0xff]
        %v3740 = vld [vmem:[%s3 + $0x128] sm:$0xff]
        %v3741 = vld [vmem:[%s3 + $0x130] sm:$0xff]
        %v3742 = vld [vmem:[%s3 + $0x138] sm:$0xff]
        %v3743 = vld [vmem:[%s3 + $0x140] sm:$0xff]
        %v3744 = vld [vmem:[%s3 + $0x148] sm:$0xff]
        %v3745 = vld [vmem:[%s3 + $0x150] sm:$0xff]
        %v3746 = vld [vmem:[%s3 + $0x158] sm:$0xff]
        %v3747 = vld [vmem:[%s3 + $0x160] sm:$0xff]
        %v3748 = vld [vmem:[%s3 + $0x168] sm:$0xff]
        %v3749 = vld [vmem:[%s3 + $0x170] sm:$0xff]
        %v3750 = vld [vmem:[%s3 + $0x178] sm:$0xff]
        %v3751 = vld [vmem:[%s3 + $0x180] sm:$0xff]
        %v3752 = vld [vmem:[%s3 + $0x188] sm:$0xff]
        %v3753 = vld [vmem:[%s3 + $0x190] sm:$0xff]
        %v3754 = vld [vmem:[%s3 + $0x198] sm:$0xff]
        %v3755 = vld [vmem:[%s3 + $0x1a0] sm:$0xff]
        %v3756 = vld [vmem:[%s3 + $0x1a8] sm:$0xff]
        %v3757 = vld [vmem:[%s3 + $0x1b0] sm:$0xff]
        %v3758 = vld [vmem:[%s3 + $0x1b8] sm:$0xff]
        %v3759 = vld [vmem:[%s3 + $0x1c0] sm:$0xff]
        %v3760 = vld [vmem:[%s3 + $0x1c8] sm:$0xff]
        %v3761 = vld [vmem:[%s3 + $0x1d0] sm:$0xff]
        %v3762 = vld [vmem:[%s3 + $0x1d8] sm:$0xff]
        %v3763 = vld [vmem:[%s3 + $0x1e0] sm:$0xff]
        %v3764 = vld [vmem:[%s3 + $0x1e8] sm:$0xff]
        %v3765 = vld [vmem:[%s3 + $0x1f0] sm:$0xff]
        %v3766 = vld [vmem:[%s3 + $0x1f8] sm:$0xff]
        %v3767 = vld [vmem:[%s3 + $0x200] sm:$0xff]
        %v3768 = vld [vmem:[%s3 + $0x208] sm:$0xff]
        %v3769 = vld [vmem:[%s3 + $0x210] sm:$0xff]
        %v3770 = vld [vmem:[%s3 + $0x218] sm:$0xff]
        %v3771 = vld [vmem:[%s3 + $0x220] sm:$0xff]
        %v3772 = vld [vmem:[%s3 + $0x228] sm:$0xff]
        %v3773 = vld [vmem:[%s3 + $0x230] sm:$0xff]
        %v3774 = vld [vmem:[%s3 + $0x238] sm:$0xff]
        %v3775 = vld [vmem:[%s3 + $0x240] sm:$0xff]
        %v3776 = vld [vmem:[%s3 + $0x248] sm:$0xff]
        %v3777 = vld [vmem:[%s3 + $0x250] sm:$0xff]
        %v3778 = vld [vmem:[%s3 + $0x258] sm:$0xff]
        %v3779 = vld [vmem:[%s3 + $0x260] sm:$0xff]
        %v3780 = vld [vmem:[%s3 + $0x268] sm:$0xff]
        %v3781 = vld [vmem:[%s3 + $0x270] sm:$0xff]
        %v3782 = vld [vmem:[%s3 + $0x278] sm:$0xff]
        %v3783 = vld [vmem:[%s3 + $0x280] sm:$0xff]
        %v3784 = vld [vmem:[%s3 + $0x288] sm:$0xff]
        %v3785 = vld [vmem:[%s3 + $0x290] sm:$0xff]
        %v3786 = vld [vmem:[%s3 + $0x298] sm:$0xff]
        %v3787 = vld [vmem:[%s3 + $0x2a0] sm:$0xff]
        %v3788 = vld [vmem:[%s3 + $0x2a8] sm:$0xff]
        %v3789 = vld [vmem:[%s3 + $0x2b0] sm:$0xff]
        %v3790 = vld [vmem:[%s3 + $0x2b8] sm:$0xff]
        %v3791 = vld [vmem:[%s3 + $0x2c0] sm:$0xff]
        %v3792 = vld [vmem:[%s3 + $0x2c8] sm:$0xff]
        %v3793 = vld [vmem:[%s3 + $0x2d0] sm:$0xff]
        %v3794 = vld [vmem:[%s3 + $0x2d8] sm:$0xff]
        %v3795 = vld [vmem:[%s3 + $0x2e0] sm:$0xff]
        %v3796 = vld [vmem:[%s3 + $0x2e8] sm:$0xff]
        %v3797 = vld [vmem:[%s3 + $0x2f0] sm:$0xff]
        %v3798 = vld [vmem:[%s3 + $0x2f8] sm:$0xff]
        %v3799 = vld [vmem:[%s3 + $0x300] sm:$0xff]
        %v3800 = vld [vmem:[%s3 + $0x308] sm:$0xff]
        %v3801 = vld [vmem:[%s3 + $0x310] sm:$0xff]
        %v3802 = vld [vmem:[%s3 + $0x318] sm:$0xff]
        %v3803 = vld [vmem:[%s3 + $0x320] sm:$0xff]
        %v3804 = vld [vmem:[%s3 + $0x328] sm:$0xff]
        %v3805 = vld [vmem:[%s3 + $0x330] sm:$0xff]
        %v3806 = vld [vmem:[%s3 + $0x338] sm:$0xff]
        %v3807 = vld [vmem:[%s3 + $0x340] sm:$0xff]
        %v3808 = vld [vmem:[%s3 + $0x348] sm:$0xff]
        %v3809 = vld [vmem:[%s3 + $0x350] sm:$0xff]
        %v3810 = vld [vmem:[%s3 + $0x358] sm:$0xff]
        %v3811 = vld [vmem:[%s3 + $0x360] sm:$0xff]
        %v3812 = vld [vmem:[%s3 + $0x368] sm:$0xff]
        %v3813 = vld [vmem:[%s3 + $0x370] sm:$0xff]
        %v3814 = vld [vmem:[%s3 + $0x378] sm:$0xff]
        %v3815 = vld [vmem:[%s3 + $0x380] sm:$0xff]
        %v3816 = vld [vmem:[%s3 + $0x388] sm:$0xff]
        %v3817 = vld [vmem:[%s3 + $0x390] sm:$0xff]
        %v3818 = vld [vmem:[%s3 + $0x398] sm:$0xff]
        %v3819 = vld [vmem:[%s3 + $0x3a0] sm:$0xff]
        %v3820 = vld [vmem:[%s3 + $0x3a8] sm:$0xff]
        %v3821 = vld [vmem:[%s3 + $0x3b0] sm:$0xff]
        %v3822 = vld [vmem:[%s3 + $0x3b8] sm:$0xff]
        %v3823 = vld [vmem:[%s3 + $0x3c0] sm:$0xff]
        %v3824 = vld [vmem:[%s3 + $0x3c8] sm:$0xff]
        %v3825 = vld [vmem:[%s3 + $0x3d0] sm:$0xff]
        %v3826 = vld [vmem:[%s3 + $0x3d8] sm:$0xff]
        %v3827 = vld [vmem:[%s3 + $0x3e0] sm:$0xff]
        %v3828 = vld [vmem:[%s3 + $0x3e8] sm:$0xff]
        %v3829 = vld [vmem:[%s3 + $0x3f0] sm:$0xff]
        %v3830 = vld [vmem:[%s3 + $0x3f8] sm:$0xff]
        %v3831 = vld [vmem:[%s3 + $0x400] sm:$0xff]
        %v3832 = vld [vmem:[%s3 + $0x408] sm:$0xff]
        %v3833 = vld [vmem:[%s3 + $0x410] sm:$0xff]
        %v3834 = vld [vmem:[%s3 + $0x418] sm:$0xff]
        %v3835 = vld [vmem:[%s3 + $0x420] sm:$0xff]
        %v3836 = vld [vmem:[%s3 + $0x428] sm:$0xff]
        %v3837 = vld [vmem:[%s3 + $0x430] sm:$0xff]
        %v3838 = vld [vmem:[%s3 + $0x438] sm:$0xff]
        %v3839 = vld [vmem:[%s3 + $0x440] sm:$0xff]
        %v3840 = vld [vmem:[%s3 + $0x448] sm:$0xff]
        %v3841 = vld [vmem:[%s3 + $0x450] sm:$0xff]
        %v3842 = vld [vmem:[%s3 + $0x458] sm:$0xff]
        %v3843 = vld [vmem:[%s3 + $0x460] sm:$0xff]
        %v3844 = vld [vmem:[%s3 + $0x468] sm:$0xff]
        %v3845 = vld [vmem:[%s3 + $0x470] sm:$0xff]
        %v3846 = vld [vmem:[%s3 + $0x478] sm:$0xff]
        %v3847 = vld [vmem:[%s3 + $0x480] sm:$0xff]
        %v3848 = vld [vmem:[%s3 + $0x488] sm:$0xff]
        %v3849 = vld [vmem:[%s3 + $0x490] sm:$0xff]
        %v3850 = vld [vmem:[%s3 + $0x498] sm:$0xff]
        %v3851 = vld [vmem:[%s4] sm:$0x1]
        %v3853 = vlaneseq
        %v3854 = vshrl.u32 %v3853, 7
        %v3855 = vsub.s32 0, %v3854
        %v3856 = vrot.slane %v3851, %v3855
        %v3858 = vsel %vm1175, %v387, 0
        %v3860 = vsel %vm1175, %v389, 0
        %v3862 = vsel %vm1175, %v392, 0
        %v3864 = vsel %vm1175, %v394, 0
        %v3866 = vsel %vm1175, %v397, 0
        %v3868 = vsel %vm1175, %v399, 0
        %v3870 = vsel %vm1175, %v402, 0
        %v3872 = vsel %vm1175, %v404, 0
        %v3874 = vsel %vm1175, %v407, 0
        %v3876 = vsel %vm1175, %v409, 0
        %v3878 = vsel %vm1175, %v412, 0
        %v3880 = vsel %vm1175, %v414, 0
        %v3882 = vsel %vm1175, %v417, 0
        %v3884 = vsel %vm1175, %v419, 0
        %v3886 = vsel %vm1175, %v422, 0
        %v3888 = vsel %vm1175, %v424, 0
        %v3890 = vsel %vm1175, %v427, 0
        %v3892 = vsel %vm1175, %v429, 0
        %v3894 = vsel %vm1175, %v432, 0
        %v3896 = vsel %vm1175, %v434, 0
        %v3898 = vsel %vm1175, %v437, 0
        %v3900 = vsel %vm1175, %v439, 0
        %v3902 = vsel %vm1175, %v442, 0
        %v3904 = vsel %vm1175, %v444, 0
        %v3906 = vsel %vm1175, %v447, 0
        %v3908 = vsel %vm1175, %v449, 0
        %v3910 = vsel %vm1175, %v452, 0
        %v3912 = vsel %vm1175, %v454, 0
        %v3914 = vsel %vm1175, %v457, 0
        %v3916 = vsel %vm1175, %v459, 0
        %v3918 = vsel %vm1175, %v546, 0
        %v3920 = vsel %vm1175, %v548, 0
        %3922 = vmatprep.subr.mxu0 0.0
        %3923 = vmatpush1.msra.mxu0 %v3703
        %3924 = vmatprep.subr.mxu0 0.0
        %3925 = vmatpush1.msra.mxu0 %v3704
        %3926 = vmatprep.subr.mxu0 0.0
        %3927 = vmatpush1.msra.mxu0 %v3705
        %3928 = vmatprep.subr.mxu0 0.0
        %3929 = vmatpush1.msra.mxu0 %v3706
        %3930 = vmatprep.subr.mxu0 0.0
        %3931 = vmatpush1.msra.mxu0 %v3707
        %3932 = vmatprep.subr.mxu0 0.0
        %3933 = vmatpush1.msra.mxu0 %v3708
        %3934 = vmatprep.subr.mxu0 0.0
        %3935 = vmatpush1.msra.mxu0 %v3709
        %3936 = vmatprep.subr.mxu0 0.0
        %3937 = vmatpush1.msra.mxu0 %v3710
        %3938 = vmatprep.subr.mxu0 0.0
        %3939 = vmatpush1.msra.mxu0 %v3711
        %3940 = vmatprep.subr.mxu0 0.0
        %3941 = vmatpush1.msra.mxu0 %v3712
        %3942 = vmatprep.subr.mxu0 0.0
        %3943 = vmatpush1.msra.mxu0 %v3713
        %3944 = vmatprep.subr.mxu0 0.0
        %3945 = vmatpush1.msra.mxu0 %v3714
        %3946 = vmatprep.subr.mxu0 0.0
        %3947 = vmatpush1.msra.mxu0 %v3715
        %3948 = vmatprep.subr.mxu0 0.0
        %3949 = vmatpush1.msra.mxu0 %v3716
        %3950 = vmatprep.subr.mxu0 0.0
        %3951 = vmatpush1.msra.mxu0 %v3717
        %3952 = vmatprep.subr.mxu0 0.0
        %3953 = vmatpush1.msra.mxu0 %v3718
        %3954 = vmatprep.subr.mxu0 0.0
        %3955 = vmatpush1.msra.mxu0 %v3719
        %3956 = vmatprep.subr.mxu0 0.0
        %3957 = vmatpush1.msra.mxu0 %v3720
        %3958 = vmatprep.subr.mxu0 0.0
        %3959 = vmatpush1.msra.mxu0 %v3721
        %3960 = vmatprep.subr.mxu0 0.0
        %3961 = vmatpush1.msra.mxu0 %v3722
        %3962 = vmatprep.subr.mxu0 0.0
        %3963 = vmatpush1.msra.mxu0 %v3723
        %3964 = vmatprep.subr.mxu0 0.0
        %3965 = vmatpush1.msra.mxu0 %v3724
        %3966 = vmatprep.subr.mxu0 0.0
        %3967 = vmatpush1.msra.mxu0 %v3725
        %3968 = vmatprep.subr.mxu0 0.0
        %3969 = vmatpush1.msra.mxu0 %v3726
        %3970 = vmatprep.subr.mxu0 0.0
        %3971 = vmatpush1.msra.mxu0 %v3727
        %3972 = vmatprep.subr.mxu0 0.0
        %3973 = vmatpush1.msra.mxu0 %v3728
        %3974 = vmatprep.subr.mxu0 0.0
        %3975 = vmatpush1.msra.mxu0 %v3729
        %3976 = vmatprep.subr.mxu0 0.0
        %3977 = vmatpush1.msra.mxu0 %v3730
        %3978 = vmatprep.subr.mxu0 0.0
        %3979 = vmatpush1.msra.mxu0 %v3731
        %3980 = vmatprep.subr.mxu0 0.0
        %3981 = vmatpush1.msra.mxu0 %v3732
        %3982 = vmatprep.subr.mxu0 0.0
        %3983 = vmatpush1.msra.mxu0 %v3733
        %3984 = vmatprep.subr.mxu0 0.0
        %3985 = vmatpush1.msra.mxu0 %v3734
        %3986 = vmatprep.mubr.f32.mxu0 %v3307
        %3987 = vmatmul.mubr.f32.gmra.mrb[0].mxu0 %v3429
        %v3988 = vpop.f32.mrb[0].mxu0
        %v3989 = vadd.f32 %v3856, %v3988
        %v3990 = vpop.f32.mrb[0].mxu0
        %3991 = vmatprep.mubr.f32.mxu0 %v3308
        %3992 = vmatmul.mubr.f32.gmra.mrb[0].mxu0 %v3431
        %v3993 = vpop.f32.mrb[0].mxu0
        %v3994 = vadd.f32 %v3856, %v3993
        %v3995 = vpop.f32.mrb[0].mxu0
        %3996 = vmatprep.mubr.f32.mxu0 %v3311
        %3997 = vmatmul.mubr.f32.gmra.mrb[0].mxu0 %v3434
        %v3998 = vpop.f32.mrb[0].mxu0
        %v3999 = vadd.f32 %v3856, %v3998
        %v4000 = vpop.f32.mrb[0].mxu0
        %4001 = vmatprep.mubr.f32.mxu0 %v3312
        %4002 = vmatmul.mubr.f32.gmra.mrb[0].mxu0 %v3436
        %v4003 = vpop.f32.mrb[0].mxu0
        %v4004 = vadd.f32 %v3856, %v4003
        %v4005 = vpop.f32.mrb[0].mxu0
        %4006 = vmatprep.mubr.f32.mxu0 %v3315
        %4007 = vmatmul.mubr.f32.gmra.mrb[0].mxu0 %v3439
        %v4008 = vpop.f32.mrb[0].mxu0
        %v4009 = vadd.f32 %v3856, %v4008
        %v4010 = vpop.f32.mrb[0].mxu0
        %4011 = vmatprep.mubr.f32.mxu0 %v3316
        %4012 = vmatmul.mubr.f32.gmra.mrb[0].mxu0 %v3441
        %v4013 = vpop.f32.mrb[0].mxu0
        %v4014 = vadd.f32 %v3856, %v4013
        %v4015 = vpop.f32.mrb[0].mxu0
        %4016 = vmatprep.mubr.f32.mxu0 %v3319
        %4017 = vmatmul.mubr.f32.gmra.mrb[0].mxu0 %v3444
        %v4018 = vpop.f32.mrb[0].mxu0
        %v4019 = vadd.f32 %v3856, %v4018
        %v4020 = vpop.f32.mrb[0].mxu0
        %4021 = vmatprep.mubr.f32.mxu0 %v3320
        %4022 = vmatmul.mubr.f32.gmra.mrb[0].mxu0 %v3446
        %v4023 = vpop.f32.mrb[0].mxu0
        %v4024 = vadd.f32 %v3856, %v4023
        %v4025 = vpop.f32.mrb[0].mxu0
        %4026 = vmatprep.mubr.f32.mxu0 %v3323
        %4027 = vmatmul.mubr.f32.gmra.mrb[0].mxu0 %v3449
        %v4028 = vpop.f32.mrb[0].mxu0
        %v4029 = vadd.f32 %v3856, %v4028
        %v4030 = vpop.f32.mrb[0].mxu0
        %4031 = vmatprep.mubr.f32.mxu0 %v3324
        %4032 = vmatmul.mubr.f32.gmra.mrb[0].mxu0 %v3451
        %v4033 = vpop.f32.mrb[0].mxu0
        %v4034 = vadd.f32 %v3856, %v4033
        %v4035 = vpop.f32.mrb[0].mxu0
        %4036 = vmatprep.mubr.f32.mxu0 %v3327
        %4037 = vmatmul.mubr.f32.gmra.mrb[0].mxu0 %v3454
        %v4038 = vpop.f32.mrb[0].mxu0
        %v4039 = vadd.f32 %v3856, %v4038
        %v4040 = vpop.f32.mrb[0].mxu0
        %4041 = vmatprep.mubr.f32.mxu0 %v3328
        %4042 = vmatmul.mubr.f32.gmra.mrb[0].mxu0 %v3456
        %v4043 = vpop.f32.mrb[0].mxu0
        %v4044 = vadd.f32 %v3856, %v4043
        %v4045 = vpop.f32.mrb[0].mxu0
        %4046 = vmatprep.mubr.f32.mxu0 %v3331
        %4047 = vmatmul.mubr.f32.gmra.mrb[0].mxu0 %v3459
        %v4048 = vpop.f32.mrb[0].mxu0
        %v4049 = vadd.f32 %v3856, %v4048
        %v4050 = vpop.f32.mrb[0].mxu0
        %4051 = vmatprep.mubr.f32.mxu0 %v3332
        %4052 = vmatmul.mubr.f32.gmra.mrb[0].mxu0 %v3461
        %v4053 = vpop.f32.mrb[0].mxu0
        %v4054 = vadd.f32 %v3856, %v4053
        %v4055 = vpop.f32.mrb[0].mxu0
        %4056 = vmatprep.mubr.f32.mxu0 %v3335
        %4057 = vmatmul.mubr.f32.gmra.mrb[0].mxu0 %v3464
        %v4058 = vpop.f32.mrb[0].mxu0
        %v4059 = vadd.f32 %v3856, %v4058
        %v4060 = vpop.f32.mrb[0].mxu0
        %4061 = vmatprep.mubr.f32.mxu0 %v3336
        %4062 = vmatmul.mubr.f32.gmra.mrb[0].mxu0 %v3466
        %v4063 = vpop.f32.mrb[0].mxu0
        %v4064 = vadd.f32 %v3856, %v4063
        %v4065 = vpop.f32.mrb[0].mxu0
        %4066 = vmatprep.mubr.f32.mxu0 %v3339
        %4067 = vmatmul.mubr.f32.gmra.mrb[0].mxu0 %v3469
        %v4068 = vpop.f32.mrb[0].mxu0
        %v4069 = vadd.f32 %v3856, %v4068
        %v4070 = vpop.f32.mrb[0].mxu0
        %4071 = vmatprep.mubr.f32.mxu0 %v3340
        %4072 = vmatmul.mubr.f32.gmra.mrb[0].mxu0 %v3471
        %v4073 = vpop.f32.mrb[0].mxu0
        %v4074 = vadd.f32 %v3856, %v4073
        %v4075 = vpop.f32.mrb[0].mxu0
        %4076 = vmatprep.mubr.f32.mxu0 %v3343
        %4077 = vmatmul.mubr.f32.gmra.mrb[0].mxu0 %v3474
        %v4078 = vpop.f32.mrb[0].mxu0
        %v4079 = vadd.f32 %v3856, %v4078
        %v4080 = vpop.f32.mrb[0].mxu0
        %4081 = vmatprep.mubr.f32.mxu0 %v3344
        %4082 = vmatmul.mubr.f32.gmra.mrb[0].mxu0 %v3476
        %v4083 = vpop.f32.mrb[0].mxu0
        %v4084 = vadd.f32 %v3856, %v4083
        %v4085 = vpop.f32.mrb[0].mxu0
        %4086 = vmatprep.mubr.f32.mxu0 %v3347
        %4087 = vmatmul.mubr.f32.gmra.mrb[0].mxu0 %v3479
        %v4088 = vpop.f32.mrb[0].mxu0
        %v4089 = vadd.f32 %v3856, %v4088
        %v4090 = vpop.f32.mrb[0].mxu0
        %4091 = vmatprep.mubr.f32.mxu0 %v3348
        %4092 = vmatmul.mubr.f32.gmra.mrb[0].mxu0 %v3481
        %v4093 = vpop.f32.mrb[0].mxu0
        %v4094 = vadd.f32 %v3856, %v4093
        %v4095 = vpop.f32.mrb[0].mxu0
        %4096 = vmatprep.mubr.f32.mxu0 %v3351
        %4097 = vmatmul.mubr.f32.gmra.mrb[0].mxu0 %v3484
        %v4098 = vpop.f32.mrb[0].mxu0
        %v4099 = vadd.f32 %v3856, %v4098
        %v4100 = vpop.f32.mrb[0].mxu0
        %4101 = vmatprep.mubr.f32.mxu0 %v3352
        %4102 = vmatmul.mubr.f32.gmra.mrb[0].mxu0 %v3486
        %v4103 = vpop.f32.mrb[0].mxu0
        %v4104 = vadd.f32 %v3856, %v4103
        %v4105 = vpop.f32.mrb[0].mxu0
        %4106 = vmatprep.mubr.f32.mxu0 %v3355
        %4107 = vmatmul.mubr.f32.gmra.mrb[0].mxu0 %v3489
        %v4108 = vpop.f32.mrb[0].mxu0
        %v4109 = vadd.f32 %v3856, %v4108
        %v4110 = vpop.f32.mrb[0].mxu0
        %4111 = vmatprep.mubr.f32.mxu0 %v3356
        %4112 = vmatmul.mubr.f32.gmra.mrb[0].mxu0 %v3491
        %v4113 = vpop.f32.mrb[0].mxu0
        %v4114 = vadd.f32 %v3856, %v4113
        %v4115 = vpop.f32.mrb[0].mxu0
        %4116 = vmatprep.mubr.f32.mxu0 %v3359
        %4117 = vmatmul.mubr.f32.gmra.mrb[0].mxu0 %v3494
        %v4118 = vpop.f32.mrb[0].mxu0
        %v4119 = vadd.f32 %v3856, %v4118
        %v4120 = vpop.f32.mrb[0].mxu0
        %4121 = vmatprep.mubr.f32.mxu0 %v3360
        %4122 = vmatmul.mubr.f32.gmra.mrb[0].mxu0 %v3496
        %v4123 = vpop.f32.mrb[0].mxu0
        %v4124 = vadd.f32 %v3856, %v4123
        %v4125 = vpop.f32.mrb[0].mxu0
        %4126 = vmatprep.mubr.f32.mxu0 %v3363
        %4127 = vmatmul.mubr.f32.gmra.mrb[0].mxu0 %v3499
        %v4128 = vpop.f32.mrb[0].mxu0
        %v4129 = vadd.f32 %v3856, %v4128
        %v4130 = vpop.f32.mrb[0].mxu0
        %4131 = vmatprep.mubr.f32.mxu0 %v3364
        %4132 = vmatmul.mubr.f32.gmra.mrb[0].mxu0 %v3501
        %v4133 = vpop.f32.mrb[0].mxu0
        %v4134 = vadd.f32 %v3856, %v4133
        %v4135 = vpop.f32.mrb[0].mxu0
        %4136 = vmatprep.mubr.f32.mxu0 %v3367
        %4137 = vmatmul.mubr.f32.gmra.mrb[0].mxu0 %v3504
        %v4138 = vpop.f32.mrb[0].mxu0
        %v4139 = vadd.f32 %v3856, %v4138
        %v4140 = vpop.f32.mrb[0].mxu0
        %4141 = vmatprep.mubr.f32.mxu0 %v3368
        %4142 = vmatmul.mubr.f32.gmra.mrb[0].mxu0 %v3506
        %v4143 = vpop.f32.mrb[0].mxu0
        %v4144 = vadd.f32 %v3856, %v4143
        %v4145 = vpop.f32.mrb[0].mxu0
        %4146 = vdwg.mxu0
        %4147 = vmatprep.subr.mxu0 0.0
        %4148 = vmatpush1.msra.mxu0 %v3735
        %4149 = vmatprep.subr.mxu0 0.0
        %4150 = vmatpush1.msra.mxu0 %v3736
        %4151 = vmatprep.subr.mxu0 0.0
        %4152 = vmatpush1.msra.mxu0 %v3737
        %4153 = vmatprep.subr.mxu0 0.0
        %4154 = vmatpush1.msra.mxu0 %v3738
        %4155 = vmatprep.subr.mxu0 0.0
        %4156 = vmatpush1.msra.mxu0 %v3739
        %4157 = vmatprep.subr.mxu0 0.0
        %4158 = vmatpush1.msra.mxu0 %v3740
        %4159 = vmatprep.subr.mxu0 0.0
        %4160 = vmatpush1.msra.mxu0 %v3741
        %4161 = vmatprep.subr.mxu0 0.0
        %4162 = vmatpush1.msra.mxu0 %v3742
        %4163 = vmatprep.subr.mxu0 0.0
        %4164 = vmatpush1.msra.mxu0 %v3743
        %4165 = vmatprep.subr.mxu0 0.0
        %4166 = vmatpush1.msra.mxu0 %v3744
        %4167 = vmatprep.subr.mxu0 0.0
        %4168 = vmatpush1.msra.mxu0 %v3745
        %4169 = vmatprep.subr.mxu0 0.0
        %4170 = vmatpush1.msra.mxu0 %v3746
        %4171 = vmatprep.subr.mxu0 0.0
        %4172 = vmatpush1.msra.mxu0 %v3747
        %4173 = vmatprep.subr.mxu0 0.0
        %4174 = vmatpush1.msra.mxu0 %v3748
        %4175 = vmatprep.subr.mxu0 0.0
        %4176 = vmatpush1.msra.mxu0 %v3749
        %4177 = vmatprep.subr.mxu0 0.0
        %4178 = vmatpush1.msra.mxu0 %v3750
        %4179 = vmatprep.subr.mxu0 0.0
        %4180 = vmatpush1.msra.mxu0 %v3751
        %4181 = vmatprep.subr.mxu0 0.0
        %4182 = vmatpush1.msra.mxu0 %v3752
        %4183 = vmatprep.subr.mxu0 0.0
        %4184 = vmatpush1.msra.mxu0 %v3753
        %4185 = vmatprep.subr.mxu0 0.0
        %4186 = vmatpush1.msra.mxu0 %v3754
        %4187 = vmatprep.subr.mxu0 0.0
        %4188 = vmatpush1.msra.mxu0 %v3755
        %4189 = vmatprep.subr.mxu0 0.0
        %4190 = vmatpush1.msra.mxu0 %v3756
        %4191 = vmatprep.subr.mxu0 0.0
        %4192 = vmatpush1.msra.mxu0 %v3757
        %4193 = vmatprep.subr.mxu0 0.0
        %4194 = vmatpush1.msra.mxu0 %v3758
        %4195 = vmatprep.subr.mxu0 0.0
        %4196 = vmatpush1.msra.mxu0 %v3759
        %4197 = vmatprep.subr.mxu0 0.0
        %4198 = vmatpush1.msra.mxu0 %v3760
        %4199 = vmatprep.subr.mxu0 0.0
        %4200 = vmatpush1.msra.mxu0 %v3761
        %4201 = vmatprep.subr.mxu0 0.0
        %4202 = vmatpush1.msra.mxu0 %v3762
        %4203 = vmatprep.subr.mxu0 0.0
        %4204 = vmatpush1.msra.mxu0 %v3763
        %4205 = vmatprep.subr.mxu0 0.0
        %4206 = vmatpush1.msra.mxu0 %v3764
        %4207 = vmatprep.subr.mxu0 0.0
        %4208 = vmatpush1.msra.mxu0 %v3765
        %4209 = vmatprep.subr.mxu0 0.0
        %4210 = vmatpush1.msra.mxu0 %v3766
        %4211 = vmatprep.mubr.f32.mxu0 %v3434
        %4212 = vmatmul.mubr.f32.gmra.mrb[0].mxu0 %v3557
        %v4213 = vpop.f32.mrb[0].mxu0
        %v4214 = vadd.f32 %v3989, %v4213
        %v4215 = vpop.f32.mrb[0].mxu0
        %4216 = vmatprep.mubr.f32.mxu0 %v3436
        %4217 = vmatmul.mubr.f32.gmra.mrb[0].mxu0 %v3559
        %v4218 = vpop.f32.mrb[0].mxu0
        %v4219 = vadd.f32 %v3994, %v4218
        %v4220 = vpop.f32.mrb[0].mxu0
        %4221 = vmatprep.mubr.f32.mxu0 %v3439
        %4222 = vmatmul.mubr.f32.gmra.mrb[0].mxu0 %v3562
        %v4223 = vpop.f32.mrb[0].mxu0
        %v4224 = vadd.f32 %v3999, %v4223
        %v4225 = vpop.f32.mrb[0].mxu0
        %4226 = vmatprep.mubr.f32.mxu0 %v3441
        %4227 = vmatmul.mubr.f32.gmra.mrb[0].mxu0 %v3564
        %v4228 = vpop.f32.mrb[0].mxu0
        %v4229 = vadd.f32 %v4004, %v4228
        %v4230 = vpop.f32.mrb[0].mxu0
        %4231 = vmatprep.mubr.f32.mxu0 %v3444
        %4232 = vmatmul.mubr.f32.gmra.mrb[0].mxu0 %v3567
        %v4233 = vpop.f32.mrb[0].mxu0
        %v4234 = vadd.f32 %v4009, %v4233
        %v4235 = vpop.f32.mrb[0].mxu0
        %4236 = vmatprep.mubr.f32.mxu0 %v3446
        %4237 = vmatmul.mubr.f32.gmra.mrb[0].mxu0 %v3569
        %v4238 = vpop.f32.mrb[0].mxu0
        %v4239 = vadd.f32 %v4014, %v4238
        %v4240 = vpop.f32.mrb[0].mxu0
        %4241 = vmatprep.mubr.f32.mxu0 %v3449
        %4242 = vmatmul.mubr.f32.gmra.mrb[0].mxu0 %v3572
        %v4243 = vpop.f32.mrb[0].mxu0
        %v4244 = vadd.f32 %v4019, %v4243
        %v4245 = vpop.f32.mrb[0].mxu0
        %4246 = vmatprep.mubr.f32.mxu0 %v3451
        %4247 = vmatmul.mubr.f32.gmra.mrb[0].mxu0 %v3574
        %v4248 = vpop.f32.mrb[0].mxu0
        %v4249 = vadd.f32 %v4024, %v4248
        %v4250 = vpop.f32.mrb[0].mxu0
        %4251 = vmatprep.mubr.f32.mxu0 %v3454
        %4252 = vmatmul.mubr.f32.gmra.mrb[0].mxu0 %v3577
        %v4253 = vpop.f32.mrb[0].mxu0
        %v4254 = vadd.f32 %v4029, %v4253
        %v4255 = vpop.f32.mrb[0].mxu0
        %4256 = vmatprep.mubr.f32.mxu0 %v3456
        %4257 = vmatmul.mubr.f32.gmra.mrb[0].mxu0 %v3579
        %v4258 = vpop.f32.mrb[0].mxu0
        %v4259 = vadd.f32 %v4034, %v4258
        %v4260 = vpop.f32.mrb[0].mxu0
        %4261 = vmatprep.mubr.f32.mxu0 %v3459
        %4262 = vmatmul.mubr.f32.gmra.mrb[0].mxu0 %v3582
        %v4263 = vpop.f32.mrb[0].mxu0
        %v4264 = vadd.f32 %v4039, %v4263
        %v4265 = vpop.f32.mrb[0].mxu0
        %4266 = vmatprep.mubr.f32.mxu0 %v3461
        %4267 = vmatmul.mubr.f32.gmra.mrb[0].mxu0 %v3584
        %v4268 = vpop.f32.mrb[0].mxu0
        %v4269 = vadd.f32 %v4044, %v4268
        %v4270 = vpop.f32.mrb[0].mxu0
        %4271 = vmatprep.mubr.f32.mxu0 %v3464
        %4272 = vmatmul.mubr.f32.gmra.mrb[0].mxu0 %v3587
        %v4273 = vpop.f32.mrb[0].mxu0
        %v4274 = vadd.f32 %v4049, %v4273
        %v4275 = vpop.f32.mrb[0].mxu0
        %4276 = vmatprep.mubr.f32.mxu0 %v3466
        %4277 = vmatmul.mubr.f32.gmra.mrb[0].mxu0 %v3589
        %v4278 = vpop.f32.mrb[0].mxu0
        %v4279 = vadd.f32 %v4054, %v4278
        %v4280 = vpop.f32.mrb[0].mxu0
        %4281 = vmatprep.mubr.f32.mxu0 %v3469
        %4282 = vmatmul.mubr.f32.gmra.mrb[0].mxu0 %v3592
        %v4283 = vpop.f32.mrb[0].mxu0
        %v4284 = vadd.f32 %v4059, %v4283
        %v4285 = vpop.f32.mrb[0].mxu0
        %4286 = vmatprep.mubr.f32.mxu0 %v3471
        %4287 = vmatmul.mubr.f32.gmra.mrb[0].mxu0 %v3594
        %v4288 = vpop.f32.mrb[0].mxu0
        %v4289 = vadd.f32 %v4064, %v4288
        %v4290 = vpop.f32.mrb[0].mxu0
        %4291 = vmatprep.mubr.f32.mxu0 %v3474
        %4292 = vmatmul.mubr.f32.gmra.mrb[0].mxu0 %v3597
        %v4293 = vpop.f32.mrb[0].mxu0
        %v4294 = vadd.f32 %v4069, %v4293
        %v4295 = vpop.f32.mrb[0].mxu0
        %4296 = vmatprep.mubr.f32.mxu0 %v3476
        %4297 = vmatmul.mubr.f32.gmra.mrb[0].mxu0 %v3599
        %v4298 = vpop.f32.mrb[0].mxu0
        %v4299 = vadd.f32 %v4074, %v4298
        %v4300 = vpop.f32.mrb[0].mxu0
        %4301 = vmatprep.mubr.f32.mxu0 %v3479
        %4302 = vmatmul.mubr.f32.gmra.mrb[0].mxu0 %v3602
        %v4303 = vpop.f32.mrb[0].mxu0
        %v4304 = vadd.f32 %v4079, %v4303
        %v4305 = vpop.f32.mrb[0].mxu0
        %4306 = vmatprep.mubr.f32.mxu0 %v3481
        %4307 = vmatmul.mubr.f32.gmra.mrb[0].mxu0 %v3604
        %v4308 = vpop.f32.mrb[0].mxu0
        %v4309 = vadd.f32 %v4084, %v4308
        %v4310 = vpop.f32.mrb[0].mxu0
        %4311 = vmatprep.mubr.f32.mxu0 %v3484
        %4312 = vmatmul.mubr.f32.gmra.mrb[0].mxu0 %v3607
        %v4313 = vpop.f32.mrb[0].mxu0
        %v4314 = vadd.f32 %v4089, %v4313
        %v4315 = vpop.f32.mrb[0].mxu0
        %4316 = vmatprep.mubr.f32.mxu0 %v3486
        %4317 = vmatmul.mubr.f32.gmra.mrb[0].mxu0 %v3609
        %v4318 = vpop.f32.mrb[0].mxu0
        %v4319 = vadd.f32 %v4094, %v4318
        %v4320 = vpop.f32.mrb[0].mxu0
        %4321 = vmatprep.mubr.f32.mxu0 %v3489
        %4322 = vmatmul.mubr.f32.gmra.mrb[0].mxu0 %v3612
        %v4323 = vpop.f32.mrb[0].mxu0
        %v4324 = vadd.f32 %v4099, %v4323
        %v4325 = vpop.f32.mrb[0].mxu0
        %4326 = vmatprep.mubr.f32.mxu0 %v3491
        %4327 = vmatmul.mubr.f32.gmra.mrb[0].mxu0 %v3614
        %v4328 = vpop.f32.mrb[0].mxu0
        %v4329 = vadd.f32 %v4104, %v4328
        %v4330 = vpop.f32.mrb[0].mxu0
        %4331 = vmatprep.mubr.f32.mxu0 %v3494
        %4332 = vmatmul.mubr.f32.gmra.mrb[0].mxu0 %v3617
        %v4333 = vpop.f32.mrb[0].mxu0
        %v4334 = vadd.f32 %v4109, %v4333
        %v4335 = vpop.f32.mrb[0].mxu0
        %4336 = vmatprep.mubr.f32.mxu0 %v3496
        %4337 = vmatmul.mubr.f32.gmra.mrb[0].mxu0 %v3619
        %v4338 = vpop.f32.mrb[0].mxu0
        %v4339 = vadd.f32 %v4114, %v4338
        %v4340 = vpop.f32.mrb[0].mxu0
        %4341 = vmatprep.mubr.f32.mxu0 %v3499
        %4342 = vmatmul.mubr.f32.gmra.mrb[0].mxu0 %v3622
        %v4343 = vpop.f32.mrb[0].mxu0
        %v4344 = vadd.f32 %v4119, %v4343
        %v4345 = vpop.f32.mrb[0].mxu0
        %4346 = vmatprep.mubr.f32.mxu0 %v3501
        %4347 = vmatmul.mubr.f32.gmra.mrb[0].mxu0 %v3624
        %v4348 = vpop.f32.mrb[0].mxu0
        %v4349 = vadd.f32 %v4124, %v4348
        %v4350 = vpop.f32.mrb[0].mxu0
        %4351 = vmatprep.mubr.f32.mxu0 %v3504
        %4352 = vmatmul.mubr.f32.gmra.mrb[0].mxu0 %v3627
        %v4353 = vpop.f32.mrb[0].mxu0
        %v4354 = vadd.f32 %v4129, %v4353
        %v4355 = vpop.f32.mrb[0].mxu0
        %4356 = vmatprep.mubr.f32.mxu0 %v3506
        %4357 = vmatmul.mubr.f32.gmra.mrb[0].mxu0 %v3629
        %v4358 = vpop.f32.mrb[0].mxu0
        %v4359 = vadd.f32 %v4134, %v4358
        %v4360 = vpop.f32.mrb[0].mxu0
        %4361 = vmatprep.mubr.f32.mxu0 %v3672
        %4362 = vmatmul.mubr.f32.gmra.mrb[0].mxu0 %v3632
        %v4363 = vpop.f32.mrb[0].mxu0
        %v4364 = vadd.f32 %v4139, %v4363
        %v4365 = vpop.f32.mrb[0].mxu0
        %4366 = vmatprep.mubr.f32.mxu0 %v3674
        %4367 = vmatmul.mubr.f32.gmra.mrb[0].mxu0 %v3634
        %v4368 = vpop.f32.mrb[0].mxu0
        %v4369 = vadd.f32 %v4144, %v4368
        %v4370 = vpop.f32.mrb[0].mxu0
        %4371 = vdwg.mxu0
        %4372 = vmatprep.subr.mxu0 0.0
        %4373 = vmatpush1.msra.mxu0 %v3767
        %4374 = vmatprep.subr.mxu0 0.0
        %4375 = vmatpush1.msra.mxu0 %v3768
        %4376 = vmatprep.subr.mxu0 0.0
        %4377 = vmatpush1.msra.mxu0 %v3769
        %4378 = vmatprep.subr.mxu0 0.0
        %4379 = vmatpush1.msra.mxu0 %v3770
        %4380 = vmatprep.subr.mxu0 0.0
        %4381 = vmatpush1.msra.mxu0 %v3771
        %4382 = vmatprep.subr.mxu0 0.0
        %4383 = vmatpush1.msra.mxu0 %v3772
        %4384 = vmatprep.subr.mxu0 0.0
        %4385 = vmatpush1.msra.mxu0 %v3773
        %4386 = vmatprep.subr.mxu0 0.0
        %4387 = vmatpush1.msra.mxu0 %v3774
        %4388 = vmatprep.subr.mxu0 0.0
        %4389 = vmatpush1.msra.mxu0 %v3775
        %4390 = vmatprep.subr.mxu0 0.0
        %4391 = vmatpush1.msra.mxu0 %v3776
        %4392 = vmatprep.subr.mxu0 0.0
        %4393 = vmatpush1.msra.mxu0 %v3777
        %4394 = vmatprep.subr.mxu0 0.0
        %4395 = vmatpush1.msra.mxu0 %v3778
        %4396 = vmatprep.subr.mxu0 0.0
        %4397 = vmatpush1.msra.mxu0 %v3779
        %4398 = vmatprep.subr.mxu0 0.0
        %4399 = vmatpush1.msra.mxu0 %v3780
        %4400 = vmatprep.subr.mxu0 0.0
        %4401 = vmatpush1.msra.mxu0 %v3781
        %4402 = vmatprep.subr.mxu0 0.0
        %4403 = vmatpush1.msra.mxu0 %v3782
        %4404 = vmatprep.subr.mxu0 0.0
        %4405 = vmatpush1.msra.mxu0 %v3783
        %4406 = vmatprep.subr.mxu0 0.0
        %4407 = vmatpush1.msra.mxu0 %v3784
        %4408 = vmatprep.subr.mxu0 0.0
        %4409 = vmatpush1.msra.mxu0 %v3785
        %4410 = vmatprep.subr.mxu0 0.0
        %4411 = vmatpush1.msra.mxu0 %v3786
        %4412 = vmatprep.subr.mxu0 0.0
        %4413 = vmatpush1.msra.mxu0 %v3787
        %4414 = vmatprep.subr.mxu0 0.0
        %4415 = vmatpush1.msra.mxu0 %v3788
        %4416 = vmatprep.subr.mxu0 0.0
        %4417 = vmatpush1.msra.mxu0 %v3789
        %4418 = vmatprep.subr.mxu0 0.0
        %4419 = vmatpush1.msra.mxu0 %v3790
        %4420 = vmatprep.subr.mxu0 0.0
        %4421 = vmatpush1.msra.mxu0 %v3791
        %4422 = vmatprep.subr.mxu0 0.0
        %4423 = vmatpush1.msra.mxu0 %v3792
        %4424 = vmatprep.subr.mxu0 0.0
        %4425 = vmatpush1.msra.mxu0 %v3793
        %4426 = vmatprep.subr.mxu0 0.0
        %4427 = vmatpush1.msra.mxu0 %v3794
        %4428 = vmatprep.subr.mxu0 0.0
        %4429 = vmatpush1.msra.mxu0 %v3795
        %4430 = vmatprep.subr.mxu0 0.0
        %4431 = vmatpush1.msra.mxu0 %v3796
        %4432 = vmatprep.subr.mxu0 0.0
        %4433 = vmatpush1.msra.mxu0 %v3797
        %4434 = vmatprep.subr.mxu0 0.0
        %4435 = vmatpush1.msra.mxu0 %v3798
        %4436 = vmatprep.mubr.f32.mxu0 %v3562
        %4437 = vmatmul.mubr.f32.gmra.mrb[0].mxu0 %v3311
        %v4438 = vpop.f32.mrb[0].mxu0
        %v4439 = vadd.f32 %v4214, %v4438
        %v4440 = vpop.f32.mrb[0].mxu0
        %4441 = vmatprep.mubr.f32.mxu0 %v3564
        %4442 = vmatmul.mubr.f32.gmra.mrb[0].mxu0 %v3312
        %v4443 = vpop.f32.mrb[0].mxu0
        %v4444 = vadd.f32 %v4219, %v4443
        %v4445 = vpop.f32.mrb[0].mxu0
        %4446 = vmatprep.mubr.f32.mxu0 %v3567
        %4447 = vmatmul.mubr.f32.gmra.mrb[0].mxu0 %v3315
        %v4448 = vpop.f32.mrb[0].mxu0
        %v4449 = vadd.f32 %v4224, %v4448
        %v4450 = vpop.f32.mrb[0].mxu0
        %4451 = vmatprep.mubr.f32.mxu0 %v3569
        %4452 = vmatmul.mubr.f32.gmra.mrb[0].mxu0 %v3316
        %v4453 = vpop.f32.mrb[0].mxu0
        %v4454 = vadd.f32 %v4229, %v4453
        %v4455 = vpop.f32.mrb[0].mxu0
        %4456 = vmatprep.mubr.f32.mxu0 %v3572
        %4457 = vmatmul.mubr.f32.gmra.mrb[0].mxu0 %v3319
        %v4458 = vpop.f32.mrb[0].mxu0
        %v4459 = vadd.f32 %v4234, %v4458
        %v4460 = vpop.f32.mrb[0].mxu0
        %4461 = vmatprep.mubr.f32.mxu0 %v3574
        %4462 = vmatmul.mubr.f32.gmra.mrb[0].mxu0 %v3320
        %v4463 = vpop.f32.mrb[0].mxu0
        %v4464 = vadd.f32 %v4239, %v4463
        %v4465 = vpop.f32.mrb[0].mxu0
        %4466 = vmatprep.mubr.f32.mxu0 %v3577
        %4467 = vmatmul.mubr.f32.gmra.mrb[0].mxu0 %v3323
        %v4468 = vpop.f32.mrb[0].mxu0
        %v4469 = vadd.f32 %v4244, %v4468
        %v4470 = vpop.f32.mrb[0].mxu0
        %4471 = vmatprep.mubr.f32.mxu0 %v3579
        %4472 = vmatmul.mubr.f32.gmra.mrb[0].mxu0 %v3324
        %v4473 = vpop.f32.mrb[0].mxu0
        %v4474 = vadd.f32 %v4249, %v4473
        %v4475 = vpop.f32.mrb[0].mxu0
        %4476 = vmatprep.mubr.f32.mxu0 %v3582
        %4477 = vmatmul.mubr.f32.gmra.mrb[0].mxu0 %v3327
        %v4478 = vpop.f32.mrb[0].mxu0
        %v4479 = vadd.f32 %v4254, %v4478
        %v4480 = vpop.f32.mrb[0].mxu0
        %4481 = vmatprep.mubr.f32.mxu0 %v3584
        %4482 = vmatmul.mubr.f32.gmra.mrb[0].mxu0 %v3328
        %v4483 = vpop.f32.mrb[0].mxu0
        %v4484 = vadd.f32 %v4259, %v4483
        %v4485 = vpop.f32.mrb[0].mxu0
        %4486 = vmatprep.mubr.f32.mxu0 %v3587
        %4487 = vmatmul.mubr.f32.gmra.mrb[0].mxu0 %v3331
        %v4488 = vpop.f32.mrb[0].mxu0
        %v4489 = vadd.f32 %v4264, %v4488
        %v4490 = vpop.f32.mrb[0].mxu0
        %4491 = vmatprep.mubr.f32.mxu0 %v3589
        %4492 = vmatmul.mubr.f32.gmra.mrb[0].mxu0 %v3332
        %v4493 = vpop.f32.mrb[0].mxu0
        %v4494 = vadd.f32 %v4269, %v4493
        %v4495 = vpop.f32.mrb[0].mxu0
        %4496 = vmatprep.mubr.f32.mxu0 %v3592
        %4497 = vmatmul.mubr.f32.gmra.mrb[0].mxu0 %v3335
        %v4498 = vpop.f32.mrb[0].mxu0
        %v4499 = vadd.f32 %v4274, %v4498
        %v4500 = vpop.f32.mrb[0].mxu0
        %4501 = vmatprep.mubr.f32.mxu0 %v3594
        %4502 = vmatmul.mubr.f32.gmra.mrb[0].mxu0 %v3336
        %v4503 = vpop.f32.mrb[0].mxu0
        %v4504 = vadd.f32 %v4279, %v4503
        %v4505 = vpop.f32.mrb[0].mxu0
        %4506 = vmatprep.mubr.f32.mxu0 %v3597
        %4507 = vmatmul.mubr.f32.gmra.mrb[0].mxu0 %v3339
        %v4508 = vpop.f32.mrb[0].mxu0
        %v4509 = vadd.f32 %v4284, %v4508
        %v4510 = vpop.f32.mrb[0].mxu0
        %4511 = vmatprep.mubr.f32.mxu0 %v3599
        %4512 = vmatmul.mubr.f32.gmra.mrb[0].mxu0 %v3340
        %v4513 = vpop.f32.mrb[0].mxu0
        %v4514 = vadd.f32 %v4289, %v4513
        %v4515 = vpop.f32.mrb[0].mxu0
        %4516 = vmatprep.mubr.f32.mxu0 %v3602
        %4517 = vmatmul.mubr.f32.gmra.mrb[0].mxu0 %v3343
        %v4518 = vpop.f32.mrb[0].mxu0
        %v4519 = vadd.f32 %v4294, %v4518
        %v4520 = vpop.f32.mrb[0].mxu0
        %4521 = vmatprep.mubr.f32.mxu0 %v3604
        %4522 = vmatmul.mubr.f32.gmra.mrb[0].mxu0 %v3344
        %v4523 = vpop.f32.mrb[0].mxu0
        %v4524 = vadd.f32 %v4299, %v4523
        %v4525 = vpop.f32.mrb[0].mxu0
        %4526 = vmatprep.mubr.f32.mxu0 %v3607
        %4527 = vmatmul.mubr.f32.gmra.mrb[0].mxu0 %v3347
        %v4528 = vpop.f32.mrb[0].mxu0
        %v4529 = vadd.f32 %v4304, %v4528
        %v4530 = vpop.f32.mrb[0].mxu0
        %4531 = vmatprep.mubr.f32.mxu0 %v3609
        %4532 = vmatmul.mubr.f32.gmra.mrb[0].mxu0 %v3348
        %v4533 = vpop.f32.mrb[0].mxu0
        %v4534 = vadd.f32 %v4309, %v4533
        %v4535 = vpop.f32.mrb[0].mxu0
        %4536 = vmatprep.mubr.f32.mxu0 %v3612
        %4537 = vmatmul.mubr.f32.gmra.mrb[0].mxu0 %v3351
        %v4538 = vpop.f32.mrb[0].mxu0
        %v4539 = vadd.f32 %v4314, %v4538
        %v4540 = vpop.f32.mrb[0].mxu0
        %4541 = vmatprep.mubr.f32.mxu0 %v3614
        %4542 = vmatmul.mubr.f32.gmra.mrb[0].mxu0 %v3352
        %v4543 = vpop.f32.mrb[0].mxu0
        %v4544 = vadd.f32 %v4319, %v4543
        %v4545 = vpop.f32.mrb[0].mxu0
        %4546 = vmatprep.mubr.f32.mxu0 %v3617
        %4547 = vmatmul.mubr.f32.gmra.mrb[0].mxu0 %v3355
        %v4548 = vpop.f32.mrb[0].mxu0
        %v4549 = vadd.f32 %v4324, %v4548
        %v4550 = vpop.f32.mrb[0].mxu0
        %4551 = vmatprep.mubr.f32.mxu0 %v3619
        %4552 = vmatmul.mubr.f32.gmra.mrb[0].mxu0 %v3356
        %v4553 = vpop.f32.mrb[0].mxu0
        %v4554 = vadd.f32 %v4329, %v4553
        %v4555 = vpop.f32.mrb[0].mxu0
        %4556 = vmatprep.mubr.f32.mxu0 %v3622
        %4557 = vmatmul.mubr.f32.gmra.mrb[0].mxu0 %v3359
        %v4558 = vpop.f32.mrb[0].mxu0
        %v4559 = vadd.f32 %v4334, %v4558
        %v4560 = vpop.f32.mrb[0].mxu0
        %4561 = vmatprep.mubr.f32.mxu0 %v3624
        %4562 = vmatmul.mubr.f32.gmra.mrb[0].mxu0 %v3360
        %v4563 = vpop.f32.mrb[0].mxu0
        %v4564 = vadd.f32 %v4339, %v4563
        %v4565 = vpop.f32.mrb[0].mxu0
        %4566 = vmatprep.mubr.f32.mxu0 %v3627
        %4567 = vmatmul.mubr.f32.gmra.mrb[0].mxu0 %v3363
        %v4568 = vpop.f32.mrb[0].mxu0
        %v4569 = vadd.f32 %v4344, %v4568
        %v4570 = vpop.f32.mrb[0].mxu0
        %4571 = vmatprep.mubr.f32.mxu0 %v3629
        %4572 = vmatmul.mubr.f32.gmra.mrb[0].mxu0 %v3364
        %v4573 = vpop.f32.mrb[0].mxu0
        %v4574 = vadd.f32 %v4349, %v4573
        %v4575 = vpop.f32.mrb[0].mxu0
        %4576 = vmatprep.mubr.f32.mxu0 %v3632
        %4577 = vmatmul.mubr.f32.gmra.mrb[0].mxu0 %v3367
        %v4578 = vpop.f32.mrb[0].mxu0
        %v4579 = vadd.f32 %v4354, %v4578
        %v4580 = vpop.f32.mrb[0].mxu0
        %4581 = vmatprep.mubr.f32.mxu0 %v3634
        %4582 = vmatmul.mubr.f32.gmra.mrb[0].mxu0 %v3368
        %v4583 = vpop.f32.mrb[0].mxu0
        %v4584 = vadd.f32 %v4359, %v4583
        %v4585 = vpop.f32.mrb[0].mxu0
        %4586 = vmatprep.mubr.f32.mxu0 %v3680
        %4587 = vmatmul.mubr.f32.gmra.mrb[0].mxu0 %v3371
        %v4588 = vpop.f32.mrb[0].mxu0
        %v4589 = vadd.f32 %v4364, %v4588
        %v4590 = vpop.f32.mrb[0].mxu0
        %4591 = vmatprep.mubr.f32.mxu0 %v3682
        %4592 = vmatmul.mubr.f32.gmra.mrb[0].mxu0 %v3372
        %v4593 = vpop.f32.mrb[0].mxu0
        %v4594 = vadd.f32 %v4369, %v4593
        %v4595 = vpop.f32.mrb[0].mxu0
        %4596 = vdwg.mxu0
        %4597 = vmatprep.subr.mxu0 0.0
        %4598 = vmatpush1.msra.mxu0 %v3799
        %4599 = vmatprep.subr.mxu0 0.0
        %4600 = vmatpush1.msra.mxu0 %v3800
        %4601 = vmatprep.subr.mxu0 0.0
        %4602 = vmatpush1.msra.mxu0 %v3801
        %4603 = vmatprep.subr.mxu0 0.0
        %4604 = vmatpush1.msra.mxu0 %v3802
        %4605 = vmatprep.subr.mxu0 0.0
        %4606 = vmatpush1.msra.mxu0 %v3803
        %4607 = vmatprep.subr.mxu0 0.0
        %4608 = vmatpush1.msra.mxu0 %v3804
        %4609 = vmatprep.subr.mxu0 0.0
        %4610 = vmatpush1.msra.mxu0 %v3805
        %4611 = vmatprep.subr.mxu0 0.0
        %4612 = vmatpush1.msra.mxu0 %v3806
        %4613 = vmatprep.subr.mxu0 0.0
        %4614 = vmatpush1.msra.mxu0 %v3807
        %4615 = vmatprep.subr.mxu0 0.0
        %4616 = vmatpush1.msra.mxu0 %v3808
        %4617 = vmatprep.subr.mxu0 0.0
        %4618 = vmatpush1.msra.mxu0 %v3809
        %4619 = vmatprep.subr.mxu0 0.0
        %4620 = vmatpush1.msra.mxu0 %v3810
        %4621 = vmatprep.subr.mxu0 0.0
        %4622 = vmatpush1.msra.mxu0 %v3811
        %4623 = vmatprep.subr.mxu0 0.0
        %4624 = vmatpush1.msra.mxu0 %v3812
        %4625 = vmatprep.subr.mxu0 0.0
        %4626 = vmatpush1.msra.mxu0 %v3813
        %4627 = vmatprep.subr.mxu0 0.0
        %4628 = vmatpush1.msra.mxu0 %v3814
        %4629 = vmatprep.subr.mxu0 0.0
        %4630 = vmatpush1.msra.mxu0 %v3815
        %4631 = vmatprep.subr.mxu0 0.0
        %4632 = vmatpush1.msra.mxu0 %v3816
        %4633 = vmatprep.subr.mxu0 0.0
        %4634 = vmatpush1.msra.mxu0 %v3817
        %4635 = vmatprep.subr.mxu0 0.0
        %4636 = vmatpush1.msra.mxu0 %v3818
        %4637 = vmatprep.subr.mxu0 0.0
        %4638 = vmatpush1.msra.mxu0 %v3819
        %4639 = vmatprep.subr.mxu0 0.0
        %4640 = vmatpush1.msra.mxu0 %v3820
        %4641 = vmatprep.subr.mxu0 0.0
        %4642 = vmatpush1.msra.mxu0 %v3821
        %4643 = vmatprep.subr.mxu0 0.0
        %4644 = vmatpush1.msra.mxu0 %v3822
        %4645 = vmatprep.subr.mxu0 0.0
        %4646 = vmatpush1.msra.mxu0 %v3823
        %4647 = vmatprep.subr.mxu0 0.0
        %4648 = vmatpush1.msra.mxu0 %v3824
        %4649 = vmatprep.subr.mxu0 0.0
        %4650 = vmatpush1.msra.mxu0 %v3825
        %4651 = vmatprep.subr.mxu0 0.0
        %4652 = vmatpush1.msra.mxu0 %v3826
        %4653 = vmatprep.subr.mxu0 0.0
        %4654 = vmatpush1.msra.mxu0 %v3827
        %4655 = vmatprep.subr.mxu0 0.0
        %4656 = vmatpush1.msra.mxu0 %v3828
        %4657 = vmatprep.subr.mxu0 0.0
        %4658 = vmatpush1.msra.mxu0 %v3829
        %4659 = vmatprep.subr.mxu0 0.0
        %4660 = vmatpush1.msra.mxu0 %v3830
        %4661 = vmatprep.mubr.f32.mxu0 %v3315
        %4662 = vmatmul.mubr.f32.gmra.mrb[0].mxu0 %v3439
        %v4663 = vpop.f32.mrb[0].mxu0
        %v4664 = vadd.f32 %v4439, %v4663
        %v4665 = vpop.f32.mrb[0].mxu0
        %4666 = vmatprep.mubr.f32.mxu0 %v3316
        %4667 = vmatmul.mubr.f32.gmra.mrb[0].mxu0 %v3441
        %v4668 = vpop.f32.mrb[0].mxu0
        %v4669 = vadd.f32 %v4444, %v4668
        %v4670 = vpop.f32.mrb[0].mxu0
        %4671 = vmatprep.mubr.f32.mxu0 %v3319
        %4672 = vmatmul.mubr.f32.gmra.mrb[0].mxu0 %v3444
        %v4673 = vpop.f32.mrb[0].mxu0
        %v4674 = vadd.f32 %v4449, %v4673
        %v4675 = vpop.f32.mrb[0].mxu0
        %4676 = vmatprep.mubr.f32.mxu0 %v3320
        %4677 = vmatmul.mubr.f32.gmra.mrb[0].mxu0 %v3446
        %v4678 = vpop.f32.mrb[0].mxu0
        %v4679 = vadd.f32 %v4454, %v4678
        %v4680 = vpop.f32.mrb[0].mxu0
        %4681 = vmatprep.mubr.f32.mxu0 %v3323
        %4682 = vmatmul.mubr.f32.gmra.mrb[0].mxu0 %v3449
        %v4683 = vpop.f32.mrb[0].mxu0
        %v4684 = vadd.f32 %v4459, %v4683
        %v4685 = vpop.f32.mrb[0].mxu0
        %4686 = vmatprep.mubr.f32.mxu0 %v3324
        %4687 = vmatmul.mubr.f32.gmra.mrb[0].mxu0 %v3451
        %v4688 = vpop.f32.mrb[0].mxu0
        %v4689 = vadd.f32 %v4464, %v4688
        %v4690 = vpop.f32.mrb[0].mxu0
        %4691 = vmatprep.mubr.f32.mxu0 %v3327
        %4692 = vmatmul.mubr.f32.gmra.mrb[0].mxu0 %v3454
        %v4693 = vpop.f32.mrb[0].mxu0
        %v4694 = vadd.f32 %v4469, %v4693
        %v4695 = vpop.f32.mrb[0].mxu0
        %4696 = vmatprep.mubr.f32.mxu0 %v3328
        %4697 = vmatmul.mubr.f32.gmra.mrb[0].mxu0 %v3456
        %v4698 = vpop.f32.mrb[0].mxu0
        %v4699 = vadd.f32 %v4474, %v4698
        %v4700 = vpop.f32.mrb[0].mxu0
        %4701 = vmatprep.mubr.f32.mxu0 %v3331
        %4702 = vmatmul.mubr.f32.gmra.mrb[0].mxu0 %v3459
        %v4703 = vpop.f32.mrb[0].mxu0
        %v4704 = vadd.f32 %v4479, %v4703
        %v4705 = vpop.f32.mrb[0].mxu0
        %4706 = vmatprep.mubr.f32.mxu0 %v3332
        %4707 = vmatmul.mubr.f32.gmra.mrb[0].mxu0 %v3461
        %v4708 = vpop.f32.mrb[0].mxu0
        %v4709 = vadd.f32 %v4484, %v4708
        %v4710 = vpop.f32.mrb[0].mxu0
        %4711 = vmatprep.mubr.f32.mxu0 %v3335
        %4712 = vmatmul.mubr.f32.gmra.mrb[0].mxu0 %v3464
        %v4713 = vpop.f32.mrb[0].mxu0
        %v4714 = vadd.f32 %v4489, %v4713
        %v4715 = vpop.f32.mrb[0].mxu0
        %4716 = vmatprep.mubr.f32.mxu0 %v3336
        %4717 = vmatmul.mubr.f32.gmra.mrb[0].mxu0 %v3466
        %v4718 = vpop.f32.mrb[0].mxu0
        %v4719 = vadd.f32 %v4494, %v4718
        %v4720 = vpop.f32.mrb[0].mxu0
        %4721 = vmatprep.mubr.f32.mxu0 %v3339
        %4722 = vmatmul.mubr.f32.gmra.mrb[0].mxu0 %v3469
        %v4723 = vpop.f32.mrb[0].mxu0
        %v4724 = vadd.f32 %v4499, %v4723
        %v4725 = vpop.f32.mrb[0].mxu0
        %4726 = vmatprep.mubr.f32.mxu0 %v3340
        %4727 = vmatmul.mubr.f32.gmra.mrb[0].mxu0 %v3471
        %v4728 = vpop.f32.mrb[0].mxu0
        %v4729 = vadd.f32 %v4504, %v4728
        %v4730 = vpop.f32.mrb[0].mxu0
        %4731 = vmatprep.mubr.f32.mxu0 %v3343
        %4732 = vmatmul.mubr.f32.gmra.mrb[0].mxu0 %v3474
        %v4733 = vpop.f32.mrb[0].mxu0
        %v4734 = vadd.f32 %v4509, %v4733
        %v4735 = vpop.f32.mrb[0].mxu0
        %4736 = vmatprep.mubr.f32.mxu0 %v3344
        %4737 = vmatmul.mubr.f32.gmra.mrb[0].mxu0 %v3476
        %v4738 = vpop.f32.mrb[0].mxu0
        %v4739 = vadd.f32 %v4514, %v4738
        %v4740 = vpop.f32.mrb[0].mxu0
        %4741 = vmatprep.mubr.f32.mxu0 %v3347
        %4742 = vmatmul.mubr.f32.gmra.mrb[0].mxu0 %v3479
        %v4743 = vpop.f32.mrb[0].mxu0
        %v4744 = vadd.f32 %v4519, %v4743
        %v4745 = vpop.f32.mrb[0].mxu0
        %4746 = vmatprep.mubr.f32.mxu0 %v3348
        %4747 = vmatmul.mubr.f32.gmra.mrb[0].mxu0 %v3481
        %v4748 = vpop.f32.mrb[0].mxu0
        %v4749 = vadd.f32 %v4524, %v4748
        %v4750 = vpop.f32.mrb[0].mxu0
        %4751 = vmatprep.mubr.f32.mxu0 %v3351
        %4752 = vmatmul.mubr.f32.gmra.mrb[0].mxu0 %v3484
        %v4753 = vpop.f32.mrb[0].mxu0
        %v4754 = vadd.f32 %v4529, %v4753
        %v4755 = vpop.f32.mrb[0].mxu0
        %4756 = vmatprep.mubr.f32.mxu0 %v3352
        %4757 = vmatmul.mubr.f32.gmra.mrb[0].mxu0 %v3486
        %v4758 = vpop.f32.mrb[0].mxu0
        %v4759 = vadd.f32 %v4534, %v4758
        %v4760 = vpop.f32.mrb[0].mxu0
        %4761 = vmatprep.mubr.f32.mxu0 %v3355
        %4762 = vmatmul.mubr.f32.gmra.mrb[0].mxu0 %v3489
        %v4763 = vpop.f32.mrb[0].mxu0
        %v4764 = vadd.f32 %v4539, %v4763
        %v4765 = vpop.f32.mrb[0].mxu0
        %4766 = vmatprep.mubr.f32.mxu0 %v3356
        %4767 = vmatmul.mubr.f32.gmra.mrb[0].mxu0 %v3491
        %v4768 = vpop.f32.mrb[0].mxu0
        %v4769 = vadd.f32 %v4544, %v4768
        %v4770 = vpop.f32.mrb[0].mxu0
        %4771 = vmatprep.mubr.f32.mxu0 %v3359
        %4772 = vmatmul.mubr.f32.gmra.mrb[0].mxu0 %v3494
        %v4773 = vpop.f32.mrb[0].mxu0
        %v4774 = vadd.f32 %v4549, %v4773
        %v4775 = vpop.f32.mrb[0].mxu0
        %4776 = vmatprep.mubr.f32.mxu0 %v3360
        %4777 = vmatmul.mubr.f32.gmra.mrb[0].mxu0 %v3496
        %v4778 = vpop.f32.mrb[0].mxu0
        %v4779 = vadd.f32 %v4554, %v4778
        %v4780 = vpop.f32.mrb[0].mxu0
        %4781 = vmatprep.mubr.f32.mxu0 %v3363
        %4782 = vmatmul.mubr.f32.gmra.mrb[0].mxu0 %v3499
        %v4783 = vpop.f32.mrb[0].mxu0
        %v4784 = vadd.f32 %v4559, %v4783
        %v4785 = vpop.f32.mrb[0].mxu0
        %4786 = vmatprep.mubr.f32.mxu0 %v3364
        %4787 = vmatmul.mubr.f32.gmra.mrb[0].mxu0 %v3501
        %v4788 = vpop.f32.mrb[0].mxu0
        %v4789 = vadd.f32 %v4564, %v4788
        %v4790 = vpop.f32.mrb[0].mxu0
        %4791 = vmatprep.mubr.f32.mxu0 %v3367
        %4792 = vmatmul.mubr.f32.gmra.mrb[0].mxu0 %v3504
        %v4793 = vpop.f32.mrb[0].mxu0
        %v4794 = vadd.f32 %v4569, %v4793
        %v4795 = vpop.f32.mrb[0].mxu0
        %4796 = vmatprep.mubr.f32.mxu0 %v3368
        %4797 = vmatmul.mubr.f32.gmra.mrb[0].mxu0 %v3506
        %v4798 = vpop.f32.mrb[0].mxu0
        %v4799 = vadd.f32 %v4574, %v4798
        %v4800 = vpop.f32.mrb[0].mxu0
        %4801 = vmatprep.mubr.f32.mxu0 %v3371
        %4802 = vmatmul.mubr.f32.gmra.mrb[0].mxu0 %v3672
        %v4803 = vpop.f32.mrb[0].mxu0
        %v4804 = vadd.f32 %v4579, %v4803
        %v4805 = vpop.f32.mrb[0].mxu0
        %4806 = vmatprep.mubr.f32.mxu0 %v3372
        %4807 = vmatmul.mubr.f32.gmra.mrb[0].mxu0 %v3674
        %v4808 = vpop.f32.mrb[0].mxu0
        %v4809 = vadd.f32 %v4584, %v4808
        %v4810 = vpop.f32.mrb[0].mxu0
        %4811 = vmatprep.mubr.f32.mxu0 %v3375
        %4812 = vmatmul.mubr.f32.gmra.mrb[0].mxu0 %v3690
        %v4813 = vpop.f32.mrb[0].mxu0
        %v4814 = vadd.f32 %v4589, %v4813
        %v4815 = vpop.f32.mrb[0].mxu0
        %4816 = vmatprep.mubr.f32.mxu0 %v3376
        %4817 = vmatmul.mubr.f32.gmra.mrb[0].mxu0 %v3692
        %v4818 = vpop.f32.mrb[0].mxu0
        %v4819 = vadd.f32 %v4594, %v4818
        %v4820 = vpop.f32.mrb[0].mxu0
        %4821 = vdwg.mxu0
        %4822 = vmatprep.subr.mxu0 0.0
        %4823 = vmatpush1.msra.mxu0 %v3831
        %4824 = vmatprep.subr.mxu0 0.0
        %4825 = vmatpush1.msra.mxu0 %v3832
        %4826 = vmatprep.subr.mxu0 0.0
        %4827 = vmatpush1.msra.mxu0 %v3833
        %4828 = vmatprep.subr.mxu0 0.0
        %4829 = vmatpush1.msra.mxu0 %v3834
        %4830 = vmatprep.subr.mxu0 0.0
        %4831 = vmatpush1.msra.mxu0 %v3835
        %4832 = vmatprep.subr.mxu0 0.0
        %4833 = vmatpush1.msra.mxu0 %v3836
        %4834 = vmatprep.subr.mxu0 0.0
        %4835 = vmatpush1.msra.mxu0 %v3837
        %4836 = vmatprep.subr.mxu0 0.0
        %4837 = vmatpush1.msra.mxu0 %v3838
        %4838 = vmatprep.subr.mxu0 0.0
        %4839 = vmatpush1.msra.mxu0 %v3839
        %4840 = vmatprep.subr.mxu0 0.0
        %4841 = vmatpush1.msra.mxu0 %v3840
        %4842 = vmatprep.subr.mxu0 0.0
        %4843 = vmatpush1.msra.mxu0 %v3841
        %4844 = vmatprep.subr.mxu0 0.0
        %4845 = vmatpush1.msra.mxu0 %v3842
        %4846 = vmatprep.subr.mxu0 0.0
        %4847 = vmatpush1.msra.mxu0 %v3843
        %4848 = vmatprep.subr.mxu0 0.0
        %4849 = vmatpush1.msra.mxu0 %v3844
        %4850 = vmatprep.subr.mxu0 0.0
        %4851 = vmatpush1.msra.mxu0 %v3845
        %4852 = vmatprep.subr.mxu0 0.0
        %4853 = vmatpush1.msra.mxu0 %v3846
        %4854 = vmatprep.subr.mxu0 0.0
        %4855 = vmatpush1.msra.mxu0 %v3847
        %4856 = vmatprep.subr.mxu0 0.0
        %4857 = vmatpush1.msra.mxu0 %v3848
        %4858 = vmatprep.subr.mxu0 0.0
        %4859 = vmatpush1.msra.mxu0 %v3849
        %4860 = vmatprep.subr.mxu0 0.0
        %4861 = vmatpush1.msra.mxu0 %v3850
        %4862 = vmatprep.subr.mxu0 0.0
        %4863 = vmatpush1.msra.mxu0 0.0
        %4864 = vmatprep.subr.mxu0 0.0
        %4865 = vmatpush1.msra.mxu0 0.0
        %4866 = vmatprep.subr.mxu0 0.0
        %4867 = vmatpush1.msra.mxu0 0.0
        %4868 = vmatprep.subr.mxu0 0.0
        %4869 = vmatpush1.msra.mxu0 0.0
        %4870 = vmatprep.subr.mxu0 0.0
        %4871 = vmatpush1.msra.mxu0 0.0
        %4872 = vmatprep.subr.mxu0 0.0
        %4873 = vmatpush1.msra.mxu0 0.0
        %4874 = vmatprep.subr.mxu0 0.0
        %4875 = vmatpush1.msra.mxu0 0.0
        %4876 = vmatprep.subr.mxu0 0.0
        %4877 = vmatpush1.msra.mxu0 0.0
        %4878 = vmatprep.subr.mxu0 0.0
        %4879 = vmatpush1.msra.mxu0 0.0
        %4880 = vmatprep.subr.mxu0 0.0
        %4881 = vmatpush1.msra.mxu0 0.0
        %4882 = vmatprep.subr.mxu0 0.0
        %4883 = vmatpush1.msra.mxu0 0.0
        %4884 = vmatprep.subr.mxu0 0.0
        %4885 = vmatpush1.msra.mxu0 0.0
        %4886 = vmatprep.mubr.f32.mxu0 %v3858
        %4887 = vmatmul.mubr.f32.gmra.mrb[0].mxu0 %v3567
        %v4888 = vpop.f32.mrb[0].mxu0
        %v4889 = vadd.f32 %v4664, %v4888
        %v4890 = vpop.f32.mrb[0].mxu0
        %4891 = vmatprep.mubr.f32.mxu0 %v3860
        %4892 = vmatmul.mubr.f32.gmra.mrb[0].mxu0 %v3569
        %v4893 = vpop.f32.mrb[0].mxu0
        %v4894 = vadd.f32 %v4669, %v4893
        %v4895 = vpop.f32.mrb[0].mxu0
        %4896 = vmatprep.mubr.f32.mxu0 %v3862
        %4897 = vmatmul.mubr.f32.gmra.mrb[0].mxu0 %v3572
        %v4898 = vpop.f32.mrb[0].mxu0
        %v4899 = vadd.f32 %v4674, %v4898
        %v4900 = vpop.f32.mrb[0].mxu0
        %4901 = vmatprep.mubr.f32.mxu0 %v3864
        %4902 = vmatmul.mubr.f32.gmra.mrb[0].mxu0 %v3574
        %v4903 = vpop.f32.mrb[0].mxu0
        %v4904 = vadd.f32 %v4679, %v4903
        %v4905 = vpop.f32.mrb[0].mxu0
        %4906 = vmatprep.mubr.f32.mxu0 %v3866
        %4907 = vmatmul.mubr.f32.gmra.mrb[0].mxu0 %v3577
        %v4908 = vpop.f32.mrb[0].mxu0
        %v4909 = vadd.f32 %v4684, %v4908
        %v4910 = vpop.f32.mrb[0].mxu0
        %4911 = vmatprep.mubr.f32.mxu0 %v3868
        %4912 = vmatmul.mubr.f32.gmra.mrb[0].mxu0 %v3579
        %v4913 = vpop.f32.mrb[0].mxu0
        %v4914 = vadd.f32 %v4689, %v4913
        %v4915 = vpop.f32.mrb[0].mxu0
        %4916 = vmatprep.mubr.f32.mxu0 %v3870
        %4917 = vmatmul.mubr.f32.gmra.mrb[0].mxu0 %v3582
        %v4918 = vpop.f32.mrb[0].mxu0
        %v4919 = vadd.f32 %v4694, %v4918
        %v4920 = vpop.f32.mrb[0].mxu0
        %4921 = vmatprep.mubr.f32.mxu0 %v3872
        %4922 = vmatmul.mubr.f32.gmra.mrb[0].mxu0 %v3584
        %v4923 = vpop.f32.mrb[0].mxu0
        %v4924 = vadd.f32 %v4699, %v4923
        %v4925 = vpop.f32.mrb[0].mxu0
        %4926 = vmatprep.mubr.f32.mxu0 %v3874
        %4927 = vmatmul.mubr.f32.gmra.mrb[0].mxu0 %v3587
        %v4928 = vpop.f32.mrb[0].mxu0
        %v4929 = vadd.f32 %v4704, %v4928
        %v4930 = vpop.f32.mrb[0].mxu0
        %4931 = vmatprep.mubr.f32.mxu0 %v3876
        %4932 = vmatmul.mubr.f32.gmra.mrb[0].mxu0 %v3589
        %v4933 = vpop.f32.mrb[0].mxu0
        %v4934 = vadd.f32 %v4709, %v4933
        %v4935 = vpop.f32.mrb[0].mxu0
        %4936 = vmatprep.mubr.f32.mxu0 %v3878
        %4937 = vmatmul.mubr.f32.gmra.mrb[0].mxu0 %v3592
        %v4938 = vpop.f32.mrb[0].mxu0
        %v4939 = vadd.f32 %v4714, %v4938
        %v4940 = vpop.f32.mrb[0].mxu0
        %4941 = vmatprep.mubr.f32.mxu0 %v3880
        %4942 = vmatmul.mubr.f32.gmra.mrb[0].mxu0 %v3594
        %v4943 = vpop.f32.mrb[0].mxu0
        %v4944 = vadd.f32 %v4719, %v4943
        %v4945 = vpop.f32.mrb[0].mxu0
        %4946 = vmatprep.mubr.f32.mxu0 %v3882
        %4947 = vmatmul.mubr.f32.gmra.mrb[0].mxu0 %v3597
        %v4948 = vpop.f32.mrb[0].mxu0
        %v4949 = vadd.f32 %v4724, %v4948
        %v4950 = vpop.f32.mrb[0].mxu0
        %4951 = vmatprep.mubr.f32.mxu0 %v3884
        %4952 = vmatmul.mubr.f32.gmra.mrb[0].mxu0 %v3599
        %v4953 = vpop.f32.mrb[0].mxu0
        %v4954 = vadd.f32 %v4729, %v4953
        %v4955 = vpop.f32.mrb[0].mxu0
        %4956 = vmatprep.mubr.f32.mxu0 %v3886
        %4957 = vmatmul.mubr.f32.gmra.mrb[0].mxu0 %v3602
        %v4958 = vpop.f32.mrb[0].mxu0
        %v4959 = vadd.f32 %v4734, %v4958
        %v4960 = vpop.f32.mrb[0].mxu0
        %4961 = vmatprep.mubr.f32.mxu0 %v3888
        %4962 = vmatmul.mubr.f32.gmra.mrb[0].mxu0 %v3604
        %v4963 = vpop.f32.mrb[0].mxu0
        %v4964 = vadd.f32 %v4739, %v4963
        %v4965 = vpop.f32.mrb[0].mxu0
        %4966 = vmatprep.mubr.f32.mxu0 %v3890
        %4967 = vmatmul.mubr.f32.gmra.mrb[0].mxu0 %v3607
        %v4968 = vpop.f32.mrb[0].mxu0
        %v4969 = vadd.f32 %v4744, %v4968
        %v4970 = vpop.f32.mrb[0].mxu0
        %4971 = vmatprep.mubr.f32.mxu0 %v3892
        %4972 = vmatmul.mubr.f32.gmra.mrb[0].mxu0 %v3609
        %v4973 = vpop.f32.mrb[0].mxu0
        %v4974 = vadd.f32 %v4749, %v4973
        %v4975 = vpop.f32.mrb[0].mxu0
        %4976 = vmatprep.mubr.f32.mxu0 %v3894
        %4977 = vmatmul.mubr.f32.gmra.mrb[0].mxu0 %v3612
        %v4978 = vpop.f32.mrb[0].mxu0
        %v4979 = vadd.f32 %v4754, %v4978
        %v4980 = vpop.f32.mrb[0].mxu0
        %4981 = vmatprep.mubr.f32.mxu0 %v3896
        %4982 = vmatmul.mubr.f32.gmra.mrb[0].mxu0 %v3614
        %v4983 = vpop.f32.mrb[0].mxu0
        %v4984 = vadd.f32 %v4759, %v4983
        %v4985 = vpop.f32.mrb[0].mxu0
        %4986 = vmatprep.mubr.f32.mxu0 %v3898
        %4987 = vmatmul.mubr.f32.gmra.mrb[0].mxu0 %v3617
        %v4988 = vpop.f32.mrb[0].mxu0
        %v4989 = vadd.f32 %v4764, %v4988
        %v4990 = vpop.f32.mrb[0].mxu0
        %4991 = vmatprep.mubr.f32.mxu0 %v3900
        %4992 = vmatmul.mubr.f32.gmra.mrb[0].mxu0 %v3619
        %v4993 = vpop.f32.mrb[0].mxu0
        %v4994 = vadd.f32 %v4769, %v4993
        %v4995 = vpop.f32.mrb[0].mxu0
        %4996 = vmatprep.mubr.f32.mxu0 %v3902
        %4997 = vmatmul.mubr.f32.gmra.mrb[0].mxu0 %v3622
        %v4998 = vpop.f32.mrb[0].mxu0
        %v4999 = vadd.f32 %v4774, %v4998
        %v5000 = vpop.f32.mrb[0].mxu0
        %5001 = vmatprep.mubr.f32.mxu0 %v3904
        %5002 = vmatmul.mubr.f32.gmra.mrb[0].mxu0 %v3624
        %v5003 = vpop.f32.mrb[0].mxu0
        %v5004 = vadd.f32 %v4779, %v5003
        %v5005 = vpop.f32.mrb[0].mxu0
        %5006 = vmatprep.mubr.f32.mxu0 %v3906
        %5007 = vmatmul.mubr.f32.gmra.mrb[0].mxu0 %v3627
        %v5008 = vpop.f32.mrb[0].mxu0
        %v5009 = vadd.f32 %v4784, %v5008
        %v5010 = vpop.f32.mrb[0].mxu0
        %5011 = vmatprep.mubr.f32.mxu0 %v3908
        %5012 = vmatmul.mubr.f32.gmra.mrb[0].mxu0 %v3629
        %v5013 = vpop.f32.mrb[0].mxu0
        %v5014 = vadd.f32 %v4789, %v5013
        %v5015 = vpop.f32.mrb[0].mxu0
        %5016 = vmatprep.mubr.f32.mxu0 %v3910
        %5017 = vmatmul.mubr.f32.gmra.mrb[0].mxu0 %v3632
        %v5018 = vpop.f32.mrb[0].mxu0
        %v5019 = vadd.f32 %v4794, %v5018
        %v5020 = vpop.f32.mrb[0].mxu0
        %5021 = vmatprep.mubr.f32.mxu0 %v3912
        %5022 = vmatmul.mubr.f32.gmra.mrb[0].mxu0 %v3634
        %v5023 = vpop.f32.mrb[0].mxu0
        %v5024 = vadd.f32 %v4799, %v5023
        %v5025 = vpop.f32.mrb[0].mxu0
        %5026 = vmatprep.mubr.f32.mxu0 %v3914
        %5027 = vmatmul.mubr.f32.gmra.mrb[0].mxu0 %v3680
        %v5028 = vpop.f32.mrb[0].mxu0
        %v5029 = vadd.f32 %v4804, %v5028
        %v5030 = vpop.f32.mrb[0].mxu0
        %5031 = vmatprep.mubr.f32.mxu0 %v3916
        %5032 = vmatmul.mubr.f32.gmra.mrb[0].mxu0 %v3682
        %v5033 = vpop.f32.mrb[0].mxu0
        %v5034 = vadd.f32 %v4809, %v5033
        %v5035 = vpop.f32.mrb[0].mxu0
        %5036 = vmatprep.mubr.f32.mxu0 %v3918
        %5037 = vmatmul.mubr.f32.gmra.mrb[0].mxu0 %v3698
        %v5038 = vpop.f32.mrb[0].mxu0
        %v5039 = vadd.f32 %v4814, %v5038
        %v5040 = vpop.f32.mrb[0].mxu0
        %5041 = vmatprep.mubr.f32.mxu0 %v3920
        %5042 = vmatmul.mubr.f32.gmra.mrb[0].mxu0 %v3700
        %v5043 = vpop.f32.mrb[0].mxu0
        %v5044 = vadd.f32 %v4819, %v5043
        %v5045 = vpop.f32.mrb[0].mxu0
        %5046 = vdwg.mxu0
        %v5047 = vmax.f32 %v4889, 0.0
        %v5048 = vmax.f32 %v4894, 0.0
        %v5049 = vmax.f32 %v4899, 0.0
        %v5050 = vmax.f32 %v4904, 0.0
        %v5051 = vmax.f32 %v4909, 0.0
        %v5052 = vmax.f32 %v4914, 0.0
        %v5053 = vmax.f32 %v4919, 0.0
        %v5054 = vmax.f32 %v4924, 0.0
        %v5055 = vmax.f32 %v4929, 0.0
        %v5056 = vmax.f32 %v4934, 0.0
        %v5057 = vmax.f32 %v4939, 0.0
        %v5058 = vmax.f32 %v4944, 0.0
        %v5059 = vmax.f32 %v4949, 0.0
        %v5060 = vmax.f32 %v4954, 0.0
        %v5061 = vmax.f32 %v4959, 0.0
        %v5062 = vmax.f32 %v4964, 0.0
        %v5063 = vmax.f32 %v4969, 0.0
        %v5064 = vmax.f32 %v4974, 0.0
        %v5065 = vmax.f32 %v4979, 0.0
        %v5066 = vmax.f32 %v4984, 0.0
        %v5067 = vmax.f32 %v4989, 0.0
        %v5068 = vmax.f32 %v4994, 0.0
        %v5069 = vmax.f32 %v4999, 0.0
        %v5070 = vmax.f32 %v5004, 0.0
        %v5071 = vmax.f32 %v5009, 0.0
        %v5072 = vmax.f32 %v5014, 0.0
        %v5073 = vmax.f32 %v5019, 0.0
        %v5074 = vmax.f32 %v5024, 0.0
        %v5075 = vmax.f32 %v5029, 0.0
        %v5076 = vmax.f32 %v5034, 0.0
        %v5077 = vmax.f32 %v5039, 0.0
        %v5078 = vmax.f32 %v5044, 0.0
        %5079 = vst.msk [vmem:[#allocation3] sm:$0xff] %vm1175, 0.0
        %5080 = vst.msk [vmem:[#allocation3 + $0x8] sm:$0xff] %vm1175, 0.0
        %5081 = vst.msk [vmem:[#allocation3 + $0x10] sm:$0xff] %vm1175, 0.0
        %5082 = vst.msk [vmem:[#allocation3 + $0x18] sm:$0xff] %vm1175, 0.0
        %5083 = vst.msk [vmem:[#allocation3 + $0x20] sm:$0xff] %vm1175, 0.0
        %5084 = vst.msk [vmem:[#allocation3 + $0x28] sm:$0xff] %vm1175, 0.0
        %5085 = vst.msk [vmem:[#allocation3 + $0x30] sm:$0xff] %vm1175, 0.0
        %5086 = vst.msk [vmem:[#allocation3 + $0x38] sm:$0xff] %vm1175, 0.0
        %5087 = vst.msk [vmem:[#allocation3 + $0x40] sm:$0xff] %vm1175, 0.0
        %5088 = vst.msk [vmem:[#allocation3 + $0x48] sm:$0xff] %vm1175, 0.0
        %5089 = vst.msk [vmem:[#allocation3 + $0x50] sm:$0xff] %vm1175, 0.0
        %5090 = vst.msk [vmem:[#allocation3 + $0x58] sm:$0xff] %vm1175, 0.0
        %5091 = vst.msk [vmem:[#allocation3 + $0x60] sm:$0xff] %vm1175, 0.0
        %5092 = vst.msk [vmem:[#allocation3 + $0x68] sm:$0xff] %vm1175, 0.0
        %5093 = vst.msk [vmem:[#allocation3 + $0x70] sm:$0xff] %vm1175, 0.0
        %5094 = vst.msk [vmem:[#allocation3 + $0x78] sm:$0xff] %vm1175, 0.0
        %5095 = vst.msk [vmem:[#allocation3 + $0x80] sm:$0xff] %vm1175, 0.0
        %5096 = vst.msk [vmem:[#allocation3 + $0x88] sm:$0xff] %vm1175, 0.0
        %5097 = vst.msk [vmem:[#allocation3 + $0x90] sm:$0xff] %vm1175, 0.0
        %5098 = vst.msk [vmem:[#allocation3 + $0x98] sm:$0xff] %vm1175, 0.0
        %5099 = vst.msk [vmem:[#allocation3 + $0xa0] sm:$0xff] %vm1175, 0.0
        %5100 = vst.msk [vmem:[#allocation3 + $0xa8] sm:$0xff] %vm1175, 0.0
        %5101 = vst.msk [vmem:[#allocation3 + $0xb0] sm:$0xff] %vm1175, 0.0
        %5102 = vst.msk [vmem:[#allocation3 + $0xb8] sm:$0xff] %vm1175, 0.0
        %5103 = vst.msk [vmem:[#allocation3 + $0xc0] sm:$0xff] %vm1175, 0.0
        %5104 = vst.msk [vmem:[#allocation3 + $0xc8] sm:$0xff] %vm1175, 0.0
        %5105 = vst.msk [vmem:[#allocation3 + $0xd0] sm:$0xff] %vm1175, 0.0
        %5106 = vst.msk [vmem:[#allocation3 + $0xd8] sm:$0xff] %vm1175, 0.0
        %5107 = vst.msk [vmem:[#allocation3 + $0xe0] sm:$0xff] %vm1175, 0.0
        %5108 = vst.msk [vmem:[#allocation3 + $0xe8] sm:$0xff] %vm1175, 0.0
        %5109 = vst.msk [vmem:[#allocation3 + $0xf0] sm:$0xff] %vm1175, 0.0
        %5110 = vst.msk [vmem:[#allocation3 + $0xf8] sm:$0xff] %vm1175, 0.0
        %5111 = vst.msk [vmem:[#allocation3 + $0x100] sm:$0xff] %vm1175, 0.0
        %5112 = vst.msk [vmem:[#allocation3 + $0x108] sm:$0xff] %vm1175, 0.0
        %5113 = vst.msk [vmem:[#allocation3 + $0x110] sm:$0xff] %vm1175, 0.0
        %5114 = vst.msk [vmem:[#allocation3 + $0x118] sm:$0xff] %vm1175, 0.0
        %5115 = vst.msk [vmem:[#allocation3 + $0x120] sm:$0xff] %vm1175, 0.0
        %5116 = vst.msk [vmem:[#allocation3 + $0x128] sm:$0xff] %vm1175, 0.0
        %5117 = vst.msk [vmem:[#allocation3 + $0x130] sm:$0xff] %vm1175, 0.0
        %5118 = vst.msk [vmem:[#allocation3 + $0x138] sm:$0xff] %vm1175, 0.0
        %5119 = vst.msk [vmem:[#allocation3 + $0x140] sm:$0xff] %vm1175, 0.0
        %5120 = vst.msk [vmem:[#allocation3 + $0x148] sm:$0xff] %vm1175, 0.0
        %5121 = vst.msk [vmem:[#allocation3 + $0x150] sm:$0xff] %vm1175, 0.0
        %5122 = vst.msk [vmem:[#allocation3 + $0x158] sm:$0xff] %vm1175, 0.0
        %5123 = vst.msk [vmem:[#allocation3 + $0x160] sm:$0xff] %vm1175, 0.0
        %5124 = vst.msk [vmem:[#allocation3 + $0x168] sm:$0xff] %vm1175, 0.0
        %5125 = vst.msk [vmem:[#allocation3 + $0x170] sm:$0xff] %vm1175, 0.0
        %5126 = vst.msk [vmem:[#allocation3 + $0x178] sm:$0xff] %vm1175, 0.0
        %5127 = vst.msk [vmem:[#allocation3 + $0x180] sm:$0xff] %vm1175, 0.0
        %5128 = vst.msk [vmem:[#allocation3 + $0x188] sm:$0xff] %vm1175, 0.0
        %5129 = vst.msk [vmem:[#allocation3 + $0x190] sm:$0xff] %vm1175, 0.0
        %5130 = vst.msk [vmem:[#allocation3 + $0x198] sm:$0xff] %vm1175, 0.0
        %5131 = vst.msk [vmem:[#allocation3 + $0x1a0] sm:$0xff] %vm1175, 0.0
        %5132 = vst.msk [vmem:[#allocation3 + $0x1a8] sm:$0xff] %vm1175, 0.0
        %5133 = vst.msk [vmem:[#allocation3 + $0x1b0] sm:$0xff] %vm1175, 0.0
        %5134 = vst.msk [vmem:[#allocation3 + $0x1b8] sm:$0xff] %vm1175, 0.0
        %5135 = vst.msk [vmem:[#allocation3 + $0x1c0] sm:$0xff] %vm1175, 0.0
        %5136 = vst.msk [vmem:[#allocation3 + $0x1c8] sm:$0xff] %vm1175, 0.0
        %5137 = vst.msk [vmem:[#allocation3 + $0x1d0] sm:$0xff] %vm1175, 0.0
        %5138 = vst.msk [vmem:[#allocation3 + $0x1d8] sm:$0xff] %vm1175, 0.0
        %5139 = vst.msk [vmem:[#allocation3 + $0x1e0] sm:$0xff] %vm1175, 0.0
        %5140 = vst.msk [vmem:[#allocation3 + $0x1e8] sm:$0xff] %vm1175, 0.0
        %5141 = vst.msk [vmem:[#allocation3 + $0x1f0] sm:$0xff] %vm1175, 0.0
        %5142 = vst.msk [vmem:[#allocation3 + $0x1f8] sm:$0xff] %vm1175, 0.0
        %5143 = vst.msk [vmem:[#allocation3 + $0x200] sm:$0xff] %vm1175, 0.0
        %5144 = vst.msk [vmem:[#allocation3 + $0x208] sm:$0xff] %vm1175, 0.0
        %5145 = vst.msk [vmem:[#allocation3 + $0x210] sm:$0xff] %vm1175, 0.0
        %5146 = vst.msk [vmem:[#allocation3 + $0x218] sm:$0xff] %vm1175, 0.0
        %5147 = vst.msk [vmem:[#allocation3 + $0x220] sm:$0xff] %vm1175, 0.0
        %5148 = vst.msk [vmem:[#allocation3 + $0x228] sm:$0xff] %vm1175, 0.0
        %5149 = vst.msk [vmem:[#allocation3 + $0x230] sm:$0xff] %vm1175, 0.0
        %5150 = vst.msk [vmem:[#allocation3 + $0x238] sm:$0xff] %vm1175, 0.0
        %s5151 = scalar_lea.vmem [#allocation3], 32
        %5152 = vst.msk [vmem:[%s5151 + $0x8] sm:$0xff] %vm1175, %v5047
        %5153 = vst.msk [vmem:[%s5151 + $0x10] sm:$0xff] %vm1175, %v5048
        %5154 = vst.msk [vmem:[%s5151 + $0x28] sm:$0xff] %vm1175, %v5049
        %5155 = vst.msk [vmem:[%s5151 + $0x30] sm:$0xff] %vm1175, %v5050
        %5156 = vst.msk [vmem:[%s5151 + $0x48] sm:$0xff] %vm1175, %v5051
        %5157 = vst.msk [vmem:[%s5151 + $0x50] sm:$0xff] %vm1175, %v5052
        %5158 = vst.msk [vmem:[%s5151 + $0x68] sm:$0xff] %vm1175, %v5053
        %5159 = vst.msk [vmem:[%s5151 + $0x70] sm:$0xff] %vm1175, %v5054
        %5160 = vst.msk [vmem:[%s5151 + $0x88] sm:$0xff] %vm1175, %v5055
        %5161 = vst.msk [vmem:[%s5151 + $0x90] sm:$0xff] %vm1175, %v5056
        %5162 = vst.msk [vmem:[%s5151 + $0xa8] sm:$0xff] %vm1175, %v5057
        %5163 = vst.msk [vmem:[%s5151 + $0xb0] sm:$0xff] %vm1175, %v5058
        %5164 = vst.msk [vmem:[%s5151 + $0xc8] sm:$0xff] %vm1175, %v5059
        %5165 = vst.msk [vmem:[%s5151 + $0xd0] sm:$0xff] %vm1175, %v5060
        %5166 = vst.msk [vmem:[%s5151 + $0xe8] sm:$0xff] %vm1175, %v5061
        %5167 = vst.msk [vmem:[%s5151 + $0xf0] sm:$0xff] %vm1175, %v5062
        %5168 = vst.msk [vmem:[%s5151 + $0x108] sm:$0xff] %vm1175, %v5063
        %5169 = vst.msk [vmem:[%s5151 + $0x110] sm:$0xff] %vm1175, %v5064
        %5170 = vst.msk [vmem:[%s5151 + $0x128] sm:$0xff] %vm1175, %v5065
        %5171 = vst.msk [vmem:[%s5151 + $0x130] sm:$0xff] %vm1175, %v5066
        %5172 = vst.msk [vmem:[%s5151 + $0x148] sm:$0xff] %vm1175, %v5067
        %5173 = vst.msk [vmem:[%s5151 + $0x150] sm:$0xff] %vm1175, %v5068
        %5174 = vst.msk [vmem:[%s5151 + $0x168] sm:$0xff] %vm1175, %v5069
        %5175 = vst.msk [vmem:[%s5151 + $0x170] sm:$0xff] %vm1175, %v5070
        %5176 = vst.msk [vmem:[%s5151 + $0x188] sm:$0xff] %vm1175, %v5071
        %5177 = vst.msk [vmem:[%s5151 + $0x190] sm:$0xff] %vm1175, %v5072
        %5178 = vst.msk [vmem:[%s5151 + $0x1a8] sm:$0xff] %vm1175, %v5073
        %5179 = vst.msk [vmem:[%s5151 + $0x1b0] sm:$0xff] %vm1175, %v5074
        %5180 = vst.msk [vmem:[%s5151 + $0x1c8] sm:$0xff] %vm1175, %v5075
        %5181 = vst.msk [vmem:[%s5151 + $0x1d0] sm:$0xff] %vm1175, %v5076
        %5182 = vst.msk [vmem:[%s5151 + $0x1e8] sm:$0xff] %vm1175, %v5077
        %5183 = vst.msk [vmem:[%s5151 + $0x1f0] sm:$0xff] %vm1175, %v5078
        %v5184 = vld [vmem:[#allocation3] sm:$0xff]
        %v5185 = vld [vmem:[#allocation3 + $0x8] sm:$0xff]
        %v5186 = vld [vmem:[#allocation3 + $0x10] sm:$0xff]
        %v5187 = vld [vmem:[#allocation3 + $0x18] sm:$0xff]
        %v5188 = vld [vmem:[#allocation3 + $0x20] sm:$0xff]
        %v5189 = vld [vmem:[#allocation3 + $0x28] sm:$0xff]
        %v5190 = vld [vmem:[#allocation3 + $0x30] sm:$0xff]
        %v5191 = vld [vmem:[#allocation3 + $0x38] sm:$0xff]
        %v5192 = vld [vmem:[#allocation3 + $0x40] sm:$0xff]
        %v5193 = vld [vmem:[#allocation3 + $0x48] sm:$0xff]
        %v5194 = vld [vmem:[#allocation3 + $0x50] sm:$0xff]
        %v5195 = vld [vmem:[#allocation3 + $0x58] sm:$0xff]
        %v5196 = vld [vmem:[#allocation3 + $0x60] sm:$0xff]
        %v5197 = vld [vmem:[#allocation3 + $0x68] sm:$0xff]
        %v5198 = vld [vmem:[#allocation3 + $0x70] sm:$0xff]
        %v5199 = vld [vmem:[#allocation3 + $0x78] sm:$0xff]
        %v5200 = vld [vmem:[#allocation3 + $0x80] sm:$0xff]
        %v5201 = vld [vmem:[#allocation3 + $0x88] sm:$0xff]
        %v5202 = vld [vmem:[#allocation3 + $0x90] sm:$0xff]
        %v5203 = vld [vmem:[#allocation3 + $0x98] sm:$0xff]
        %v5204 = vld [vmem:[#allocation3 + $0xa0] sm:$0xff]
        %v5205 = vld [vmem:[#allocation3 + $0xa8] sm:$0xff]
        %v5206 = vld [vmem:[#allocation3 + $0xb0] sm:$0xff]
        %v5207 = vld [vmem:[#allocation3 + $0xb8] sm:$0xff]
        %v5208 = vld [vmem:[#allocation3 + $0xc0] sm:$0xff]
        %v5209 = vld [vmem:[#allocation3 + $0xc8] sm:$0xff]
        %v5210 = vld [vmem:[#allocation3 + $0xd0] sm:$0xff]
        %v5211 = vld [vmem:[#allocation3 + $0xd8] sm:$0xff]
        %v5212 = vld [vmem:[#allocation3 + $0xe0] sm:$0xff]
        %v5213 = vld [vmem:[#allocation3 + $0xe8] sm:$0xff]
        %v5214 = vld [vmem:[#allocation3 + $0xf0] sm:$0xff]
        %v5215 = vld [vmem:[#allocation3 + $0xf8] sm:$0xff]
        %v5216 = vld [vmem:[#allocation3 + $0x100] sm:$0xff]
        %v5217 = vld [vmem:[#allocation3 + $0x108] sm:$0xff]
        %v5218 = vld [vmem:[#allocation3 + $0x110] sm:$0xff]
        %v5219 = vld [vmem:[#allocation3 + $0x118] sm:$0xff]
        %v5220 = vld [vmem:[#allocation3 + $0x120] sm:$0xff]
        %v5221 = vld [vmem:[#allocation3 + $0x128] sm:$0xff]
        %v5222 = vld [vmem:[#allocation3 + $0x130] sm:$0xff]
        %v5223 = vld [vmem:[#allocation3 + $0x138] sm:$0xff]
        %v5224 = vld [vmem:[#allocation3 + $0x140] sm:$0xff]
        %v5225 = vld [vmem:[#allocation3 + $0x148] sm:$0xff]
        %v5226 = vld [vmem:[#allocation3 + $0x150] sm:$0xff]
        %v5227 = vld [vmem:[#allocation3 + $0x158] sm:$0xff]
        %v5228 = vld [vmem:[#allocation3 + $0x160] sm:$0xff]
        %v5229 = vld [vmem:[#allocation3 + $0x168] sm:$0xff]
        %v5230 = vld [vmem:[#allocation3 + $0x170] sm:$0xff]
        %v5231 = vld [vmem:[#allocation3 + $0x178] sm:$0xff]
        %v5232 = vld [vmem:[#allocation3 + $0x180] sm:$0xff]
        %v5233 = vld [vmem:[#allocation3 + $0x188] sm:$0xff]
        %v5234 = vld [vmem:[#allocation3 + $0x190] sm:$0xff]
        %v5235 = vld [vmem:[#allocation3 + $0x198] sm:$0xff]
        %v5236 = vld [vmem:[#allocation3 + $0x1a0] sm:$0xff]
        %v5237 = vld [vmem:[#allocation3 + $0x1a8] sm:$0xff]
        %v5238 = vld [vmem:[#allocation3 + $0x1b0] sm:$0xff]
        %v5239 = vld [vmem:[#allocation3 + $0x1b8] sm:$0xff]
        %v5240 = vld [vmem:[#allocation3 + $0x1c0] sm:$0xff]
        %v5241 = vld [vmem:[#allocation3 + $0x1c8] sm:$0xff]
        %v5242 = vld [vmem:[#allocation3 + $0x1d0] sm:$0xff]
        %v5243 = vld [vmem:[#allocation3 + $0x1d8] sm:$0xff]
        %v5244 = vld [vmem:[#allocation3 + $0x1e0] sm:$0xff]
        %v5245 = vld [vmem:[#allocation3 + $0x1e8] sm:$0xff]
        %v5246 = vld [vmem:[#allocation3 + $0x1f0] sm:$0xff]
        %v5247 = vld [vmem:[#allocation3 + $0x1f8] sm:$0xff]
        %v5248 = vld [vmem:[#allocation3 + $0x200] sm:$0xff]
        %v5249 = vld [vmem:[#allocation3 + $0x208] sm:$0xff]
        %v5250 = vld [vmem:[#allocation3 + $0x210] sm:$0xff]
        %v5251 = vld [vmem:[#allocation3 + $0x218] sm:$0xff]
        %v5252 = vld [vmem:[#allocation3 + $0x220] sm:$0xff]
        %v5253 = vld [vmem:[#allocation3 + $0x228] sm:$0xff]
        %v5254 = vld [vmem:[#allocation3 + $0x230] sm:$0xff]
        %v5255 = vld [vmem:[#allocation3 + $0x238] sm:$0xff]
        %v5304 = vrot.slane %v5184, 7
        %v5305 = vrot.slane %v5185, 7
        %v5306 = vsel %vm3426, %v5304, %v5305
        %v5307 = vrot.slane %v5186, 7
        %v5308 = vsel %vm3426, %v5305, %v5307
        %v5309 = vrot.slane %v5188, 7
        %v5310 = vrot.slane %v5189, 7
        %v5311 = vsel %vm3426, %v5309, %v5310
        %v5312 = vrot.slane %v5190, 7
        %v5313 = vsel %vm3426, %v5310, %v5312
        %v5314 = vrot.slane %v5192, 7
        %v5315 = vrot.slane %v5193, 7
        %v5316 = vsel %vm3426, %v5314, %v5315
        %v5317 = vrot.slane %v5194, 7
        %v5318 = vsel %vm3426, %v5315, %v5317
        %v5319 = vrot.slane %v5196, 7
        %v5320 = vrot.slane %v5197, 7
        %v5321 = vsel %vm3426, %v5319, %v5320
        %v5322 = vrot.slane %v5198, 7
        %v5323 = vsel %vm3426, %v5320, %v5322
        %v5324 = vrot.slane %v5200, 7
        %v5325 = vrot.slane %v5201, 7
        %v5326 = vsel %vm3426, %v5324, %v5325
        %v5327 = vrot.slane %v5202, 7
        %v5328 = vsel %vm3426, %v5325, %v5327
        %v5329 = vrot.slane %v5204, 7
        %v5330 = vrot.slane %v5205, 7
        %v5331 = vsel %vm3426, %v5329, %v5330
        %v5332 = vrot.slane %v5206, 7
        %v5333 = vsel %vm3426, %v5330, %v5332
        %v5334 = vrot.slane %v5208, 7
        %v5335 = vrot.slane %v5209, 7
        %v5336 = vsel %vm3426, %v5334, %v5335
        %v5337 = vrot.slane %v5210, 7
        %v5338 = vsel %vm3426, %v5335, %v5337
        %v5339 = vrot.slane %v5212, 7
        %v5340 = vrot.slane %v5213, 7
        %v5341 = vsel %vm3426, %v5339, %v5340
        %v5342 = vrot.slane %v5214, 7
        %v5343 = vsel %vm3426, %v5340, %v5342
        %v5344 = vrot.slane %v5216, 7
        %v5345 = vrot.slane %v5217, 7
        %v5346 = vsel %vm3426, %v5344, %v5345
        %v5347 = vrot.slane %v5218, 7
        %v5348 = vsel %vm3426, %v5345, %v5347
        %v5349 = vrot.slane %v5220, 7
        %v5350 = vrot.slane %v5221, 7
        %v5351 = vsel %vm3426, %v5349, %v5350
        %v5352 = vrot.slane %v5222, 7
        %v5353 = vsel %vm3426, %v5350, %v5352
        %v5354 = vrot.slane %v5224, 7
        %v5355 = vrot.slane %v5225, 7
        %v5356 = vsel %vm3426, %v5354, %v5355
        %v5357 = vrot.slane %v5226, 7
        %v5358 = vsel %vm3426, %v5355, %v5357
        %v5359 = vrot.slane %v5228, 7
        %v5360 = vrot.slane %v5229, 7
        %v5361 = vsel %vm3426, %v5359, %v5360
        %v5362 = vrot.slane %v5230, 7
        %v5363 = vsel %vm3426, %v5360, %v5362
        %v5364 = vrot.slane %v5232, 7
        %v5365 = vrot.slane %v5233, 7
        %v5366 = vsel %vm3426, %v5364, %v5365
        %v5367 = vrot.slane %v5234, 7
        %v5368 = vsel %vm3426, %v5365, %v5367
        %v5369 = vrot.slane %v5236, 7
        %v5370 = vrot.slane %v5237, 7
        %v5371 = vsel %vm3426, %v5369, %v5370
        %v5372 = vrot.slane %v5238, 7
        %v5373 = vsel %vm3426, %v5370, %v5372
        %v5374 = vrot.slane %v5240, 7
        %v5375 = vrot.slane %v5241, 7
        %v5376 = vsel %vm3426, %v5374, %v5375
        %v5377 = vrot.slane %v5242, 7
        %v5378 = vsel %vm3426, %v5375, %v5377
        %v5379 = vrot.slane %v5244, 7
        %v5380 = vrot.slane %v5245, 7
        %v5381 = vsel %vm3426, %v5379, %v5380
        %v5382 = vrot.slane %v5246, 7
        %v5383 = vsel %vm3426, %v5380, %v5382
        %v5432 = vrot.slane %v5185, 1
        %v5433 = vrot.slane %v5186, 1
        %v5434 = vsel %vm379, %v5432, %v5433
        %v5435 = vrot.slane %v5187, 1
        %v5436 = vsel %vm379, %v5433, %v5435
        %v5437 = vrot.slane %v5189, 1
        %v5438 = vrot.slane %v5190, 1
        %v5439 = vsel %vm379, %v5437, %v5438
        %v5440 = vrot.slane %v5191, 1
        %v5441 = vsel %vm379, %v5438, %v5440
        %v5442 = vrot.slane %v5193, 1
        %v5443 = vrot.slane %v5194, 1
        %v5444 = vsel %vm379, %v5442, %v5443
        %v5445 = vrot.slane %v5195, 1
        %v5446 = vsel %vm379, %v5443, %v5445
        %v5447 = vrot.slane %v5197, 1
        %v5448 = vrot.slane %v5198, 1
        %v5449 = vsel %vm379, %v5447, %v5448
        %v5450 = vrot.slane %v5199, 1
        %v5451 = vsel %vm379, %v5448, %v5450
        %v5452 = vrot.slane %v5201, 1
        %v5453 = vrot.slane %v5202, 1
        %v5454 = vsel %vm379, %v5452, %v5453
        %v5455 = vrot.slane %v5203, 1
        %v5456 = vsel %vm379, %v5453, %v5455
        %v5457 = vrot.slane %v5205, 1
        %v5458 = vrot.slane %v5206, 1
        %v5459 = vsel %vm379, %v5457, %v5458
        %v5460 = vrot.slane %v5207, 1
        %v5461 = vsel %vm379, %v5458, %v5460
        %v5462 = vrot.slane %v5209, 1
        %v5463 = vrot.slane %v5210, 1
        %v5464 = vsel %vm379, %v5462, %v5463
        %v5465 = vrot.slane %v5211, 1
        %v5466 = vsel %vm379, %v5463, %v5465
        %v5467 = vrot.slane %v5213, 1
        %v5468 = vrot.slane %v5214, 1
        %v5469 = vsel %vm379, %v5467, %v5468
        %v5470 = vrot.slane %v5215, 1
        %v5471 = vsel %vm379, %v5468, %v5470
        %v5472 = vrot.slane %v5217, 1
        %v5473 = vrot.slane %v5218, 1
        %v5474 = vsel %vm379, %v5472, %v5473
        %v5475 = vrot.slane %v5219, 1
        %v5476 = vsel %vm379, %v5473, %v5475
        %v5477 = vrot.slane %v5221, 1
        %v5478 = vrot.slane %v5222, 1
        %v5479 = vsel %vm379, %v5477, %v5478
        %v5480 = vrot.slane %v5223, 1
        %v5481 = vsel %vm379, %v5478, %v5480
        %v5482 = vrot.slane %v5225, 1
        %v5483 = vrot.slane %v5226, 1
        %v5484 = vsel %vm379, %v5482, %v5483
        %v5485 = vrot.slane %v5227, 1
        %v5486 = vsel %vm379, %v5483, %v5485
        %v5487 = vrot.slane %v5229, 1
        %v5488 = vrot.slane %v5230, 1
        %v5489 = vsel %vm379, %v5487, %v5488
        %v5490 = vrot.slane %v5231, 1
        %v5491 = vsel %vm379, %v5488, %v5490
        %v5492 = vrot.slane %v5233, 1
        %v5493 = vrot.slane %v5234, 1
        %v5494 = vsel %vm379, %v5492, %v5493
        %v5495 = vrot.slane %v5235, 1
        %v5496 = vsel %vm379, %v5493, %v5495
        %v5497 = vrot.slane %v5237, 1
        %v5498 = vrot.slane %v5238, 1
        %v5499 = vsel %vm379, %v5497, %v5498
        %v5500 = vrot.slane %v5239, 1
        %v5501 = vsel %vm379, %v5498, %v5500
        %v5502 = vrot.slane %v5241, 1
        %v5503 = vrot.slane %v5242, 1
        %v5504 = vsel %vm379, %v5502, %v5503
        %v5505 = vrot.slane %v5243, 1
        %v5506 = vsel %vm379, %v5503, %v5505
        %v5507 = vrot.slane %v5245, 1
        %v5508 = vrot.slane %v5246, 1
        %v5509 = vsel %vm379, %v5507, %v5508
        %v5510 = vrot.slane %v5247, 1
        %v5511 = vsel %vm379, %v5508, %v5510
        %v5515 = vrot.slane %v5248, 7
        %v5516 = vrot.slane %v5249, 7
        %v5517 = vsel %vm3426, %v5515, %v5516
        %v5518 = vrot.slane %v5250, 7
        %v5519 = vsel %vm3426, %v5516, %v5518
        %v5521 = vrot.slane %v5249, 1
        %v5522 = vrot.slane %v5250, 1
        %v5523 = vsel %vm379, %v5521, %v5522
        %v5524 = vrot.slane %v5251, 1
        %v5525 = vsel %vm379, %v5522, %v5524
        %v5529 = vrot.slane %v5252, 7
        %v5530 = vrot.slane %v5253, 7
        %v5531 = vsel %vm3426, %v5529, %v5530
        %v5532 = vrot.slane %v5254, 7
        %v5533 = vsel %vm3426, %v5530, %v5532
        %v5535 = vrot.slane %v5253, 1
        %v5536 = vrot.slane %v5254, 1
        %v5537 = vsel %vm379, %v5535, %v5536
        %v5538 = vrot.slane %v5255, 1
        %v5539 = vsel %vm379, %v5536, %v5538
        %5540 = vrot.lane.b32.xlu0 %v5185, 32
        %v5541 = vpop.permute.xlu0 %5540
        %5542 = vrot.lane.b32.xlu0 %v5186, 32
        %v5543 = vpop.permute.xlu0 %5542
        %5544 = vrot.lane.b32.xlu0 %v5189, 32
        %v5545 = vpop.permute.xlu0 %5544
        %5546 = vrot.lane.b32.xlu0 %v5190, 32
        %v5547 = vpop.permute.xlu0 %5546
        %5548 = vrot.lane.b32.xlu0 %v5193, 32
        %v5549 = vpop.permute.xlu0 %5548
        %5550 = vrot.lane.b32.xlu0 %v5194, 32
        %v5551 = vpop.permute.xlu0 %5550
        %5552 = vrot.lane.b32.xlu0 %v5197, 32
        %v5553 = vpop.permute.xlu0 %5552
        %5554 = vrot.lane.b32.xlu0 %v5198, 32
        %v5555 = vpop.permute.xlu0 %5554
        %5556 = vrot.lane.b32.xlu0 %v5201, 32
        %v5557 = vpop.permute.xlu0 %5556
        %5558 = vrot.lane.b32.xlu0 %v5202, 32
        %v5559 = vpop.permute.xlu0 %5558
        %5560 = vrot.lane.b32.xlu0 %v5205, 32
        %v5561 = vpop.permute.xlu0 %5560
        %5562 = vrot.lane.b32.xlu0 %v5206, 32
        %v5563 = vpop.permute.xlu0 %5562
        %5564 = vrot.lane.b32.xlu0 %v5209, 32
        %v5565 = vpop.permute.xlu0 %5564
        %5566 = vrot.lane.b32.xlu0 %v5210, 32
        %v5567 = vpop.permute.xlu0 %5566
        %5568 = vrot.lane.b32.xlu0 %v5213, 32
        %v5569 = vpop.permute.xlu0 %5568
        %5570 = vrot.lane.b32.xlu0 %v5214, 32
        %v5571 = vpop.permute.xlu0 %5570
        %5572 = vrot.lane.b32.xlu0 %v5217, 32
        %v5573 = vpop.permute.xlu0 %5572
        %5574 = vrot.lane.b32.xlu0 %v5218, 32
        %v5575 = vpop.permute.xlu0 %5574
        %5576 = vrot.lane.b32.xlu0 %v5221, 32
        %v5577 = vpop.permute.xlu0 %5576
        %5578 = vrot.lane.b32.xlu0 %v5222, 32
        %v5579 = vpop.permute.xlu0 %5578
        %5580 = vrot.lane.b32.xlu0 %v5225, 32
        %v5581 = vpop.permute.xlu0 %5580
        %5582 = vrot.lane.b32.xlu0 %v5226, 32
        %v5583 = vpop.permute.xlu0 %5582
        %5584 = vrot.lane.b32.xlu0 %v5229, 32
        %v5585 = vpop.permute.xlu0 %5584
        %5586 = vrot.lane.b32.xlu0 %v5230, 32
        %v5587 = vpop.permute.xlu0 %5586
        %5588 = vrot.lane.b32.xlu0 %v5233, 32
        %v5589 = vpop.permute.xlu0 %5588
        %5590 = vrot.lane.b32.xlu0 %v5234, 32
        %v5591 = vpop.permute.xlu0 %5590
        %5592 = vrot.lane.b32.xlu0 %v5237, 32
        %v5593 = vpop.permute.xlu0 %5592
        %5594 = vrot.lane.b32.xlu0 %v5238, 32
        %v5595 = vpop.permute.xlu0 %5594
        %5596 = vrot.lane.b32.xlu0 %v5241, 32
        %v5597 = vpop.permute.xlu0 %5596
        %5598 = vrot.lane.b32.xlu0 %v5242, 32
        %v5599 = vpop.permute.xlu0 %5598
        %5600 = vrot.lane.b32.xlu0 %v5245, 32
        %v5601 = vpop.permute.xlu0 %5600
        %5602 = vrot.lane.b32.xlu0 %v5246, 32
        %v5603 = vpop.permute.xlu0 %5602
        %5636 = vrot.lane.b32.xlu0 %v5434, 64
        %v5637 = vpop.permute.xlu0 %5636
        %5638 = vrot.lane.b32.xlu0 %v5436, 64
        %v5639 = vpop.permute.xlu0 %5638
        %5640 = vrot.lane.b32.xlu0 %v5439, 64
        %v5641 = vpop.permute.xlu0 %5640
        %5642 = vrot.lane.b32.xlu0 %v5441, 64
        %v5643 = vpop.permute.xlu0 %5642
        %5644 = vrot.lane.b32.xlu0 %v5444, 64
        %v5645 = vpop.permute.xlu0 %5644
        %5646 = vrot.lane.b32.xlu0 %v5446, 64
        %v5647 = vpop.permute.xlu0 %5646
        %5648 = vrot.lane.b32.xlu0 %v5449, 64
        %v5649 = vpop.permute.xlu0 %5648
        %5650 = vrot.lane.b32.xlu0 %v5451, 64
        %v5651 = vpop.permute.xlu0 %5650
        %5652 = vrot.lane.b32.xlu0 %v5454, 64
        %v5653 = vpop.permute.xlu0 %5652
        %5654 = vrot.lane.b32.xlu0 %v5456, 64
        %v5655 = vpop.permute.xlu0 %5654
        %5656 = vrot.lane.b32.xlu0 %v5459, 64
        %v5657 = vpop.permute.xlu0 %5656
        %5658 = vrot.lane.b32.xlu0 %v5461, 64
        %v5659 = vpop.permute.xlu0 %5658
        %5660 = vrot.lane.b32.xlu0 %v5464, 64
        %v5661 = vpop.permute.xlu0 %5660
        %5662 = vrot.lane.b32.xlu0 %v5466, 64
        %v5663 = vpop.permute.xlu0 %5662
        %5664 = vrot.lane.b32.xlu0 %v5469, 64
        %v5665 = vpop.permute.xlu0 %5664
        %5666 = vrot.lane.b32.xlu0 %v5471, 64
        %v5667 = vpop.permute.xlu0 %5666
        %5668 = vrot.lane.b32.xlu0 %v5474, 64
        %v5669 = vpop.permute.xlu0 %5668
        %5670 = vrot.lane.b32.xlu0 %v5476, 64
        %v5671 = vpop.permute.xlu0 %5670
        %5672 = vrot.lane.b32.xlu0 %v5479, 64
        %v5673 = vpop.permute.xlu0 %5672
        %5674 = vrot.lane.b32.xlu0 %v5481, 64
        %v5675 = vpop.permute.xlu0 %5674
        %5676 = vrot.lane.b32.xlu0 %v5484, 64
        %v5677 = vpop.permute.xlu0 %5676
        %5678 = vrot.lane.b32.xlu0 %v5486, 64
        %v5679 = vpop.permute.xlu0 %5678
        %5680 = vrot.lane.b32.xlu0 %v5489, 64
        %v5681 = vpop.permute.xlu0 %5680
        %5682 = vrot.lane.b32.xlu0 %v5491, 64
        %v5683 = vpop.permute.xlu0 %5682
        %5684 = vrot.lane.b32.xlu0 %v5494, 64
        %v5685 = vpop.permute.xlu0 %5684
        %5686 = vrot.lane.b32.xlu0 %v5496, 64
        %v5687 = vpop.permute.xlu0 %5686
        %5688 = vrot.lane.b32.xlu0 %v5499, 64
        %v5689 = vpop.permute.xlu0 %5688
        %5690 = vrot.lane.b32.xlu0 %v5501, 64
        %v5691 = vpop.permute.xlu0 %5690
        %5692 = vrot.lane.b32.xlu0 %v5504, 64
        %v5693 = vpop.permute.xlu0 %5692
        %5694 = vrot.lane.b32.xlu0 %v5506, 64
        %v5695 = vpop.permute.xlu0 %5694
        %5696 = vrot.lane.b32.xlu0 %v5509, 64
        %v5697 = vpop.permute.xlu0 %5696
        %5698 = vrot.lane.b32.xlu0 %v5511, 64
        %v5699 = vpop.permute.xlu0 %5698
        %5732 = vrot.lane.b32.xlu0 %v5311, 96
        %v5733 = vpop.permute.xlu0 %5732
        %5734 = vrot.lane.b32.xlu0 %v5313, 96
        %v5735 = vpop.permute.xlu0 %5734
        %5736 = vrot.lane.b32.xlu0 %v5316, 96
        %v5737 = vpop.permute.xlu0 %5736
        %5738 = vrot.lane.b32.xlu0 %v5318, 96
        %v5739 = vpop.permute.xlu0 %5738
        %5740 = vrot.lane.b32.xlu0 %v5321, 96
        %v5741 = vpop.permute.xlu0 %5740
        %5742 = vrot.lane.b32.xlu0 %v5323, 96
        %v5743 = vpop.permute.xlu0 %5742
        %5744 = vrot.lane.b32.xlu0 %v5326, 96
        %v5745 = vpop.permute.xlu0 %5744
        %5746 = vrot.lane.b32.xlu0 %v5328, 96
        %v5747 = vpop.permute.xlu0 %5746
        %5748 = vrot.lane.b32.xlu0 %v5331, 96
        %v5749 = vpop.permute.xlu0 %5748
        %5750 = vrot.lane.b32.xlu0 %v5333, 96
        %v5751 = vpop.permute.xlu0 %5750
        %5752 = vrot.lane.b32.xlu0 %v5336, 96
        %v5753 = vpop.permute.xlu0 %5752
        %5754 = vrot.lane.b32.xlu0 %v5338, 96
        %v5755 = vpop.permute.xlu0 %5754
        %5756 = vrot.lane.b32.xlu0 %v5341, 96
        %v5757 = vpop.permute.xlu0 %5756
        %5758 = vrot.lane.b32.xlu0 %v5343, 96
        %v5759 = vpop.permute.xlu0 %5758
        %5760 = vrot.lane.b32.xlu0 %v5346, 96
        %v5761 = vpop.permute.xlu0 %5760
        %5762 = vrot.lane.b32.xlu0 %v5348, 96
        %v5763 = vpop.permute.xlu0 %5762
        %5764 = vrot.lane.b32.xlu0 %v5351, 96
        %v5765 = vpop.permute.xlu0 %5764
        %5766 = vrot.lane.b32.xlu0 %v5353, 96
        %v5767 = vpop.permute.xlu0 %5766
        %5768 = vrot.lane.b32.xlu0 %v5356, 96
        %v5769 = vpop.permute.xlu0 %5768
        %5770 = vrot.lane.b32.xlu0 %v5358, 96
        %v5771 = vpop.permute.xlu0 %5770
        %5772 = vrot.lane.b32.xlu0 %v5361, 96
        %v5773 = vpop.permute.xlu0 %5772
        %5774 = vrot.lane.b32.xlu0 %v5363, 96
        %v5775 = vpop.permute.xlu0 %5774
        %5776 = vrot.lane.b32.xlu0 %v5366, 96
        %v5777 = vpop.permute.xlu0 %5776
        %5778 = vrot.lane.b32.xlu0 %v5368, 96
        %v5779 = vpop.permute.xlu0 %5778
        %5780 = vrot.lane.b32.xlu0 %v5371, 96
        %v5781 = vpop.permute.xlu0 %5780
        %5782 = vrot.lane.b32.xlu0 %v5373, 96
        %v5783 = vpop.permute.xlu0 %5782
        %5784 = vrot.lane.b32.xlu0 %v5376, 96
        %v5785 = vpop.permute.xlu0 %5784
        %5786 = vrot.lane.b32.xlu0 %v5378, 96
        %v5787 = vpop.permute.xlu0 %5786
        %5788 = vrot.lane.b32.xlu0 %v5381, 96
        %v5789 = vpop.permute.xlu0 %5788
        %5790 = vrot.lane.b32.xlu0 %v5383, 96
        %v5791 = vpop.permute.xlu0 %5790
        %5792 = vrot.lane.b32.xlu0 %v5517, 96
        %v5793 = vpop.permute.xlu0 %5792
        %5794 = vrot.lane.b32.xlu0 %v5519, 96
        %v5795 = vpop.permute.xlu0 %5794
        %5828 = vrot.lane.b32.xlu0 %v5439, 32
        %v5829 = vpop.permute.xlu0 %5828
        %5830 = vrot.lane.b32.xlu0 %v5441, 32
        %v5831 = vpop.permute.xlu0 %5830
        %5832 = vrot.lane.b32.xlu0 %v5444, 32
        %v5833 = vpop.permute.xlu0 %5832
        %5834 = vrot.lane.b32.xlu0 %v5446, 32
        %v5835 = vpop.permute.xlu0 %5834
        %5836 = vrot.lane.b32.xlu0 %v5449, 32
        %v5837 = vpop.permute.xlu0 %5836
        %5838 = vrot.lane.b32.xlu0 %v5451, 32
        %v5839 = vpop.permute.xlu0 %5838
        %5840 = vrot.lane.b32.xlu0 %v5454, 32
        %v5841 = vpop.permute.xlu0 %5840
        %5842 = vrot.lane.b32.xlu0 %v5456, 32
        %v5843 = vpop.permute.xlu0 %5842
        %5844 = vrot.lane.b32.xlu0 %v5459, 32
        %v5845 = vpop.permute.xlu0 %5844
        %5846 = vrot.lane.b32.xlu0 %v5461, 32
        %v5847 = vpop.permute.xlu0 %5846
        %5848 = vrot.lane.b32.xlu0 %v5464, 32
        %v5849 = vpop.permute.xlu0 %5848
        %5850 = vrot.lane.b32.xlu0 %v5466, 32
        %v5851 = vpop.permute.xlu0 %5850
        %5852 = vrot.lane.b32.xlu0 %v5469, 32
        %v5853 = vpop.permute.xlu0 %5852
        %5854 = vrot.lane.b32.xlu0 %v5471, 32
        %v5855 = vpop.permute.xlu0 %5854
        %5856 = vrot.lane.b32.xlu0 %v5474, 32
        %v5857 = vpop.permute.xlu0 %5856
        %5858 = vrot.lane.b32.xlu0 %v5476, 32
        %v5859 = vpop.permute.xlu0 %5858
        %5860 = vrot.lane.b32.xlu0 %v5479, 32
        %v5861 = vpop.permute.xlu0 %5860
        %5862 = vrot.lane.b32.xlu0 %v5481, 32
        %v5863 = vpop.permute.xlu0 %5862
        %5864 = vrot.lane.b32.xlu0 %v5484, 32
        %v5865 = vpop.permute.xlu0 %5864
        %5866 = vrot.lane.b32.xlu0 %v5486, 32
        %v5867 = vpop.permute.xlu0 %5866
        %5868 = vrot.lane.b32.xlu0 %v5489, 32
        %v5869 = vpop.permute.xlu0 %5868
        %5870 = vrot.lane.b32.xlu0 %v5491, 32
        %v5871 = vpop.permute.xlu0 %5870
        %5872 = vrot.lane.b32.xlu0 %v5494, 32
        %v5873 = vpop.permute.xlu0 %5872
        %5874 = vrot.lane.b32.xlu0 %v5496, 32
        %v5875 = vpop.permute.xlu0 %5874
        %5876 = vrot.lane.b32.xlu0 %v5499, 32
        %v5877 = vpop.permute.xlu0 %5876
        %5878 = vrot.lane.b32.xlu0 %v5501, 32
        %v5879 = vpop.permute.xlu0 %5878
        %5880 = vrot.lane.b32.xlu0 %v5504, 32
        %v5881 = vpop.permute.xlu0 %5880
        %5882 = vrot.lane.b32.xlu0 %v5506, 32
        %v5883 = vpop.permute.xlu0 %5882
        %5884 = vrot.lane.b32.xlu0 %v5509, 32
        %v5885 = vpop.permute.xlu0 %5884
        %5886 = vrot.lane.b32.xlu0 %v5511, 32
        %v5887 = vpop.permute.xlu0 %5886
        %5888 = vrot.lane.b32.xlu0 %v5523, 32
        %v5889 = vpop.permute.xlu0 %5888
        %5890 = vrot.lane.b32.xlu0 %v5525, 32
        %v5891 = vpop.permute.xlu0 %5890
        %5924 = vrot.lane.b32.xlu0 %v5316, 64
        %v5925 = vpop.permute.xlu0 %5924
        %5926 = vrot.lane.b32.xlu0 %v5318, 64
        %v5927 = vpop.permute.xlu0 %5926
        %5928 = vrot.lane.b32.xlu0 %v5321, 64
        %v5929 = vpop.permute.xlu0 %5928
        %5930 = vrot.lane.b32.xlu0 %v5323, 64
        %v5931 = vpop.permute.xlu0 %5930
        %5932 = vrot.lane.b32.xlu0 %v5326, 64
        %v5933 = vpop.permute.xlu0 %5932
        %5934 = vrot.lane.b32.xlu0 %v5328, 64
        %v5935 = vpop.permute.xlu0 %5934
        %5936 = vrot.lane.b32.xlu0 %v5331, 64
        %v5937 = vpop.permute.xlu0 %5936
        %5938 = vrot.lane.b32.xlu0 %v5333, 64
        %v5939 = vpop.permute.xlu0 %5938
        %5940 = vrot.lane.b32.xlu0 %v5336, 64
        %v5941 = vpop.permute.xlu0 %5940
        %5942 = vrot.lane.b32.xlu0 %v5338, 64
        %v5943 = vpop.permute.xlu0 %5942
        %5944 = vrot.lane.b32.xlu0 %v5341, 64
        %v5945 = vpop.permute.xlu0 %5944
        %5946 = vrot.lane.b32.xlu0 %v5343, 64
        %v5947 = vpop.permute.xlu0 %5946
        %5948 = vrot.lane.b32.xlu0 %v5346, 64
        %v5949 = vpop.permute.xlu0 %5948
        %5950 = vrot.lane.b32.xlu0 %v5348, 64
        %v5951 = vpop.permute.xlu0 %5950
        %5952 = vrot.lane.b32.xlu0 %v5351, 64
        %v5953 = vpop.permute.xlu0 %5952
        %5954 = vrot.lane.b32.xlu0 %v5353, 64
        %v5955 = vpop.permute.xlu0 %5954
        %5956 = vrot.lane.b32.xlu0 %v5356, 64
        %v5957 = vpop.permute.xlu0 %5956
        %5958 = vrot.lane.b32.xlu0 %v5358, 64
        %v5959 = vpop.permute.xlu0 %5958
        %5960 = vrot.lane.b32.xlu0 %v5361, 64
        %v5961 = vpop.permute.xlu0 %5960
        %5962 = vrot.lane.b32.xlu0 %v5363, 64
        %v5963 = vpop.permute.xlu0 %5962
        %5964 = vrot.lane.b32.xlu0 %v5366, 64
        %v5965 = vpop.permute.xlu0 %5964
        %5966 = vrot.lane.b32.xlu0 %v5368, 64
        %v5967 = vpop.permute.xlu0 %5966
        %5968 = vrot.lane.b32.xlu0 %v5371, 64
        %v5969 = vpop.permute.xlu0 %5968
        %5970 = vrot.lane.b32.xlu0 %v5373, 64
        %v5971 = vpop.permute.xlu0 %5970
        %5972 = vrot.lane.b32.xlu0 %v5376, 64
        %v5973 = vpop.permute.xlu0 %5972
        %5974 = vrot.lane.b32.xlu0 %v5378, 64
        %v5975 = vpop.permute.xlu0 %5974
        %5976 = vrot.lane.b32.xlu0 %v5381, 64
        %v5977 = vpop.permute.xlu0 %5976
        %5978 = vrot.lane.b32.xlu0 %v5383, 64
        %v5979 = vpop.permute.xlu0 %5978
        %5980 = vrot.lane.b32.xlu0 %v5517, 64
        %v5981 = vpop.permute.xlu0 %5980
        %5982 = vrot.lane.b32.xlu0 %v5519, 64
        %v5983 = vpop.permute.xlu0 %5982
        %5984 = vrot.lane.b32.xlu0 %v5531, 64
        %v5985 = vpop.permute.xlu0 %5984
        %5986 = vrot.lane.b32.xlu0 %v5533, 64
        %v5987 = vpop.permute.xlu0 %5986
        %6020 = vrot.lane.b32.xlu0 %v5193, 96
        %v6021 = vpop.permute.xlu0 %6020
        %6022 = vrot.lane.b32.xlu0 %v5194, 96
        %v6023 = vpop.permute.xlu0 %6022
        %6024 = vrot.lane.b32.xlu0 %v5197, 96
        %v6025 = vpop.permute.xlu0 %6024
        %6026 = vrot.lane.b32.xlu0 %v5198, 96
        %v6027 = vpop.permute.xlu0 %6026
        %6028 = vrot.lane.b32.xlu0 %v5201, 96
        %v6029 = vpop.permute.xlu0 %6028
        %6030 = vrot.lane.b32.xlu0 %v5202, 96
        %v6031 = vpop.permute.xlu0 %6030
        %6032 = vrot.lane.b32.xlu0 %v5205, 96
        %v6033 = vpop.permute.xlu0 %6032
        %6034 = vrot.lane.b32.xlu0 %v5206, 96
        %v6035 = vpop.permute.xlu0 %6034
        %6036 = vrot.lane.b32.xlu0 %v5209, 96
        %v6037 = vpop.permute.xlu0 %6036
        %6038 = vrot.lane.b32.xlu0 %v5210, 96
        %v6039 = vpop.permute.xlu0 %6038
        %6040 = vrot.lane.b32.xlu0 %v5213, 96
        %v6041 = vpop.permute.xlu0 %6040
        %6042 = vrot.lane.b32.xlu0 %v5214, 96
        %v6043 = vpop.permute.xlu0 %6042
        %6044 = vrot.lane.b32.xlu0 %v5217, 96
        %v6045 = vpop.permute.xlu0 %6044
        %6046 = vrot.lane.b32.xlu0 %v5218, 96
        %v6047 = vpop.permute.xlu0 %6046
        %6048 = vrot.lane.b32.xlu0 %v5221, 96
        %v6049 = vpop.permute.xlu0 %6048
        %6050 = vrot.lane.b32.xlu0 %v5222, 96
        %v6051 = vpop.permute.xlu0 %6050
        %6052 = vrot.lane.b32.xlu0 %v5225, 96
        %v6053 = vpop.permute.xlu0 %6052
        %6054 = vrot.lane.b32.xlu0 %v5226, 96
        %v6055 = vpop.permute.xlu0 %6054
        %6056 = vrot.lane.b32.xlu0 %v5229, 96
        %v6057 = vpop.permute.xlu0 %6056
        %6058 = vrot.lane.b32.xlu0 %v5230, 96
        %v6059 = vpop.permute.xlu0 %6058
        %6060 = vrot.lane.b32.xlu0 %v5233, 96
        %v6061 = vpop.permute.xlu0 %6060
        %6062 = vrot.lane.b32.xlu0 %v5234, 96
        %v6063 = vpop.permute.xlu0 %6062
        %6064 = vrot.lane.b32.xlu0 %v5237, 96
        %v6065 = vpop.permute.xlu0 %6064
        %6066 = vrot.lane.b32.xlu0 %v5238, 96
        %v6067 = vpop.permute.xlu0 %6066
        %6068 = vrot.lane.b32.xlu0 %v5241, 96
        %v6069 = vpop.permute.xlu0 %6068
        %6070 = vrot.lane.b32.xlu0 %v5242, 96
        %v6071 = vpop.permute.xlu0 %6070
        %6072 = vrot.lane.b32.xlu0 %v5245, 96
        %v6073 = vpop.permute.xlu0 %6072
        %6074 = vrot.lane.b32.xlu0 %v5246, 96
        %v6075 = vpop.permute.xlu0 %6074
        %6076 = vrot.lane.b32.xlu0 %v5249, 96
        %v6077 = vpop.permute.xlu0 %6076
        %6078 = vrot.lane.b32.xlu0 %v5250, 96
        %v6079 = vpop.permute.xlu0 %6078
        %6080 = vrot.lane.b32.xlu0 %v5253, 96
        %v6081 = vpop.permute.xlu0 %6080
        %6082 = vrot.lane.b32.xlu0 %v5254, 96
        %v6083 = vpop.permute.xlu0 %6082
        %v6116 = vsel %vm1175, %v5306, %v5541
        %v6117 = vsel %vm1175, %v5308, %v5543
        %v6118 = vsel %vm1175, %v5311, %v5545
        %v6119 = vsel %vm1175, %v5313, %v5547
        %v6120 = vsel %vm1175, %v5316, %v5549
        %v6121 = vsel %vm1175, %v5318, %v5551
        %v6122 = vsel %vm1175, %v5321, %v5553
        %v6123 = vsel %vm1175, %v5323, %v5555
        %v6124 = vsel %vm1175, %v5326, %v5557
        %v6125 = vsel %vm1175, %v5328, %v5559
        %v6126 = vsel %vm1175, %v5331, %v5561
        %v6127 = vsel %vm1175, %v5333, %v5563
        %v6128 = vsel %vm1175, %v5336, %v5565
        %v6129 = vsel %vm1175, %v5338, %v5567
        %v6130 = vsel %vm1175, %v5341, %v5569
        %v6131 = vsel %vm1175, %v5343, %v5571
        %v6132 = vsel %vm1175, %v5346, %v5573
        %v6133 = vsel %vm1175, %v5348, %v5575
        %v6134 = vsel %vm1175, %v5351, %v5577
        %v6135 = vsel %vm1175, %v5353, %v5579
        %v6136 = vsel %vm1175, %v5356, %v5581
        %v6137 = vsel %vm1175, %v5358, %v5583
        %v6138 = vsel %vm1175, %v5361, %v5585
        %v6139 = vsel %vm1175, %v5363, %v5587
        %v6140 = vsel %vm1175, %v5366, %v5589
        %v6141 = vsel %vm1175, %v5368, %v5591
        %v6142 = vsel %vm1175, %v5371, %v5593
        %v6143 = vsel %vm1175, %v5373, %v5595
        %v6144 = vsel %vm1175, %v5376, %v5597
        %v6145 = vsel %vm1175, %v5378, %v5599
        %v6146 = vsel %vm1175, %v5381, %v5601
        %v6147 = vsel %vm1175, %v5383, %v5603
        %v6148 = vsel %vm1208, %v6116, %v5637
        %v6149 = vsel %vm1208, %v6117, %v5639
        %v6150 = vsel %vm1208, %v6118, %v5641
        %v6151 = vsel %vm1208, %v6119, %v5643
        %v6152 = vsel %vm1208, %v6120, %v5645
        %v6153 = vsel %vm1208, %v6121, %v5647
        %v6154 = vsel %vm1208, %v6122, %v5649
        %v6155 = vsel %vm1208, %v6123, %v5651
        %v6156 = vsel %vm1208, %v6124, %v5653
        %v6157 = vsel %vm1208, %v6125, %v5655
        %v6158 = vsel %vm1208, %v6126, %v5657
        %v6159 = vsel %vm1208, %v6127, %v5659
        %v6160 = vsel %vm1208, %v6128, %v5661
        %v6161 = vsel %vm1208, %v6129, %v5663
        %v6162 = vsel %vm1208, %v6130, %v5665
        %v6163 = vsel %vm1208, %v6131, %v5667
        %v6164 = vsel %vm1208, %v6132, %v5669
        %v6165 = vsel %vm1208, %v6133, %v5671
        %v6166 = vsel %vm1208, %v6134, %v5673
        %v6167 = vsel %vm1208, %v6135, %v5675
        %v6168 = vsel %vm1208, %v6136, %v5677
        %v6169 = vsel %vm1208, %v6137, %v5679
        %v6170 = vsel %vm1208, %v6138, %v5681
        %v6171 = vsel %vm1208, %v6139, %v5683
        %v6172 = vsel %vm1208, %v6140, %v5685
        %v6173 = vsel %vm1208, %v6141, %v5687
        %v6174 = vsel %vm1208, %v6142, %v5689
        %v6175 = vsel %vm1208, %v6143, %v5691
        %v6176 = vsel %vm1208, %v6144, %v5693
        %v6177 = vsel %vm1208, %v6145, %v5695
        %v6178 = vsel %vm1208, %v6146, %v5697
        %v6179 = vsel %vm1208, %v6147, %v5699
        %v6180 = vsel %vm1241, %v6148, %v5733
        %v6181 = vsel %vm1241, %v6149, %v5735
        %v6182 = vsel %vm1241, %v6150, %v5737
        %v6183 = vsel %vm1241, %v6151, %v5739
        %v6184 = vsel %vm1241, %v6152, %v5741
        %v6185 = vsel %vm1241, %v6153, %v5743
        %v6186 = vsel %vm1241, %v6154, %v5745
        %v6187 = vsel %vm1241, %v6155, %v5747
        %v6188 = vsel %vm1241, %v6156, %v5749
        %v6189 = vsel %vm1241, %v6157, %v5751
        %v6190 = vsel %vm1241, %v6158, %v5753
        %v6191 = vsel %vm1241, %v6159, %v5755
        %v6192 = vsel %vm1241, %v6160, %v5757
        %v6193 = vsel %vm1241, %v6161, %v5759
        %v6194 = vsel %vm1241, %v6162, %v5761
        %v6195 = vsel %vm1241, %v6163, %v5763
        %v6196 = vsel %vm1241, %v6164, %v5765
        %v6197 = vsel %vm1241, %v6165, %v5767
        %v6198 = vsel %vm1241, %v6166, %v5769
        %v6199 = vsel %vm1241, %v6167, %v5771
        %v6200 = vsel %vm1241, %v6168, %v5773
        %v6201 = vsel %vm1241, %v6169, %v5775
        %v6202 = vsel %vm1241, %v6170, %v5777
        %v6203 = vsel %vm1241, %v6171, %v5779
        %v6204 = vsel %vm1241, %v6172, %v5781
        %v6205 = vsel %vm1241, %v6173, %v5783
        %v6206 = vsel %vm1241, %v6174, %v5785
        %v6207 = vsel %vm1241, %v6175, %v5787
        %v6208 = vsel %vm1241, %v6176, %v5789
        %v6209 = vsel %vm1241, %v6177, %v5791
        %v6210 = vsel %vm1241, %v6178, %v5793
        %v6211 = vsel %vm1241, %v6179, %v5795
        %v6212 = vsel %vm1175, %v5189, %v5829
        %v6213 = vsel %vm1175, %v5190, %v5831
        %v6214 = vsel %vm1175, %v5193, %v5833
        %v6215 = vsel %vm1175, %v5194, %v5835
        %v6216 = vsel %vm1175, %v5197, %v5837
        %v6217 = vsel %vm1175, %v5198, %v5839
        %v6218 = vsel %vm1175, %v5201, %v5841
        %v6219 = vsel %vm1175, %v5202, %v5843
        %v6220 = vsel %vm1175, %v5205, %v5845
        %v6221 = vsel %vm1175, %v5206, %v5847
        %v6222 = vsel %vm1175, %v5209, %v5849
        %v6223 = vsel %vm1175, %v5210, %v5851
        %v6224 = vsel %vm1175, %v5213, %v5853
        %v6225 = vsel %vm1175, %v5214, %v5855
        %v6226 = vsel %vm1175, %v5217, %v5857
        %v6227 = vsel %vm1175, %v5218, %v5859
        %v6228 = vsel %vm1175, %v5221, %v5861
        %v6229 = vsel %vm1175, %v5222, %v5863
        %v6230 = vsel %vm1175, %v5225, %v5865
        %v6231 = vsel %vm1175, %v5226, %v5867
        %v6232 = vsel %vm1175, %v5229, %v5869
        %v6233 = vsel %vm1175, %v5230, %v5871
        %v6234 = vsel %vm1175, %v5233, %v5873
        %v6235 = vsel %vm1175, %v5234, %v5875
        %v6236 = vsel %vm1175, %v5237, %v5877
        %v6237 = vsel %vm1175, %v5238, %v5879
        %v6238 = vsel %vm1175, %v5241, %v5881
        %v6239 = vsel %vm1175, %v5242, %v5883
        %v6240 = vsel %vm1175, %v5245, %v5885
        %v6241 = vsel %vm1175, %v5246, %v5887
        %v6242 = vsel %vm1175, %v5249, %v5889
        %v6243 = vsel %vm1175, %v5250, %v5891
        %v6244 = vsel %vm1208, %v6212, %v5925
        %v6245 = vsel %vm1208, %v6213, %v5927
        %v6246 = vsel %vm1208, %v6214, %v5929
        %v6247 = vsel %vm1208, %v6215, %v5931
        %v6248 = vsel %vm1208, %v6216, %v5933
        %v6249 = vsel %vm1208, %v6217, %v5935
        %v6250 = vsel %vm1208, %v6218, %v5937
        %v6251 = vsel %vm1208, %v6219, %v5939
        %v6252 = vsel %vm1208, %v6220, %v5941
        %v6253 = vsel %vm1208, %v6221, %v5943
        %v6254 = vsel %vm1208, %v6222, %v5945
        %v6255 = vsel %vm1208, %v6223, %v5947
        %v6256 = vsel %vm1208, %v6224, %v5949
        %v6257 = vsel %vm1208, %v6225, %v5951
        %v6258 = vsel %vm1208, %v6226, %v5953
        %v6259 = vsel %vm1208, %v6227, %v5955
        %v6260 = vsel %vm1208, %v6228, %v5957
        %v6261 = vsel %vm1208, %v6229, %v5959
        %v6262 = vsel %vm1208, %v6230, %v5961
        %v6263 = vsel %vm1208, %v6231, %v5963
        %v6264 = vsel %vm1208, %v6232, %v5965
        %v6265 = vsel %vm1208, %v6233, %v5967
        %v6266 = vsel %vm1208, %v6234, %v5969
        %v6267 = vsel %vm1208, %v6235, %v5971
        %v6268 = vsel %vm1208, %v6236, %v5973
        %v6269 = vsel %vm1208, %v6237, %v5975
        %v6270 = vsel %vm1208, %v6238, %v5977
        %v6271 = vsel %vm1208, %v6239, %v5979
        %v6272 = vsel %vm1208, %v6240, %v5981
        %v6273 = vsel %vm1208, %v6241, %v5983
        %v6274 = vsel %vm1208, %v6242, %v5985
        %v6275 = vsel %vm1208, %v6243, %v5987
        %v6276 = vsel %vm1241, %v6244, %v6021
        %v6277 = vsel %vm1241, %v6245, %v6023
        %v6278 = vsel %vm1241, %v6246, %v6025
        %v6279 = vsel %vm1241, %v6247, %v6027
        %v6280 = vsel %vm1241, %v6248, %v6029
        %v6281 = vsel %vm1241, %v6249, %v6031
        %v6282 = vsel %vm1241, %v6250, %v6033
        %v6283 = vsel %vm1241, %v6251, %v6035
        %v6284 = vsel %vm1241, %v6252, %v6037
        %v6285 = vsel %vm1241, %v6253, %v6039
        %v6286 = vsel %vm1241, %v6254, %v6041
        %v6287 = vsel %vm1241, %v6255, %v6043
        %v6288 = vsel %vm1241, %v6256, %v6045
        %v6289 = vsel %vm1241, %v6257, %v6047
        %v6290 = vsel %vm1241, %v6258, %v6049
        %v6291 = vsel %vm1241, %v6259, %v6051
        %v6292 = vsel %vm1241, %v6260, %v6053
        %v6293 = vsel %vm1241, %v6261, %v6055
        %v6294 = vsel %vm1241, %v6262, %v6057
        %v6295 = vsel %vm1241, %v6263, %v6059
        %v6296 = vsel %vm1241, %v6264, %v6061
        %v6297 = vsel %vm1241, %v6265, %v6063
        %v6298 = vsel %vm1241, %v6266, %v6065
        %v6299 = vsel %vm1241, %v6267, %v6067
        %v6300 = vsel %vm1241, %v6268, %v6069
        %v6301 = vsel %vm1241, %v6269, %v6071
        %v6302 = vsel %vm1241, %v6270, %v6073
        %v6303 = vsel %vm1241, %v6271, %v6075
        %v6304 = vsel %vm1241, %v6272, %v6077
        %v6305 = vsel %vm1241, %v6273, %v6079
        %v6306 = vsel %vm1241, %v6274, %v6081
        %v6307 = vsel %vm1241, %v6275, %v6083
        %v6308 = vld [vmem:[%s5] sm:$0xff]
        %v6309 = vld [vmem:[%s5 + $0x8] sm:$0xff]
        %v6310 = vld [vmem:[%s5 + $0x10] sm:$0xff]
        %v6311 = vld [vmem:[%s5 + $0x18] sm:$0xff]
        %v6312 = vld [vmem:[%s5 + $0x20] sm:$0xff]
        %v6313 = vld [vmem:[%s5 + $0x28] sm:$0xff]
        %v6314 = vld [vmem:[%s5 + $0x30] sm:$0xff]
        %v6315 = vld [vmem:[%s5 + $0x38] sm:$0xff]
        %v6316 = vld [vmem:[%s5 + $0x40] sm:$0xff]
        %v6317 = vld [vmem:[%s5 + $0x48] sm:$0xff]
        %v6318 = vld [vmem:[%s5 + $0x50] sm:$0xff]
        %v6319 = vld [vmem:[%s5 + $0x58] sm:$0xff]
        %v6320 = vld [vmem:[%s5 + $0x60] sm:$0xff]
        %v6321 = vld [vmem:[%s5 + $0x68] sm:$0xff]
        %v6322 = vld [vmem:[%s5 + $0x70] sm:$0xff]
        %v6323 = vld [vmem:[%s5 + $0x78] sm:$0xff]
        %v6324 = vld [vmem:[%s5 + $0x80] sm:$0xff]
        %v6325 = vld [vmem:[%s5 + $0x88] sm:$0xff]
        %v6326 = vld [vmem:[%s5 + $0x90] sm:$0xff]
        %v6327 = vld [vmem:[%s5 + $0x98] sm:$0xff]
        %v6328 = vld [vmem:[%s5 + $0xa0] sm:$0xff]
        %v6329 = vld [vmem:[%s5 + $0xa8] sm:$0xff]
        %v6330 = vld [vmem:[%s5 + $0xb0] sm:$0xff]
        %v6331 = vld [vmem:[%s5 + $0xb8] sm:$0xff]
        %v6332 = vld [vmem:[%s5 + $0xc0] sm:$0xff]
        %v6333 = vld [vmem:[%s5 + $0xc8] sm:$0xff]
        %v6334 = vld [vmem:[%s5 + $0xd0] sm:$0xff]
        %v6335 = vld [vmem:[%s5 + $0xd8] sm:$0xff]
        %v6336 = vld [vmem:[%s5 + $0xe0] sm:$0xff]
        %v6337 = vld [vmem:[%s5 + $0xe8] sm:$0xff]
        %v6338 = vld [vmem:[%s5 + $0xf0] sm:$0xff]
        %v6339 = vld [vmem:[%s5 + $0xf8] sm:$0xff]
        %v6340 = vld [vmem:[%s5 + $0x100] sm:$0xff]
        %v6341 = vld [vmem:[%s5 + $0x108] sm:$0xff]
        %v6342 = vld [vmem:[%s5 + $0x110] sm:$0xff]
        %v6343 = vld [vmem:[%s5 + $0x118] sm:$0xff]
        %v6344 = vld [vmem:[%s6] sm:$0x1]
        %v6346 = vlaneseq
        %v6347 = vshrl.u32 %v6346, 7
        %v6348 = vsub.s32 0, %v6347
        %v6349 = vrot.slane %v6344, %v6348
        %v6351 = vsel %vm1175, %v5444, 0
        %v6353 = vsel %vm1175, %v5446, 0
        %v6355 = vsel %vm1175, %v5449, 0
        %v6357 = vsel %vm1175, %v5451, 0
        %v6359 = vsel %vm1175, %v5454, 0
        %v6361 = vsel %vm1175, %v5456, 0
        %v6363 = vsel %vm1175, %v5459, 0
        %v6365 = vsel %vm1175, %v5461, 0
        %v6367 = vsel %vm1175, %v5464, 0
        %v6369 = vsel %vm1175, %v5466, 0
        %v6371 = vsel %vm1175, %v5469, 0
        %v6373 = vsel %vm1175, %v5471, 0
        %v6375 = vsel %vm1175, %v5474, 0
        %v6377 = vsel %vm1175, %v5476, 0
        %v6379 = vsel %vm1175, %v5479, 0
        %v6381 = vsel %vm1175, %v5481, 0
        %v6383 = vsel %vm1175, %v5484, 0
        %v6385 = vsel %vm1175, %v5486, 0
        %v6387 = vsel %vm1175, %v5489, 0
        %v6389 = vsel %vm1175, %v5491, 0
        %v6391 = vsel %vm1175, %v5494, 0
        %v6393 = vsel %vm1175, %v5496, 0
        %v6395 = vsel %vm1175, %v5499, 0
        %v6397 = vsel %vm1175, %v5501, 0
        %v6399 = vsel %vm1175, %v5504, 0
        %v6401 = vsel %vm1175, %v5506, 0
        %v6403 = vsel %vm1175, %v5509, 0
        %v6405 = vsel %vm1175, %v5511, 0
        %v6407 = vsel %vm1175, %v5523, 0
        %v6409 = vsel %vm1175, %v5525, 0
        %v6411 = vsel %vm1175, %v5537, 0
        %v6413 = vsel %vm1175, %v5539, 0
        %6415 = vmatprep.subr.mxu0 0.0
        %6416 = vmatpush1.msra.mxu0 %v6308
        %6417 = vmatprep.subr.mxu0 0.0
        %6418 = vmatpush1.msra.mxu0 %v6309
        %6419 = vmatprep.subr.mxu0 0.0
        %6420 = vmatpush1.msra.mxu0 %v6310
        %6421 = vmatprep.subr.mxu0 0.0
        %6422 = vmatpush1.msra.mxu0 %v6311
        %6423 = vmatprep.subr.mxu0 0.0
        %6424 = vmatpush1.msra.mxu0 %v6312
        %6425 = vmatprep.subr.mxu0 0.0
        %6426 = vmatpush1.msra.mxu0 %v6313
        %6427 = vmatprep.subr.mxu0 0.0
        %6428 = vmatpush1.msra.mxu0 %v6314
        %6429 = vmatprep.subr.mxu0 0.0
        %6430 = vmatpush1.msra.mxu0 %v6315
        %6431 = vmatprep.subr.mxu0 0.0
        %6432 = vmatpush1.msra.mxu0 %v6316
        %6433 = vmatprep.subr.mxu0 0.0
        %6434 = vmatpush1.msra.mxu0 %v6317
        %6435 = vmatprep.subr.mxu0 0.0
        %6436 = vmatpush1.msra.mxu0 %v6318
        %6437 = vmatprep.subr.mxu0 0.0
        %6438 = vmatpush1.msra.mxu0 %v6319
        %6439 = vmatprep.subr.mxu0 0.0
        %6440 = vmatpush1.msra.mxu0 %v6320
        %6441 = vmatprep.subr.mxu0 0.0
        %6442 = vmatpush1.msra.mxu0 %v6321
        %6443 = vmatprep.subr.mxu0 0.0
        %6444 = vmatpush1.msra.mxu0 %v6322
        %6445 = vmatprep.subr.mxu0 0.0
        %6446 = vmatpush1.msra.mxu0 %v6323
        %6447 = vmatprep.subr.mxu0 0.0
        %6448 = vmatpush1.msra.mxu0 %v6324
        %6449 = vmatprep.subr.mxu0 0.0
        %6450 = vmatpush1.msra.mxu0 %v6325
        %6451 = vmatprep.subr.mxu0 0.0
        %6452 = vmatpush1.msra.mxu0 %v6326
        %6453 = vmatprep.subr.mxu0 0.0
        %6454 = vmatpush1.msra.mxu0 %v6327
        %6455 = vmatprep.subr.mxu0 0.0
        %6456 = vmatpush1.msra.mxu0 %v6328
        %6457 = vmatprep.subr.mxu0 0.0
        %6458 = vmatpush1.msra.mxu0 %v6329
        %6459 = vmatprep.subr.mxu0 0.0
        %6460 = vmatpush1.msra.mxu0 %v6330
        %6461 = vmatprep.subr.mxu0 0.0
        %6462 = vmatpush1.msra.mxu0 %v6331
        %6463 = vmatprep.subr.mxu0 0.0
        %6464 = vmatpush1.msra.mxu0 %v6332
        %6465 = vmatprep.subr.mxu0 0.0
        %6466 = vmatpush1.msra.mxu0 %v6333
        %6467 = vmatprep.subr.mxu0 0.0
        %6468 = vmatpush1.msra.mxu0 %v6334
        %6469 = vmatprep.subr.mxu0 0.0
        %6470 = vmatpush1.msra.mxu0 %v6335
        %6471 = vmatprep.subr.mxu0 0.0
        %6472 = vmatpush1.msra.mxu0 %v6336
        %6473 = vmatprep.subr.mxu0 0.0
        %6474 = vmatpush1.msra.mxu0 %v6337
        %6475 = vmatprep.subr.mxu0 0.0
        %6476 = vmatpush1.msra.mxu0 %v6338
        %6477 = vmatprep.subr.mxu0 0.0
        %6478 = vmatpush1.msra.mxu0 %v6339
        %6479 = vmatprep.mubr.f32.mxu0 %v6276
        %6480 = vmatmul.mubr.f32.gmra.mrb[0].mxu0 %v6180
        %v6481 = vpop.f32.mrb[0].mxu0
        %v6482 = vadd.f32 %v6349, %v6481
        %v6483 = vpop.f32.mrb[0].mxu0
        %6484 = vmatprep.mubr.f32.mxu0 %v6277
        %6485 = vmatmul.mubr.f32.gmra.mrb[0].mxu0 %v6181
        %v6486 = vpop.f32.mrb[0].mxu0
        %v6487 = vadd.f32 %v6349, %v6486
        %v6488 = vpop.f32.mrb[0].mxu0
        %6489 = vmatprep.mubr.f32.mxu0 %v6278
        %6490 = vmatmul.mubr.f32.gmra.mrb[0].mxu0 %v6182
        %v6491 = vpop.f32.mrb[0].mxu0
        %v6492 = vadd.f32 %v6349, %v6491
        %v6493 = vpop.f32.mrb[0].mxu0
        %6494 = vmatprep.mubr.f32.mxu0 %v6279
        %6495 = vmatmul.mubr.f32.gmra.mrb[0].mxu0 %v6183
        %v6496 = vpop.f32.mrb[0].mxu0
        %v6497 = vadd.f32 %v6349, %v6496
        %v6498 = vpop.f32.mrb[0].mxu0
        %6499 = vmatprep.mubr.f32.mxu0 %v6280
        %6500 = vmatmul.mubr.f32.gmra.mrb[0].mxu0 %v6184
        %v6501 = vpop.f32.mrb[0].mxu0
        %v6502 = vadd.f32 %v6349, %v6501
        %v6503 = vpop.f32.mrb[0].mxu0
        %6504 = vmatprep.mubr.f32.mxu0 %v6281
        %6505 = vmatmul.mubr.f32.gmra.mrb[0].mxu0 %v6185
        %v6506 = vpop.f32.mrb[0].mxu0
        %v6507 = vadd.f32 %v6349, %v6506
        %v6508 = vpop.f32.mrb[0].mxu0
        %6509 = vmatprep.mubr.f32.mxu0 %v6282
        %6510 = vmatmul.mubr.f32.gmra.mrb[0].mxu0 %v6186
        %v6511 = vpop.f32.mrb[0].mxu0
        %v6512 = vadd.f32 %v6349, %v6511
        %v6513 = vpop.f32.mrb[0].mxu0
        %6514 = vmatprep.mubr.f32.mxu0 %v6283
        %6515 = vmatmul.mubr.f32.gmra.mrb[0].mxu0 %v6187
        %v6516 = vpop.f32.mrb[0].mxu0
        %v6517 = vadd.f32 %v6349, %v6516
        %v6518 = vpop.f32.mrb[0].mxu0
        %6519 = vmatprep.mubr.f32.mxu0 %v6284
        %6520 = vmatmul.mubr.f32.gmra.mrb[0].mxu0 %v6188
        %v6521 = vpop.f32.mrb[0].mxu0
        %v6522 = vadd.f32 %v6349, %v6521
        %v6523 = vpop.f32.mrb[0].mxu0
        %6524 = vmatprep.mubr.f32.mxu0 %v6285
        %6525 = vmatmul.mubr.f32.gmra.mrb[0].mxu0 %v6189
        %v6526 = vpop.f32.mrb[0].mxu0
        %v6527 = vadd.f32 %v6349, %v6526
        %v6528 = vpop.f32.mrb[0].mxu0
        %6529 = vmatprep.mubr.f32.mxu0 %v6286
        %6530 = vmatmul.mubr.f32.gmra.mrb[0].mxu0 %v6190
        %v6531 = vpop.f32.mrb[0].mxu0
        %v6532 = vadd.f32 %v6349, %v6531
        %v6533 = vpop.f32.mrb[0].mxu0
        %6534 = vmatprep.mubr.f32.mxu0 %v6287
        %6535 = vmatmul.mubr.f32.gmra.mrb[0].mxu0 %v6191
        %v6536 = vpop.f32.mrb[0].mxu0
        %v6537 = vadd.f32 %v6349, %v6536
        %v6538 = vpop.f32.mrb[0].mxu0
        %6539 = vmatprep.mubr.f32.mxu0 %v6288
        %6540 = vmatmul.mubr.f32.gmra.mrb[0].mxu0 %v6192
        %v6541 = vpop.f32.mrb[0].mxu0
        %v6542 = vadd.f32 %v6349, %v6541
        %v6543 = vpop.f32.mrb[0].mxu0
        %6544 = vmatprep.mubr.f32.mxu0 %v6289
        %6545 = vmatmul.mubr.f32.gmra.mrb[0].mxu0 %v6193
        %v6546 = vpop.f32.mrb[0].mxu0
        %v6547 = vadd.f32 %v6349, %v6546
        %v6548 = vpop.f32.mrb[0].mxu0
        %6549 = vmatprep.mubr.f32.mxu0 %v6290
        %6550 = vmatmul.mubr.f32.gmra.mrb[0].mxu0 %v6194
        %v6551 = vpop.f32.mrb[0].mxu0
        %v6552 = vadd.f32 %v6349, %v6551
        %v6553 = vpop.f32.mrb[0].mxu0
        %6554 = vmatprep.mubr.f32.mxu0 %v6291
        %6555 = vmatmul.mubr.f32.gmra.mrb[0].mxu0 %v6195
        %v6556 = vpop.f32.mrb[0].mxu0
        %v6557 = vadd.f32 %v6349, %v6556
        %v6558 = vpop.f32.mrb[0].mxu0
        %6559 = vmatprep.mubr.f32.mxu0 %v6292
        %6560 = vmatmul.mubr.f32.gmra.mrb[0].mxu0 %v6196
        %v6561 = vpop.f32.mrb[0].mxu0
        %v6562 = vadd.f32 %v6349, %v6561
        %v6563 = vpop.f32.mrb[0].mxu0
        %6564 = vmatprep.mubr.f32.mxu0 %v6293
        %6565 = vmatmul.mubr.f32.gmra.mrb[0].mxu0 %v6197
        %v6566 = vpop.f32.mrb[0].mxu0
        %v6567 = vadd.f32 %v6349, %v6566
        %v6568 = vpop.f32.mrb[0].mxu0
        %6569 = vmatprep.mubr.f32.mxu0 %v6294
        %6570 = vmatmul.mubr.f32.gmra.mrb[0].mxu0 %v6198
        %v6571 = vpop.f32.mrb[0].mxu0
        %v6572 = vadd.f32 %v6349, %v6571
        %v6573 = vpop.f32.mrb[0].mxu0
        %6574 = vmatprep.mubr.f32.mxu0 %v6295
        %6575 = vmatmul.mubr.f32.gmra.mrb[0].mxu0 %v6199
        %v6576 = vpop.f32.mrb[0].mxu0
        %v6577 = vadd.f32 %v6349, %v6576
        %v6578 = vpop.f32.mrb[0].mxu0
        %6579 = vmatprep.mubr.f32.mxu0 %v6296
        %6580 = vmatmul.mubr.f32.gmra.mrb[0].mxu0 %v6200
        %v6581 = vpop.f32.mrb[0].mxu0
        %v6582 = vadd.f32 %v6349, %v6581
        %v6583 = vpop.f32.mrb[0].mxu0
        %6584 = vmatprep.mubr.f32.mxu0 %v6297
        %6585 = vmatmul.mubr.f32.gmra.mrb[0].mxu0 %v6201
        %v6586 = vpop.f32.mrb[0].mxu0
        %v6587 = vadd.f32 %v6349, %v6586
        %v6588 = vpop.f32.mrb[0].mxu0
        %6589 = vmatprep.mubr.f32.mxu0 %v6298
        %6590 = vmatmul.mubr.f32.gmra.mrb[0].mxu0 %v6202
        %v6591 = vpop.f32.mrb[0].mxu0
        %v6592 = vadd.f32 %v6349, %v6591
        %v6593 = vpop.f32.mrb[0].mxu0
        %6594 = vmatprep.mubr.f32.mxu0 %v6299
        %6595 = vmatmul.mubr.f32.gmra.mrb[0].mxu0 %v6203
        %v6596 = vpop.f32.mrb[0].mxu0
        %v6597 = vadd.f32 %v6349, %v6596
        %v6598 = vpop.f32.mrb[0].mxu0
        %6599 = vmatprep.mubr.f32.mxu0 %v6300
        %6600 = vmatmul.mubr.f32.gmra.mrb[0].mxu0 %v6204
        %v6601 = vpop.f32.mrb[0].mxu0
        %v6602 = vadd.f32 %v6349, %v6601
        %v6603 = vpop.f32.mrb[0].mxu0
        %6604 = vmatprep.mubr.f32.mxu0 %v6301
        %6605 = vmatmul.mubr.f32.gmra.mrb[0].mxu0 %v6205
        %v6606 = vpop.f32.mrb[0].mxu0
        %v6607 = vadd.f32 %v6349, %v6606
        %v6608 = vpop.f32.mrb[0].mxu0
        %6609 = vmatprep.mubr.f32.mxu0 %v6302
        %6610 = vmatmul.mubr.f32.gmra.mrb[0].mxu0 %v6206
        %v6611 = vpop.f32.mrb[0].mxu0
        %v6612 = vadd.f32 %v6349, %v6611
        %v6613 = vpop.f32.mrb[0].mxu0
        %6614 = vmatprep.mubr.f32.mxu0 %v6303
        %6615 = vmatmul.mubr.f32.gmra.mrb[0].mxu0 %v6207
        %v6616 = vpop.f32.mrb[0].mxu0
        %v6617 = vadd.f32 %v6349, %v6616
        %v6618 = vpop.f32.mrb[0].mxu0
        %6619 = vmatprep.mubr.f32.mxu0 %v6304
        %6620 = vmatmul.mubr.f32.gmra.mrb[0].mxu0 %v6208
        %v6621 = vpop.f32.mrb[0].mxu0
        %v6622 = vadd.f32 %v6349, %v6621
        %v6623 = vpop.f32.mrb[0].mxu0
        %6624 = vmatprep.mubr.f32.mxu0 %v6305
        %6625 = vmatmul.mubr.f32.gmra.mrb[0].mxu0 %v6209
        %v6626 = vpop.f32.mrb[0].mxu0
        %v6627 = vadd.f32 %v6349, %v6626
        %v6628 = vpop.f32.mrb[0].mxu0
        %6629 = vmatprep.mubr.f32.mxu0 %v6306
        %6630 = vmatmul.mubr.f32.gmra.mrb[0].mxu0 %v6210
        %v6631 = vpop.f32.mrb[0].mxu0
        %v6632 = vadd.f32 %v6349, %v6631
        %v6633 = vpop.f32.mrb[0].mxu0
        %6634 = vmatprep.mubr.f32.mxu0 %v6307
        %6635 = vmatmul.mubr.f32.gmra.mrb[0].mxu0 %v6211
        %v6636 = vpop.f32.mrb[0].mxu0
        %v6637 = vadd.f32 %v6349, %v6636
        %v6638 = vpop.f32.mrb[0].mxu0
        %6639 = vdwg.mxu0
        %6640 = vmatprep.subr.mxu0 0.0
        %6641 = vmatpush1.msra.mxu0 %v6340
        %6642 = vmatprep.subr.mxu0 0.0
        %6643 = vmatpush1.msra.mxu0 %v6341
        %6644 = vmatprep.subr.mxu0 0.0
        %6645 = vmatpush1.msra.mxu0 %v6342
        %6646 = vmatprep.subr.mxu0 0.0
        %6647 = vmatpush1.msra.mxu0 %v6343
        %6648 = vmatprep.subr.mxu0 0.0
        %6649 = vmatpush1.msra.mxu0 0.0
        %6650 = vmatprep.subr.mxu0 0.0
        %6651 = vmatpush1.msra.mxu0 0.0
        %6652 = vmatprep.subr.mxu0 0.0
        %6653 = vmatpush1.msra.mxu0 0.0
        %6654 = vmatprep.subr.mxu0 0.0
        %6655 = vmatpush1.msra.mxu0 0.0
        %6656 = vmatprep.subr.mxu0 0.0
        %6657 = vmatpush1.msra.mxu0 0.0
        %6658 = vmatprep.subr.mxu0 0.0
        %6659 = vmatpush1.msra.mxu0 0.0
        %6660 = vmatprep.subr.mxu0 0.0
        %6661 = vmatpush1.msra.mxu0 0.0
        %6662 = vmatprep.subr.mxu0 0.0
        %6663 = vmatpush1.msra.mxu0 0.0
        %6664 = vmatprep.subr.mxu0 0.0
        %6665 = vmatpush1.msra.mxu0 0.0
        %6666 = vmatprep.subr.mxu0 0.0
        %6667 = vmatpush1.msra.mxu0 0.0
        %6668 = vmatprep.subr.mxu0 0.0
        %6669 = vmatpush1.msra.mxu0 0.0
        %6670 = vmatprep.subr.mxu0 0.0
        %6671 = vmatpush1.msra.mxu0 0.0
        %6672 = vmatprep.subr.mxu0 0.0
        %6673 = vmatpush1.msra.mxu0 0.0
        %6674 = vmatprep.subr.mxu0 0.0
        %6675 = vmatpush1.msra.mxu0 0.0
        %6676 = vmatprep.subr.mxu0 0.0
        %6677 = vmatpush1.msra.mxu0 0.0
        %6678 = vmatprep.subr.mxu0 0.0
        %6679 = vmatpush1.msra.mxu0 0.0
        %6680 = vmatprep.subr.mxu0 0.0
        %6681 = vmatpush1.msra.mxu0 0.0
        %6682 = vmatprep.subr.mxu0 0.0
        %6683 = vmatpush1.msra.mxu0 0.0
        %6684 = vmatprep.subr.mxu0 0.0
        %6685 = vmatpush1.msra.mxu0 0.0
        %6686 = vmatprep.subr.mxu0 0.0
        %6687 = vmatpush1.msra.mxu0 0.0
        %6688 = vmatprep.subr.mxu0 0.0
        %6689 = vmatpush1.msra.mxu0 0.0
        %6690 = vmatprep.subr.mxu0 0.0
        %6691 = vmatpush1.msra.mxu0 0.0
        %6692 = vmatprep.subr.mxu0 0.0
        %6693 = vmatpush1.msra.mxu0 0.0
        %6694 = vmatprep.subr.mxu0 0.0
        %6695 = vmatpush1.msra.mxu0 0.0
        %6696 = vmatprep.subr.mxu0 0.0
        %6697 = vmatpush1.msra.mxu0 0.0
        %6698 = vmatprep.subr.mxu0 0.0
        %6699 = vmatpush1.msra.mxu0 0.0
        %6700 = vmatprep.subr.mxu0 0.0
        %6701 = vmatpush1.msra.mxu0 0.0
        %6702 = vmatprep.subr.mxu0 0.0
        %6703 = vmatpush1.msra.mxu0 0.0
        %6704 = vmatprep.mubr.f32.mxu0 0.0
        %6705 = vmatmul.mubr.f32.gmra.mrb[0].mxu0 %v6351
        %v6706 = vpop.f32.mrb[0].mxu0
        %v6707 = vadd.f32 %v6482, %v6706
        %v6708 = vpop.f32.mrb[0].mxu0
        %6709 = vmatprep.mubr.f32.mxu0 0.0
        %6710 = vmatmul.mubr.f32.gmra.mrb[0].mxu0 %v6353
        %v6711 = vpop.f32.mrb[0].mxu0
        %v6712 = vadd.f32 %v6487, %v6711
        %v6713 = vpop.f32.mrb[0].mxu0
        %6714 = vmatprep.mubr.f32.mxu0 0.0
        %6715 = vmatmul.mubr.f32.gmra.mrb[0].mxu0 %v6355
        %v6716 = vpop.f32.mrb[0].mxu0
        %v6717 = vadd.f32 %v6492, %v6716
        %v6718 = vpop.f32.mrb[0].mxu0
        %6719 = vmatprep.mubr.f32.mxu0 0.0
        %6720 = vmatmul.mubr.f32.gmra.mrb[0].mxu0 %v6357
        %v6721 = vpop.f32.mrb[0].mxu0
        %v6722 = vadd.f32 %v6497, %v6721
        %v6723 = vpop.f32.mrb[0].mxu0
        %6724 = vmatprep.mubr.f32.mxu0 0.0
        %6725 = vmatmul.mubr.f32.gmra.mrb[0].mxu0 %v6359
        %v6726 = vpop.f32.mrb[0].mxu0
        %v6727 = vadd.f32 %v6502, %v6726
        %v6728 = vpop.f32.mrb[0].mxu0
        %6729 = vmatprep.mubr.f32.mxu0 0.0
        %6730 = vmatmul.mubr.f32.gmra.mrb[0].mxu0 %v6361
        %v6731 = vpop.f32.mrb[0].mxu0
        %v6732 = vadd.f32 %v6507, %v6731
        %v6733 = vpop.f32.mrb[0].mxu0
        %6734 = vmatprep.mubr.f32.mxu0 0.0
        %6735 = vmatmul.mubr.f32.gmra.mrb[0].mxu0 %v6363
        %v6736 = vpop.f32.mrb[0].mxu0
        %v6737 = vadd.f32 %v6512, %v6736
        %v6738 = vpop.f32.mrb[0].mxu0
        %6739 = vmatprep.mubr.f32.mxu0 0.0
        %6740 = vmatmul.mubr.f32.gmra.mrb[0].mxu0 %v6365
        %v6741 = vpop.f32.mrb[0].mxu0
        %v6742 = vadd.f32 %v6517, %v6741
        %v6743 = vpop.f32.mrb[0].mxu0
        %6744 = vmatprep.mubr.f32.mxu0 0.0
        %6745 = vmatmul.mubr.f32.gmra.mrb[0].mxu0 %v6367
        %v6746 = vpop.f32.mrb[0].mxu0
        %v6747 = vadd.f32 %v6522, %v6746
        %v6748 = vpop.f32.mrb[0].mxu0
        %6749 = vmatprep.mubr.f32.mxu0 0.0
        %6750 = vmatmul.mubr.f32.gmra.mrb[0].mxu0 %v6369
        %v6751 = vpop.f32.mrb[0].mxu0
        %v6752 = vadd.f32 %v6527, %v6751
        %v6753 = vpop.f32.mrb[0].mxu0
        %6754 = vmatprep.mubr.f32.mxu0 0.0
        %6755 = vmatmul.mubr.f32.gmra.mrb[0].mxu0 %v6371
        %v6756 = vpop.f32.mrb[0].mxu0
        %v6757 = vadd.f32 %v6532, %v6756
        %v6758 = vpop.f32.mrb[0].mxu0
        %6759 = vmatprep.mubr.f32.mxu0 0.0
        %6760 = vmatmul.mubr.f32.gmra.mrb[0].mxu0 %v6373
        %v6761 = vpop.f32.mrb[0].mxu0
        %v6762 = vadd.f32 %v6537, %v6761
        %v6763 = vpop.f32.mrb[0].mxu0
        %6764 = vmatprep.mubr.f32.mxu0 0.0
        %6765 = vmatmul.mubr.f32.gmra.mrb[0].mxu0 %v6375
        %v6766 = vpop.f32.mrb[0].mxu0
        %v6767 = vadd.f32 %v6542, %v6766
        %v6768 = vpop.f32.mrb[0].mxu0
        %6769 = vmatprep.mubr.f32.mxu0 0.0
        %6770 = vmatmul.mubr.f32.gmra.mrb[0].mxu0 %v6377
        %v6771 = vpop.f32.mrb[0].mxu0
        %v6772 = vadd.f32 %v6547, %v6771
        %v6773 = vpop.f32.mrb[0].mxu0
        %6774 = vmatprep.mubr.f32.mxu0 0.0
        %6775 = vmatmul.mubr.f32.gmra.mrb[0].mxu0 %v6379
        %v6776 = vpop.f32.mrb[0].mxu0
        %v6777 = vadd.f32 %v6552, %v6776
        %v6778 = vpop.f32.mrb[0].mxu0
        %6779 = vmatprep.mubr.f32.mxu0 0.0
        %6780 = vmatmul.mubr.f32.gmra.mrb[0].mxu0 %v6381
        %v6781 = vpop.f32.mrb[0].mxu0
        %v6782 = vadd.f32 %v6557, %v6781
        %v6783 = vpop.f32.mrb[0].mxu0
        %6784 = vmatprep.mubr.f32.mxu0 0.0
        %6785 = vmatmul.mubr.f32.gmra.mrb[0].mxu0 %v6383
        %v6786 = vpop.f32.mrb[0].mxu0
        %v6787 = vadd.f32 %v6562, %v6786
        %v6788 = vpop.f32.mrb[0].mxu0
        %6789 = vmatprep.mubr.f32.mxu0 0.0
        %6790 = vmatmul.mubr.f32.gmra.mrb[0].mxu0 %v6385
        %v6791 = vpop.f32.mrb[0].mxu0
        %v6792 = vadd.f32 %v6567, %v6791
        %v6793 = vpop.f32.mrb[0].mxu0
        %6794 = vmatprep.mubr.f32.mxu0 0.0
        %6795 = vmatmul.mubr.f32.gmra.mrb[0].mxu0 %v6387
        %v6796 = vpop.f32.mrb[0].mxu0
        %v6797 = vadd.f32 %v6572, %v6796
        %v6798 = vpop.f32.mrb[0].mxu0
        %6799 = vmatprep.mubr.f32.mxu0 0.0
        %6800 = vmatmul.mubr.f32.gmra.mrb[0].mxu0 %v6389
        %v6801 = vpop.f32.mrb[0].mxu0
        %v6802 = vadd.f32 %v6577, %v6801
        %v6803 = vpop.f32.mrb[0].mxu0
        %6804 = vmatprep.mubr.f32.mxu0 0.0
        %6805 = vmatmul.mubr.f32.gmra.mrb[0].mxu0 %v6391
        %v6806 = vpop.f32.mrb[0].mxu0
        %v6807 = vadd.f32 %v6582, %v6806
        %v6808 = vpop.f32.mrb[0].mxu0
        %6809 = vmatprep.mubr.f32.mxu0 0.0
        %6810 = vmatmul.mubr.f32.gmra.mrb[0].mxu0 %v6393
        %v6811 = vpop.f32.mrb[0].mxu0
        %v6812 = vadd.f32 %v6587, %v6811
        %v6813 = vpop.f32.mrb[0].mxu0
        %6814 = vmatprep.mubr.f32.mxu0 0.0
        %6815 = vmatmul.mubr.f32.gmra.mrb[0].mxu0 %v6395
        %v6816 = vpop.f32.mrb[0].mxu0
        %v6817 = vadd.f32 %v6592, %v6816
        %v6818 = vpop.f32.mrb[0].mxu0
        %6819 = vmatprep.mubr.f32.mxu0 0.0
        %6820 = vmatmul.mubr.f32.gmra.mrb[0].mxu0 %v6397
        %v6821 = vpop.f32.mrb[0].mxu0
        %v6822 = vadd.f32 %v6597, %v6821
        %v6823 = vpop.f32.mrb[0].mxu0
        %6824 = vmatprep.mubr.f32.mxu0 0.0
        %6825 = vmatmul.mubr.f32.gmra.mrb[0].mxu0 %v6399
        %v6826 = vpop.f32.mrb[0].mxu0
        %v6827 = vadd.f32 %v6602, %v6826
        %v6828 = vpop.f32.mrb[0].mxu0
        %6829 = vmatprep.mubr.f32.mxu0 0.0
        %6830 = vmatmul.mubr.f32.gmra.mrb[0].mxu0 %v6401
        %v6831 = vpop.f32.mrb[0].mxu0
        %v6832 = vadd.f32 %v6607, %v6831
        %v6833 = vpop.f32.mrb[0].mxu0
        %6834 = vmatprep.mubr.f32.mxu0 0.0
        %6835 = vmatmul.mubr.f32.gmra.mrb[0].mxu0 %v6403
        %v6836 = vpop.f32.mrb[0].mxu0
        %v6837 = vadd.f32 %v6612, %v6836
        %v6838 = vpop.f32.mrb[0].mxu0
        %6839 = vmatprep.mubr.f32.mxu0 0.0
        %6840 = vmatmul.mubr.f32.gmra.mrb[0].mxu0 %v6405
        %v6841 = vpop.f32.mrb[0].mxu0
        %v6842 = vadd.f32 %v6617, %v6841
        %v6843 = vpop.f32.mrb[0].mxu0
        %6844 = vmatprep.mubr.f32.mxu0 0.0
        %6845 = vmatmul.mubr.f32.gmra.mrb[0].mxu0 %v6407
        %v6846 = vpop.f32.mrb[0].mxu0
        %v6847 = vadd.f32 %v6622, %v6846
        %v6848 = vpop.f32.mrb[0].mxu0
        %6849 = vmatprep.mubr.f32.mxu0 0.0
        %6850 = vmatmul.mubr.f32.gmra.mrb[0].mxu0 %v6409
        %v6851 = vpop.f32.mrb[0].mxu0
        %v6852 = vadd.f32 %v6627, %v6851
        %v6853 = vpop.f32.mrb[0].mxu0
        %6854 = vmatprep.mubr.f32.mxu0 0.0
        %6855 = vmatmul.mubr.f32.gmra.mrb[0].mxu0 %v6411
        %v6856 = vpop.f32.mrb[0].mxu0
        %v6857 = vadd.f32 %v6632, %v6856
        %v6858 = vpop.f32.mrb[0].mxu0
        %6859 = vmatprep.mubr.f32.mxu0 0.0
        %6860 = vmatmul.mubr.f32.gmra.mrb[0].mxu0 %v6413
        %v6861 = vpop.f32.mrb[0].mxu0
        %v6862 = vadd.f32 %v6637, %v6861
        %v6863 = vpop.f32.mrb[0].mxu0
        %6864 = vdwg.mxu0
        %v6865 = vmax.f32 %v6707, 0.0
        %v6866 = vmax.f32 %v6712, 0.0
        %v6867 = vmax.f32 %v6717, 0.0
        %v6868 = vmax.f32 %v6722, 0.0
        %v6869 = vmax.f32 %v6727, 0.0
        %v6870 = vmax.f32 %v6732, 0.0
        %v6871 = vmax.f32 %v6737, 0.0
        %v6872 = vmax.f32 %v6742, 0.0
        %v6873 = vmax.f32 %v6747, 0.0
        %v6874 = vmax.f32 %v6752, 0.0
        %v6875 = vmax.f32 %v6757, 0.0
        %v6876 = vmax.f32 %v6762, 0.0
        %v6877 = vmax.f32 %v6767, 0.0
        %v6878 = vmax.f32 %v6772, 0.0
        %v6879 = vmax.f32 %v6777, 0.0
        %v6880 = vmax.f32 %v6782, 0.0
        %v6881 = vmax.f32 %v6787, 0.0
        %v6882 = vmax.f32 %v6792, 0.0
        %v6883 = vmax.f32 %v6797, 0.0
        %v6884 = vmax.f32 %v6802, 0.0
        %v6885 = vmax.f32 %v6807, 0.0
        %v6886 = vmax.f32 %v6812, 0.0
        %v6887 = vmax.f32 %v6817, 0.0
        %v6888 = vmax.f32 %v6822, 0.0
        %v6889 = vmax.f32 %v6827, 0.0
        %v6890 = vmax.f32 %v6832, 0.0
        %v6891 = vmax.f32 %v6837, 0.0
        %v6892 = vmax.f32 %v6842, 0.0
        %v6893 = vmax.f32 %v6847, 0.0
        %v6894 = vmax.f32 %v6852, 0.0
        %v6895 = vmax.f32 %v6857, 0.0
        %v6896 = vmax.f32 %v6862, 0.0
        %6897 = vst.msk [vmem:[%s271] sm:$0xff] %vm1175, %v6865
        %6898 = vst.msk [vmem:[%s271 + $0x8] sm:$0xff] %vm1175, %v6866
        %6899 = vst.msk [vmem:[%s271 + $0x10] sm:$0xff] %vm1175, %v6867
        %6900 = vst.msk [vmem:[%s271 + $0x18] sm:$0xff] %vm1175, %v6868
        %6901 = vst.msk [vmem:[%s271 + $0x20] sm:$0xff] %vm1175, %v6869
        %6902 = vst.msk [vmem:[%s271 + $0x28] sm:$0xff] %vm1175, %v6870
        %6903 = vst.msk [vmem:[%s271 + $0x30] sm:$0xff] %vm1175, %v6871
        %6904 = vst.msk [vmem:[%s271 + $0x38] sm:$0xff] %vm1175, %v6872
        %6905 = vst.msk [vmem:[%s271 + $0x40] sm:$0xff] %vm1175, %v6873
        %6906 = vst.msk [vmem:[%s271 + $0x48] sm:$0xff] %vm1175, %v6874
        %6907 = vst.msk [vmem:[%s271 + $0x50] sm:$0xff] %vm1175, %v6875
        %6908 = vst.msk [vmem:[%s271 + $0x58] sm:$0xff] %vm1175, %v6876
        %6909 = vst.msk [vmem:[%s271 + $0x60] sm:$0xff] %vm1175, %v6877
        %6910 = vst.msk [vmem:[%s271 + $0x68] sm:$0xff] %vm1175, %v6878
        %6911 = vst.msk [vmem:[%s271 + $0x70] sm:$0xff] %vm1175, %v6879
        %6912 = vst.msk [vmem:[%s271 + $0x78] sm:$0xff] %vm1175, %v6880
        %6913 = vst.msk [vmem:[%s271 + $0x80] sm:$0xff] %vm1175, %v6881
        %6914 = vst.msk [vmem:[%s271 + $0x88] sm:$0xff] %vm1175, %v6882
        %6915 = vst.msk [vmem:[%s271 + $0x90] sm:$0xff] %vm1175, %v6883
        %6916 = vst.msk [vmem:[%s271 + $0x98] sm:$0xff] %vm1175, %v6884
        %6917 = vst.msk [vmem:[%s271 + $0xa0] sm:$0xff] %vm1175, %v6885
        %6918 = vst.msk [vmem:[%s271 + $0xa8] sm:$0xff] %vm1175, %v6886
        %6919 = vst.msk [vmem:[%s271 + $0xb0] sm:$0xff] %vm1175, %v6887
        %6920 = vst.msk [vmem:[%s271 + $0xb8] sm:$0xff] %vm1175, %v6888
        %6921 = vst.msk [vmem:[%s271 + $0xc0] sm:$0xff] %vm1175, %v6889
        %6922 = vst.msk [vmem:[%s271 + $0xc8] sm:$0xff] %vm1175, %v6890
        %6923 = vst.msk [vmem:[%s271 + $0xd0] sm:$0xff] %vm1175, %v6891
        %6924 = vst.msk [vmem:[%s271 + $0xd8] sm:$0xff] %vm1175, %v6892
        %6925 = vst.msk [vmem:[%s271 + $0xe0] sm:$0xff] %vm1175, %v6893
        %6926 = vst.msk [vmem:[%s271 + $0xe8] sm:$0xff] %vm1175, %v6894
        %6927 = vst.msk [vmem:[%s271 + $0xf0] sm:$0xff] %vm1175, %v6895
        %6928 = vst.msk [vmem:[%s271 + $0xf8] sm:$0xff] %vm1175, %v6896
        %s6929 = sand.u32 %s181, 1
        %s6930 = scalar_lea.sflag [#allocation6], %s6929
        %s6931 = sand.u32 %s181, 1
        %s6932 = smul.addr %s6931, 256
        %s6933 = scalar_lea.vmem [#allocation5], %s6932
        // Predicated region
        $region49: #{tpu_custom_call.1} parent=47 // pred_check
          %p6934 = pneg %p191
        $region50: #{tpu_custom_call.1} parent=47 // pred_check_branch
          %6936 = sbr.rel (%p6934) target = $region52
        $region51: #{tpu_custom_call.1} parent=47 // pred_region
          %s6938 = ssub.s32 4096, 4096
          %6939 = vsyncadd %s6930, %s6938
          %s6940 = smul.addr %s21, 32
          %s6941 = smul.addr %s6940, 128
          %s6942 = scalar_lea.hbm %s7, %s6941
          %s6943 = sshll.u32 %s6933, 4
          %s6944 = int_to_ptr.vmem [resolvable:$true] %s6943
          %6949 = dma.vmem_to_hbm [thread:$0]  %s6944, 4096, %s6942, %s6930, 128, 128, 8
        $region52: #{tpu_custom_call.1} parent=47 // pred_fallthru
          _
      $region48: #{tpu_custom_call.1} parent=5 // pred_fallthru
        _
      %p6950 = scmp.le.s32.totalorder 2, %s16
      // Predicated region
      $region53: #{tpu_custom_call.1} parent=5 // pred_check
        %p6951 = pneg %p6950
      $region54: #{tpu_custom_call.1} parent=5 // pred_check_branch
        %6953 = sbr.rel (%p6951) target = $region56
      $region55: #{tpu_custom_call.1} parent=5 // pred_region
        %s6954 = ssub.s32 %s16, 2
        // Predicated region
        $region57: #{tpu_custom_call.1} parent=55 // pred_check
          %p6955 = pneg %p197
        $region58: #{tpu_custom_call.1} parent=55 // pred_check_branch
          %6957 = sbr.rel (%p6955) target = $region60
        $region59: #{tpu_custom_call.1} parent=55 // pred_region
          %s6958 = sand.u32 %s182, 1
          %s6959 = scalar_lea.sflag [#allocation6], %s6958
          %s6960 = sand.u32 %s182, 1
          %s6961 = smul.addr %s6960, 256
          %s6962 = scalar_lea.vmem [#allocation5], %s6961
          %6963 = dma.done %s6959, 4096
        $region60: #{tpu_custom_call.1} parent=55 // pred_fallthru
          _
      $region56: #{tpu_custom_call.1} parent=5 // pred_fallthru
        _
    $region6: #{tpu_custom_call.1} parent=1 // loop_footer
      %s20 = sadd.s32 1, %s16
    $region7: #{tpu_custom_call.1} parent=1 // loop_footer_branch
      %15 = sbr.rel target = $region3
    $region8: #{tpu_custom_call.1} parent=1 // loop_exit
      _
    %6964 = vsyncpa [#allocation6], 1
    %s6965 = scalar_lea.sflag [#allocation6], 1
    %6966 = vsyncpa %s6965, 1

</llo_original>
